<compile_context>
chip_gen: v7x
topology: tpu7x:2x2x1
jax: 0.10.0
libtpu: 0.0.40
codegen_flags: <defaults>
</compile_context>

<pallas_src>
import math

import numpy as np
import jax
import jax.numpy as jnp
from jax import lax
from jax.experimental import pallas as pl
from jax.experimental.pallas import tpu as pltpu

EPS = 1e-5
NEG_SLOPE = 0.01          # nn.LeakyReLU() default
HIDDEN = [32, 16, 4, 1]   # conv output channels
IN_CH = 3


# ---------------------------------------------------------------------------
# Geometry / constant selection matrices (built once, wrapper-side)
# ---------------------------------------------------------------------------
def _layer_geoms(n, h, w):
    geoms = []
    cin, hh, ww = IN_CH, h, w
    for cout in HIDDEN:
        geoms.append(dict(cin=cin, cout=cout, hin=hh, win=ww,
                          ho=hh // 2, wo=ww // 2, hp=hh + 2, wp=ww + 2))
        cin, hh, ww = cout, hh // 2, ww // 2
    return geoms


def _row_select(n, geom):
    """R[ki, (b, i), (b, h)] = 1  iff  h == 2*i + ki   (per-image row decimation)."""
    ho, hp = geom["ho"], geom["hp"]
    r = np.zeros((3, n * ho, n * hp), np.float32)
    for ki in range(3):
        for b in range(n):
            for i in range(ho):
                r[ki, b * ho + i, b * hp + 2 * i + ki] = 1.0
    return r


def _col_select(geom):
    """S[kj, w, j] = 1  iff  w == 2*j + kj   (column decimation, folded into weights)."""
    wo, wp = geom["wo"], geom["wp"]
    s = np.zeros((3, wp, wo), np.float32)
    for kj in range(3):
        for j in range(wo):
            s[kj, 2 * j + kj, j] = 1.0
    return s


def _pack_operands(params, geoms, n):
    """Build all kernel operands (everything except the padded input A1)."""
    ops = []
    for geom, lyr in zip(geoms, params["convs"]):
        s = _col_select(geom)
        w = np.asarray(lyr["w"])                       # (Cout, Cin, 3, 3)
        c_mats = []
        for ki in range(3):
            ck = np.zeros((geom["wp"] * geom["cin"],
                           geom["wo"] * geom["cout"]), np.float32)
            for kj in range(3):
                # banded weight block: C_ki[(w, c), (j, co)] = W[co, c, ki, kj] iff w == 2j+kj
                ck += np.kron(s[kj], np.ascontiguousarray(w[:, :, ki, kj].T))
            c_mats.append(ck)
        c_all = jnp.asarray(np.stack(c_mats))          # (3, Wp*Cin, Wo*Cout)
        r_all = jnp.asarray(_row_select(n, geom))      # (3, N*Ho, N*Hp)
        t_red = np.tile(np.eye(geom["cout"], dtype=np.float32), (geom["wo"], 1))
        gb = jnp.stack([lyr["gamma"], lyr["beta"]])    # (2, Cout)
        ops += [c_all, r_all,
                jnp.asarray(t_red),                    # (Wo*Cout, Cout)  column -> channel reduce
                jnp.asarray(np.ascontiguousarray(t_red.T)),  # (Cout, Wo*Cout) channel broadcast
                gb]
    # fc21 (reference forward applies it twice; computed once here).  Split even/odd rows
    # of the (8, 4) weight so the in-kernel flatten becomes two tiny matmuls (no reshape).
    wl = np.asarray(params["fc21_w"])                  # (8, 4)
    ops += [jnp.asarray(np.ascontiguousarray(wl[0::2, :].T)),   # (4, 4)
            jnp.asarray(np.ascontiguousarray(wl[1::2, :].T)),   # (4, 4)
            params["fc21_b"].reshape(4, 1)]                      # (4, 1)
    return ops


# ---------------------------------------------------------------------------
# Fused Pallas kernel (whole network, VMEM-resident activations)
# ---------------------------------------------------------------------------
def _make_kernel(n, geoms):
    inv_counts = [1.0 / float(n * g["ho"] * g["wo"]) for g in geoms]

    def _conv_bn_lrelu(a, c_ref, r_ref, tr_ref, tb_ref, gb_ref, inv_count):
        # Conv 3x3/s2/p1 (bias-free; the Conv2d bias cancels exactly under train-mode BN)
        # as 3 banded matmuls: row-decimate, then banded weight matmul.
        o = None
        for ki in range(3):
            dec = jnp.dot(r_ref[ki], a, preferred_element_type=jnp.float32)
            t = jnp.dot(dec, c_ref[ki], preferred_element_type=jnp.float32)
            o = t if o is None else o + t
        # One-pass BN batch statistics.  Stack [sum ; sum-of-squares] rows and reduce the
        # (w, channel) columns down to channels with a single matmul.
        sums = jnp.concatenate(
            [jnp.sum(o, axis=0, keepdims=True),
             jnp.sum(o * o, axis=0, keepdims=True)], axis=0)                   # (2, Wo*Cout)
        s12 = jnp.dot(sums, tr_ref[...], preferred_element_type=jnp.float32)   # (2, Cout)
        mean = s12[0:1, :] * inv_count
        var = s12[1:2, :] * inv_count - mean * mean                             # biased variance
        gamma = gb_ref[0:1, :]
        beta = gb_ref[1:2, :]
        scale = gamma * lax.rsqrt(var + EPS)
        shift = beta - mean * scale
        # Broadcast [scale ; shift] from (2, Cout) to (2, Wo*Cout) with one matmul.
        ssb = jnp.dot(jnp.concatenate([scale, shift], axis=0), tb_ref[...],
                      preferred_element_type=jnp.float32)                       # (2, Wo*Cout)
        y = o * ssb[0:1, :] + ssb[1:2, :]
        return jnp.where(y >= 0, y, NEG_SLOPE * y)                               # LeakyReLU

    def kernel(a1_ref,
               c1, r1, t1r, t1b, gb1,
               c2, r2, t2r, t2b, gb2,
               c3, r3, t3r, t3b, gb3,
               c4, r4, t4r, t4b, gb4,
               wfce_ref, wfco_ref, bfc_ref,
               out_ref,
               a2_s, a3_s, a4_s):
        layer_refs = [(c1, r1, t1r, t1b, gb1),
                      (c2, r2, t2r, t2b, gb2),
                      (c3, r3, t3r, t3b, gb3),
                      (c4, r4, t4r, t4b, gb4)]
        scratch = [a2_s, a3_s, a4_s]
        # Zero the padded VMEM scratch buffers (their borders are the next conv's padding).
        for s in scratch:
            s[...] = jnp.zeros_like(s)

        a = a1_ref[...]                                # (N*Hp, Wp*Cin) padded input
        y = None
        for l, g in enumerate(geoms):
            lr = layer_refs[l]
            y = _conv_bn_lrelu(a, *lr, inv_counts[l])  # (N*Ho, Wo*Cout)
            if l < 3:
                nxt = scratch[l]
                ho, wo, cout = g["ho"], g["wo"], g["cout"]
                hp_next = geoms[l + 1]["hp"]
                # Write into the interior of the next layer's padded buffer (stays in VMEM).
                for b in range(n):
                    nxt[b * hp_next + 1: b * hp_next + 1 + ho,
                        cout: cout * (wo + 1)] = y[b * ho:(b + 1) * ho, :]
                a = nxt[...]

        # y is (N*2, 2) with C == 1, rows = (n, h), cols = w -> row-major flatten equals the
        # PyTorch reshape(-1, 8).  fc21 on that (1, 8) vector as two (4,4)@(4,1) matmuls.
        out_ref[...] = (jnp.dot(wfce_ref[...], y[:, 0:1], preferred_element_type=jnp.float32)
                        + jnp.dot(wfco_ref[...], y[:, 1:2], preferred_element_type=jnp.float32)
                        + bfc_ref[...])

    return kernel


# ---------------------------------------------------------------------------
# Parameter init (deterministic, PyTorch-default-style uniform bounds)
# ---------------------------------------------------------------------------
def init_params(key):
    params = {"convs": []}
    cin = IN_CH
    for cout in HIDDEN:
        key, k1, k2 = jax.random.split(key, 3)
        bound = 1.0 / math.sqrt(cin * 9)
        w = jax.random.uniform(k1, (cout, cin, 3, 3), minval=-bound, maxval=bound)
        b = jax.random.uniform(k2, (cout,), minval=-bound, maxval=bound)
        params["convs"].append(dict(
            w=w.astype(jnp.float32),
            # Conv2d bias kept for parity with the PyTorch module, but it cancels exactly
            # under training-mode BatchNorm (mean subtraction), so the kernel ignores it.
            b=b.astype(jnp.float32),
            gamma=jnp.ones((cout,), jnp.float32),
            beta=jnp.zeros((cout,), jnp.float32),
        ))
        cin = cout
    key, k1, k2, k3, k4 = jax.random.split(key, 5)
    bound = 1.0 / math.sqrt(8)
    params["fc21_w"] = jax.random.uniform(k1, (4, 8), minval=-bound, maxval=bound).T.astype(jnp.float32)
    params["fc21_b"] = jax.random.uniform(k2, (4,), minval=-bound, maxval=bound).astype(jnp.float32)
    # fc22 exists in __init__ but is unused by the reference forward.
    params["fc22_w"] = jax.random.uniform(k3, (4, 8), minval=-bound, maxval=bound).T.astype(jnp.float32)
    params["fc22_b"] = jax.random.uniform(k4, (4,), minval=-bound, maxval=bound).astype(jnp.float32)
    return params


# ---------------------------------------------------------------------------
# Forward builder: one pallas_call for the whole network
# ---------------------------------------------------------------------------
def build_forward(params, x_shape):
    n, cin, h, w = x_shape
    assert cin == IN_CH and h % 16 == 0 and w % 16 == 0
    geoms = _layer_geoms(n, h, w)
    flat = n * geoms[-1]["ho"] * geoms[-1]["wo"] * geoms[-1]["cout"]
    # TODO(synk): the fused fc21 path assumes reshape(-1, 8) yields exactly one row
    # (true for the module's 32x32 / batch-2 use); generalize the row grouping if batch scales.
    assert flat == 8, "fused fc21 path expects a single (1, 8) row after the conv stack"

    ops = _pack_operands(params, geoms, n)
    kernel = _make_kernel(n, geoms)

    a1_shape = (n * (h + 2), (w + 2) * IN_CH)
    in_shapes = [a1_shape] + [tuple(o.shape) for o in ops]

    def _full_spec(shape):
        zeros = (0,) * len(shape)
        return pl.BlockSpec(shape, lambda i, _z=zeros: _z)

    call = pl.pallas_call(
        kernel,
        out_shape=jax.ShapeDtypeStruct((4, 1), jnp.float32),
        grid=(1,),
        in_specs=[_full_spec(s) for s in in_shapes],
        out_specs=_full_spec((4, 1)),
        scratch_shapes=[
            pltpu.VMEM((n * g["hp"], g["wp"] * g["cin"]), jnp.float32)
            for g in geoms[1:]
        ],
        compiler_params=pltpu.CompilerParams(
            dimension_semantics=("arbitrary",),
            vmem_limit_bytes=32 * 1024 * 1024,
        ),
    )

    @jax.jit
    def forward(x_nchw):
        # Layout plumbing only (no im2col expansion): NCHW -> padded (N*Hp, Wp*C) slab.
        xh = jnp.transpose(x_nchw, (0, 2, 3, 1)).astype(jnp.float32)
        xp = jnp.pad(xh, ((0, 0), (1, 1), (1, 1), (0, 0)))
        a1 = xp.reshape(n * (h + 2), (w + 2) * IN_CH)
        out = call(a1, *ops)
        mean = out.reshape(1, 4)
        # Reference forward applies fc21 to the same input twice -> identical values; dedup.
        return mean, mean

    return forward


if __name__ == "__main__":
    key = jax.random.PRNGKey(0)
    key, pkey, xkey = jax.random.split(key, 3)
    params = init_params(pkey)
    # Input: NCHW like PyTorch. 32x32 -> 16 -> 8 -> 4 -> 2 spatial; (2,1,2,2) flattens to (1,8).
    x = jax.random.normal(xkey, (2, 3, 32, 32), dtype=jnp.float32)
    forward = build_forward(params, x.shape)
    mean, var = forward(x)
    jax.block_until_ready((mean, var))
    assert mean.shape == (1, 4) and var.shape == (1, 4)
    print("KERNEL_OK")
</pallas_src>

<mosaic_0001>
module attributes {stable_mosaic.version = 11 : i64} {
  func.func @kernel(%arg0: i32, %arg1: memref<68x102xf32, #tpu.memory_space<vmem>>, %arg2: memref<3x102x512xf32, #tpu.memory_space<vmem>>, %arg3: memref<3x32x68xf32, #tpu.memory_space<vmem>>, %arg4: memref<512x32xf32, #tpu.memory_space<vmem>>, %arg5: memref<32x512xf32, #tpu.memory_space<vmem>>, %arg6: memref<2x32xf32, #tpu.memory_space<vmem>>, %arg7: memref<3x576x128xf32, #tpu.memory_space<vmem>>, %arg8: memref<3x16x36xf32, #tpu.memory_space<vmem>>, %arg9: memref<128x16xf32, #tpu.memory_space<vmem>>, %arg10: memref<16x128xf32, #tpu.memory_space<vmem>>, %arg11: memref<2x16xf32, #tpu.memory_space<vmem>>, %arg12: memref<3x160x16xf32, #tpu.memory_space<vmem>>, %arg13: memref<3x8x20xf32, #tpu.memory_space<vmem>>, %arg14: memref<16x4xf32, #tpu.memory_space<vmem>>, %arg15: memref<4x16xf32, #tpu.memory_space<vmem>>, %arg16: memref<2x4xf32, #tpu.memory_space<vmem>>, %arg17: memref<3x24x2xf32, #tpu.memory_space<vmem>>, %arg18: memref<3x4x12xf32, #tpu.memory_space<vmem>>, %arg19: memref<2x1xf32, #tpu.memory_space<vmem>>, %arg20: memref<1x2xf32, #tpu.memory_space<vmem>>, %arg21: memref<2x1xf32, #tpu.memory_space<vmem>>, %arg22: memref<4x4xf32, #tpu.memory_space<vmem>>, %arg23: memref<4x4xf32, #tpu.memory_space<vmem>>, %arg24: memref<4x1xf32, #tpu.memory_space<vmem>>, %arg25: memref<4x1xf32, #tpu.memory_space<vmem>>, %arg26: memref<36x576xf32, #tpu.memory_space<vmem>>, %arg27: memref<20x160xf32, #tpu.memory_space<vmem>>, %arg28: memref<12x24xf32, #tpu.memory_space<vmem>>) attributes {dimension_semantics = [#tpu.dimension_semantics<arbitrary>], iteration_bounds = array<i64: 1>, scalar_prefetch = 0 : i64, scratch_operands = 3 : i64, tpu.core_type = #tpu.core_type<tc>, window_params = [{pipeline_mode = #tpu.pipeline_mode<synchronous>, transform_indices = @transform_0, window_bounds = array<i64: 68, 102>}, {pipeline_mode = #tpu.pipeline_mode<synchronous>, transform_indices = @transform_1, window_bounds = array<i64: 3, 102, 512>}, {pipeline_mode = #tpu.pipeline_mode<synchronous>, transform_indices = @transform_2, window_bounds = array<i64: 3, 32, 68>}, {pipeline_mode = #tpu.pipeline_mode<synchronous>, transform_indices = @transform_3, window_bounds = array<i64: 512, 32>}, {pipeline_mode = #tpu.pipeline_mode<synchronous>, transform_indices = @transform_4, window_bounds = array<i64: 32, 512>}, {pipeline_mode = #tpu.pipeline_mode<synchronous>, transform_indices = @transform_5, window_bounds = array<i64: 2, 32>}, {pipeline_mode = #tpu.pipeline_mode<synchronous>, transform_indices = @transform_6, window_bounds = array<i64: 3, 576, 128>}, {pipeline_mode = #tpu.pipeline_mode<synchronous>, transform_indices = @transform_7, window_bounds = array<i64: 3, 16, 36>}, {pipeline_mode = #tpu.pipeline_mode<synchronous>, transform_indices = @transform_8, window_bounds = array<i64: 128, 16>}, {pipeline_mode = #tpu.pipeline_mode<synchronous>, transform_indices = @transform_9, window_bounds = array<i64: 16, 128>}, {pipeline_mode = #tpu.pipeline_mode<synchronous>, transform_indices = @transform_10, window_bounds = array<i64: 2, 16>}, {pipeline_mode = #tpu.pipeline_mode<synchronous>, transform_indices = @transform_11, window_bounds = array<i64: 3, 160, 16>}, {pipeline_mode = #tpu.pipeline_mode<synchronous>, transform_indices = @transform_12, window_bounds = array<i64: 3, 8, 20>}, {pipeline_mode = #tpu.pipeline_mode<synchronous>, transform_indices = @transform_13, window_bounds = array<i64: 16, 4>}, {pipeline_mode = #tpu.pipeline_mode<synchronous>, transform_indices = @transform_14, window_bounds = array<i64: 4, 16>}, {pipeline_mode = #tpu.pipeline_mode<synchronous>, transform_indices = @transform_15, window_bounds = array<i64: 2, 4>}, {pipeline_mode = #tpu.pipeline_mode<synchronous>, transform_indices = @transform_16, window_bounds = array<i64: 3, 24, 2>}, {pipeline_mode = #tpu.pipeline_mode<synchronous>, transform_indices = @transform_17, window_bounds = array<i64: 3, 4, 12>}, {pipeline_mode = #tpu.pipeline_mode<synchronous>, transform_indices = @transform_18, window_bounds = array<i64: 2, 1>}, {pipeline_mode = #tpu.pipeline_mode<synchronous>, transform_indices = @transform_19, window_bounds = array<i64: 1, 2>}, {pipeline_mode = #tpu.pipeline_mode<synchronous>, transform_indices = @transform_20, window_bounds = array<i64: 2, 1>}, {pipeline_mode = #tpu.pipeline_mode<synchronous>, transform_indices = @transform_21, window_bounds = array<i64: 4, 4>}, {pipeline_mode = #tpu.pipeline_mode<synchronous>, transform_indices = @transform_22, window_bounds = array<i64: 4, 4>}, {pipeline_mode = #tpu.pipeline_mode<synchronous>, transform_indices = @transform_23, window_bounds = array<i64: 4, 1>}, {pipeline_mode = #tpu.pipeline_mode<synchronous>, transform_indices = @transform_24, window_bounds = array<i64: 4, 1>}]} {
    %cst = arith.constant 0.000000e+00 : f32
    %0 = vector.broadcast %cst : f32 to vector<36x576xf32>
    %c0 = arith.constant 0 : index
    %c0_0 = arith.constant 0 : index
    %1 = vector.load %arg26[%c0, %c0_0] : memref<36x576xf32, #tpu.memory_space<vmem>>, vector<36x576xf32>
    tpu.vector_store %arg26[%c0, %c0_0], %0 {strides = array<i32>} : memref<36x576xf32, #tpu.memory_space<vmem>>, vector<36x576xf32>,
    %cst_1 = arith.constant 0.000000e+00 : f32
    %2 = vector.broadcast %cst_1 : f32 to vector<20x160xf32>
    %c0_2 = arith.constant 0 : index
    %c0_3 = arith.constant 0 : index
    %3 = vector.load %arg27[%c0_2, %c0_3] : memref<20x160xf32, #tpu.memory_space<vmem>>, vector<20x160xf32>
    tpu.vector_store %arg27[%c0_2, %c0_3], %2 {strides = array<i32>} : memref<20x160xf32, #tpu.memory_space<vmem>>, vector<20x160xf32>,
    %cst_4 = arith.constant 0.000000e+00 : f32
    %4 = vector.broadcast %cst_4 : f32 to vector<12x24xf32>
    %c0_5 = arith.constant 0 : index
    %c0_6 = arith.constant 0 : index
    %5 = vector.load %arg28[%c0_5, %c0_6] : memref<12x24xf32, #tpu.memory_space<vmem>>, vector<12x24xf32>
    tpu.vector_store %arg28[%c0_5, %c0_6], %4 {strides = array<i32>} : memref<12x24xf32, #tpu.memory_space<vmem>>, vector<12x24xf32>,
    %c0_7 = arith.constant 0 : index
    %c0_8 = arith.constant 0 : index
    %6 = vector.load %arg1[%c0_7, %c0_8] : memref<68x102xf32, #tpu.memory_space<vmem>>, vector<68x102xf32>
    %c0_9 = arith.constant 0 : index
    %c0_10 = arith.constant 0 : index
    %c0_11 = arith.constant 0 : index
    %7 = vector.load %arg3[%c0_9, %c0_10, %c0_11] : memref<3x32x68xf32, #tpu.memory_space<vmem>>, vector<1x32x68xf32>
    %8 = vector.shape_cast %7 : vector<1x32x68xf32> to vector<32x68xf32>
    %cst_12 = arith.constant dense<0.000000e+00> : vector<32x102xf32>
    %9 = tpu.matmul %8, %6, %cst_12 {dimension_numbers = #tpu.dot_dimension_numbers<[1], [0], [0], [1], [0, 0, 1, 1], [], []>} : vector<32x68xf32>, vector<68x102xf32>, vector<32x102xf32> -> vector<32x102xf32>
    %c0_13 = arith.constant 0 : index
    %c0_14 = arith.constant 0 : index
    %c0_15 = arith.constant 0 : index
    %10 = vector.load %arg2[%c0_13, %c0_14, %c0_15] : memref<3x102x512xf32, #tpu.memory_space<vmem>>, vector<1x102x512xf32>
    %11 = vector.shape_cast %10 : vector<1x102x512xf32> to vector<102x512xf32>
    %cst_16 = arith.constant dense<0.000000e+00> : vector<32x512xf32>
    %12 = tpu.matmul %9, %11, %cst_16 {dimension_numbers = #tpu.dot_dimension_numbers<[1], [0], [0], [1], [0, 0, 1, 1], [], []>} : vector<32x102xf32>, vector<102x512xf32>, vector<32x512xf32> -> vector<32x512xf32>
    %c1 = arith.constant 1 : index
    %c0_17 = arith.constant 0 : index
    %c0_18 = arith.constant 0 : index
    %13 = vector.load %arg3[%c1, %c0_17, %c0_18] : memref<3x32x68xf32, #tpu.memory_space<vmem>>, vector<1x32x68xf32>
    %14 = vector.shape_cast %13 : vector<1x32x68xf32> to vector<32x68xf32>
    %cst_19 = arith.constant dense<0.000000e+00> : vector<32x102xf32>
    %15 = tpu.matmul %14, %6, %cst_19 {dimension_numbers = #tpu.dot_dimension_numbers<[1], [0], [0], [1], [0, 0, 1, 1], [], []>} : vector<32x68xf32>, vector<68x102xf32>, vector<32x102xf32> -> vector<32x102xf32>
    %c1_20 = arith.constant 1 : index
    %c0_21 = arith.constant 0 : index
    %c0_22 = arith.constant 0 : index
    %16 = vector.load %arg2[%c1_20, %c0_21, %c0_22] : memref<3x102x512xf32, #tpu.memory_space<vmem>>, vector<1x102x512xf32>
    %17 = vector.shape_cast %16 : vector<1x102x512xf32> to vector<102x512xf32>
    %cst_23 = arith.constant dense<0.000000e+00> : vector<32x512xf32>
    %18 = tpu.matmul %15, %17, %cst_23 {dimension_numbers = #tpu.dot_dimension_numbers<[1], [0], [0], [1], [0, 0, 1, 1], [], []>} : vector<32x102xf32>, vector<102x512xf32>, vector<32x512xf32> -> vector<32x512xf32>
    %19 = arith.addf %12, %18 : vector<32x512xf32>
    %c2 = arith.constant 2 : index
    %c0_24 = arith.constant 0 : index
    %c0_25 = arith.constant 0 : index
    %20 = vector.load %arg3[%c2, %c0_24, %c0_25] : memref<3x32x68xf32, #tpu.memory_space<vmem>>, vector<1x32x68xf32>
    %21 = vector.shape_cast %20 : vector<1x32x68xf32> to vector<32x68xf32>
    %cst_26 = arith.constant dense<0.000000e+00> : vector<32x102xf32>
    %22 = tpu.matmul %21, %6, %cst_26 {dimension_numbers = #tpu.dot_dimension_numbers<[1], [0], [0], [1], [0, 0, 1, 1], [], []>} : vector<32x68xf32>, vector<68x102xf32>, vector<32x102xf32> -> vector<32x102xf32>
    %c2_27 = arith.constant 2 : index
    %c0_28 = arith.constant 0 : index
    %c0_29 = arith.constant 0 : index
    %23 = vector.load %arg2[%c2_27, %c0_28, %c0_29] : memref<3x102x512xf32, #tpu.memory_space<vmem>>, vector<1x102x512xf32>
    %24 = vector.shape_cast %23 : vector<1x102x512xf32> to vector<102x512xf32>
    %cst_30 = arith.constant dense<0.000000e+00> : vector<32x512xf32>
    %25 = tpu.matmul %22, %24, %cst_30 {dimension_numbers = #tpu.dot_dimension_numbers<[1], [0], [0], [1], [0, 0, 1, 1], [], []>} : vector<32x102xf32>, vector<102x512xf32>, vector<32x512xf32> -> vector<32x512xf32>
    %26 = arith.addf %19, %25 : vector<32x512xf32>
    %cst_31 = arith.constant dense<0.000000e+00> : vector<512xf32>
    %27 = vector.multi_reduction <add>, %26, %cst_31 [0] : vector<32x512xf32> to vector<512xf32>
    %28 = vector.shape_cast %27 : vector<512xf32> to vector<1x512xf32>
    %29 = arith.mulf %26, %26 : vector<32x512xf32>
    %cst_32 = arith.constant dense<0.000000e+00> : vector<512xf32>
    %30 = vector.multi_reduction <add>, %29, %cst_32 [0] : vector<32x512xf32> to vector<512xf32>
    %31 = vector.shape_cast %30 : vector<512xf32> to vector<1x512xf32>
    %32 = tpu.concatenate %28, %31 in 0 : vector<1x512xf32>, vector<1x512xf32> -> vector<2x512xf32>
    %c0_33 = arith.constant 0 : index
    %c0_34 = arith.constant 0 : index
    %33 = vector.load %arg4[%c0_33, %c0_34] : memref<512x32xf32, #tpu.memory_space<vmem>>, vector<512x32xf32>
    %cst_35 = arith.constant dense<0.000000e+00> : vector<2x32xf32>
    %34 = tpu.matmul %32, %33, %cst_35 {dimension_numbers = #tpu.dot_dimension_numbers<[1], [0], [0], [1], [0, 0, 1, 1], [], []>} : vector<2x512xf32>, vector<512x32xf32>, vector<2x32xf32> -> vector<2x32xf32>
    %35 = vector.extract_strided_slice %34 {offsets = [0, 0], sizes = [1, 32], strides = [1, 1]} : vector<2x32xf32> to vector<1x32xf32>
    %cst_36 = arith.constant 0.001953125 : f32
    %36 = vector.broadcast %cst_36 : f32 to vector<1x32xf32>
    %37 = arith.mulf %35, %36 : vector<1x32xf32>
    %38 = vector.extract_strided_slice %34 {offsets = [1, 0], sizes = [1, 32], strides = [1, 1]} : vector<2x32xf32> to vector<1x32xf32>
    %cst_37 = arith.constant 0.001953125 : f32
    %39 = vector.broadcast %cst_37 : f32 to vector<1x32xf32>
    %40 = arith.mulf %38, %39 : vector<1x32xf32>
    %41 = arith.mulf %37, %37 : vector<1x32xf32>
    %42 = arith.subf %40, %41 : vector<1x32xf32>
    %c0_38 = arith.constant 0 : index
    %c0_39 = arith.constant 0 : index
    %43 = vector.load %arg6[%c0_38, %c0_39] : memref<2x32xf32, #tpu.memory_space<vmem>>, vector<1x32xf32>
    %c1_40 = arith.constant 1 : index
    %c0_41 = arith.constant 0 : index
    %44 = vector.load %arg6[%c1_40, %c0_41] : memref<2x32xf32, #tpu.memory_space<vmem>>, vector<1x32xf32>
    %cst_42 = arith.constant 9.99999974E-6 : f32
    %45 = vector.broadcast %cst_42 : f32 to vector<1x32xf32>
    %46 = arith.addf %42, %45 : vector<1x32xf32>
    %47 = math.rsqrt %46 : vector<1x32xf32>
    %48 = arith.mulf %43, %47 : vector<1x32xf32>
    %49 = arith.mulf %37, %48 : vector<1x32xf32>
    %50 = arith.subf %44, %49 : vector<1x32xf32>
    %51 = tpu.concatenate %48, %50 in 0 : vector<1x32xf32>, vector<1x32xf32> -> vector<2x32xf32>
    %c0_43 = arith.constant 0 : index
    %c0_44 = arith.constant 0 : index
    %52 = vector.load %arg5[%c0_43, %c0_44] : memref<32x512xf32, #tpu.memory_space<vmem>>, vector<32x512xf32>
    %cst_45 = arith.constant dense<0.000000e+00> : vector<2x512xf32>
    %53 = tpu.matmul %51, %52, %cst_45 {dimension_numbers = #tpu.dot_dimension_numbers<[1], [0], [0], [1], [0, 0, 1, 1], [], []>} : vector<2x32xf32>, vector<32x512xf32>, vector<2x512xf32> -> vector<2x512xf32>
    %54 = vector.extract_strided_slice %53 {offsets = [0, 0], sizes = [1, 512], strides = [1, 1]} : vector<2x512xf32> to vector<1x512xf32>
    %55 = vector.broadcast %54 : vector<1x512xf32> to vector<32x512xf32>
    %56 = arith.mulf %26, %55 : vector<32x512xf32>
    %57 = vector.extract_strided_slice %53 {offsets = [1, 0], sizes = [1, 512], strides = [1, 1]} : vector<2x512xf32> to vector<1x512xf32>
    %58 = vector.broadcast %57 : vector<1x512xf32> to vector<32x512xf32>
    %59 = arith.addf %56, %58 : vector<32x512xf32>
    %cst_46 = arith.constant 0.000000e+00 : f32
    %60 = vector.broadcast %cst_46 : f32 to vector<32x512xf32>
    %61 = arith.cmpf oge, %59, %60 : vector<32x512xf32>
    %cst_47 = arith.constant 0.00999999977 : f32
    %62 = vector.broadcast %cst_47 : f32 to vector<32x512xf32>
    %63 = arith.mulf %62, %59 : vector<32x512xf32>
    %64 = arith.select %61, %59, %63 : vector<32x512xi1>, vector<32x512xf32>
    %65 = vector.extract_strided_slice %64 {offsets = [0, 0], sizes = [16, 512], strides = [1, 1]} : vector<32x512xf32> to vector<16x512xf32>
    %c1_48 = arith.constant 1 : index
    %c32 = arith.constant 32 : index
    %66 = vector.load %arg26[%c1_48, %c32] : memref<36x576xf32, #tpu.memory_space<vmem>>, vector<16x512xf32>
    tpu.vector_store %arg26[%c1_48, %c32], %65 {strides = array<i32>} : memref<36x576xf32, #tpu.memory_space<vmem>>, vector<16x512xf32>,
    %67 = vector.extract_strided_slice %64 {offsets = [16, 0], sizes = [16, 512], strides = [1, 1]} : vector<32x512xf32> to vector<16x512xf32>
    %c19 = arith.constant 19 : index
    %c32_49 = arith.constant 32 : index
    %68 = vector.load %arg26[%c19, %c32_49] : memref<36x576xf32, #tpu.memory_space<vmem>>, vector<16x512xf32>
    tpu.vector_store %arg26[%c19, %c32_49], %67 {strides = array<i32>} : memref<36x576xf32, #tpu.memory_space<vmem>>, vector<16x512xf32>,
    %c0_50 = arith.constant 0 : index
    %c0_51 = arith.constant 0 : index
    %69 = vector.load %arg26[%c0_50, %c0_51] : memref<36x576xf32, #tpu.memory_space<vmem>>, vector<36x576xf32>
    %c0_52 = arith.constant 0 : index
    %c0_53 = arith.constant 0 : index
    %c0_54 = arith.constant 0 : index
    %70 = vector.load %arg8[%c0_52, %c0_53, %c0_54] : memref<3x16x36xf32, #tpu.memory_space<vmem>>, vector<1x16x36xf32>
    %71 = vector.shape_cast %70 : vector<1x16x36xf32> to vector<16x36xf32>
    %cst_55 = arith.constant dense<0.000000e+00> : vector<16x576xf32>
    %72 = tpu.matmul %71, %69, %cst_55 {dimension_numbers = #tpu.dot_dimension_numbers<[1], [0], [0], [1], [0, 0, 1, 1], [], []>} : vector<16x36xf32>, vector<36x576xf32>, vector<16x576xf32> -> vector<16x576xf32>
    %c0_56 = arith.constant 0 : index
    %c0_57 = arith.constant 0 : index
    %c0_58 = arith.constant 0 : index
    %73 = vector.load %arg7[%c0_56, %c0_57, %c0_58] : memref<3x576x128xf32, #tpu.memory_space<vmem>>, vector<1x576x128xf32>
    %74 = vector.shape_cast %73 : vector<1x576x128xf32> to vector<576x128xf32>
    %cst_59 = arith.constant dense<0.000000e+00> : vector<16x128xf32>
    %75 = tpu.matmul %72, %74, %cst_59 {dimension_numbers = #tpu.dot_dimension_numbers<[1], [0], [0], [1], [0, 0, 1, 1], [], []>} : vector<16x576xf32>, vector<576x128xf32>, vector<16x128xf32> -> vector<16x128xf32>
    %c1_60 = arith.constant 1 : index
    %c0_61 = arith.constant 0 : index
    %c0_62 = arith.constant 0 : index
    %76 = vector.load %arg8[%c1_60, %c0_61, %c0_62] : memref<3x16x36xf32, #tpu.memory_space<vmem>>, vector<1x16x36xf32>
    %77 = vector.shape_cast %76 : vector<1x16x36xf32> to vector<16x36xf32>
    %cst_63 = arith.constant dense<0.000000e+00> : vector<16x576xf32>
    %78 = tpu.matmul %77, %69, %cst_63 {dimension_numbers = #tpu.dot_dimension_numbers<[1], [0], [0], [1], [0, 0, 1, 1], [], []>} : vector<16x36xf32>, vector<36x576xf32>, vector<16x576xf32> -> vector<16x576xf32>
    %c1_64 = arith.constant 1 : index
    %c0_65 = arith.constant 0 : index
    %c0_66 = arith.constant 0 : index
    %79 = vector.load %arg7[%c1_64, %c0_65, %c0_66] : memref<3x576x128xf32, #tpu.memory_space<vmem>>, vector<1x576x128xf32>
    %80 = vector.shape_cast %79 : vector<1x576x128xf32> to vector<576x128xf32>
    %cst_67 = arith.constant dense<0.000000e+00> : vector<16x128xf32>
    %81 = tpu.matmul %78, %80, %cst_67 {dimension_numbers = #tpu.dot_dimension_numbers<[1], [0], [0], [1], [0, 0, 1, 1], [], []>} : vector<16x576xf32>, vector<576x128xf32>, vector<16x128xf32> -> vector<16x128xf32>
    %82 = arith.addf %75, %81 : vector<16x128xf32>
    %c2_68 = arith.constant 2 : index
    %c0_69 = arith.constant 0 : index
    %c0_70 = arith.constant 0 : index
    %83 = vector.load %arg8[%c2_68, %c0_69, %c0_70] : memref<3x16x36xf32, #tpu.memory_space<vmem>>, vector<1x16x36xf32>
    %84 = vector.shape_cast %83 : vector<1x16x36xf32> to vector<16x36xf32>
    %cst_71 = arith.constant dense<0.000000e+00> : vector<16x576xf32>
    %85 = tpu.matmul %84, %69, %cst_71 {dimension_numbers = #tpu.dot_dimension_numbers<[1], [0], [0], [1], [0, 0, 1, 1], [], []>} : vector<16x36xf32>, vector<36x576xf32>, vector<16x576xf32> -> vector<16x576xf32>
    %c2_72 = arith.constant 2 : index
    %c0_73 = arith.constant 0 : index
    %c0_74 = arith.constant 0 : index
    %86 = vector.load %arg7[%c2_72, %c0_73, %c0_74] : memref<3x576x128xf32, #tpu.memory_space<vmem>>, vector<1x576x128xf32>
    %87 = vector.shape_cast %86 : vector<1x576x128xf32> to vector<576x128xf32>
    %cst_75 = arith.constant dense<0.000000e+00> : vector<16x128xf32>
    %88 = tpu.matmul %85, %87, %cst_75 {dimension_numbers = #tpu.dot_dimension_numbers<[1], [0], [0], [1], [0, 0, 1, 1], [], []>} : vector<16x576xf32>, vector<576x128xf32>, vector<16x128xf32> -> vector<16x128xf32>
    %89 = arith.addf %82, %88 : vector<16x128xf32>
    %cst_76 = arith.constant dense<0.000000e+00> : vector<128xf32>
    %90 = vector.multi_reduction <add>, %89, %cst_76 [0] : vector<16x128xf32> to vector<128xf32>
    %91 = vector.shape_cast %90 : vector<128xf32> to vector<1x128xf32>
    %92 = arith.mulf %89, %89 : vector<16x128xf32>
    %cst_77 = arith.constant dense<0.000000e+00> : vector<128xf32>
    %93 = vector.multi_reduction <add>, %92, %cst_77 [0] : vector<16x128xf32> to vector<128xf32>
    %94 = vector.shape_cast %93 : vector<128xf32> to vector<1x128xf32>
    %95 = tpu.concatenate %91, %94 in 0 : vector<1x128xf32>, vector<1x128xf32> -> vector<2x128xf32>
    %c0_78 = arith.constant 0 : index
    %c0_79 = arith.constant 0 : index
    %96 = vector.load %arg9[%c0_78, %c0_79] : memref<128x16xf32, #tpu.memory_space<vmem>>, vector<128x16xf32>
    %cst_80 = arith.constant dense<0.000000e+00> : vector<2x16xf32>
    %97 = tpu.matmul %95, %96, %cst_80 {dimension_numbers = #tpu.dot_dimension_numbers<[1], [0], [0], [1], [0, 0, 1, 1], [], []>} : vector<2x128xf32>, vector<128x16xf32>, vector<2x16xf32> -> vector<2x16xf32>
    %98 = vector.extract_strided_slice %97 {offsets = [0, 0], sizes = [1, 16], strides = [1, 1]} : vector<2x16xf32> to vector<1x16xf32>
    %cst_81 = arith.constant 7.812500e-03 : f32
    %99 = vector.broadcast %cst_81 : f32 to vector<1x16xf32>
    %100 = arith.mulf %98, %99 : vector<1x16xf32>
    %101 = vector.extract_strided_slice %97 {offsets = [1, 0], sizes = [1, 16], strides = [1, 1]} : vector<2x16xf32> to vector<1x16xf32>
    %cst_82 = arith.constant 7.812500e-03 : f32
    %102 = vector.broadcast %cst_82 : f32 to vector<1x16xf32>
    %103 = arith.mulf %101, %102 : vector<1x16xf32>
    %104 = arith.mulf %100, %100 : vector<1x16xf32>
    %105 = arith.subf %103, %104 : vector<1x16xf32>
    %c0_83 = arith.constant 0 : index
    %c0_84 = arith.constant 0 : index
    %106 = vector.load %arg11[%c0_83, %c0_84] : memref<2x16xf32, #tpu.memory_space<vmem>>, vector<1x16xf32>
    %c1_85 = arith.constant 1 : index
    %c0_86 = arith.constant 0 : index
    %107 = vector.load %arg11[%c1_85, %c0_86] : memref<2x16xf32, #tpu.memory_space<vmem>>, vector<1x16xf32>
    %cst_87 = arith.constant 9.99999974E-6 : f32
    %108 = vector.broadcast %cst_87 : f32 to vector<1x16xf32>
    %109 = arith.addf %105, %108 : vector<1x16xf32>
    %110 = math.rsqrt %109 : vector<1x16xf32>
    %111 = arith.mulf %106, %110 : vector<1x16xf32>
    %112 = arith.mulf %100, %111 : vector<1x16xf32>
    %113 = arith.subf %107, %112 : vector<1x16xf32>
    %114 = tpu.concatenate %111, %113 in 0 : vector<1x16xf32>, vector<1x16xf32> -> vector<2x16xf32>
    %c0_88 = arith.constant 0 : index
    %c0_89 = arith.constant 0 : index
    %115 = vector.load %arg10[%c0_88, %c0_89] : memref<16x128xf32, #tpu.memory_space<vmem>>, vector<16x128xf32>
    %cst_90 = arith.constant dense<0.000000e+00> : vector<2x128xf32>
    %116 = tpu.matmul %114, %115, %cst_90 {dimension_numbers = #tpu.dot_dimension_numbers<[1], [0], [0], [1], [0, 0, 1, 1], [], []>} : vector<2x16xf32>, vector<16x128xf32>, vector<2x128xf32> -> vector<2x128xf32>
    %117 = vector.extract_strided_slice %116 {offsets = [0, 0], sizes = [1, 128], strides = [1, 1]} : vector<2x128xf32> to vector<1x128xf32>
    %118 = vector.broadcast %117 : vector<1x128xf32> to vector<16x128xf32>
    %119 = arith.mulf %89, %118 : vector<16x128xf32>
    %120 = vector.extract_strided_slice %116 {offsets = [1, 0], sizes = [1, 128], strides = [1, 1]} : vector<2x128xf32> to vector<1x128xf32>
    %121 = vector.broadcast %120 : vector<1x128xf32> to vector<16x128xf32>
    %122 = arith.addf %119, %121 : vector<16x128xf32>
    %cst_91 = arith.constant 0.000000e+00 : f32
    %123 = vector.broadcast %cst_91 : f32 to vector<16x128xf32>
    %124 = arith.cmpf oge, %122, %123 : vector<16x128xf32>
    %cst_92 = arith.constant 0.00999999977 : f32
    %125 = vector.broadcast %cst_92 : f32 to vector<16x128xf32>
    %126 = arith.mulf %125, %122 : vector<16x128xf32>
    %127 = arith.select %124, %122, %126 : vector<16x128xi1>, vector<16x128xf32>
    %128 = vector.extract_strided_slice %127 {offsets = [0, 0], sizes = [8, 128], strides = [1, 1]} : vector<16x128xf32> to vector<8x128xf32>
    %c1_93 = arith.constant 1 : index
    %c16 = arith.constant 16 : index
    %129 = vector.load %arg27[%c1_93, %c16] : memref<20x160xf32, #tpu.memory_space<vmem>>, vector<8x128xf32>
    tpu.vector_store %arg27[%c1_93, %c16], %128 {strides = array<i32>} : memref<20x160xf32, #tpu.memory_space<vmem>>, vector<8x128xf32>,
    %130 = vector.extract_strided_slice %127 {offsets = [8, 0], sizes = [8, 128], strides = [1, 1]} : vector<16x128xf32> to vector<8x128xf32>
    %c11 = arith.constant 11 : index
    %c16_94 = arith.constant 16 : index
    %131 = vector.load %arg27[%c11, %c16_94] : memref<20x160xf32, #tpu.memory_space<vmem>>, vector<8x128xf32>
    tpu.vector_store %arg27[%c11, %c16_94], %130 {strides = array<i32>} : memref<20x160xf32, #tpu.memory_space<vmem>>, vector<8x128xf32>,
    %c0_95 = arith.constant 0 : index
    %c0_96 = arith.constant 0 : index
    %132 = vector.load %arg27[%c0_95, %c0_96] : memref<20x160xf32, #tpu.memory_space<vmem>>, vector<20x160xf32>
    %c0_97 = arith.constant 0 : index
    %c0_98 = arith.constant 0 : index
    %c0_99 = arith.constant 0 : index
    %133 = vector.load %arg13[%c0_97, %c0_98, %c0_99] : memref<3x8x20xf32, #tpu.memory_space<vmem>>, vector<1x8x20xf32>
    %134 = vector.shape_cast %133 : vector<1x8x20xf32> to vector<8x20xf32>
    %cst_100 = arith.constant dense<0.000000e+00> : vector<8x160xf32>
    %135 = tpu.matmul %134, %132, %cst_100 {dimension_numbers = #tpu.dot_dimension_numbers<[1], [0], [0], [1], [0, 0, 1, 1], [], []>} : vector<8x20xf32>, vector<20x160xf32>, vector<8x160xf32> -> vector<8x160xf32>
    %c0_101 = arith.constant 0 : index
    %c0_102 = arith.constant 0 : index
    %c0_103 = arith.constant 0 : index
    %136 = vector.load %arg12[%c0_101, %c0_102, %c0_103] : memref<3x160x16xf32, #tpu.memory_space<vmem>>, vector<1x160x16xf32>
    %137 = vector.shape_cast %136 : vector<1x160x16xf32> to vector<160x16xf32>
    %cst_104 = arith.constant dense<0.000000e+00> : vector<8x16xf32>
    %138 = tpu.matmul %135, %137, %cst_104 {dimension_numbers = #tpu.dot_dimension_numbers<[1], [0], [0], [1], [0, 0, 1, 1], [], []>} : vector<8x160xf32>, vector<160x16xf32>, vector<8x16xf32> -> vector<8x16xf32>
    %c1_105 = arith.constant 1 : index
    %c0_106 = arith.constant 0 : index
    %c0_107 = arith.constant 0 : index
    %139 = vector.load %arg13[%c1_105, %c0_106, %c0_107] : memref<3x8x20xf32, #tpu.memory_space<vmem>>, vector<1x8x20xf32>
    %140 = vector.shape_cast %139 : vector<1x8x20xf32> to vector<8x20xf32>
    %cst_108 = arith.constant dense<0.000000e+00> : vector<8x160xf32>
    %141 = tpu.matmul %140, %132, %cst_108 {dimension_numbers = #tpu.dot_dimension_numbers<[1], [0], [0], [1], [0, 0, 1, 1], [], []>} : vector<8x20xf32>, vector<20x160xf32>, vector<8x160xf32> -> vector<8x160xf32>
    %c1_109 = arith.constant 1 : index
    %c0_110 = arith.constant 0 : index
    %c0_111 = arith.constant 0 : index
    %142 = vector.load %arg12[%c1_109, %c0_110, %c0_111] : memref<3x160x16xf32, #tpu.memory_space<vmem>>, vector<1x160x16xf32>
    %143 = vector.shape_cast %142 : vector<1x160x16xf32> to vector<160x16xf32>
    %cst_112 = arith.constant dense<0.000000e+00> : vector<8x16xf32>
    %144 = tpu.matmul %141, %143, %cst_112 {dimension_numbers = #tpu.dot_dimension_numbers<[1], [0], [0], [1], [0, 0, 1, 1], [], []>} : vector<8x160xf32>, vector<160x16xf32>, vector<8x16xf32> -> vector<8x16xf32>
    %145 = arith.addf %138, %144 : vector<8x16xf32>
    %c2_113 = arith.constant 2 : index
    %c0_114 = arith.constant 0 : index
    %c0_115 = arith.constant 0 : index
    %146 = vector.load %arg13[%c2_113, %c0_114, %c0_115] : memref<3x8x20xf32, #tpu.memory_space<vmem>>, vector<1x8x20xf32>
    %147 = vector.shape_cast %146 : vector<1x8x20xf32> to vector<8x20xf32>
    %cst_116 = arith.constant dense<0.000000e+00> : vector<8x160xf32>
    %148 = tpu.matmul %147, %132, %cst_116 {dimension_numbers = #tpu.dot_dimension_numbers<[1], [0], [0], [1], [0, 0, 1, 1], [], []>} : vector<8x20xf32>, vector<20x160xf32>, vector<8x160xf32> -> vector<8x160xf32>
    %c2_117 = arith.constant 2 : index
    %c0_118 = arith.constant 0 : index
    %c0_119 = arith.constant 0 : index
    %149 = vector.load %arg12[%c2_117, %c0_118, %c0_119] : memref<3x160x16xf32, #tpu.memory_space<vmem>>, vector<1x160x16xf32>
    %150 = vector.shape_cast %149 : vector<1x160x16xf32> to vector<160x16xf32>
    %cst_120 = arith.constant dense<0.000000e+00> : vector<8x16xf32>
    %151 = tpu.matmul %148, %150, %cst_120 {dimension_numbers = #tpu.dot_dimension_numbers<[1], [0], [0], [1], [0, 0, 1, 1], [], []>} : vector<8x160xf32>, vector<160x16xf32>, vector<8x16xf32> -> vector<8x16xf32>
    %152 = arith.addf %145, %151 : vector<8x16xf32>
    %cst_121 = arith.constant dense<0.000000e+00> : vector<16xf32>
    %153 = vector.multi_reduction <add>, %152, %cst_121 [0] : vector<8x16xf32> to vector<16xf32>
    %154 = vector.shape_cast %153 : vector<16xf32> to vector<1x16xf32>
    %155 = arith.mulf %152, %152 : vector<8x16xf32>
    %cst_122 = arith.constant dense<0.000000e+00> : vector<16xf32>
    %156 = vector.multi_reduction <add>, %155, %cst_122 [0] : vector<8x16xf32> to vector<16xf32>
    %157 = vector.shape_cast %156 : vector<16xf32> to vector<1x16xf32>
    %158 = tpu.concatenate %154, %157 in 0 : vector<1x16xf32>, vector<1x16xf32> -> vector<2x16xf32>
    %c0_123 = arith.constant 0 : index
    %c0_124 = arith.constant 0 : index
    %159 = vector.load %arg14[%c0_123, %c0_124] : memref<16x4xf32, #tpu.memory_space<vmem>>, vector<16x4xf32>
    %cst_125 = arith.constant dense<0.000000e+00> : vector<2x4xf32>
    %160 = tpu.matmul %158, %159, %cst_125 {dimension_numbers = #tpu.dot_dimension_numbers<[1], [0], [0], [1], [0, 0, 1, 1], [], []>} : vector<2x16xf32>, vector<16x4xf32>, vector<2x4xf32> -> vector<2x4xf32>
    %161 = vector.extract_strided_slice %160 {offsets = [0, 0], sizes = [1, 4], strides = [1, 1]} : vector<2x4xf32> to vector<1x4xf32>
    %cst_126 = arith.constant 3.125000e-02 : f32
    %162 = vector.broadcast %cst_126 : f32 to vector<1x4xf32>
    %163 = arith.mulf %161, %162 : vector<1x4xf32>
    %164 = vector.extract_strided_slice %160 {offsets = [1, 0], sizes = [1, 4], strides = [1, 1]} : vector<2x4xf32> to vector<1x4xf32>
    %cst_127 = arith.constant 3.125000e-02 : f32
    %165 = vector.broadcast %cst_127 : f32 to vector<1x4xf32>
    %166 = arith.mulf %164, %165 : vector<1x4xf32>
    %167 = arith.mulf %163, %163 : vector<1x4xf32>
    %168 = arith.subf %166, %167 : vector<1x4xf32>
    %c0_128 = arith.constant 0 : index
    %c0_129 = arith.constant 0 : index
    %169 = vector.load %arg16[%c0_128, %c0_129] : memref<2x4xf32, #tpu.memory_space<vmem>>, vector<1x4xf32>
    %c1_130 = arith.constant 1 : index
    %c0_131 = arith.constant 0 : index
    %170 = vector.load %arg16[%c1_130, %c0_131] : memref<2x4xf32, #tpu.memory_space<vmem>>, vector<1x4xf32>
    %cst_132 = arith.constant 9.99999974E-6 : f32
    %171 = vector.broadcast %cst_132 : f32 to vector<1x4xf32>
    %172 = arith.addf %168, %171 : vector<1x4xf32>
    %173 = math.rsqrt %172 : vector<1x4xf32>
    %174 = arith.mulf %169, %173 : vector<1x4xf32>
    %175 = arith.mulf %163, %174 : vector<1x4xf32>
    %176 = arith.subf %170, %175 : vector<1x4xf32>
    %177 = tpu.concatenate %174, %176 in 0 : vector<1x4xf32>, vector<1x4xf32> -> vector<2x4xf32>
    %c0_133 = arith.constant 0 : index
    %c0_134 = arith.constant 0 : index
    %178 = vector.load %arg15[%c0_133, %c0_134] : memref<4x16xf32, #tpu.memory_space<vmem>>, vector<4x16xf32>
    %cst_135 = arith.constant dense<0.000000e+00> : vector<2x16xf32>
    %179 = tpu.matmul %177, %178, %cst_135 {dimension_numbers = #tpu.dot_dimension_numbers<[1], [0], [0], [1], [0, 0, 1, 1], [], []>} : vector<2x4xf32>, vector<4x16xf32>, vector<2x16xf32> -> vector<2x16xf32>
    %180 = vector.extract_strided_slice %179 {offsets = [0, 0], sizes = [1, 16], strides = [1, 1]} : vector<2x16xf32> to vector<1x16xf32>
    %181 = vector.broadcast %180 : vector<1x16xf32> to vector<8x16xf32>
    %182 = arith.mulf %152, %181 : vector<8x16xf32>
    %183 = vector.extract_strided_slice %179 {offsets = [1, 0], sizes = [1, 16], strides = [1, 1]} : vector<2x16xf32> to vector<1x16xf32>
    %184 = vector.broadcast %183 : vector<1x16xf32> to vector<8x16xf32>
    %185 = arith.addf %182, %184 : vector<8x16xf32>
    %cst_136 = arith.constant 0.000000e+00 : f32
    %186 = vector.broadcast %cst_136 : f32 to vector<8x16xf32>
    %187 = arith.cmpf oge, %185, %186 : vector<8x16xf32>
    %cst_137 = arith.constant 0.00999999977 : f32
    %188 = vector.broadcast %cst_137 : f32 to vector<8x16xf32>
    %189 = arith.mulf %188, %185 : vector<8x16xf32>
    %190 = arith.select %187, %185, %189 : vector<8x16xi1>, vector<8x16xf32>
    %191 = vector.extract_strided_slice %190 {offsets = [0, 0], sizes = [4, 16], strides = [1, 1]} : vector<8x16xf32> to vector<4x16xf32>
    %c1_138 = arith.constant 1 : index
    %c4 = arith.constant 4 : index
    %192 = vector.load %arg28[%c1_138, %c4] : memref<12x24xf32, #tpu.memory_space<vmem>>, vector<4x16xf32>
    tpu.vector_store %arg28[%c1_138, %c4], %191 {strides = array<i32>} : memref<12x24xf32, #tpu.memory_space<vmem>>, vector<4x16xf32>,
    %193 = vector.extract_strided_slice %190 {offsets = [4, 0], sizes = [4, 16], strides = [1, 1]} : vector<8x16xf32> to vector<4x16xf32>
    %c7 = arith.constant 7 : index
    %c4_139 = arith.constant 4 : index
    %194 = vector.load %arg28[%c7, %c4_139] : memref<12x24xf32, #tpu.memory_space<vmem>>, vector<4x16xf32>
    tpu.vector_store %arg28[%c7, %c4_139], %193 {strides = array<i32>} : memref<12x24xf32, #tpu.memory_space<vmem>>, vector<4x16xf32>,
    %c0_140 = arith.constant 0 : index
    %c0_141 = arith.constant 0 : index
    %195 = vector.load %arg28[%c0_140, %c0_141] : memref<12x24xf32, #tpu.memory_space<vmem>>, vector<12x24xf32>
    %c0_142 = arith.constant 0 : index
    %c0_143 = arith.constant 0 : index
    %c0_144 = arith.constant 0 : index
    %196 = vector.load %arg18[%c0_142, %c0_143, %c0_144] : memref<3x4x12xf32, #tpu.memory_space<vmem>>, vector<1x4x12xf32>
    %197 = vector.shape_cast %196 : vector<1x4x12xf32> to vector<4x12xf32>
    %cst_145 = arith.constant dense<0.000000e+00> : vector<4x24xf32>
    %198 = tpu.matmul %197, %195, %cst_145 {dimension_numbers = #tpu.dot_dimension_numbers<[1], [0], [0], [1], [0, 0, 1, 1], [], []>} : vector<4x12xf32>, vector<12x24xf32>, vector<4x24xf32> -> vector<4x24xf32>
    %c0_146 = arith.constant 0 : index
    %c0_147 = arith.constant 0 : index
    %c0_148 = arith.constant 0 : index
    %199 = vector.load %arg17[%c0_146, %c0_147, %c0_148] : memref<3x24x2xf32, #tpu.memory_space<vmem>>, vector<1x24x2xf32>
    %200 = vector.shape_cast %199 : vector<1x24x2xf32> to vector<24x2xf32>
    %cst_149 = arith.constant dense<0.000000e+00> : vector<4x2xf32>
    %201 = tpu.matmul %198, %200, %cst_149 {dimension_numbers = #tpu.dot_dimension_numbers<[1], [0], [0], [1], [0, 0, 1, 1], [], []>} : vector<4x24xf32>, vector<24x2xf32>, vector<4x2xf32> -> vector<4x2xf32>
    %c1_150 = arith.constant 1 : index
    %c0_151 = arith.constant 0 : index
    %c0_152 = arith.constant 0 : index
    %202 = vector.load %arg18[%c1_150, %c0_151, %c0_152] : memref<3x4x12xf32, #tpu.memory_space<vmem>>, vector<1x4x12xf32>
    %203 = vector.shape_cast %202 : vector<1x4x12xf32> to vector<4x12xf32>
    %cst_153 = arith.constant dense<0.000000e+00> : vector<4x24xf32>
    %204 = tpu.matmul %203, %195, %cst_153 {dimension_numbers = #tpu.dot_dimension_numbers<[1], [0], [0], [1], [0, 0, 1, 1], [], []>} : vector<4x12xf32>, vector<12x24xf32>, vector<4x24xf32> -> vector<4x24xf32>
    %c1_154 = arith.constant 1 : index
    %c0_155 = arith.constant 0 : index
    %c0_156 = arith.constant 0 : index
    %205 = vector.load %arg17[%c1_154, %c0_155, %c0_156] : memref<3x24x2xf32, #tpu.memory_space<vmem>>, vector<1x24x2xf32>
    %206 = vector.shape_cast %205 : vector<1x24x2xf32> to vector<24x2xf32>
    %cst_157 = arith.constant dense<0.000000e+00> : vector<4x2xf32>
    %207 = tpu.matmul %204, %206, %cst_157 {dimension_numbers = #tpu.dot_dimension_numbers<[1], [0], [0], [1], [0, 0, 1, 1], [], []>} : vector<4x24xf32>, vector<24x2xf32>, vector<4x2xf32> -> vector<4x2xf32>
    %208 = arith.addf %201, %207 : vector<4x2xf32>
    %c2_158 = arith.constant 2 : index
    %c0_159 = arith.constant 0 : index
    %c0_160 = arith.constant 0 : index
    %209 = vector.load %arg18[%c2_158, %c0_159, %c0_160] : memref<3x4x12xf32, #tpu.memory_space<vmem>>, vector<1x4x12xf32>
    %210 = vector.shape_cast %209 : vector<1x4x12xf32> to vector<4x12xf32>
    %cst_161 = arith.constant dense<0.000000e+00> : vector<4x24xf32>
    %211 = tpu.matmul %210, %195, %cst_161 {dimension_numbers = #tpu.dot_dimension_numbers<[1], [0], [0], [1], [0, 0, 1, 1], [], []>} : vector<4x12xf32>, vector<12x24xf32>, vector<4x24xf32> -> vector<4x24xf32>
    %c2_162 = arith.constant 2 : index
    %c0_163 = arith.constant 0 : index
    %c0_164 = arith.constant 0 : index
    %212 = vector.load %arg17[%c2_162, %c0_163, %c0_164] : memref<3x24x2xf32, #tpu.memory_space<vmem>>, vector<1x24x2xf32>
    %213 = vector.shape_cast %212 : vector<1x24x2xf32> to vector<24x2xf32>
    %cst_165 = arith.constant dense<0.000000e+00> : vector<4x2xf32>
    %214 = tpu.matmul %211, %213, %cst_165 {dimension_numbers = #tpu.dot_dimension_numbers<[1], [0], [0], [1], [0, 0, 1, 1], [], []>} : vector<4x24xf32>, vector<24x2xf32>, vector<4x2xf32> -> vector<4x2xf32>
    %215 = arith.addf %208, %214 : vector<4x2xf32>
    %cst_166 = arith.constant dense<0.000000e+00> : vector<2xf32>
    %216 = vector.multi_reduction <add>, %215, %cst_166 [0] : vector<4x2xf32> to vector<2xf32>
    %217 = vector.shape_cast %216 : vector<2xf32> to vector<1x2xf32>
    %218 = arith.mulf %215, %215 : vector<4x2xf32>
    %cst_167 = arith.constant dense<0.000000e+00> : vector<2xf32>
    %219 = vector.multi_reduction <add>, %218, %cst_167 [0] : vector<4x2xf32> to vector<2xf32>
    %220 = vector.shape_cast %219 : vector<2xf32> to vector<1x2xf32>
    %221 = tpu.concatenate %217, %220 in 0 : vector<1x2xf32>, vector<1x2xf32> -> vector<2x2xf32>
    %c0_168 = arith.constant 0 : index
    %c0_169 = arith.constant 0 : index
    %222 = vector.load %arg19[%c0_168, %c0_169] : memref<2x1xf32, #tpu.memory_space<vmem>>, vector<2x1xf32>
    %cst_170 = arith.constant dense<0.000000e+00> : vector<2x1xf32>
    %223 = tpu.matmul %221, %222, %cst_170 {dimension_numbers = #tpu.dot_dimension_numbers<[1], [0], [0], [1], [0, 0, 1, 1], [], []>} : vector<2x2xf32>, vector<2x1xf32>, vector<2x1xf32> -> vector<2x1xf32>
    %224 = vector.extract_strided_slice %223 {offsets = [0, 0], sizes = [1, 1], strides = [1, 1]} : vector<2x1xf32> to vector<1x1xf32>
    %cst_171 = arith.constant 1.250000e-01 : f32
    %225 = vector.broadcast %cst_171 : f32 to vector<1x1xf32>
    %226 = arith.mulf %224, %225 : vector<1x1xf32>
    %227 = vector.extract_strided_slice %223 {offsets = [1, 0], sizes = [1, 1], strides = [1, 1]} : vector<2x1xf32> to vector<1x1xf32>
    %cst_172 = arith.constant 1.250000e-01 : f32
    %228 = vector.broadcast %cst_172 : f32 to vector<1x1xf32>
    %229 = arith.mulf %227, %228 : vector<1x1xf32>
    %230 = arith.mulf %226, %226 : vector<1x1xf32>
    %231 = arith.subf %229, %230 : vector<1x1xf32>
    %c0_173 = arith.constant 0 : index
    %c0_174 = arith.constant 0 : index
    %232 = vector.load %arg21[%c0_173, %c0_174] : memref<2x1xf32, #tpu.memory_space<vmem>>, vector<1x1xf32>
    %c1_175 = arith.constant 1 : index
    %c0_176 = arith.constant 0 : index
    %233 = vector.load %arg21[%c1_175, %c0_176] : memref<2x1xf32, #tpu.memory_space<vmem>>, vector<1x1xf32>
    %cst_177 = arith.constant 9.99999974E-6 : f32
    %234 = vector.broadcast %cst_177 : f32 to vector<1x1xf32>
    %235 = arith.addf %231, %234 : vector<1x1xf32>
    %236 = math.rsqrt %235 : vector<1x1xf32>
    %237 = arith.mulf %232, %236 : vector<1x1xf32>
    %238 = arith.mulf %226, %237 : vector<1x1xf32>
    %239 = arith.subf %233, %238 : vector<1x1xf32>
    %240 = tpu.concatenate %237, %239 in 0 : vector<1x1xf32>, vector<1x1xf32> -> vector<2x1xf32>
    %c0_178 = arith.constant 0 : index
    %c0_179 = arith.constant 0 : index
    %241 = vector.load %arg20[%c0_178, %c0_179] : memref<1x2xf32, #tpu.memory_space<vmem>>, vector<1x2xf32>
    %cst_180 = arith.constant dense<0.000000e+00> : vector<2x2xf32>
    %242 = tpu.matmul %240, %241, %cst_180 {dimension_numbers = #tpu.dot_dimension_numbers<[1], [0], [0], [1], [0, 0, 1, 1], [], []>} : vector<2x1xf32>, vector<1x2xf32>, vector<2x2xf32> -> vector<2x2xf32>
    %243 = vector.extract_strided_slice %242 {offsets = [0, 0], sizes = [1, 2], strides = [1, 1]} : vector<2x2xf32> to vector<1x2xf32>
    %244 = vector.broadcast %243 : vector<1x2xf32> to vector<4x2xf32>
    %245 = arith.mulf %215, %244 : vector<4x2xf32>
    %246 = vector.extract_strided_slice %242 {offsets = [1, 0], sizes = [1, 2], strides = [1, 1]} : vector<2x2xf32> to vector<1x2xf32>
    %247 = vector.broadcast %246 : vector<1x2xf32> to vector<4x2xf32>
    %248 = arith.addf %245, %247 : vector<4x2xf32>
    %cst_181 = arith.constant 0.000000e+00 : f32
    %249 = vector.broadcast %cst_181 : f32 to vector<4x2xf32>
    %250 = arith.cmpf oge, %248, %249 : vector<4x2xf32>
    %cst_182 = arith.constant 0.00999999977 : f32
    %251 = vector.broadcast %cst_182 : f32 to vector<4x2xf32>
    %252 = arith.mulf %251, %248 : vector<4x2xf32>
    %253 = arith.select %250, %248, %252 : vector<4x2xi1>, vector<4x2xf32>
    %c0_183 = arith.constant 0 : index
    %c0_184 = arith.constant 0 : index
    %254 = vector.load %arg22[%c0_183, %c0_184] : memref<4x4xf32, #tpu.memory_space<vmem>>, vector<4x4xf32>
    %255 = vector.extract_strided_slice %253 {offsets = [0, 0], sizes = [4, 1], strides = [1, 1]} : vector<4x2xf32> to vector<4x1xf32>
    %cst_185 = arith.constant dense<0.000000e+00> : vector<4x1xf32>
    %256 = tpu.matmul %254, %255, %cst_185 {dimension_numbers = #tpu.dot_dimension_numbers<[1], [0], [0], [1], [0, 0, 1, 1], [], []>} : vector<4x4xf32>, vector<4x1xf32>, vector<4x1xf32> -> vector<4x1xf32>
    %c0_186 = arith.constant 0 : index
    %c0_187 = arith.constant 0 : index
    %257 = vector.load %arg23[%c0_186, %c0_187] : memref<4x4xf32, #tpu.memory_space<vmem>>, vector<4x4xf32>
    %258 = vector.extract_strided_slice %253 {offsets = [0, 1], sizes = [4, 1], strides = [1, 1]} : vector<4x2xf32> to vector<4x1xf32>
    %cst_188 = arith.constant dense<0.000000e+00> : vector<4x1xf32>
    %259 = tpu.matmul %257, %258, %cst_188 {dimension_numbers = #tpu.dot_dimension_numbers<[1], [0], [0], [1], [0, 0, 1, 1], [], []>} : vector<4x4xf32>, vector<4x1xf32>, vector<4x1xf32> -> vector<4x1xf32>
    %260 = arith.addf %256, %259 : vector<4x1xf32>
    %c0_189 = arith.constant 0 : index
    %c0_190 = arith.constant 0 : index
    %261 = vector.load %arg24[%c0_189, %c0_190] : memref<4x1xf32, #tpu.memory_space<vmem>>, vector<4x1xf32>
    %262 = arith.addf %260, %261 : vector<4x1xf32>
    %c0_191 = arith.constant 0 : index
    %c0_192 = arith.constant 0 : index
    %263 = vector.load %arg25[%c0_191, %c0_192] : memref<4x1xf32, #tpu.memory_space<vmem>>, vector<4x1xf32>
    tpu.vector_store %arg25[%c0_191, %c0_192], %262 {strides = array<i32>} : memref<4x1xf32, #tpu.memory_space<vmem>>, vector<4x1xf32>,
    return
  }
  func.func @transform_0(%arg0: i32) -> (i32, i32) {
    %c0_i32 = arith.constant 0 : i32
    %c0_i32_0 = arith.constant 0 : i32
    %c0_i32_1 = arith.constant 0 : i32
    return %c0_i32, %c0_i32_0 : i32, i32
  }
  func.func @transform_1(%arg0: i32) -> (i32, i32, i32) {
    %c0_i32 = arith.constant 0 : i32
    %c0_i32_0 = arith.constant 0 : i32
    %c0_i32_1 = arith.constant 0 : i32
    %c0_i32_2 = arith.constant 0 : i32
    return %c0_i32, %c0_i32_0, %c0_i32_1 : i32, i32, i32
  }
  func.func @transform_2(%arg0: i32) -> (i32, i32, i32) {
    %c0_i32 = arith.constant 0 : i32
    %c0_i32_0 = arith.constant 0 : i32
    %c0_i32_1 = arith.constant 0 : i32
    %c0_i32_2 = arith.constant 0 : i32
    return %c0_i32, %c0_i32_0, %c0_i32_1 : i32, i32, i32
  }
  func.func @transform_3(%arg0: i32) -> (i32, i32) {
    %c0_i32 = arith.constant 0 : i32
    %c0_i32_0 = arith.constant 0 : i32
    %c0_i32_1 = arith.constant 0 : i32
    return %c0_i32, %c0_i32_0 : i32, i32
  }
  func.func @transform_4(%arg0: i32) -> (i32, i32) {
    %c0_i32 = arith.constant 0 : i32
    %c0_i32_0 = arith.constant 0 : i32
    %c0_i32_1 = arith.constant 0 : i32
    return %c0_i32, %c0_i32_0 : i32, i32
  }
  func.func @transform_5(%arg0: i32) -> (i32, i32) {
    %c0_i32 = arith.constant 0 : i32
    %c0_i32_0 = arith.constant 0 : i32
    %c0_i32_1 = arith.constant 0 : i32
    return %c0_i32, %c0_i32_0 : i32, i32
  }
  func.func @transform_6(%arg0: i32) -> (i32, i32, i32) {
    %c0_i32 = arith.constant 0 : i32
    %c0_i32_0 = arith.constant 0 : i32
    %c0_i32_1 = arith.constant 0 : i32
    %c0_i32_2 = arith.constant 0 : i32
    return %c0_i32, %c0_i32_0, %c0_i32_1 : i32, i32, i32
  }
  func.func @transform_7(%arg0: i32) -> (i32, i32, i32) {
    %c0_i32 = arith.constant 0 : i32
    %c0_i32_0 = arith.constant 0 : i32
    %c0_i32_1 = arith.constant 0 : i32
    %c0_i32_2 = arith.constant 0 : i32
    return %c0_i32, %c0_i32_0, %c0_i32_1 : i32, i32, i32
  }
  func.func @transform_8(%arg0: i32) -> (i32, i32) {
    %c0_i32 = arith.constant 0 : i32
    %c0_i32_0 = arith.constant 0 : i32
    %c0_i32_1 = arith.constant 0 : i32
    return %c0_i32, %c0_i32_0 : i32, i32
  }
  func.func @transform_9(%arg0: i32) -> (i32, i32) {
    %c0_i32 = arith.constant 0 : i32
    %c0_i32_0 = arith.constant 0 : i32
    %c0_i32_1 = arith.constant 0 : i32
    return %c0_i32, %c0_i32_0 : i32, i32
  }
  func.func @transform_10(%arg0: i32) -> (i32, i32) {
    %c0_i32 = arith.constant 0 : i32
    %c0_i32_0 = arith.constant 0 : i32
    %c0_i32_1 = arith.constant 0 : i32
    return %c0_i32, %c0_i32_0 : i32, i32
  }
  func.func @transform_11(%arg0: i32) -> (i32, i32, i32) {
    %c0_i32 = arith.constant 0 : i32
    %c0_i32_0 = arith.constant 0 : i32
    %c0_i32_1 = arith.constant 0 : i32
    %c0_i32_2 = arith.constant 0 : i32
    return %c0_i32, %c0_i32_0, %c0_i32_1 : i32, i32, i32
  }
  func.func @transform_12(%arg0: i32) -> (i32, i32, i32) {
    %c0_i32 = arith.constant 0 : i32
    %c0_i32_0 = arith.constant 0 : i32
    %c0_i32_1 = arith.constant 0 : i32
    %c0_i32_2 = arith.constant 0 : i32
    return %c0_i32, %c0_i32_0, %c0_i32_1 : i32, i32, i32
  }
  func.func @transform_13(%arg0: i32) -> (i32, i32) {
    %c0_i32 = arith.constant 0 : i32
    %c0_i32_0 = arith.constant 0 : i32
    %c0_i32_1 = arith.constant 0 : i32
    return %c0_i32, %c0_i32_0 : i32, i32
  }
  func.func @transform_14(%arg0: i32) -> (i32, i32) {
    %c0_i32 = arith.constant 0 : i32
    %c0_i32_0 = arith.constant 0 : i32
    %c0_i32_1 = arith.constant 0 : i32
    return %c0_i32, %c0_i32_0 : i32, i32
  }
  func.func @transform_15(%arg0: i32) -> (i32, i32) {
    %c0_i32 = arith.constant 0 : i32
    %c0_i32_0 = arith.constant 0 : i32
    %c0_i32_1 = arith.constant 0 : i32
    return %c0_i32, %c0_i32_0 : i32, i32
  }
  func.func @transform_16(%arg0: i32) -> (i32, i32, i32) {
    %c0_i32 = arith.constant 0 : i32
    %c0_i32_0 = arith.constant 0 : i32
    %c0_i32_1 = arith.constant 0 : i32
    %c0_i32_2 = arith.constant 0 : i32
    return %c0_i32, %c0_i32_0, %c0_i32_1 : i32, i32, i32
  }
  func.func @transform_17(%arg0: i32) -> (i32, i32, i32) {
    %c0_i32 = arith.constant 0 : i32
    %c0_i32_0 = arith.constant 0 : i32
    %c0_i32_1 = arith.constant 0 : i32
    %c0_i32_2 = arith.constant 0 : i32
    return %c0_i32, %c0_i32_0, %c0_i32_1 : i32, i32, i32
  }
  func.func @transform_18(%arg0: i32) -> (i32, i32) {
    %c0_i32 = arith.constant 0 : i32
    %c0_i32_0 = arith.constant 0 : i32
    %c0_i32_1 = arith.constant 0 : i32
    return %c0_i32, %c0_i32_0 : i32, i32
  }
  func.func @transform_19(%arg0: i32) -> (i32, i32) {
    %c0_i32 = arith.constant 0 : i32
    %c0_i32_0 = arith.constant 0 : i32
    %c0_i32_1 = arith.constant 0 : i32
    return %c0_i32, %c0_i32_0 : i32, i32
  }
  func.func @transform_20(%arg0: i32) -> (i32, i32) {
    %c0_i32 = arith.constant 0 : i32
    %c0_i32_0 = arith.constant 0 : i32
    %c0_i32_1 = arith.constant 0 : i32
    return %c0_i32, %c0_i32_0 : i32, i32
  }
  func.func @transform_21(%arg0: i32) -> (i32, i32) {
    %c0_i32 = arith.constant 0 : i32
    %c0_i32_0 = arith.constant 0 : i32
    %c0_i32_1 = arith.constant 0 : i32
    return %c0_i32, %c0_i32_0 : i32, i32
  }
  func.func @transform_22(%arg0: i32) -> (i32, i32) {
    %c0_i32 = arith.constant 0 : i32
    %c0_i32_0 = arith.constant 0 : i32
    %c0_i32_1 = arith.constant 0 : i32
    return %c0_i32, %c0_i32_0 : i32, i32
  }
  func.func @transform_23(%arg0: i32) -> (i32, i32) {
    %c0_i32 = arith.constant 0 : i32
    %c0_i32_0 = arith.constant 0 : i32
    %c0_i32_1 = arith.constant 0 : i32
    return %c0_i32, %c0_i32_0 : i32, i32
  }
  func.func @transform_24(%arg0: i32) -> (i32, i32) {
    %c0_i32 = arith.constant 0 : i32
    %c0_i32_0 = arith.constant 0 : i32
    %c0_i32_1 = arith.constant 0 : i32
    return %c0_i32, %c0_i32_0 : i32, i32
  }
}

</mosaic_0001>

<llo_original>
// kernel: forward.1
$region0: #{forward.1}
  #allocation0 [shape = 'u32[]', space=smem, size = 0x4, offset = 0x4, fixed_abs, tag = 'smem constant byte address 0x4 - core index']
  #allocation1 [shape = 'u32[144,128]{1,0:T(1,128)}', space=vmem, size = 0x12000, scoped, tag = 'internal scratch']
  #allocation2 [shape = 'f32[36,576]{1,0:T(8,128)}', space=vmem, size = 0x19000, scoped, tag = 'scratch operand']
  #allocation3 [shape = 'f32[20,160]{1,0:T(8,128)}', space=vmem, size = 0x6000, scoped, tag = 'scratch operand']
  #allocation4 [shape = 'f32[12,24]{1,0:T(8,128)}', space=vmem, size = 0x2000, scoped, tag = 'scratch operand']
  %s0 = inlined_call_operand.vmem [shape: f32[68,102], index: 0, kind: input, shape index: {}]
  %s1 = inlined_call_operand.vmem [shape: f32[3,102,512], index: 1, kind: input, shape index: {}]
  %s2 = inlined_call_operand.vmem [shape: f32[3,32,68], index: 2, kind: input, shape index: {}]
  %s3 = inlined_call_operand.hbm [shape: f32[512,32], index: 3, kind: input, shape index: {}]
  %s4 = inlined_call_operand.hbm [shape: f32[32,512], index: 4, kind: input, shape index: {}]
  %s5 = inlined_call_operand.vmem [shape: f32[2,32], index: 5, kind: input, shape index: {}]
  %s6 = inlined_call_operand.hbm [shape: f32[3,576,128], index: 6, kind: input, shape index: {}]
  %s7 = inlined_call_operand.hbm [shape: f32[3,16,36], index: 7, kind: input, shape index: {}]
  %s8 = inlined_call_operand.hbm [shape: f32[128,16], index: 8, kind: input, shape index: {}]
  %s9 = inlined_call_operand.hbm [shape: f32[16,128], index: 9, kind: input, shape index: {}]
  %s10 = inlined_call_operand.hbm [shape: f32[2,16], index: 10, kind: input, shape index: {}]
  %s11 = inlined_call_operand.hbm [shape: f32[3,160,16], index: 11, kind: input, shape index: {}]
  %s12 = inlined_call_operand.hbm [shape: f32[3,8,20], index: 12, kind: input, shape index: {}]
  %s13 = inlined_call_operand.hbm [shape: f32[16,4], index: 13, kind: input, shape index: {}]
  %s14 = inlined_call_operand.hbm [shape: f32[4,16], index: 14, kind: input, shape index: {}]
  %s15 = inlined_call_operand.hbm [shape: f32[2,4], index: 15, kind: input, shape index: {}]
  %s16 = inlined_call_operand.hbm [shape: f32[3,24,2], index: 16, kind: input, shape index: {}]
  %s17 = inlined_call_operand.vmem [shape: f32[3,4,12], index: 17, kind: input, shape index: {}]
  %s18 = inlined_call_operand.vmem [shape: f32[2,1], index: 18, kind: input, shape index: {}]
  %s19 = inlined_call_operand.vmem [shape: f32[1,2], index: 19, kind: input, shape index: {}]
  %s20 = inlined_call_operand.hbm [shape: f32[2,1], index: 20, kind: input, shape index: {}]
  %s21 = inlined_call_operand.hbm [shape: f32[4,4], index: 21, kind: input, shape index: {}]
  %s22 = inlined_call_operand.hbm [shape: f32[4,4], index: 22, kind: input, shape index: {}]
  %s23 = inlined_call_operand.hbm [shape: f32[4,1], index: 23, kind: input, shape index: {}]
  %s24 = inlined_call_operand.vmem [shape: f32[4,1], index: 24, kind: output, shape index: {}]
  %s25 = sld [smem:[#allocation0]]
  $region174: #{forward.1} parent=0
    _
  %s27 = ssub.s32 1, %s25
  %s28 = scalar_select 0, %s27, %s25
  $region1: #{forward.1} parent=0
    #allocation5 [shape = 'u8[262144]{0}', space=vmem, size = 0x40000, scoped, tag = 'input window, operand 3, single buffered']
    #allocation6 [shape = 's32[1]{0}', space=sflag, size = 0x4, scoped, tag = 'scoped memory for forward.1']
    #allocation7 [shape = 'u8[65536]{0}', space=vmem, size = 0x10000, scoped, tag = 'input window, operand 4, single buffered']
    #allocation8 [shape = 's32[1]{0}', space=sflag, size = 0x4, scoped, tag = 'scoped memory for forward.1']
    #allocation9 [shape = 'u8[884736]{0}', space=vmem, size = 0xd8000, scoped, tag = 'input window, operand 6, single buffered']
    #allocation10 [shape = 'u8[24576]{0}', space=vmem, size = 0x6000, scoped, tag = 'input window, operand 7, single buffered']
    #allocation11 [shape = 's32[1]{0}', space=sflag, size = 0x4, scoped, tag = 'scoped memory for forward.1']
    #allocation12 [shape = 'u8[65536]{0}', space=vmem, size = 0x10000, scoped, tag = 'input window, operand 8, single buffered']
    #allocation13 [shape = 'u8[8192]{0}', space=vmem, size = 0x2000, scoped, tag = 'input window, operand 9, single buffered']
    #allocation14 [shape = 's32[1]{0}', space=sflag, size = 0x4, scoped, tag = 'scoped memory for forward.1']
    #allocation15 [shape = 'u8[1024]{0}', space=vmem, size = 0x400, scoped, tag = 'input window, operand 10, single buffered']
    #allocation16 [shape = 'u8[245760]{0}', space=vmem, size = 0x3c000, scoped, tag = 'input window, operand 11, single buffered']
    #allocation17 [shape = 's32[1]{0}', space=sflag, size = 0x4, scoped, tag = 'scoped memory for forward.1']
    #allocation18 [shape = 'u8[12288]{0}', space=vmem, size = 0x3000, scoped, tag = 'input window, operand 12, single buffered']
    #allocation19 [shape = 'u8[8192]{0}', space=vmem, size = 0x2000, scoped, tag = 'input window, operand 13, single buffered']
    #allocation20 [shape = 's32[1]{0}', space=sflag, size = 0x4, scoped, tag = 'scoped memory for forward.1']
    #allocation21 [shape = 'u8[2048]{0}', space=vmem, size = 0x800, scoped, tag = 'input window, operand 14, single buffered']
    #allocation22 [shape = 'u8[1024]{0}', space=vmem, size = 0x400, scoped, tag = 'input window, operand 15, single buffered']
    #allocation23 [shape = 's32[1]{0}', space=sflag, size = 0x4, scoped, tag = 'scoped memory for forward.1']
    #allocation24 [shape = 'u8[36864]{0}', space=vmem, size = 0x9000, scoped, tag = 'input window, operand 16, single buffered']
    #allocation25 [shape = 'u8[1024]{0}', space=vmem, size = 0x400, scoped, tag = 'input window, operand 20, single buffered']
    #allocation26 [shape = 's32[1]{0}', space=sflag, size = 0x4, scoped, tag = 'scoped memory for forward.1']
    #allocation27 [shape = 'u8[2048]{0}', space=vmem, size = 0x800, scoped, tag = 'input window, operand 21, single buffered']
    #allocation28 [shape = 'u8[2048]{0}', space=vmem, size = 0x800, scoped, tag = 'input window, operand 22, single buffered']
    #allocation29 [shape = 's32[1]{0}', space=sflag, size = 0x4, scoped, tag = 'scoped memory for forward.1']
    #allocation30 [shape = 'u8[2048]{0}', space=vmem, size = 0x800, scoped, tag = 'input window, operand 23, single buffered']
    %29 = vsyncpa [#allocation6], 0
    %30 = vsyncpa [#allocation8], 0
    %31 = vsyncpa [#allocation11], 0
    %32 = vsyncpa [#allocation14], 0
    %33 = vsyncpa [#allocation17], 0
    %34 = vsyncpa [#allocation20], 0
    %35 = vsyncpa [#allocation23], 0
    %36 = vsyncpa [#allocation26], 0
    %37 = vsyncpa [#allocation29], 0
    // Predicated region
    $region2: #{forward.1} parent=1 // pred_check
      _
    $region3: #{forward.1} parent=1 // pred_check_branch
      %39 = sbr.rel (0) target = $region5
    $region4: #{forward.1} parent=1 // pred_region
      _
    $region5: #{forward.1} parent=1 // pred_fallthru
      _
    // Predicated region
    $region6: #{forward.1} parent=1 // pred_check
      _
    $region7: #{forward.1} parent=1 // pred_check_branch
      %41 = sbr.rel (0) target = $region9
    $region8: #{forward.1} parent=1 // pred_region
      _
    $region9: #{forward.1} parent=1 // pred_fallthru
      _
    // Predicated region
    $region10: #{forward.1} parent=1 // pred_check
      _
    $region11: #{forward.1} parent=1 // pred_check_branch
      %43 = sbr.rel (0) target = $region13
    $region12: #{forward.1} parent=1 // pred_region
      _
    $region13: #{forward.1} parent=1 // pred_fallthru
      _
    // Predicated region
    $region14: #{forward.1} parent=1 // pred_check
      _
    $region15: #{forward.1} parent=1 // pred_check_branch
      %45 = sbr.rel (0) target = $region17
    $region16: #{forward.1} parent=1 // pred_region
      %s47 = ssub.s32 8192, 8192
      %48 = vsyncadd [#allocation6], %s47
      %s49 = sshll.u32 [#allocation5], 4
      %s50 = int_to_ptr.vmem [resolvable:$true] %s49
      %55 = dma.hbm_to_vmem [thread:$0]  %s3, 8192, %s50, [#allocation6], 128, 128, 8
    $region17: #{forward.1} parent=1 // pred_fallthru
      _
    // Predicated region
    $region18: #{forward.1} parent=1 // pred_check
      _
    $region19: #{forward.1} parent=1 // pred_check_branch
      %57 = sbr.rel (0) target = $region21
    $region20: #{forward.1} parent=1 // pred_region
      %s59 = ssub.s32 2048, 2048
      %60 = vsyncadd [#allocation8], %s59
      %s61 = sshll.u32 [#allocation7], 4
      %s62 = int_to_ptr.vmem [resolvable:$true] %s61
      %67 = dma.hbm_to_vmem [thread:$0]  %s4, 2048, %s62, [#allocation8], 512, 512, 32
    $region21: #{forward.1} parent=1 // pred_fallthru
      _
    // Predicated region
    $region22: #{forward.1} parent=1 // pred_check
      _
    $region23: #{forward.1} parent=1 // pred_check_branch
      %69 = sbr.rel (0) target = $region25
    $region24: #{forward.1} parent=1 // pred_region
      _
    $region25: #{forward.1} parent=1 // pred_fallthru
      _
    // Predicated region
    $region26: #{forward.1} parent=1 // pred_check
      _
    $region27: #{forward.1} parent=1 // pred_check_branch
      %71 = sbr.rel (0) target = $region29
    $region28: #{forward.1} parent=1 // pred_region
      %s73 = ssub.s32 27648, 27648
      %74 = vsyncadd [#allocation8], %s73
      %s75 = sshll.u32 [#allocation9], 4
      %s76 = int_to_ptr.vmem [resolvable:$true] %s75
      %81 = dma.hbm_to_vmem [thread:$0]  %s6, 27648, %s76, [#allocation8], 128, 128, 8
    $region29: #{forward.1} parent=1 // pred_fallthru
      _
    // Predicated region
    $region30: #{forward.1} parent=1 // pred_check
      _
    $region31: #{forward.1} parent=1 // pred_check_branch
      %83 = sbr.rel (0) target = $region33
    $region32: #{forward.1} parent=1 // pred_region
      %s85 = ssub.s32 768, 768
      %86 = vsyncadd [#allocation11], %s85
      %s87 = sshll.u32 [#allocation10], 4
      %s88 = int_to_ptr.vmem [resolvable:$true] %s87
      %93 = dma.hbm_to_vmem [thread:$0]  %s7, 768, %s88, [#allocation11], 128, 128, 8
    $region33: #{forward.1} parent=1 // pred_fallthru
      _
    // Predicated region
    $region34: #{forward.1} parent=1 // pred_check
      _
    $region35: #{forward.1} parent=1 // pred_check_branch
      %95 = sbr.rel (0) target = $region37
    $region36: #{forward.1} parent=1 // pred_region
      %s97 = ssub.s32 2048, 2048
      %98 = vsyncadd [#allocation11], %s97
      %s99 = sshll.u32 [#allocation12], 4
      %s100 = int_to_ptr.vmem [resolvable:$true] %s99
      %105 = dma.hbm_to_vmem [thread:$0]  %s8, 2048, %s100, [#allocation11], 128, 128, 8
    $region37: #{forward.1} parent=1 // pred_fallthru
      _
    // Predicated region
    $region38: #{forward.1} parent=1 // pred_check
      _
    $region39: #{forward.1} parent=1 // pred_check_branch
      %107 = sbr.rel (0) target = $region41
    $region40: #{forward.1} parent=1 // pred_region
      %s109 = ssub.s32 256, 256
      %110 = vsyncadd [#allocation14], %s109
      %s111 = sshll.u32 [#allocation13], 4
      %s112 = int_to_ptr.vmem [resolvable:$true] %s111
      %117 = dma.hbm_to_vmem [thread:$0]  %s9, 256, %s112, [#allocation14], 128, 128, 8
    $region41: #{forward.1} parent=1 // pred_fallthru
      _
    // Predicated region
    $region42: #{forward.1} parent=1 // pred_check
      _
    $region43: #{forward.1} parent=1 // pred_check_branch
      %119 = sbr.rel (0) target = $region45
    $region44: #{forward.1} parent=1 // pred_region
      %s121 = ssub.s32 32, 32
      %122 = vsyncadd [#allocation14], %s121
      %s124 = sshll.u32 [#allocation15], 4
      %s125 = int_to_ptr.vmem [resolvable:$true] %s124
      %127 = dma.hbm_to_vmem [thread:$0]  %s10, 32, %s125, [#allocation14]
    $region45: #{forward.1} parent=1 // pred_fallthru
      _
    // Predicated region
    $region46: #{forward.1} parent=1 // pred_check
      _
    $region47: #{forward.1} parent=1 // pred_check_branch
      %129 = sbr.rel (0) target = $region49
    $region48: #{forward.1} parent=1 // pred_region
      %s131 = ssub.s32 7680, 7680
      %132 = vsyncadd [#allocation17], %s131
      %s133 = sshll.u32 [#allocation16], 4
      %s134 = int_to_ptr.vmem [resolvable:$true] %s133
      %139 = dma.hbm_to_vmem [thread:$0]  %s11, 7680, %s134, [#allocation17], 128, 128, 8
    $region49: #{forward.1} parent=1 // pred_fallthru
      _
    // Predicated region
    $region50: #{forward.1} parent=1 // pred_check
      _
    $region51: #{forward.1} parent=1 // pred_check_branch
      %141 = sbr.rel (0) target = $region53
    $region52: #{forward.1} parent=1 // pred_region
      %s143 = ssub.s32 384, 384
      %144 = vsyncadd [#allocation17], %s143
      %s145 = sshll.u32 [#allocation18], 4
      %s146 = int_to_ptr.vmem [resolvable:$true] %s145
      %151 = dma.hbm_to_vmem [thread:$0]  %s12, 384, %s146, [#allocation17], 128, 128, 8
    $region53: #{forward.1} parent=1 // pred_fallthru
      _
    // Predicated region
    $region54: #{forward.1} parent=1 // pred_check
      _
    $region55: #{forward.1} parent=1 // pred_check_branch
      %153 = sbr.rel (0) target = $region57
    $region56: #{forward.1} parent=1 // pred_region
      %s155 = ssub.s32 256, 256
      %156 = vsyncadd [#allocation20], %s155
      %s157 = sshll.u32 [#allocation19], 4
      %s158 = int_to_ptr.vmem [resolvable:$true] %s157
      %163 = dma.hbm_to_vmem [thread:$0]  %s13, 256, %s158, [#allocation20], 128, 128, 8
    $region57: #{forward.1} parent=1 // pred_fallthru
      _
    // Predicated region
    $region58: #{forward.1} parent=1 // pred_check
      _
    $region59: #{forward.1} parent=1 // pred_check_branch
      %165 = sbr.rel (0) target = $region61
    $region60: #{forward.1} parent=1 // pred_region
      %s167 = ssub.s32 64, 64
      %168 = vsyncadd [#allocation20], %s167
      %s170 = sshll.u32 [#allocation21], 4
      %s171 = int_to_ptr.vmem [resolvable:$true] %s170
      %173 = dma.hbm_to_vmem [thread:$0]  %s14, 64, %s171, [#allocation20]
    $region61: #{forward.1} parent=1 // pred_fallthru
      _
    // Predicated region
    $region62: #{forward.1} parent=1 // pred_check
      _
    $region63: #{forward.1} parent=1 // pred_check_branch
      %175 = sbr.rel (0) target = $region65
    $region64: #{forward.1} parent=1 // pred_region
      %s177 = ssub.s32 32, 32
      %178 = vsyncadd [#allocation23], %s177
      %s180 = sshll.u32 [#allocation22], 4
      %s181 = int_to_ptr.vmem [resolvable:$true] %s180
      %183 = dma.hbm_to_vmem [thread:$0]  %s15, 32, %s181, [#allocation23]
    $region65: #{forward.1} parent=1 // pred_fallthru
      _
    // Predicated region
    $region66: #{forward.1} parent=1 // pred_check
      _
    $region67: #{forward.1} parent=1 // pred_check_branch
      %185 = sbr.rel (0) target = $region69
    $region68: #{forward.1} parent=1 // pred_region
      %s187 = ssub.s32 1152, 1152
      %188 = vsyncadd [#allocation23], %s187
      %s189 = sshll.u32 [#allocation24], 4
      %s190 = int_to_ptr.vmem [resolvable:$true] %s189
      %195 = dma.hbm_to_vmem [thread:$0]  %s16, 1152, %s190, [#allocation23], 128, 128, 8
    $region69: #{forward.1} parent=1 // pred_fallthru
      _
    // Predicated region
    $region70: #{forward.1} parent=1 // pred_check
      _
    $region71: #{forward.1} parent=1 // pred_check_branch
      %197 = sbr.rel (0) target = $region73
    $region72: #{forward.1} parent=1 // pred_region
      _
    $region73: #{forward.1} parent=1 // pred_fallthru
      _
    // Predicated region
    $region74: #{forward.1} parent=1 // pred_check
      _
    $region75: #{forward.1} parent=1 // pred_check_branch
      %199 = sbr.rel (0) target = $region77
    $region76: #{forward.1} parent=1 // pred_region
      _
    $region77: #{forward.1} parent=1 // pred_fallthru
      _
    // Predicated region
    $region78: #{forward.1} parent=1 // pred_check
      _
    $region79: #{forward.1} parent=1 // pred_check_branch
      %201 = sbr.rel (0) target = $region81
    $region80: #{forward.1} parent=1 // pred_region
      _
    $region81: #{forward.1} parent=1 // pred_fallthru
      _
    // Predicated region
    $region82: #{forward.1} parent=1 // pred_check
      _
    $region83: #{forward.1} parent=1 // pred_check_branch
      %203 = sbr.rel (0) target = $region85
    $region84: #{forward.1} parent=1 // pred_region
      %s205 = ssub.s32 32, 32
      %206 = vsyncadd [#allocation26], %s205
      %s208 = sshll.u32 [#allocation25], 4
      %s209 = int_to_ptr.vmem [resolvable:$true] %s208
      %211 = dma.hbm_to_vmem [thread:$0]  %s20, 32, %s209, [#allocation26]
    $region85: #{forward.1} parent=1 // pred_fallthru
      _
    // Predicated region
    $region86: #{forward.1} parent=1 // pred_check
      _
    $region87: #{forward.1} parent=1 // pred_check_branch
      %213 = sbr.rel (0) target = $region89
    $region88: #{forward.1} parent=1 // pred_region
      %s215 = ssub.s32 64, 64
      %216 = vsyncadd [#allocation26], %s215
      %s218 = sshll.u32 [#allocation27], 4
      %s219 = int_to_ptr.vmem [resolvable:$true] %s218
      %221 = dma.hbm_to_vmem [thread:$0]  %s21, 64, %s219, [#allocation26]
    $region89: #{forward.1} parent=1 // pred_fallthru
      _
    // Predicated region
    $region90: #{forward.1} parent=1 // pred_check
      _
    $region91: #{forward.1} parent=1 // pred_check_branch
      %223 = sbr.rel (0) target = $region93
    $region92: #{forward.1} parent=1 // pred_region
      %s225 = ssub.s32 64, 64
      %226 = vsyncadd [#allocation29], %s225
      %s228 = sshll.u32 [#allocation28], 4
      %s229 = int_to_ptr.vmem [resolvable:$true] %s228
      %231 = dma.hbm_to_vmem [thread:$0]  %s22, 64, %s229, [#allocation29]
    $region93: #{forward.1} parent=1 // pred_fallthru
      _
    // Predicated region
    $region94: #{forward.1} parent=1 // pred_check
      _
    $region95: #{forward.1} parent=1 // pred_check_branch
      %233 = sbr.rel (0) target = $region97
    $region96: #{forward.1} parent=1 // pred_region
      %s235 = ssub.s32 64, 64
      %236 = vsyncadd [#allocation29], %s235
      %s238 = sshll.u32 [#allocation30], 4
      %s239 = int_to_ptr.vmem [resolvable:$true] %s238
      %241 = dma.hbm_to_vmem [thread:$0]  %s23, 64, %s239, [#allocation29]
    $region97: #{forward.1} parent=1 // pred_fallthru
      _
    // Predicated region
    $region98: #{forward.1} parent=1 // pred_check
      _
    $region99: #{forward.1} parent=1 // pred_check_branch
      %243 = sbr.rel (0) target = $region101
    $region100: #{forward.1} parent=1 // pred_region
      %244 = dma.done [#allocation6], 8192
    $region101: #{forward.1} parent=1 // pred_fallthru
      _
    // Predicated region
    $region102: #{forward.1} parent=1 // pred_check
      _
    $region103: #{forward.1} parent=1 // pred_check_branch
      %246 = sbr.rel (0) target = $region105
    $region104: #{forward.1} parent=1 // pred_region
      %247 = dma.done [#allocation8], 2048
    $region105: #{forward.1} parent=1 // pred_fallthru
      _
    // Predicated region
    $region106: #{forward.1} parent=1 // pred_check
      _
    $region107: #{forward.1} parent=1 // pred_check_branch
      %249 = sbr.rel (0) target = $region109
    $region108: #{forward.1} parent=1 // pred_region
      %250 = dma.done [#allocation8], 27648
    $region109: #{forward.1} parent=1 // pred_fallthru
      _
    // Predicated region
    $region110: #{forward.1} parent=1 // pred_check
      _
    $region111: #{forward.1} parent=1 // pred_check_branch
      %252 = sbr.rel (0) target = $region113
    $region112: #{forward.1} parent=1 // pred_region
      %253 = dma.done [#allocation11], 768
    $region113: #{forward.1} parent=1 // pred_fallthru
      _
    // Predicated region
    $region114: #{forward.1} parent=1 // pred_check
      _
    $region115: #{forward.1} parent=1 // pred_check_branch
      %255 = sbr.rel (0) target = $region117
    $region116: #{forward.1} parent=1 // pred_region
      %256 = dma.done [#allocation11], 2048
    $region117: #{forward.1} parent=1 // pred_fallthru
      _
    // Predicated region
    $region118: #{forward.1} parent=1 // pred_check
      _
    $region119: #{forward.1} parent=1 // pred_check_branch
      %258 = sbr.rel (0) target = $region121
    $region120: #{forward.1} parent=1 // pred_region
      %259 = dma.done [#allocation14], 256
    $region121: #{forward.1} parent=1 // pred_fallthru
      _
    // Predicated region
    $region122: #{forward.1} parent=1 // pred_check
      _
    $region123: #{forward.1} parent=1 // pred_check_branch
      %261 = sbr.rel (0) target = $region125
    $region124: #{forward.1} parent=1 // pred_region
      %262 = dma.done [#allocation14], 32
    $region125: #{forward.1} parent=1 // pred_fallthru
      _
    // Predicated region
    $region126: #{forward.1} parent=1 // pred_check
      _
    $region127: #{forward.1} parent=1 // pred_check_branch
      %264 = sbr.rel (0) target = $region129
    $region128: #{forward.1} parent=1 // pred_region
      %265 = dma.done [#allocation17], 7680
    $region129: #{forward.1} parent=1 // pred_fallthru
      _
    // Predicated region
    $region130: #{forward.1} parent=1 // pred_check
      _
    $region131: #{forward.1} parent=1 // pred_check_branch
      %267 = sbr.rel (0) target = $region133
    $region132: #{forward.1} parent=1 // pred_region
      %268 = dma.done [#allocation17], 384
    $region133: #{forward.1} parent=1 // pred_fallthru
      _
    // Predicated region
    $region134: #{forward.1} parent=1 // pred_check
      _
    $region135: #{forward.1} parent=1 // pred_check_branch
      %270 = sbr.rel (0) target = $region137
    $region136: #{forward.1} parent=1 // pred_region
      %271 = dma.done [#allocation20], 256
    $region137: #{forward.1} parent=1 // pred_fallthru
      _
    // Predicated region
    $region138: #{forward.1} parent=1 // pred_check
      _
    $region139: #{forward.1} parent=1 // pred_check_branch
      %273 = sbr.rel (0) target = $region141
    $region140: #{forward.1} parent=1 // pred_region
      %274 = dma.done [#allocation20], 64
    $region141: #{forward.1} parent=1 // pred_fallthru
      _
    // Predicated region
    $region142: #{forward.1} parent=1 // pred_check
      _
    $region143: #{forward.1} parent=1 // pred_check_branch
      %276 = sbr.rel (0) target = $region145
    $region144: #{forward.1} parent=1 // pred_region
      %277 = dma.done [#allocation23], 32
    $region145: #{forward.1} parent=1 // pred_fallthru
      _
    // Predicated region
    $region146: #{forward.1} parent=1 // pred_check
      _
    $region147: #{forward.1} parent=1 // pred_check_branch
      %279 = sbr.rel (0) target = $region149
    $region148: #{forward.1} parent=1 // pred_region
      %280 = dma.done [#allocation23], 1152
    $region149: #{forward.1} parent=1 // pred_fallthru
      _
    // Predicated region
    $region150: #{forward.1} parent=1 // pred_check
      _
    $region151: #{forward.1} parent=1 // pred_check_branch
      %282 = sbr.rel (0) target = $region153
    $region152: #{forward.1} parent=1 // pred_region
      %283 = dma.done [#allocation26], 32
    $region153: #{forward.1} parent=1 // pred_fallthru
      _
    // Predicated region
    $region154: #{forward.1} parent=1 // pred_check
      _
    $region155: #{forward.1} parent=1 // pred_check_branch
      %285 = sbr.rel (0) target = $region157
    $region156: #{forward.1} parent=1 // pred_region
      %286 = dma.done [#allocation26], 64
    $region157: #{forward.1} parent=1 // pred_fallthru
      _
    // Predicated region
    $region158: #{forward.1} parent=1 // pred_check
      _
    $region159: #{forward.1} parent=1 // pred_check_branch
      %288 = sbr.rel (0) target = $region161
    $region160: #{forward.1} parent=1 // pred_region
      %289 = dma.done [#allocation29], 64
    $region161: #{forward.1} parent=1 // pred_fallthru
      _
    // Predicated region
    $region162: #{forward.1} parent=1 // pred_check
      _
    $region163: #{forward.1} parent=1 // pred_check_branch
      %291 = sbr.rel (0) target = $region165
    $region164: #{forward.1} parent=1 // pred_region
      %292 = dma.done [#allocation29], 64
    $region165: #{forward.1} parent=1 // pred_fallthru
      _
    %293 = vst [vmem:[#allocation2] sm:$0xff] 0.0
    %294 = vst [vmem:[#allocation2 + $0x8] sm:$0xff] 0.0
    %295 = vst [vmem:[#allocation2 + $0x10] sm:$0xff] 0.0
    %296 = vst [vmem:[#allocation2 + $0x18] sm:$0xff] 0.0
    %vm297 = vcmask 523264
    %298 = vst.msk [vmem:[#allocation2 + $0x20] sm:$0xff] %vm297, 0.0
    %299 = vst [vmem:[#allocation2 + $0x28] sm:$0xff] 0.0
    %300 = vst [vmem:[#allocation2 + $0x30] sm:$0xff] 0.0
    %301 = vst [vmem:[#allocation2 + $0x38] sm:$0xff] 0.0
    %302 = vst [vmem:[#allocation2 + $0x40] sm:$0xff] 0.0
    %303 = vst.msk [vmem:[#allocation2 + $0x48] sm:$0xff] %vm297, 0.0
    %304 = vst [vmem:[#allocation2 + $0x50] sm:$0xff] 0.0
    %305 = vst [vmem:[#allocation2 + $0x58] sm:$0xff] 0.0
    %306 = vst [vmem:[#allocation2 + $0x60] sm:$0xff] 0.0
    %307 = vst [vmem:[#allocation2 + $0x68] sm:$0xff] 0.0
    %308 = vst.msk [vmem:[#allocation2 + $0x70] sm:$0xff] %vm297, 0.0
    %309 = vst [vmem:[#allocation2 + $0x78] sm:$0xff] 0.0
    %310 = vst [vmem:[#allocation2 + $0x80] sm:$0xff] 0.0
    %311 = vst [vmem:[#allocation2 + $0x88] sm:$0xff] 0.0
    %312 = vst [vmem:[#allocation2 + $0x90] sm:$0xff] 0.0
    %313 = vst.msk [vmem:[#allocation2 + $0x98] sm:$0xff] %vm297, 0.0
    %314 = vst [vmem:[#allocation2 + $0xa0] sm:$0xf] 0.0
    %315 = vst [vmem:[#allocation2 + $0xa8] sm:$0xf] 0.0
    %316 = vst [vmem:[#allocation2 + $0xb0] sm:$0xf] 0.0
    %317 = vst [vmem:[#allocation2 + $0xb8] sm:$0xf] 0.0
    %vm318 = vcmask 519168
    %319 = vst.msk [vmem:[#allocation2 + $0xc0] sm:$0xf] %vm318, 0.0
    %320 = vst [vmem:[#allocation3] sm:$0xff] 0.0
    %vm321 = vcmask 261120
    %322 = vst.msk [vmem:[#allocation3 + $0x8] sm:$0xff] %vm321, 0.0
    %323 = vst [vmem:[#allocation3 + $0x10] sm:$0xff] 0.0
    %324 = vst.msk [vmem:[#allocation3 + $0x18] sm:$0xff] %vm321, 0.0
    %325 = vst [vmem:[#allocation3 + $0x20] sm:$0xf] 0.0
    %vm326 = vcmask 257024
    %327 = vst.msk [vmem:[#allocation3 + $0x28] sm:$0xf] %vm326, 0.0
    %vm328 = vcmask 195584
    %329 = vst.msk [vmem:[#allocation4] sm:$0xff] %vm328, 0.0
    %vm330 = vcmask 191488
    %331 = vst.msk [vmem:[#allocation4 + $0x8] sm:$0xf] %vm330, 0.0
    %v332 = vld [vmem:[%s0] sm:$0xff]
    %v333 = vld [vmem:[%s0 + $0x8] sm:$0xff]
    %v334 = vld [vmem:[%s0 + $0x10] sm:$0xff]
    %v335 = vld [vmem:[%s0 + $0x18] sm:$0xff]
    %v336 = vld [vmem:[%s0 + $0x20] sm:$0xff]
    %v337 = vld [vmem:[%s0 + $0x28] sm:$0xff]
    %v338 = vld [vmem:[%s0 + $0x30] sm:$0xff]
    %v339 = vld [vmem:[%s0 + $0x38] sm:$0xff]
    %v340 = vld [vmem:[%s0 + $0x40] sm:$0xf]
    %v341 = vld [vmem:[%s2] sm:$0xff]
    %v342 = vld [vmem:[%s2 + $0x8] sm:$0xff]
    %v343 = vld [vmem:[%s2 + $0x10] sm:$0xff]
    %v344 = vld [vmem:[%s2 + $0x18] sm:$0xff]
    %vm345 = vcmask 556032
    %v347 = vsel %vm345, %v341, 0
    %v350 = vsel %vm345, %v342, 0
    %v353 = vsel %vm345, %v343, 0
    %v356 = vsel %vm345, %v344, 0
    %vm358 = vcmask 1043456
    %v360 = vsel %vm358, %v340, 0
    %362 = vmatprep.subr.mxu0 0.0
    %363 = vmatpush1.msra.mxu0 %v332
    %364 = vmatprep.subr.mxu0 0.0
    %365 = vmatpush1.msra.mxu0 %v333
    %366 = vmatprep.subr.mxu0 0.0
    %367 = vmatpush1.msra.mxu0 %v334
    %368 = vmatprep.subr.mxu0 0.0
    %369 = vmatpush1.msra.mxu0 %v335
    %370 = vmatprep.subr.mxu0 0.0
    %371 = vmatpush1.msra.mxu0 %v336
    %372 = vmatprep.subr.mxu0 0.0
    %373 = vmatpush1.msra.mxu0 %v337
    %374 = vmatprep.subr.mxu0 0.0
    %375 = vmatpush1.msra.mxu0 %v338
    %376 = vmatprep.subr.mxu0 0.0
    %377 = vmatpush1.msra.mxu0 %v339
    %378 = vmatprep.subr.mxu0 0.0
    %379 = vmatpush1.msra.mxu0 %v360
    %380 = vmatprep.subr.mxu0 0.0
    %381 = vmatpush1.msra.mxu0 0.0
    %382 = vmatprep.subr.mxu0 0.0
    %383 = vmatpush1.msra.mxu0 0.0
    %384 = vmatprep.subr.mxu0 0.0
    %385 = vmatpush1.msra.mxu0 0.0
    %386 = vmatprep.subr.mxu0 0.0
    %387 = vmatpush1.msra.mxu0 0.0
    %388 = vmatprep.subr.mxu0 0.0
    %389 = vmatpush1.msra.mxu0 0.0
    %390 = vmatprep.subr.mxu0 0.0
    %391 = vmatpush1.msra.mxu0 0.0
    %392 = vmatprep.subr.mxu0 0.0
    %393 = vmatpush1.msra.mxu0 0.0
    %394 = vmatprep.subr.mxu0 0.0
    %395 = vmatpush1.msra.mxu0 0.0
    %396 = vmatprep.subr.mxu0 0.0
    %397 = vmatpush1.msra.mxu0 0.0
    %398 = vmatprep.subr.mxu0 0.0
    %399 = vmatpush1.msra.mxu0 0.0
    %400 = vmatprep.subr.mxu0 0.0
    %401 = vmatpush1.msra.mxu0 0.0
    %402 = vmatprep.subr.mxu0 0.0
    %403 = vmatpush1.msra.mxu0 0.0
    %404 = vmatprep.subr.mxu0 0.0
    %405 = vmatpush1.msra.mxu0 0.0
    %406 = vmatprep.subr.mxu0 0.0
    %407 = vmatpush1.msra.mxu0 0.0
    %408 = vmatprep.subr.mxu0 0.0
    %409 = vmatpush1.msra.mxu0 0.0
    %410 = vmatprep.subr.mxu0 0.0
    %411 = vmatpush1.msra.mxu0 0.0
    %412 = vmatprep.subr.mxu0 0.0
    %413 = vmatpush1.msra.mxu0 0.0
    %414 = vmatprep.subr.mxu0 0.0
    %415 = vmatpush1.msra.mxu0 0.0
    %416 = vmatprep.subr.mxu0 0.0
    %417 = vmatpush1.msra.mxu0 0.0
    %418 = vmatprep.subr.mxu0 0.0
    %419 = vmatpush1.msra.mxu0 0.0
    %420 = vmatprep.subr.mxu0 0.0
    %421 = vmatpush1.msra.mxu0 0.0
    %422 = vmatprep.subr.mxu0 0.0
    %423 = vmatpush1.msra.mxu0 0.0
    %424 = vmatprep.subr.mxu0 0.0
    %425 = vmatpush1.msra.mxu0 0.0
    %426 = vmatprep.mubr.f32.mxu0 0.0
    %427 = vmatmul.mubr.f32.gmra.mrb[0].mxu0 %v347
    %v428 = vpop.f32.mrb[0].mxu0
    %v429 = vadd.f32 0.0, %v428
    %v430 = vpop.f32.mrb[0].mxu0
    %431 = vmatprep.mubr.f32.mxu0 0.0
    %432 = vmatmul.mubr.f32.gmra.mrb[0].mxu0 %v350
    %v433 = vpop.f32.mrb[0].mxu0
    %v434 = vadd.f32 0.0, %v433
    %v435 = vpop.f32.mrb[0].mxu0
    %436 = vmatprep.mubr.f32.mxu0 0.0
    %437 = vmatmul.mubr.f32.gmra.mrb[0].mxu0 %v353
    %v438 = vpop.f32.mrb[0].mxu0
    %v439 = vadd.f32 0.0, %v438
    %v440 = vpop.f32.mrb[0].mxu0
    %441 = vmatprep.mubr.f32.mxu0 0.0
    %442 = vmatmul.mubr.f32.gmra.mrb[0].mxu0 %v356
    %v443 = vpop.f32.mrb[0].mxu0
    %v444 = vadd.f32 0.0, %v443
    %v445 = vpop.f32.mrb[0].mxu0
    %446 = vdwg.mxu0
    %v447 = vld [vmem:[%s1] sm:$0xff]
    %v448 = vld [vmem:[%s1 + $0x8] sm:$0xff]
    %v449 = vld [vmem:[%s1 + $0x10] sm:$0xff]
    %v450 = vld [vmem:[%s1 + $0x18] sm:$0xff]
    %v451 = vld [vmem:[%s1 + $0x20] sm:$0xff]
    %v452 = vld [vmem:[%s1 + $0x28] sm:$0xff]
    %v453 = vld [vmem:[%s1 + $0x30] sm:$0xff]
    %v454 = vld [vmem:[%s1 + $0x38] sm:$0xff]
    %v455 = vld [vmem:[%s1 + $0x40] sm:$0xff]
    %v456 = vld [vmem:[%s1 + $0x48] sm:$0xff]
    %v457 = vld [vmem:[%s1 + $0x50] sm:$0xff]
    %v458 = vld [vmem:[%s1 + $0x58] sm:$0xff]
    %v459 = vld [vmem:[%s1 + $0x60] sm:$0xff]
    %v460 = vld [vmem:[%s1 + $0x68] sm:$0xff]
    %v461 = vld [vmem:[%s1 + $0x70] sm:$0xff]
    %v462 = vld [vmem:[%s1 + $0x78] sm:$0xff]
    %v463 = vld [vmem:[%s1 + $0x80] sm:$0xff]
    %v464 = vld [vmem:[%s1 + $0x88] sm:$0xff]
    %v465 = vld [vmem:[%s1 + $0x90] sm:$0xff]
    %v466 = vld [vmem:[%s1 + $0x98] sm:$0xff]
    %v467 = vld [vmem:[%s1 + $0xa0] sm:$0xff]
    %v468 = vld [vmem:[%s1 + $0xa8] sm:$0xff]
    %v469 = vld [vmem:[%s1 + $0xb0] sm:$0xff]
    %v470 = vld [vmem:[%s1 + $0xb8] sm:$0xff]
    %v471 = vld [vmem:[%s1 + $0xc0] sm:$0xff]
    %v472 = vld [vmem:[%s1 + $0xc8] sm:$0xff]
    %v473 = vld [vmem:[%s1 + $0xd0] sm:$0xff]
    %v474 = vld [vmem:[%s1 + $0xd8] sm:$0xff]
    %v475 = vld [vmem:[%s1 + $0xe0] sm:$0xff]
    %v476 = vld [vmem:[%s1 + $0xe8] sm:$0xff]
    %v477 = vld [vmem:[%s1 + $0xf0] sm:$0xff]
    %v478 = vld [vmem:[%s1 + $0xf8] sm:$0xff]
    %v479 = vld [vmem:[%s1 + $0x100] sm:$0xff]
    %v480 = vld [vmem:[%s1 + $0x108] sm:$0xff]
    %v481 = vld [vmem:[%s1 + $0x110] sm:$0xff]
    %v482 = vld [vmem:[%s1 + $0x118] sm:$0xff]
    %v483 = vld [vmem:[%s1 + $0x120] sm:$0xff]
    %v484 = vld [vmem:[%s1 + $0x128] sm:$0xff]
    %v485 = vld [vmem:[%s1 + $0x130] sm:$0xff]
    %v486 = vld [vmem:[%s1 + $0x138] sm:$0xff]
    %v487 = vld [vmem:[%s1 + $0x140] sm:$0xff]
    %v488 = vld [vmem:[%s1 + $0x148] sm:$0xff]
    %v489 = vld [vmem:[%s1 + $0x150] sm:$0xff]
    %v490 = vld [vmem:[%s1 + $0x158] sm:$0xff]
    %v491 = vld [vmem:[%s1 + $0x160] sm:$0xff]
    %v492 = vld [vmem:[%s1 + $0x168] sm:$0xff]
    %v493 = vld [vmem:[%s1 + $0x170] sm:$0xff]
    %v494 = vld [vmem:[%s1 + $0x178] sm:$0xff]
    %v495 = vld [vmem:[%s1 + $0x180] sm:$0x3f]
    %v496 = vld [vmem:[%s1 + $0x188] sm:$0x3f]
    %v497 = vld [vmem:[%s1 + $0x190] sm:$0x3f]
    %v498 = vld [vmem:[%s1 + $0x198] sm:$0x3f]
    %s499 = scalar_lea.vmem %s2, 32
    %v500 = vld [vmem:[%s499] sm:$0xff]
    %v501 = vld [vmem:[%s499 + $0x8] sm:$0xff]
    %v502 = vld [vmem:[%s499 + $0x10] sm:$0xff]
    %v503 = vld [vmem:[%s499 + $0x18] sm:$0xff]
    %v505 = vsel %vm345, %v500, 0
    %v508 = vsel %vm345, %v501, 0
    %v511 = vsel %vm345, %v502, 0
    %v514 = vsel %vm345, %v503, 0
    %516 = vmatprep.subr.mxu0 0.0
    %517 = vmatpush1.msra.mxu0 %v332
    %518 = vmatprep.subr.mxu0 0.0
    %519 = vmatpush1.msra.mxu0 %v333
    %520 = vmatprep.subr.mxu0 0.0
    %521 = vmatpush1.msra.mxu0 %v334
    %522 = vmatprep.subr.mxu0 0.0
    %523 = vmatpush1.msra.mxu0 %v335
    %524 = vmatprep.subr.mxu0 0.0
    %525 = vmatpush1.msra.mxu0 %v336
    %526 = vmatprep.subr.mxu0 0.0
    %527 = vmatpush1.msra.mxu0 %v337
    %528 = vmatprep.subr.mxu0 0.0
    %529 = vmatpush1.msra.mxu0 %v338
    %530 = vmatprep.subr.mxu0 0.0
    %531 = vmatpush1.msra.mxu0 %v339
    %532 = vmatprep.subr.mxu0 0.0
    %533 = vmatpush1.msra.mxu0 %v360
    %534 = vmatprep.subr.mxu0 0.0
    %535 = vmatpush1.msra.mxu0 0.0
    %536 = vmatprep.subr.mxu0 0.0
    %537 = vmatpush1.msra.mxu0 0.0
    %538 = vmatprep.subr.mxu0 0.0
    %539 = vmatpush1.msra.mxu0 0.0
    %540 = vmatprep.subr.mxu0 0.0
    %541 = vmatpush1.msra.mxu0 0.0
    %542 = vmatprep.subr.mxu0 0.0
    %543 = vmatpush1.msra.mxu0 0.0
    %544 = vmatprep.subr.mxu0 0.0
    %545 = vmatpush1.msra.mxu0 0.0
    %546 = vmatprep.subr.mxu0 0.0
    %547 = vmatpush1.msra.mxu0 0.0
    %548 = vmatprep.subr.mxu0 0.0
    %549 = vmatpush1.msra.mxu0 0.0
    %550 = vmatprep.subr.mxu0 0.0
    %551 = vmatpush1.msra.mxu0 0.0
    %552 = vmatprep.subr.mxu0 0.0
    %553 = vmatpush1.msra.mxu0 0.0
    %554 = vmatprep.subr.mxu0 0.0
    %555 = vmatpush1.msra.mxu0 0.0
    %556 = vmatprep.subr.mxu0 0.0
    %557 = vmatpush1.msra.mxu0 0.0
    %558 = vmatprep.subr.mxu0 0.0
    %559 = vmatpush1.msra.mxu0 0.0
    %560 = vmatprep.subr.mxu0 0.0
    %561 = vmatpush1.msra.mxu0 0.0
    %562 = vmatprep.subr.mxu0 0.0
    %563 = vmatpush1.msra.mxu0 0.0
    %564 = vmatprep.subr.mxu0 0.0
    %565 = vmatpush1.msra.mxu0 0.0
    %566 = vmatprep.subr.mxu0 0.0
    %567 = vmatpush1.msra.mxu0 0.0
    %568 = vmatprep.subr.mxu0 0.0
    %569 = vmatpush1.msra.mxu0 0.0
    %570 = vmatprep.subr.mxu0 0.0
    %571 = vmatpush1.msra.mxu0 0.0
    %572 = vmatprep.subr.mxu0 0.0
    %573 = vmatpush1.msra.mxu0 0.0
    %574 = vmatprep.subr.mxu0 0.0
    %575 = vmatpush1.msra.mxu0 0.0
    %576 = vmatprep.subr.mxu0 0.0
    %577 = vmatpush1.msra.mxu0 0.0
    %578 = vmatprep.subr.mxu0 0.0
    %579 = vmatpush1.msra.mxu0 0.0
    %580 = vmatprep.mubr.f32.mxu0 0.0
    %581 = vmatmul.mubr.f32.gmra.mrb[0].mxu0 %v505
    %v582 = vpop.f32.mrb[0].mxu0
    %v583 = vadd.f32 0.0, %v582
    %v584 = vpop.f32.mrb[0].mxu0
    %585 = vmatprep.mubr.f32.mxu0 0.0
    %586 = vmatmul.mubr.f32.gmra.mrb[0].mxu0 %v508
    %v587 = vpop.f32.mrb[0].mxu0
    %v588 = vadd.f32 0.0, %v587
    %v589 = vpop.f32.mrb[0].mxu0
    %590 = vmatprep.mubr.f32.mxu0 0.0
    %591 = vmatmul.mubr.f32.gmra.mrb[0].mxu0 %v511
    %v592 = vpop.f32.mrb[0].mxu0
    %v593 = vadd.f32 0.0, %v592
    %v594 = vpop.f32.mrb[0].mxu0
    %595 = vmatprep.mubr.f32.mxu0 0.0
    %596 = vmatmul.mubr.f32.gmra.mrb[0].mxu0 %v514
    %v597 = vpop.f32.mrb[0].mxu0
    %v598 = vadd.f32 0.0, %v597
    %v599 = vpop.f32.mrb[0].mxu0
    %600 = vdwg.mxu0
    %s601 = scalar_lea.vmem %s1, 416
    %v602 = vld [vmem:[%s601] sm:$0xff]
    %v603 = vld [vmem:[%s601 + $0x8] sm:$0xff]
    %v604 = vld [vmem:[%s601 + $0x10] sm:$0xff]
    %v605 = vld [vmem:[%s601 + $0x18] sm:$0xff]
    %v606 = vld [vmem:[%s601 + $0x20] sm:$0xff]
    %v607 = vld [vmem:[%s601 + $0x28] sm:$0xff]
    %v608 = vld [vmem:[%s601 + $0x30] sm:$0xff]
    %v609 = vld [vmem:[%s601 + $0x38] sm:$0xff]
    %v610 = vld [vmem:[%s601 + $0x40] sm:$0xff]
    %v611 = vld [vmem:[%s601 + $0x48] sm:$0xff]
    %v612 = vld [vmem:[%s601 + $0x50] sm:$0xff]
    %v613 = vld [vmem:[%s601 + $0x58] sm:$0xff]
    %v614 = vld [vmem:[%s601 + $0x60] sm:$0xff]
    %v615 = vld [vmem:[%s601 + $0x68] sm:$0xff]
    %v616 = vld [vmem:[%s601 + $0x70] sm:$0xff]
    %v617 = vld [vmem:[%s601 + $0x78] sm:$0xff]
    %v618 = vld [vmem:[%s601 + $0x80] sm:$0xff]
    %v619 = vld [vmem:[%s601 + $0x88] sm:$0xff]
    %v620 = vld [vmem:[%s601 + $0x90] sm:$0xff]
    %v621 = vld [vmem:[%s601 + $0x98] sm:$0xff]
    %v622 = vld [vmem:[%s601 + $0xa0] sm:$0xff]
    %v623 = vld [vmem:[%s601 + $0xa8] sm:$0xff]
    %v624 = vld [vmem:[%s601 + $0xb0] sm:$0xff]
    %v625 = vld [vmem:[%s601 + $0xb8] sm:$0xff]
    %v626 = vld [vmem:[%s601 + $0xc0] sm:$0xff]
    %v627 = vld [vmem:[%s601 + $0xc8] sm:$0xff]
    %v628 = vld [vmem:[%s601 + $0xd0] sm:$0xff]
    %v629 = vld [vmem:[%s601 + $0xd8] sm:$0xff]
    %v630 = vld [vmem:[%s601 + $0xe0] sm:$0xff]
    %v631 = vld [vmem:[%s601 + $0xe8] sm:$0xff]
    %v632 = vld [vmem:[%s601 + $0xf0] sm:$0xff]
    %v633 = vld [vmem:[%s601 + $0xf8] sm:$0xff]
    %v634 = vld [vmem:[%s601 + $0x100] sm:$0xff]
    %v635 = vld [vmem:[%s601 + $0x108] sm:$0xff]
    %v636 = vld [vmem:[%s601 + $0x110] sm:$0xff]
    %v637 = vld [vmem:[%s601 + $0x118] sm:$0xff]
    %v638 = vld [vmem:[%s601 + $0x120] sm:$0xff]
    %v639 = vld [vmem:[%s601 + $0x128] sm:$0xff]
    %v640 = vld [vmem:[%s601 + $0x130] sm:$0xff]
    %v641 = vld [vmem:[%s601 + $0x138] sm:$0xff]
    %v642 = vld [vmem:[%s601 + $0x140] sm:$0xff]
    %v643 = vld [vmem:[%s601 + $0x148] sm:$0xff]
    %v644 = vld [vmem:[%s601 + $0x150] sm:$0xff]
    %v645 = vld [vmem:[%s601 + $0x158] sm:$0xff]
    %v646 = vld [vmem:[%s601 + $0x160] sm:$0xff]
    %v647 = vld [vmem:[%s601 + $0x168] sm:$0xff]
    %v648 = vld [vmem:[%s601 + $0x170] sm:$0xff]
    %v649 = vld [vmem:[%s601 + $0x178] sm:$0xff]
    %v650 = vld [vmem:[%s601 + $0x180] sm:$0x3f]
    %v651 = vld [vmem:[%s601 + $0x188] sm:$0x3f]
    %v652 = vld [vmem:[%s601 + $0x190] sm:$0x3f]
    %v653 = vld [vmem:[%s601 + $0x198] sm:$0x3f]
    %vm654 = vcmask 834560
    %v656 = vsel %vm654, %v583, 0
    %v659 = vsel %vm654, %v588, 0
    %v662 = vsel %vm654, %v593, 0
    %v665 = vsel %vm654, %v598, 0
    %vm667 = vcmask 1045504
    %v669 = vsel %vm667, %v650, 0
    %v672 = vsel %vm667, %v651, 0
    %v675 = vsel %vm667, %v652, 0
    %v678 = vsel %vm667, %v653, 0
    %680 = vmatprep.subr.mxu0 %v603
    %681 = vmatpush1.msra.mxu0 %v602
    %682 = vmatprep.subr.mxu0 %v607
    %683 = vmatpush1.msra.mxu0 %v606
    %684 = vmatprep.subr.mxu0 %v611
    %685 = vmatpush1.msra.mxu0 %v610
    %686 = vmatprep.subr.mxu0 %v615
    %687 = vmatpush1.msra.mxu0 %v614
    %688 = vmatprep.subr.mxu0 %v619
    %689 = vmatpush1.msra.mxu0 %v618
    %690 = vmatprep.subr.mxu0 %v623
    %691 = vmatpush1.msra.mxu0 %v622
    %692 = vmatprep.subr.mxu0 %v627
    %693 = vmatpush1.msra.mxu0 %v626
    %694 = vmatprep.subr.mxu0 %v631
    %695 = vmatpush1.msra.mxu0 %v630
    %696 = vmatprep.subr.mxu0 %v635
    %697 = vmatpush1.msra.mxu0 %v634
    %698 = vmatprep.subr.mxu0 %v639
    %699 = vmatpush1.msra.mxu0 %v638
    %700 = vmatprep.subr.mxu0 %v643
    %701 = vmatpush1.msra.mxu0 %v642
    %702 = vmatprep.subr.mxu0 %v647
    %703 = vmatpush1.msra.mxu0 %v646
    %704 = vmatprep.subr.mxu0 %v672
    %705 = vmatpush1.msra.mxu0 %v669
    %706 = vmatprep.subr.mxu0 0.0
    %707 = vmatpush1.msra.mxu0 0.0
    %708 = vmatprep.subr.mxu0 0.0
    %709 = vmatpush1.msra.mxu0 0.0
    %710 = vmatprep.subr.mxu0 0.0
    %711 = vmatpush1.msra.mxu0 0.0
    %712 = vmatprep.subr.mxu0 0.0
    %713 = vmatpush1.msra.mxu0 0.0
    %714 = vmatprep.subr.mxu0 0.0
    %715 = vmatpush1.msra.mxu0 0.0
    %716 = vmatprep.subr.mxu0 0.0
    %717 = vmatpush1.msra.mxu0 0.0
    %718 = vmatprep.subr.mxu0 0.0
    %719 = vmatpush1.msra.mxu0 0.0
    %720 = vmatprep.subr.mxu0 0.0
    %721 = vmatpush1.msra.mxu0 0.0
    %722 = vmatprep.subr.mxu0 0.0
    %723 = vmatpush1.msra.mxu0 0.0
    %724 = vmatprep.subr.mxu0 0.0
    %725 = vmatpush1.msra.mxu0 0.0
    %726 = vmatprep.subr.mxu0 0.0
    %727 = vmatpush1.msra.mxu0 0.0
    %728 = vmatprep.subr.mxu0 0.0
    %729 = vmatpush1.msra.mxu0 0.0
    %730 = vmatprep.subr.mxu0 0.0
    %731 = vmatpush1.msra.mxu0 0.0
    %732 = vmatprep.subr.mxu0 0.0
    %733 = vmatpush1.msra.mxu0 0.0
    %734 = vmatprep.subr.mxu0 0.0
    %735 = vmatpush1.msra.mxu0 0.0
    %736 = vmatprep.subr.mxu0 0.0
    %737 = vmatpush1.msra.mxu0 0.0
    %738 = vmatprep.subr.mxu0 0.0
    %739 = vmatpush1.msra.mxu0 0.0
    %740 = vmatprep.subr.mxu0 0.0
    %741 = vmatpush1.msra.mxu0 0.0
    %742 = vmatprep.subr.mxu0 0.0
    %743 = vmatpush1.msra.mxu0 0.0
    %744 = vmatprep.mubr.f32.mxu0 0.0
    %745 = vmatmul.mubr.f32.gmra.mrb[0].mxu0 %v656
    %v746 = vpop.f32.mrb[0].mxu0
    %v747 = vadd.f32 0.0, %v746
    %v748 = vpop.f32.mrb[0].mxu0
    %v749 = vadd.f32 0.0, %v748
    %750 = vmatprep.mubr.f32.mxu0 0.0
    %751 = vmatmul.mubr.f32.gmra.mrb[0].mxu0 %v659
    %v752 = vpop.f32.mrb[0].mxu0
    %v753 = vadd.f32 0.0, %v752
    %v754 = vpop.f32.mrb[0].mxu0
    %v755 = vadd.f32 0.0, %v754
    %756 = vmatprep.mubr.f32.mxu0 0.0
    %757 = vmatmul.mubr.f32.gmra.mrb[0].mxu0 %v662
    %v758 = vpop.f32.mrb[0].mxu0
    %v759 = vadd.f32 0.0, %v758
    %v760 = vpop.f32.mrb[0].mxu0
    %v761 = vadd.f32 0.0, %v760
    %762 = vmatprep.mubr.f32.mxu0 0.0
    %763 = vmatmul.mubr.f32.gmra.mrb[0].mxu0 %v665
    %v764 = vpop.f32.mrb[0].mxu0
    %v765 = vadd.f32 0.0, %v764
    %v766 = vpop.f32.mrb[0].mxu0
    %v767 = vadd.f32 0.0, %v766
    %768 = vdwg.mxu0
    %769 = vmatprep.subr.mxu0 %v605
    %770 = vmatpush1.msra.mxu0 %v604
    %771 = vmatprep.subr.mxu0 %v609
    %772 = vmatpush1.msra.mxu0 %v608
    %773 = vmatprep.subr.mxu0 %v613
    %774 = vmatpush1.msra.mxu0 %v612
    %775 = vmatprep.subr.mxu0 %v617
    %776 = vmatpush1.msra.mxu0 %v616
    %777 = vmatprep.subr.mxu0 %v621
    %778 = vmatpush1.msra.mxu0 %v620
    %779 = vmatprep.subr.mxu0 %v625
    %780 = vmatpush1.msra.mxu0 %v624
    %781 = vmatprep.subr.mxu0 %v629
    %782 = vmatpush1.msra.mxu0 %v628
    %783 = vmatprep.subr.mxu0 %v633
    %784 = vmatpush1.msra.mxu0 %v632
    %785 = vmatprep.subr.mxu0 %v637
    %786 = vmatpush1.msra.mxu0 %v636
    %787 = vmatprep.subr.mxu0 %v641
    %788 = vmatpush1.msra.mxu0 %v640
    %789 = vmatprep.subr.mxu0 %v645
    %790 = vmatpush1.msra.mxu0 %v644
    %791 = vmatprep.subr.mxu0 %v649
    %792 = vmatpush1.msra.mxu0 %v648
    %793 = vmatprep.subr.mxu0 %v678
    %794 = vmatpush1.msra.mxu0 %v675
    %795 = vmatprep.subr.mxu0 0.0
    %796 = vmatpush1.msra.mxu0 0.0
    %797 = vmatprep.subr.mxu0 0.0
    %798 = vmatpush1.msra.mxu0 0.0
    %799 = vmatprep.subr.mxu0 0.0
    %800 = vmatpush1.msra.mxu0 0.0
    %801 = vmatprep.subr.mxu0 0.0
    %802 = vmatpush1.msra.mxu0 0.0
    %803 = vmatprep.subr.mxu0 0.0
    %804 = vmatpush1.msra.mxu0 0.0
    %805 = vmatprep.subr.mxu0 0.0
    %806 = vmatpush1.msra.mxu0 0.0
    %807 = vmatprep.subr.mxu0 0.0
    %808 = vmatpush1.msra.mxu0 0.0
    %809 = vmatprep.subr.mxu0 0.0
    %810 = vmatpush1.msra.mxu0 0.0
    %811 = vmatprep.subr.mxu0 0.0
    %812 = vmatpush1.msra.mxu0 0.0
    %813 = vmatprep.subr.mxu0 0.0
    %814 = vmatpush1.msra.mxu0 0.0
    %815 = vmatprep.subr.mxu0 0.0
    %816 = vmatpush1.msra.mxu0 0.0
    %817 = vmatprep.subr.mxu0 0.0
    %818 = vmatpush1.msra.mxu0 0.0
    %819 = vmatprep.subr.mxu0 0.0
    %820 = vmatpush1.msra.mxu0 0.0
    %821 = vmatprep.subr.mxu0 0.0
    %822 = vmatpush1.msra.mxu0 0.0
    %823 = vmatprep.subr.mxu0 0.0
    %824 = vmatpush1.msra.mxu0 0.0
    %825 = vmatprep.subr.mxu0 0.0
    %826 = vmatpush1.msra.mxu0 0.0
    %827 = vmatprep.subr.mxu0 0.0
    %828 = vmatpush1.msra.mxu0 0.0
    %829 = vmatprep.subr.mxu0 0.0
    %830 = vmatpush1.msra.mxu0 0.0
    %831 = vmatprep.subr.mxu0 0.0
    %832 = vmatpush1.msra.mxu0 0.0
    %833 = vmatprep.mubr.f32.mxu0 0.0
    %834 = vmatmul.mubr.f32.gmra.mrb[0].mxu0 %v656
    %v835 = vpop.f32.mrb[0].mxu0
    %v836 = vadd.f32 0.0, %v835
    %v837 = vpop.f32.mrb[0].mxu0
    %v838 = vadd.f32 0.0, %v837
    %839 = vmatprep.mubr.f32.mxu0 0.0
    %840 = vmatmul.mubr.f32.gmra.mrb[0].mxu0 %v659
    %v841 = vpop.f32.mrb[0].mxu0
    %v842 = vadd.f32 0.0, %v841
    %v843 = vpop.f32.mrb[0].mxu0
    %v844 = vadd.f32 0.0, %v843
    %845 = vmatprep.mubr.f32.mxu0 0.0
    %846 = vmatmul.mubr.f32.gmra.mrb[0].mxu0 %v662
    %v847 = vpop.f32.mrb[0].mxu0
    %v848 = vadd.f32 0.0, %v847
    %v849 = vpop.f32.mrb[0].mxu0
    %v850 = vadd.f32 0.0, %v849
    %851 = vmatprep.mubr.f32.mxu0 0.0
    %852 = vmatmul.mubr.f32.gmra.mrb[0].mxu0 %v665
    %v853 = vpop.f32.mrb[0].mxu0
    %v854 = vadd.f32 0.0, %v853
    %v855 = vpop.f32.mrb[0].mxu0
    %v856 = vadd.f32 0.0, %v855
    %857 = vdwg.mxu0
    %v859 = vsel %vm654, %v429, 0
    %v862 = vsel %vm654, %v434, 0
    %v865 = vsel %vm654, %v439, 0
    %v868 = vsel %vm654, %v444, 0
    %v871 = vsel %vm667, %v495, 0
    %v874 = vsel %vm667, %v496, 0
    %v877 = vsel %vm667, %v497, 0
    %v880 = vsel %vm667, %v498, 0
    %882 = vmatprep.subr.mxu0 %v448
    %883 = vmatpush1.msra.mxu0 %v447
    %884 = vmatprep.subr.mxu0 %v452
    %885 = vmatpush1.msra.mxu0 %v451
    %886 = vmatprep.subr.mxu0 %v456
    %887 = vmatpush1.msra.mxu0 %v455
    %888 = vmatprep.subr.mxu0 %v460
    %889 = vmatpush1.msra.mxu0 %v459
    %890 = vmatprep.subr.mxu0 %v464
    %891 = vmatpush1.msra.mxu0 %v463
    %892 = vmatprep.subr.mxu0 %v468
    %893 = vmatpush1.msra.mxu0 %v467
    %894 = vmatprep.subr.mxu0 %v472
    %895 = vmatpush1.msra.mxu0 %v471
    %896 = vmatprep.subr.mxu0 %v476
    %897 = vmatpush1.msra.mxu0 %v475
    %898 = vmatprep.subr.mxu0 %v480
    %899 = vmatpush1.msra.mxu0 %v479
    %900 = vmatprep.subr.mxu0 %v484
    %901 = vmatpush1.msra.mxu0 %v483
    %902 = vmatprep.subr.mxu0 %v488
    %903 = vmatpush1.msra.mxu0 %v487
    %904 = vmatprep.subr.mxu0 %v492
    %905 = vmatpush1.msra.mxu0 %v491
    %906 = vmatprep.subr.mxu0 %v874
    %907 = vmatpush1.msra.mxu0 %v871
    %908 = vmatprep.subr.mxu0 0.0
    %909 = vmatpush1.msra.mxu0 0.0
    %910 = vmatprep.subr.mxu0 0.0
    %911 = vmatpush1.msra.mxu0 0.0
    %912 = vmatprep.subr.mxu0 0.0
    %913 = vmatpush1.msra.mxu0 0.0
    %914 = vmatprep.subr.mxu0 0.0
    %915 = vmatpush1.msra.mxu0 0.0
    %916 = vmatprep.subr.mxu0 0.0
    %917 = vmatpush1.msra.mxu0 0.0
    %918 = vmatprep.subr.mxu0 0.0
    %919 = vmatpush1.msra.mxu0 0.0
    %920 = vmatprep.subr.mxu0 0.0
    %921 = vmatpush1.msra.mxu0 0.0
    %922 = vmatprep.subr.mxu0 0.0
    %923 = vmatpush1.msra.mxu0 0.0
    %924 = vmatprep.subr.mxu0 0.0
    %925 = vmatpush1.msra.mxu0 0.0
    %926 = vmatprep.subr.mxu0 0.0
    %927 = vmatpush1.msra.mxu0 0.0
    %928 = vmatprep.subr.mxu0 0.0
    %929 = vmatpush1.msra.mxu0 0.0
    %930 = vmatprep.subr.mxu0 0.0
    %931 = vmatpush1.msra.mxu0 0.0
    %932 = vmatprep.subr.mxu0 0.0
    %933 = vmatpush1.msra.mxu0 0.0
    %934 = vmatprep.subr.mxu0 0.0
    %935 = vmatpush1.msra.mxu0 0.0
    %936 = vmatprep.subr.mxu0 0.0
    %937 = vmatpush1.msra.mxu0 0.0
    %938 = vmatprep.subr.mxu0 0.0
    %939 = vmatpush1.msra.mxu0 0.0
    %940 = vmatprep.subr.mxu0 0.0
    %941 = vmatpush1.msra.mxu0 0.0
    %942 = vmatprep.subr.mxu0 0.0
    %943 = vmatpush1.msra.mxu0 0.0
    %944 = vmatprep.subr.mxu0 0.0
    %945 = vmatpush1.msra.mxu0 0.0
    %946 = vmatprep.mubr.f32.mxu0 0.0
    %947 = vmatmul.mubr.f32.gmra.mrb[0].mxu0 %v859
    %v948 = vpop.f32.mrb[0].mxu0
    %v949 = vadd.f32 %v747, %v948
    %v950 = vpop.f32.mrb[0].mxu0
    %v951 = vadd.f32 %v749, %v950
    %952 = vmatprep.mubr.f32.mxu0 0.0
    %953 = vmatmul.mubr.f32.gmra.mrb[0].mxu0 %v862
    %v954 = vpop.f32.mrb[0].mxu0
    %v955 = vadd.f32 %v753, %v954
    %v956 = vpop.f32.mrb[0].mxu0
    %v957 = vadd.f32 %v755, %v956
    %958 = vmatprep.mubr.f32.mxu0 0.0
    %959 = vmatmul.mubr.f32.gmra.mrb[0].mxu0 %v865
    %v960 = vpop.f32.mrb[0].mxu0
    %v961 = vadd.f32 %v759, %v960
    %v962 = vpop.f32.mrb[0].mxu0
    %v963 = vadd.f32 %v761, %v962
    %964 = vmatprep.mubr.f32.mxu0 0.0
    %965 = vmatmul.mubr.f32.gmra.mrb[0].mxu0 %v868
    %v966 = vpop.f32.mrb[0].mxu0
    %v967 = vadd.f32 %v765, %v966
    %v968 = vpop.f32.mrb[0].mxu0
    %v969 = vadd.f32 %v767, %v968
    %970 = vdwg.mxu0
    %971 = vmatprep.subr.mxu0 %v450
    %972 = vmatpush1.msra.mxu0 %v449
    %973 = vmatprep.subr.mxu0 %v454
    %974 = vmatpush1.msra.mxu0 %v453
    %975 = vmatprep.subr.mxu0 %v458
    %976 = vmatpush1.msra.mxu0 %v457
    %977 = vmatprep.subr.mxu0 %v462
    %978 = vmatpush1.msra.mxu0 %v461
    %979 = vmatprep.subr.mxu0 %v466
    %980 = vmatpush1.msra.mxu0 %v465
    %981 = vmatprep.subr.mxu0 %v470
    %982 = vmatpush1.msra.mxu0 %v469
    %983 = vmatprep.subr.mxu0 %v474
    %984 = vmatpush1.msra.mxu0 %v473
    %985 = vmatprep.subr.mxu0 %v478
    %986 = vmatpush1.msra.mxu0 %v477
    %987 = vmatprep.subr.mxu0 %v482
    %988 = vmatpush1.msra.mxu0 %v481
    %989 = vmatprep.subr.mxu0 %v486
    %990 = vmatpush1.msra.mxu0 %v485
    %991 = vmatprep.subr.mxu0 %v490
    %992 = vmatpush1.msra.mxu0 %v489
    %993 = vmatprep.subr.mxu0 %v494
    %994 = vmatpush1.msra.mxu0 %v493
    %995 = vmatprep.subr.mxu0 %v880
    %996 = vmatpush1.msra.mxu0 %v877
    %997 = vmatprep.subr.mxu0 0.0
    %998 = vmatpush1.msra.mxu0 0.0
    %999 = vmatprep.subr.mxu0 0.0
    %1000 = vmatpush1.msra.mxu0 0.0
    %1001 = vmatprep.subr.mxu0 0.0
    %1002 = vmatpush1.msra.mxu0 0.0
    %1003 = vmatprep.subr.mxu0 0.0
    %1004 = vmatpush1.msra.mxu0 0.0
    %1005 = vmatprep.subr.mxu0 0.0
    %1006 = vmatpush1.msra.mxu0 0.0
    %1007 = vmatprep.subr.mxu0 0.0
    %1008 = vmatpush1.msra.mxu0 0.0
    %1009 = vmatprep.subr.mxu0 0.0
    %1010 = vmatpush1.msra.mxu0 0.0
    %1011 = vmatprep.subr.mxu0 0.0
    %1012 = vmatpush1.msra.mxu0 0.0
    %1013 = vmatprep.subr.mxu0 0.0
    %1014 = vmatpush1.msra.mxu0 0.0
    %1015 = vmatprep.subr.mxu0 0.0
    %1016 = vmatpush1.msra.mxu0 0.0
    %1017 = vmatprep.subr.mxu0 0.0
    %1018 = vmatpush1.msra.mxu0 0.0
    %1019 = vmatprep.subr.mxu0 0.0
    %1020 = vmatpush1.msra.mxu0 0.0
    %1021 = vmatprep.subr.mxu0 0.0
    %1022 = vmatpush1.msra.mxu0 0.0
    %1023 = vmatprep.subr.mxu0 0.0
    %1024 = vmatpush1.msra.mxu0 0.0
    %1025 = vmatprep.subr.mxu0 0.0
    %1026 = vmatpush1.msra.mxu0 0.0
    %1027 = vmatprep.subr.mxu0 0.0
    %1028 = vmatpush1.msra.mxu0 0.0
    %1029 = vmatprep.subr.mxu0 0.0
    %1030 = vmatpush1.msra.mxu0 0.0
    %1031 = vmatprep.subr.mxu0 0.0
    %1032 = vmatpush1.msra.mxu0 0.0
    %1033 = vmatprep.subr.mxu0 0.0
    %1034 = vmatpush1.msra.mxu0 0.0
    %1035 = vmatprep.mubr.f32.mxu0 0.0
    %1036 = vmatmul.mubr.f32.gmra.mrb[0].mxu0 %v859
    %v1037 = vpop.f32.mrb[0].mxu0
    %v1038 = vadd.f32 %v836, %v1037
    %v1039 = vpop.f32.mrb[0].mxu0
    %v1040 = vadd.f32 %v838, %v1039
    %1041 = vmatprep.mubr.f32.mxu0 0.0
    %1042 = vmatmul.mubr.f32.gmra.mrb[0].mxu0 %v862
    %v1043 = vpop.f32.mrb[0].mxu0
    %v1044 = vadd.f32 %v842, %v1043
    %v1045 = vpop.f32.mrb[0].mxu0
    %v1046 = vadd.f32 %v844, %v1045
    %1047 = vmatprep.mubr.f32.mxu0 0.0
    %1048 = vmatmul.mubr.f32.gmra.mrb[0].mxu0 %v865
    %v1049 = vpop.f32.mrb[0].mxu0
    %v1050 = vadd.f32 %v848, %v1049
    %v1051 = vpop.f32.mrb[0].mxu0
    %v1052 = vadd.f32 %v850, %v1051
    %1053 = vmatprep.mubr.f32.mxu0 0.0
    %1054 = vmatmul.mubr.f32.gmra.mrb[0].mxu0 %v868
    %v1055 = vpop.f32.mrb[0].mxu0
    %v1056 = vadd.f32 %v854, %v1055
    %v1057 = vpop.f32.mrb[0].mxu0
    %v1058 = vadd.f32 %v856, %v1057
    %1059 = vdwg.mxu0
    %s1060 = scalar_lea.vmem %s2, 64
    %v1061 = vld [vmem:[%s1060] sm:$0xff]
    %v1062 = vld [vmem:[%s1060 + $0x8] sm:$0xff]
    %v1063 = vld [vmem:[%s1060 + $0x10] sm:$0xff]
    %v1064 = vld [vmem:[%s1060 + $0x18] sm:$0xff]
    %v1066 = vsel %vm345, %v1061, 0
    %v1069 = vsel %vm345, %v1062, 0
    %v1072 = vsel %vm345, %v1063, 0
    %v1075 = vsel %vm345, %v1064, 0
    %1077 = vmatprep.subr.mxu0 0.0
    %1078 = vmatpush1.msra.mxu0 %v332
    %1079 = vmatprep.subr.mxu0 0.0
    %1080 = vmatpush1.msra.mxu0 %v333
    %1081 = vmatprep.subr.mxu0 0.0
    %1082 = vmatpush1.msra.mxu0 %v334
    %1083 = vmatprep.subr.mxu0 0.0
    %1084 = vmatpush1.msra.mxu0 %v335
    %1085 = vmatprep.subr.mxu0 0.0
    %1086 = vmatpush1.msra.mxu0 %v336
    %1087 = vmatprep.subr.mxu0 0.0
    %1088 = vmatpush1.msra.mxu0 %v337
    %1089 = vmatprep.subr.mxu0 0.0
    %1090 = vmatpush1.msra.mxu0 %v338
    %1091 = vmatprep.subr.mxu0 0.0
    %1092 = vmatpush1.msra.mxu0 %v339
    %1093 = vmatprep.subr.mxu0 0.0
    %1094 = vmatpush1.msra.mxu0 %v360
    %1095 = vmatprep.subr.mxu0 0.0
    %1096 = vmatpush1.msra.mxu0 0.0
    %1097 = vmatprep.subr.mxu0 0.0
    %1098 = vmatpush1.msra.mxu0 0.0
    %1099 = vmatprep.subr.mxu0 0.0
    %1100 = vmatpush1.msra.mxu0 0.0
    %1101 = vmatprep.subr.mxu0 0.0
    %1102 = vmatpush1.msra.mxu0 0.0
    %1103 = vmatprep.subr.mxu0 0.0
    %1104 = vmatpush1.msra.mxu0 0.0
    %1105 = vmatprep.subr.mxu0 0.0
    %1106 = vmatpush1.msra.mxu0 0.0
    %1107 = vmatprep.subr.mxu0 0.0
    %1108 = vmatpush1.msra.mxu0 0.0
    %1109 = vmatprep.subr.mxu0 0.0
    %1110 = vmatpush1.msra.mxu0 0.0
    %1111 = vmatprep.subr.mxu0 0.0
    %1112 = vmatpush1.msra.mxu0 0.0
    %1113 = vmatprep.subr.mxu0 0.0
    %1114 = vmatpush1.msra.mxu0 0.0
    %1115 = vmatprep.subr.mxu0 0.0
    %1116 = vmatpush1.msra.mxu0 0.0
    %1117 = vmatprep.subr.mxu0 0.0
    %1118 = vmatpush1.msra.mxu0 0.0
    %1119 = vmatprep.subr.mxu0 0.0
    %1120 = vmatpush1.msra.mxu0 0.0
    %1121 = vmatprep.subr.mxu0 0.0
    %1122 = vmatpush1.msra.mxu0 0.0
    %1123 = vmatprep.subr.mxu0 0.0
    %1124 = vmatpush1.msra.mxu0 0.0
    %1125 = vmatprep.subr.mxu0 0.0
    %1126 = vmatpush1.msra.mxu0 0.0
    %1127 = vmatprep.subr.mxu0 0.0
    %1128 = vmatpush1.msra.mxu0 0.0
    %1129 = vmatprep.subr.mxu0 0.0
    %1130 = vmatpush1.msra.mxu0 0.0
    %1131 = vmatprep.subr.mxu0 0.0
    %1132 = vmatpush1.msra.mxu0 0.0
    %1133 = vmatprep.subr.mxu0 0.0
    %1134 = vmatpush1.msra.mxu0 0.0
    %1135 = vmatprep.subr.mxu0 0.0
    %1136 = vmatpush1.msra.mxu0 0.0
    %1137 = vmatprep.subr.mxu0 0.0
    %1138 = vmatpush1.msra.mxu0 0.0
    %1139 = vmatprep.subr.mxu0 0.0
    %1140 = vmatpush1.msra.mxu0 0.0
    %1141 = vmatprep.mubr.f32.mxu0 0.0
    %1142 = vmatmul.mubr.f32.gmra.mrb[0].mxu0 %v1066
    %v1143 = vpop.f32.mrb[0].mxu0
    %v1144 = vadd.f32 0.0, %v1143
    %v1145 = vpop.f32.mrb[0].mxu0
    %1146 = vmatprep.mubr.f32.mxu0 0.0
    %1147 = vmatmul.mubr.f32.gmra.mrb[0].mxu0 %v1069
    %v1148 = vpop.f32.mrb[0].mxu0
    %v1149 = vadd.f32 0.0, %v1148
    %v1150 = vpop.f32.mrb[0].mxu0
    %1151 = vmatprep.mubr.f32.mxu0 0.0
    %1152 = vmatmul.mubr.f32.gmra.mrb[0].mxu0 %v1072
    %v1153 = vpop.f32.mrb[0].mxu0
    %v1154 = vadd.f32 0.0, %v1153
    %v1155 = vpop.f32.mrb[0].mxu0
    %1156 = vmatprep.mubr.f32.mxu0 0.0
    %1157 = vmatmul.mubr.f32.gmra.mrb[0].mxu0 %v1075
    %v1158 = vpop.f32.mrb[0].mxu0
    %v1159 = vadd.f32 0.0, %v1158
    %v1160 = vpop.f32.mrb[0].mxu0
    %1161 = vdwg.mxu0
    %s1162 = scalar_lea.vmem %s1, 832
    %v1163 = vld [vmem:[%s1162] sm:$0xff]
    %v1164 = vld [vmem:[%s1162 + $0x8] sm:$0xff]
    %v1165 = vld [vmem:[%s1162 + $0x10] sm:$0xff]
    %v1166 = vld [vmem:[%s1162 + $0x18] sm:$0xff]
    %v1167 = vld [vmem:[%s1162 + $0x20] sm:$0xff]
    %v1168 = vld [vmem:[%s1162 + $0x28] sm:$0xff]
    %v1169 = vld [vmem:[%s1162 + $0x30] sm:$0xff]
    %v1170 = vld [vmem:[%s1162 + $0x38] sm:$0xff]
    %v1171 = vld [vmem:[%s1162 + $0x40] sm:$0xff]
    %v1172 = vld [vmem:[%s1162 + $0x48] sm:$0xff]
    %v1173 = vld [vmem:[%s1162 + $0x50] sm:$0xff]
    %v1174 = vld [vmem:[%s1162 + $0x58] sm:$0xff]
    %v1175 = vld [vmem:[%s1162 + $0x60] sm:$0xff]
    %v1176 = vld [vmem:[%s1162 + $0x68] sm:$0xff]
    %v1177 = vld [vmem:[%s1162 + $0x70] sm:$0xff]
    %v1178 = vld [vmem:[%s1162 + $0x78] sm:$0xff]
    %v1179 = vld [vmem:[%s1162 + $0x80] sm:$0xff]
    %v1180 = vld [vmem:[%s1162 + $0x88] sm:$0xff]
    %v1181 = vld [vmem:[%s1162 + $0x90] sm:$0xff]
    %v1182 = vld [vmem:[%s1162 + $0x98] sm:$0xff]
    %v1183 = vld [vmem:[%s1162 + $0xa0] sm:$0xff]
    %v1184 = vld [vmem:[%s1162 + $0xa8] sm:$0xff]
    %v1185 = vld [vmem:[%s1162 + $0xb0] sm:$0xff]
    %v1186 = vld [vmem:[%s1162 + $0xb8] sm:$0xff]
    %v1187 = vld [vmem:[%s1162 + $0xc0] sm:$0xff]
    %v1188 = vld [vmem:[%s1162 + $0xc8] sm:$0xff]
    %v1189 = vld [vmem:[%s1162 + $0xd0] sm:$0xff]
    %v1190 = vld [vmem:[%s1162 + $0xd8] sm:$0xff]
    %v1191 = vld [vmem:[%s1162 + $0xe0] sm:$0xff]
    %v1192 = vld [vmem:[%s1162 + $0xe8] sm:$0xff]
    %v1193 = vld [vmem:[%s1162 + $0xf0] sm:$0xff]
    %v1194 = vld [vmem:[%s1162 + $0xf8] sm:$0xff]
    %v1195 = vld [vmem:[%s1162 + $0x100] sm:$0xff]
    %v1196 = vld [vmem:[%s1162 + $0x108] sm:$0xff]
    %v1197 = vld [vmem:[%s1162 + $0x110] sm:$0xff]
    %v1198 = vld [vmem:[%s1162 + $0x118] sm:$0xff]
    %v1199 = vld [vmem:[%s1162 + $0x120] sm:$0xff]
    %v1200 = vld [vmem:[%s1162 + $0x128] sm:$0xff]
    %v1201 = vld [vmem:[%s1162 + $0x130] sm:$0xff]
    %v1202 = vld [vmem:[%s1162 + $0x138] sm:$0xff]
    %v1203 = vld [vmem:[%s1162 + $0x140] sm:$0xff]
    %v1204 = vld [vmem:[%s1162 + $0x148] sm:$0xff]
    %v1205 = vld [vmem:[%s1162 + $0x150] sm:$0xff]
    %v1206 = vld [vmem:[%s1162 + $0x158] sm:$0xff]
    %v1207 = vld [vmem:[%s1162 + $0x160] sm:$0xff]
    %v1208 = vld [vmem:[%s1162 + $0x168] sm:$0xff]
    %v1209 = vld [vmem:[%s1162 + $0x170] sm:$0xff]
    %v1210 = vld [vmem:[%s1162 + $0x178] sm:$0xff]
    %v1211 = vld [vmem:[%s1162 + $0x180] sm:$0x3f]
    %v1212 = vld [vmem:[%s1162 + $0x188] sm:$0x3f]
    %v1213 = vld [vmem:[%s1162 + $0x190] sm:$0x3f]
    %v1214 = vld [vmem:[%s1162 + $0x198] sm:$0x3f]
    %v1216 = vsel %vm654, %v1144, 0
    %v1219 = vsel %vm654, %v1149, 0
    %v1222 = vsel %vm654, %v1154, 0
    %v1225 = vsel %vm654, %v1159, 0
    %v1228 = vsel %vm667, %v1211, 0
    %v1231 = vsel %vm667, %v1212, 0
    %v1234 = vsel %vm667, %v1213, 0
    %v1237 = vsel %vm667, %v1214, 0
    %1239 = vmatprep.subr.mxu0 %v1164
    %1240 = vmatpush1.msra.mxu0 %v1163
    %1241 = vmatprep.subr.mxu0 %v1168
    %1242 = vmatpush1.msra.mxu0 %v1167
    %1243 = vmatprep.subr.mxu0 %v1172
    %1244 = vmatpush1.msra.mxu0 %v1171
    %1245 = vmatprep.subr.mxu0 %v1176
    %1246 = vmatpush1.msra.mxu0 %v1175
    %1247 = vmatprep.subr.mxu0 %v1180
    %1248 = vmatpush1.msra.mxu0 %v1179
    %1249 = vmatprep.subr.mxu0 %v1184
    %1250 = vmatpush1.msra.mxu0 %v1183
    %1251 = vmatprep.subr.mxu0 %v1188
    %1252 = vmatpush1.msra.mxu0 %v1187
    %1253 = vmatprep.subr.mxu0 %v1192
    %1254 = vmatpush1.msra.mxu0 %v1191
    %1255 = vmatprep.subr.mxu0 %v1196
    %1256 = vmatpush1.msra.mxu0 %v1195
    %1257 = vmatprep.subr.mxu0 %v1200
    %1258 = vmatpush1.msra.mxu0 %v1199
    %1259 = vmatprep.subr.mxu0 %v1204
    %1260 = vmatpush1.msra.mxu0 %v1203
    %1261 = vmatprep.subr.mxu0 %v1208
    %1262 = vmatpush1.msra.mxu0 %v1207
    %1263 = vmatprep.subr.mxu0 %v1231
    %1264 = vmatpush1.msra.mxu0 %v1228
    %1265 = vmatprep.subr.mxu0 0.0
    %1266 = vmatpush1.msra.mxu0 0.0
    %1267 = vmatprep.subr.mxu0 0.0
    %1268 = vmatpush1.msra.mxu0 0.0
    %1269 = vmatprep.subr.mxu0 0.0
    %1270 = vmatpush1.msra.mxu0 0.0
    %1271 = vmatprep.subr.mxu0 0.0
    %1272 = vmatpush1.msra.mxu0 0.0
    %1273 = vmatprep.subr.mxu0 0.0
    %1274 = vmatpush1.msra.mxu0 0.0
    %1275 = vmatprep.subr.mxu0 0.0
    %1276 = vmatpush1.msra.mxu0 0.0
    %1277 = vmatprep.subr.mxu0 0.0
    %1278 = vmatpush1.msra.mxu0 0.0
    %1279 = vmatprep.subr.mxu0 0.0
    %1280 = vmatpush1.msra.mxu0 0.0
    %1281 = vmatprep.subr.mxu0 0.0
    %1282 = vmatpush1.msra.mxu0 0.0
    %1283 = vmatprep.subr.mxu0 0.0
    %1284 = vmatpush1.msra.mxu0 0.0
    %1285 = vmatprep.subr.mxu0 0.0
    %1286 = vmatpush1.msra.mxu0 0.0
    %1287 = vmatprep.subr.mxu0 0.0
    %1288 = vmatpush1.msra.mxu0 0.0
    %1289 = vmatprep.subr.mxu0 0.0
    %1290 = vmatpush1.msra.mxu0 0.0
    %1291 = vmatprep.subr.mxu0 0.0
    %1292 = vmatpush1.msra.mxu0 0.0
    %1293 = vmatprep.subr.mxu0 0.0
    %1294 = vmatpush1.msra.mxu0 0.0
    %1295 = vmatprep.subr.mxu0 0.0
    %1296 = vmatpush1.msra.mxu0 0.0
    %1297 = vmatprep.subr.mxu0 0.0
    %1298 = vmatpush1.msra.mxu0 0.0
    %1299 = vmatprep.subr.mxu0 0.0
    %1300 = vmatpush1.msra.mxu0 0.0
    %1301 = vmatprep.subr.mxu0 0.0
    %1302 = vmatpush1.msra.mxu0 0.0
    %1303 = vmatprep.mubr.f32.mxu0 0.0
    %1304 = vmatmul.mubr.f32.gmra.mrb[0].mxu0 %v1216
    %v1305 = vpop.f32.mrb[0].mxu0
    %v1306 = vadd.f32 0.0, %v1305
    %v1307 = vpop.f32.mrb[0].mxu0
    %v1308 = vadd.f32 0.0, %v1307
    %1309 = vmatprep.mubr.f32.mxu0 0.0
    %1310 = vmatmul.mubr.f32.gmra.mrb[0].mxu0 %v1219
    %v1311 = vpop.f32.mrb[0].mxu0
    %v1312 = vadd.f32 0.0, %v1311
    %v1313 = vpop.f32.mrb[0].mxu0
    %v1314 = vadd.f32 0.0, %v1313
    %1315 = vmatprep.mubr.f32.mxu0 0.0
    %1316 = vmatmul.mubr.f32.gmra.mrb[0].mxu0 %v1222
    %v1317 = vpop.f32.mrb[0].mxu0
    %v1318 = vadd.f32 0.0, %v1317
    %v1319 = vpop.f32.mrb[0].mxu0
    %v1320 = vadd.f32 0.0, %v1319
    %1321 = vmatprep.mubr.f32.mxu0 0.0
    %1322 = vmatmul.mubr.f32.gmra.mrb[0].mxu0 %v1225
    %v1323 = vpop.f32.mrb[0].mxu0
    %v1324 = vadd.f32 0.0, %v1323
    %v1325 = vpop.f32.mrb[0].mxu0
    %v1326 = vadd.f32 0.0, %v1325
    %1327 = vdwg.mxu0
    %1328 = vmatprep.subr.mxu0 %v1166
    %1329 = vmatpush1.msra.mxu0 %v1165
    %1330 = vmatprep.subr.mxu0 %v1170
    %1331 = vmatpush1.msra.mxu0 %v1169
    %1332 = vmatprep.subr.mxu0 %v1174
    %1333 = vmatpush1.msra.mxu0 %v1173
    %1334 = vmatprep.subr.mxu0 %v1178
    %1335 = vmatpush1.msra.mxu0 %v1177
    %1336 = vmatprep.subr.mxu0 %v1182
    %1337 = vmatpush1.msra.mxu0 %v1181
    %1338 = vmatprep.subr.mxu0 %v1186
    %1339 = vmatpush1.msra.mxu0 %v1185
    %1340 = vmatprep.subr.mxu0 %v1190
    %1341 = vmatpush1.msra.mxu0 %v1189
    %1342 = vmatprep.subr.mxu0 %v1194
    %1343 = vmatpush1.msra.mxu0 %v1193
    %1344 = vmatprep.subr.mxu0 %v1198
    %1345 = vmatpush1.msra.mxu0 %v1197
    %1346 = vmatprep.subr.mxu0 %v1202
    %1347 = vmatpush1.msra.mxu0 %v1201
    %1348 = vmatprep.subr.mxu0 %v1206
    %1349 = vmatpush1.msra.mxu0 %v1205
    %1350 = vmatprep.subr.mxu0 %v1210
    %1351 = vmatpush1.msra.mxu0 %v1209
    %1352 = vmatprep.subr.mxu0 %v1237
    %1353 = vmatpush1.msra.mxu0 %v1234
    %1354 = vmatprep.subr.mxu0 0.0
    %1355 = vmatpush1.msra.mxu0 0.0
    %1356 = vmatprep.subr.mxu0 0.0
    %1357 = vmatpush1.msra.mxu0 0.0
    %1358 = vmatprep.subr.mxu0 0.0
    %1359 = vmatpush1.msra.mxu0 0.0
    %1360 = vmatprep.subr.mxu0 0.0
    %1361 = vmatpush1.msra.mxu0 0.0
    %1362 = vmatprep.subr.mxu0 0.0
    %1363 = vmatpush1.msra.mxu0 0.0
    %1364 = vmatprep.subr.mxu0 0.0
    %1365 = vmatpush1.msra.mxu0 0.0
    %1366 = vmatprep.subr.mxu0 0.0
    %1367 = vmatpush1.msra.mxu0 0.0
    %1368 = vmatprep.subr.mxu0 0.0
    %1369 = vmatpush1.msra.mxu0 0.0
    %1370 = vmatprep.subr.mxu0 0.0
    %1371 = vmatpush1.msra.mxu0 0.0
    %1372 = vmatprep.subr.mxu0 0.0
    %1373 = vmatpush1.msra.mxu0 0.0
    %1374 = vmatprep.subr.mxu0 0.0
    %1375 = vmatpush1.msra.mxu0 0.0
    %1376 = vmatprep.subr.mxu0 0.0
    %1377 = vmatpush1.msra.mxu0 0.0
    %1378 = vmatprep.subr.mxu0 0.0
    %1379 = vmatpush1.msra.mxu0 0.0
    %1380 = vmatprep.subr.mxu0 0.0
    %1381 = vmatpush1.msra.mxu0 0.0
    %1382 = vmatprep.subr.mxu0 0.0
    %1383 = vmatpush1.msra.mxu0 0.0
    %1384 = vmatprep.subr.mxu0 0.0
    %1385 = vmatpush1.msra.mxu0 0.0
    %1386 = vmatprep.subr.mxu0 0.0
    %1387 = vmatpush1.msra.mxu0 0.0
    %1388 = vmatprep.subr.mxu0 0.0
    %1389 = vmatpush1.msra.mxu0 0.0
    %1390 = vmatprep.subr.mxu0 0.0
    %1391 = vmatpush1.msra.mxu0 0.0
    %1392 = vmatprep.mubr.f32.mxu0 0.0
    %1393 = vmatmul.mubr.f32.gmra.mrb[0].mxu0 %v1216
    %v1394 = vpop.f32.mrb[0].mxu0
    %v1395 = vadd.f32 0.0, %v1394
    %v1396 = vpop.f32.mrb[0].mxu0
    %v1397 = vadd.f32 0.0, %v1396
    %1398 = vmatprep.mubr.f32.mxu0 0.0
    %1399 = vmatmul.mubr.f32.gmra.mrb[0].mxu0 %v1219
    %v1400 = vpop.f32.mrb[0].mxu0
    %v1401 = vadd.f32 0.0, %v1400
    %v1402 = vpop.f32.mrb[0].mxu0
    %v1403 = vadd.f32 0.0, %v1402
    %1404 = vmatprep.mubr.f32.mxu0 0.0
    %1405 = vmatmul.mubr.f32.gmra.mrb[0].mxu0 %v1222
    %v1406 = vpop.f32.mrb[0].mxu0
    %v1407 = vadd.f32 0.0, %v1406
    %v1408 = vpop.f32.mrb[0].mxu0
    %v1409 = vadd.f32 0.0, %v1408
    %1410 = vmatprep.mubr.f32.mxu0 0.0
    %1411 = vmatmul.mubr.f32.gmra.mrb[0].mxu0 %v1225
    %v1412 = vpop.f32.mrb[0].mxu0
    %v1413 = vadd.f32 0.0, %v1412
    %v1414 = vpop.f32.mrb[0].mxu0
    %v1415 = vadd.f32 0.0, %v1414
    %1416 = vdwg.mxu0
    %v1417 = vadd.f32 %v949, %v1306
    %v1418 = vadd.f32 %v951, %v1308
    %v1419 = vadd.f32 %v1038, %v1395
    %v1420 = vadd.f32 %v1040, %v1397
    %v1421 = vadd.f32 %v955, %v1312
    %v1422 = vadd.f32 %v957, %v1314
    %v1423 = vadd.f32 %v1044, %v1401
    %v1424 = vadd.f32 %v1046, %v1403
    %v1425 = vadd.f32 %v961, %v1318
    %v1426 = vadd.f32 %v963, %v1320
    %v1427 = vadd.f32 %v1050, %v1407
    %v1428 = vadd.f32 %v1052, %v1409
    %v1429 = vadd.f32 %v967, %v1324
    %v1430 = vadd.f32 %v969, %v1326
    %v1431 = vadd.f32 %v1056, %v1413
    %v1432 = vadd.f32 %v1058, %v1415
    %v1433 = vadd.f32 %v1417, %v1421
    %v1434 = vadd.f32 %v1433, %v1425
    %v1435 = vadd.f32 %v1434, %v1429
    %v1436 = vrot.slane %v1435, 4
    %v1437 = vadd.f32 %v1435, %v1436
    %v1438 = vrot.slane %v1437, 2
    %v1439 = vadd.f32 %v1437, %v1438
    %v1440 = vrot.slane %v1439, 1
    %v1441 = vadd.f32 %v1439, %v1440
    %v1442 = vadd.f32 %v1418, %v1422
    %v1443 = vadd.f32 %v1442, %v1426
    %v1444 = vadd.f32 %v1443, %v1430
    %v1445 = vrot.slane %v1444, 4
    %v1446 = vadd.f32 %v1444, %v1445
    %v1447 = vrot.slane %v1446, 2
    %v1448 = vadd.f32 %v1446, %v1447
    %v1449 = vrot.slane %v1448, 1
    %v1450 = vadd.f32 %v1448, %v1449
    %v1451 = vadd.f32 %v1419, %v1423
    %v1452 = vadd.f32 %v1451, %v1427
    %v1453 = vadd.f32 %v1452, %v1431
    %v1454 = vrot.slane %v1453, 4
    %v1455 = vadd.f32 %v1453, %v1454
    %v1456 = vrot.slane %v1455, 2
    %v1457 = vadd.f32 %v1455, %v1456
    %v1458 = vrot.slane %v1457, 1
    %v1459 = vadd.f32 %v1457, %v1458
    %v1460 = vadd.f32 %v1420, %v1424
    %v1461 = vadd.f32 %v1460, %v1428
    %v1462 = vadd.f32 %v1461, %v1432
    %v1463 = vrot.slane %v1462, 4
    %v1464 = vadd.f32 %v1462, %v1463
    %v1465 = vrot.slane %v1464, 2
    %v1466 = vadd.f32 %v1464, %v1465
    %v1467 = vrot.slane %v1466, 1
    %v1468 = vadd.f32 %v1466, %v1467
    %v1469 = vmul.f32 %v1417, %v1417
    %v1470 = vmul.f32 %v1418, %v1418
    %v1471 = vmul.f32 %v1419, %v1419
    %v1472 = vmul.f32 %v1420, %v1420
    %v1473 = vmul.f32 %v1421, %v1421
    %v1474 = vmul.f32 %v1422, %v1422
    %v1475 = vmul.f32 %v1423, %v1423
    %v1476 = vmul.f32 %v1424, %v1424
    %v1477 = vmul.f32 %v1425, %v1425
    %v1478 = vmul.f32 %v1426, %v1426
    %v1479 = vmul.f32 %v1427, %v1427
    %v1480 = vmul.f32 %v1428, %v1428
    %v1481 = vmul.f32 %v1429, %v1429
    %v1482 = vmul.f32 %v1430, %v1430
    %v1483 = vmul.f32 %v1431, %v1431
    %v1484 = vmul.f32 %v1432, %v1432
    %v1485 = vadd.f32 %v1469, %v1473
    %v1486 = vadd.f32 %v1485, %v1477
    %v1487 = vadd.f32 %v1486, %v1481
    %v1488 = vrot.slane %v1487, 4
    %v1489 = vadd.f32 %v1487, %v1488
    %v1490 = vrot.slane %v1489, 2
    %v1491 = vadd.f32 %v1489, %v1490
    %v1492 = vrot.slane %v1491, 1
    %v1493 = vadd.f32 %v1491, %v1492
    %v1494 = vadd.f32 %v1470, %v1474
    %v1495 = vadd.f32 %v1494, %v1478
    %v1496 = vadd.f32 %v1495, %v1482
    %v1497 = vrot.slane %v1496, 4
    %v1498 = vadd.f32 %v1496, %v1497
    %v1499 = vrot.slane %v1498, 2
    %v1500 = vadd.f32 %v1498, %v1499
    %v1501 = vrot.slane %v1500, 1
    %v1502 = vadd.f32 %v1500, %v1501
    %v1503 = vadd.f32 %v1471, %v1475
    %v1504 = vadd.f32 %v1503, %v1479
    %v1505 = vadd.f32 %v1504, %v1483
    %v1506 = vrot.slane %v1505, 4
    %v1507 = vadd.f32 %v1505, %v1506
    %v1508 = vrot.slane %v1507, 2
    %v1509 = vadd.f32 %v1507, %v1508
    %v1510 = vrot.slane %v1509, 1
    %v1511 = vadd.f32 %v1509, %v1510
    %v1512 = vadd.f32 %v1472, %v1476
    %v1513 = vadd.f32 %v1512, %v1480
    %v1514 = vadd.f32 %v1513, %v1484
    %v1515 = vrot.slane %v1514, 4
    %v1516 = vadd.f32 %v1514, %v1515
    %v1517 = vrot.slane %v1516, 2
    %v1518 = vadd.f32 %v1516, %v1517
    %v1519 = vrot.slane %v1518, 1
    %v1520 = vadd.f32 %v1518, %v1519
    %vm1521 = vcmask 1040384
    %v1522 = vsel %vm1521, %v1441, %v1493
    %v1523 = vsel %vm1521, %v1450, %v1502
    %v1524 = vsel %vm1521, %v1459, %v1511
    %v1525 = vsel %vm1521, %v1468, %v1520
    %v1526 = vld [vmem:[#allocation5] sm:$0xff]
    %v1527 = vld [vmem:[#allocation5 + $0x8] sm:$0xff]
    %v1528 = vld [vmem:[#allocation5 + $0x10] sm:$0xff]
    %v1529 = vld [vmem:[#allocation5 + $0x18] sm:$0xff]
    %v1530 = vld [vmem:[#allocation5 + $0x20] sm:$0xff]
    %v1531 = vld [vmem:[#allocation5 + $0x28] sm:$0xff]
    %v1532 = vld [vmem:[#allocation5 + $0x30] sm:$0xff]
    %v1533 = vld [vmem:[#allocation5 + $0x38] sm:$0xff]
    %v1534 = vld [vmem:[#allocation5 + $0x40] sm:$0xff]
    %v1535 = vld [vmem:[#allocation5 + $0x48] sm:$0xff]
    %v1536 = vld [vmem:[#allocation5 + $0x50] sm:$0xff]
    %v1537 = vld [vmem:[#allocation5 + $0x58] sm:$0xff]
    %v1538 = vld [vmem:[#allocation5 + $0x60] sm:$0xff]
    %v1539 = vld [vmem:[#allocation5 + $0x68] sm:$0xff]
    %v1540 = vld [vmem:[#allocation5 + $0x70] sm:$0xff]
    %v1541 = vld [vmem:[#allocation5 + $0x78] sm:$0xff]
    %v1542 = vld [vmem:[#allocation5 + $0x80] sm:$0xff]
    %v1543 = vld [vmem:[#allocation5 + $0x88] sm:$0xff]
    %v1544 = vld [vmem:[#allocation5 + $0x90] sm:$0xff]
    %v1545 = vld [vmem:[#allocation5 + $0x98] sm:$0xff]
    %v1546 = vld [vmem:[#allocation5 + $0xa0] sm:$0xff]
    %v1547 = vld [vmem:[#allocation5 + $0xa8] sm:$0xff]
    %v1548 = vld [vmem:[#allocation5 + $0xb0] sm:$0xff]
    %v1549 = vld [vmem:[#allocation5 + $0xb8] sm:$0xff]
    %v1550 = vld [vmem:[#allocation5 + $0xc0] sm:$0xff]
    %v1551 = vld [vmem:[#allocation5 + $0xc8] sm:$0xff]
    %v1552 = vld [vmem:[#allocation5 + $0xd0] sm:$0xff]
    %v1553 = vld [vmem:[#allocation5 + $0xd8] sm:$0xff]
    %v1554 = vld [vmem:[#allocation5 + $0xe0] sm:$0xff]
    %v1555 = vld [vmem:[#allocation5 + $0xe8] sm:$0xff]
    %v1556 = vld [vmem:[#allocation5 + $0xf0] sm:$0xff]
    %v1557 = vld [vmem:[#allocation5 + $0xf8] sm:$0xff]
    %v1558 = vld [vmem:[#allocation5 + $0x100] sm:$0xff]
    %v1559 = vld [vmem:[#allocation5 + $0x108] sm:$0xff]
    %v1560 = vld [vmem:[#allocation5 + $0x110] sm:$0xff]
    %v1561 = vld [vmem:[#allocation5 + $0x118] sm:$0xff]
    %v1562 = vld [vmem:[#allocation5 + $0x120] sm:$0xff]
    %v1563 = vld [vmem:[#allocation5 + $0x128] sm:$0xff]
    %v1564 = vld [vmem:[#allocation5 + $0x130] sm:$0xff]
    %v1565 = vld [vmem:[#allocation5 + $0x138] sm:$0xff]
    %v1566 = vld [vmem:[#allocation5 + $0x140] sm:$0xff]
    %v1567 = vld [vmem:[#allocation5 + $0x148] sm:$0xff]
    %v1568 = vld [vmem:[#allocation5 + $0x150] sm:$0xff]
    %v1569 = vld [vmem:[#allocation5 + $0x158] sm:$0xff]
    %v1570 = vld [vmem:[#allocation5 + $0x160] sm:$0xff]
    %v1571 = vld [vmem:[#allocation5 + $0x168] sm:$0xff]
    %v1572 = vld [vmem:[#allocation5 + $0x170] sm:$0xff]
    %v1573 = vld [vmem:[#allocation5 + $0x178] sm:$0xff]
    %v1574 = vld [vmem:[#allocation5 + $0x180] sm:$0xff]
    %v1575 = vld [vmem:[#allocation5 + $0x188] sm:$0xff]
    %v1576 = vld [vmem:[#allocation5 + $0x190] sm:$0xff]
    %v1577 = vld [vmem:[#allocation5 + $0x198] sm:$0xff]
    %v1578 = vld [vmem:[#allocation5 + $0x1a0] sm:$0xff]
    %v1579 = vld [vmem:[#allocation5 + $0x1a8] sm:$0xff]
    %v1580 = vld [vmem:[#allocation5 + $0x1b0] sm:$0xff]
    %v1581 = vld [vmem:[#allocation5 + $0x1b8] sm:$0xff]
    %v1582 = vld [vmem:[#allocation5 + $0x1c0] sm:$0xff]
    %v1583 = vld [vmem:[#allocation5 + $0x1c8] sm:$0xff]
    %v1584 = vld [vmem:[#allocation5 + $0x1d0] sm:$0xff]
    %v1585 = vld [vmem:[#allocation5 + $0x1d8] sm:$0xff]
    %v1586 = vld [vmem:[#allocation5 + $0x1e0] sm:$0xff]
    %v1587 = vld [vmem:[#allocation5 + $0x1e8] sm:$0xff]
    %v1588 = vld [vmem:[#allocation5 + $0x1f0] sm:$0xff]
    %v1589 = vld [vmem:[#allocation5 + $0x1f8] sm:$0xff]
    %1590 = vmatprep.subr.mxu0 0.0
    %1591 = vmatpush1.msra.mxu0 %v1526
    %1592 = vmatprep.subr.mxu0 0.0
    %1593 = vmatpush1.msra.mxu0 %v1527
    %1594 = vmatprep.subr.mxu0 0.0
    %1595 = vmatpush1.msra.mxu0 %v1528
    %1596 = vmatprep.subr.mxu0 0.0
    %1597 = vmatpush1.msra.mxu0 %v1529
    %1598 = vmatprep.subr.mxu0 0.0
    %1599 = vmatpush1.msra.mxu0 %v1530
    %1600 = vmatprep.subr.mxu0 0.0
    %1601 = vmatpush1.msra.mxu0 %v1531
    %1602 = vmatprep.subr.mxu0 0.0
    %1603 = vmatpush1.msra.mxu0 %v1532
    %1604 = vmatprep.subr.mxu0 0.0
    %1605 = vmatpush1.msra.mxu0 %v1533
    %1606 = vmatprep.subr.mxu0 0.0
    %1607 = vmatpush1.msra.mxu0 %v1534
    %1608 = vmatprep.subr.mxu0 0.0
    %1609 = vmatpush1.msra.mxu0 %v1535
    %1610 = vmatprep.subr.mxu0 0.0
    %1611 = vmatpush1.msra.mxu0 %v1536
    %1612 = vmatprep.subr.mxu0 0.0
    %1613 = vmatpush1.msra.mxu0 %v1537
    %1614 = vmatprep.subr.mxu0 0.0
    %1615 = vmatpush1.msra.mxu0 %v1538
    %1616 = vmatprep.subr.mxu0 0.0
    %1617 = vmatpush1.msra.mxu0 %v1539
    %1618 = vmatprep.subr.mxu0 0.0
    %1619 = vmatpush1.msra.mxu0 %v1540
    %1620 = vmatprep.subr.mxu0 0.0
    %1621 = vmatpush1.msra.mxu0 %v1541
    %1622 = vmatprep.subr.mxu0 0.0
    %1623 = vmatpush1.msra.mxu0 %v1542
    %1624 = vmatprep.subr.mxu0 0.0
    %1625 = vmatpush1.msra.mxu0 %v1543
    %1626 = vmatprep.subr.mxu0 0.0
    %1627 = vmatpush1.msra.mxu0 %v1544
    %1628 = vmatprep.subr.mxu0 0.0
    %1629 = vmatpush1.msra.mxu0 %v1545
    %1630 = vmatprep.subr.mxu0 0.0
    %1631 = vmatpush1.msra.mxu0 %v1546
    %1632 = vmatprep.subr.mxu0 0.0
    %1633 = vmatpush1.msra.mxu0 %v1547
    %1634 = vmatprep.subr.mxu0 0.0
    %1635 = vmatpush1.msra.mxu0 %v1548
    %1636 = vmatprep.subr.mxu0 0.0
    %1637 = vmatpush1.msra.mxu0 %v1549
    %1638 = vmatprep.subr.mxu0 0.0
    %1639 = vmatpush1.msra.mxu0 %v1550
    %1640 = vmatprep.subr.mxu0 0.0
    %1641 = vmatpush1.msra.mxu0 %v1551
    %1642 = vmatprep.subr.mxu0 0.0
    %1643 = vmatpush1.msra.mxu0 %v1552
    %1644 = vmatprep.subr.mxu0 0.0
    %1645 = vmatpush1.msra.mxu0 %v1553
    %1646 = vmatprep.subr.mxu0 0.0
    %1647 = vmatpush1.msra.mxu0 %v1554
    %1648 = vmatprep.subr.mxu0 0.0
    %1649 = vmatpush1.msra.mxu0 %v1555
    %1650 = vmatprep.subr.mxu0 0.0
    %1651 = vmatpush1.msra.mxu0 %v1556
    %1652 = vmatprep.subr.mxu0 0.0
    %1653 = vmatpush1.msra.mxu0 %v1557
    %1654 = vmatprep.mubr.f32.mxu0 %v1523
    %1655 = vmatmul.mubr.f32.gmra.mrb[0].mxu0 %v1522
    %v1656 = vpop.f32.mrb[0].mxu0
    %v1657 = vadd.f32 0.0, %v1656
    %v1658 = vpop.f32.mrb[0].mxu0
    %1659 = vdwg.mxu0
    %1660 = vmatprep.subr.mxu0 0.0
    %1661 = vmatpush1.msra.mxu0 %v1558
    %1662 = vmatprep.subr.mxu0 0.0
    %1663 = vmatpush1.msra.mxu0 %v1559
    %1664 = vmatprep.subr.mxu0 0.0
    %1665 = vmatpush1.msra.mxu0 %v1560
    %1666 = vmatprep.subr.mxu0 0.0
    %1667 = vmatpush1.msra.mxu0 %v1561
    %1668 = vmatprep.subr.mxu0 0.0
    %1669 = vmatpush1.msra.mxu0 %v1562
    %1670 = vmatprep.subr.mxu0 0.0
    %1671 = vmatpush1.msra.mxu0 %v1563
    %1672 = vmatprep.subr.mxu0 0.0
    %1673 = vmatpush1.msra.mxu0 %v1564
    %1674 = vmatprep.subr.mxu0 0.0
    %1675 = vmatpush1.msra.mxu0 %v1565
    %1676 = vmatprep.subr.mxu0 0.0
    %1677 = vmatpush1.msra.mxu0 %v1566
    %1678 = vmatprep.subr.mxu0 0.0
    %1679 = vmatpush1.msra.mxu0 %v1567
    %1680 = vmatprep.subr.mxu0 0.0
    %1681 = vmatpush1.msra.mxu0 %v1568
    %1682 = vmatprep.subr.mxu0 0.0
    %1683 = vmatpush1.msra.mxu0 %v1569
    %1684 = vmatprep.subr.mxu0 0.0
    %1685 = vmatpush1.msra.mxu0 %v1570
    %1686 = vmatprep.subr.mxu0 0.0
    %1687 = vmatpush1.msra.mxu0 %v1571
    %1688 = vmatprep.subr.mxu0 0.0
    %1689 = vmatpush1.msra.mxu0 %v1572
    %1690 = vmatprep.subr.mxu0 0.0
    %1691 = vmatpush1.msra.mxu0 %v1573
    %1692 = vmatprep.subr.mxu0 0.0
    %1693 = vmatpush1.msra.mxu0 %v1574
    %1694 = vmatprep.subr.mxu0 0.0
    %1695 = vmatpush1.msra.mxu0 %v1575
    %1696 = vmatprep.subr.mxu0 0.0
    %1697 = vmatpush1.msra.mxu0 %v1576
    %1698 = vmatprep.subr.mxu0 0.0
    %1699 = vmatpush1.msra.mxu0 %v1577
    %1700 = vmatprep.subr.mxu0 0.0
    %1701 = vmatpush1.msra.mxu0 %v1578
    %1702 = vmatprep.subr.mxu0 0.0
    %1703 = vmatpush1.msra.mxu0 %v1579
    %1704 = vmatprep.subr.mxu0 0.0
    %1705 = vmatpush1.msra.mxu0 %v1580
    %1706 = vmatprep.subr.mxu0 0.0
    %1707 = vmatpush1.msra.mxu0 %v1581
    %1708 = vmatprep.subr.mxu0 0.0
    %1709 = vmatpush1.msra.mxu0 %v1582
    %1710 = vmatprep.subr.mxu0 0.0
    %1711 = vmatpush1.msra.mxu0 %v1583
    %1712 = vmatprep.subr.mxu0 0.0
    %1713 = vmatpush1.msra.mxu0 %v1584
    %1714 = vmatprep.subr.mxu0 0.0
    %1715 = vmatpush1.msra.mxu0 %v1585
    %1716 = vmatprep.subr.mxu0 0.0
    %1717 = vmatpush1.msra.mxu0 %v1586
    %1718 = vmatprep.subr.mxu0 0.0
    %1719 = vmatpush1.msra.mxu0 %v1587
    %1720 = vmatprep.subr.mxu0 0.0
    %1721 = vmatpush1.msra.mxu0 %v1588
    %1722 = vmatprep.subr.mxu0 0.0
    %1723 = vmatpush1.msra.mxu0 %v1589
    %1724 = vmatprep.mubr.f32.mxu0 %v1525
    %1725 = vmatmul.mubr.f32.gmra.mrb[0].mxu0 %v1524
    %v1726 = vpop.f32.mrb[0].mxu0
    %v1727 = vadd.f32 %v1657, %v1726
    %v1728 = vpop.f32.mrb[0].mxu0
    %1729 = vdwg.mxu0
    %v1730 = vmul.f32 %v1727, 0.001953125
    %v1731 = vmul.f32 %v1730, %v1730
    %v1733 = vrot.slane %v1731, 7
    %v1735 = vsub.f32 %v1730, %v1733
    %v1736 = vld [vmem:[%s5] sm:$0x1]
    %v1737 = vld [vmem:[%s5 + $0x1] sm:$0x1]
    %v1738 = vadd.f32 %v1735, 1e-05
    %v1739 = vrsqrt.pop %v1738
    %v1741 = vrot.slane %v1739, 1
    %v1743 = vmul.f32 %v1736, %v1741
    %v1744 = vmul.f32 %v1730, %v1743
    %v1745 = vsub.f32 %v1737, %v1744
    %v1747 = vrot.slane %v1745, 7
    %v1749 = vsel %vm1521, %v1743, %v1747
    %v1750 = vld [vmem:[#allocation7] sm:$0xff]
    %v1751 = vld [vmem:[#allocation7 + $0x8] sm:$0xff]
    %v1752 = vld [vmem:[#allocation7 + $0x10] sm:$0xff]
    %v1753 = vld [vmem:[#allocation7 + $0x18] sm:$0xff]
    %v1754 = vld [vmem:[#allocation7 + $0x20] sm:$0xff]
    %v1755 = vld [vmem:[#allocation7 + $0x28] sm:$0xff]
    %v1756 = vld [vmem:[#allocation7 + $0x30] sm:$0xff]
    %v1757 = vld [vmem:[#allocation7 + $0x38] sm:$0xff]
    %v1758 = vld [vmem:[#allocation7 + $0x40] sm:$0xff]
    %v1759 = vld [vmem:[#allocation7 + $0x48] sm:$0xff]
    %v1760 = vld [vmem:[#allocation7 + $0x50] sm:$0xff]
    %v1761 = vld [vmem:[#allocation7 + $0x58] sm:$0xff]
    %v1762 = vld [vmem:[#allocation7 + $0x60] sm:$0xff]
    %v1763 = vld [vmem:[#allocation7 + $0x68] sm:$0xff]
    %v1764 = vld [vmem:[#allocation7 + $0x70] sm:$0xff]
    %v1765 = vld [vmem:[#allocation7 + $0x78] sm:$0xff]
    %v1767 = vsel %vm321, %v1749, 0
    %1769 = vmatprep.subr.mxu0 %v1751
    %1770 = vmatpush1.msra.mxu0 %v1750
    %1771 = vmatprep.subr.mxu0 %v1755
    %1772 = vmatpush1.msra.mxu0 %v1754
    %1773 = vmatprep.subr.mxu0 %v1759
    %1774 = vmatpush1.msra.mxu0 %v1758
    %1775 = vmatprep.subr.mxu0 %v1763
    %1776 = vmatpush1.msra.mxu0 %v1762
    %1777 = vmatprep.subr.mxu0 0.0
    %1778 = vmatpush1.msra.mxu0 0.0
    %1779 = vmatprep.subr.mxu0 0.0
    %1780 = vmatpush1.msra.mxu0 0.0
    %1781 = vmatprep.subr.mxu0 0.0
    %1782 = vmatpush1.msra.mxu0 0.0
    %1783 = vmatprep.subr.mxu0 0.0
    %1784 = vmatpush1.msra.mxu0 0.0
    %1785 = vmatprep.subr.mxu0 0.0
    %1786 = vmatpush1.msra.mxu0 0.0
    %1787 = vmatprep.subr.mxu0 0.0
    %1788 = vmatpush1.msra.mxu0 0.0
    %1789 = vmatprep.subr.mxu0 0.0
    %1790 = vmatpush1.msra.mxu0 0.0
    %1791 = vmatprep.subr.mxu0 0.0
    %1792 = vmatpush1.msra.mxu0 0.0
    %1793 = vmatprep.subr.mxu0 0.0
    %1794 = vmatpush1.msra.mxu0 0.0
    %1795 = vmatprep.subr.mxu0 0.0
    %1796 = vmatpush1.msra.mxu0 0.0
    %1797 = vmatprep.subr.mxu0 0.0
    %1798 = vmatpush1.msra.mxu0 0.0
    %1799 = vmatprep.subr.mxu0 0.0
    %1800 = vmatpush1.msra.mxu0 0.0
    %1801 = vmatprep.subr.mxu0 0.0
    %1802 = vmatpush1.msra.mxu0 0.0
    %1803 = vmatprep.subr.mxu0 0.0
    %1804 = vmatpush1.msra.mxu0 0.0
    %1805 = vmatprep.subr.mxu0 0.0
    %1806 = vmatpush1.msra.mxu0 0.0
    %1807 = vmatprep.subr.mxu0 0.0
    %1808 = vmatpush1.msra.mxu0 0.0
    %1809 = vmatprep.subr.mxu0 0.0
    %1810 = vmatpush1.msra.mxu0 0.0
    %1811 = vmatprep.subr.mxu0 0.0
    %1812 = vmatpush1.msra.mxu0 0.0
    %1813 = vmatprep.subr.mxu0 0.0
    %1814 = vmatpush1.msra.mxu0 0.0
    %1815 = vmatprep.subr.mxu0 0.0
    %1816 = vmatpush1.msra.mxu0 0.0
    %1817 = vmatprep.subr.mxu0 0.0
    %1818 = vmatpush1.msra.mxu0 0.0
    %1819 = vmatprep.subr.mxu0 0.0
    %1820 = vmatpush1.msra.mxu0 0.0
    %1821 = vmatprep.subr.mxu0 0.0
    %1822 = vmatpush1.msra.mxu0 0.0
    %1823 = vmatprep.subr.mxu0 0.0
    %1824 = vmatpush1.msra.mxu0 0.0
    %1825 = vmatprep.subr.mxu0 0.0
    %1826 = vmatpush1.msra.mxu0 0.0
    %1827 = vmatprep.subr.mxu0 0.0
    %1828 = vmatpush1.msra.mxu0 0.0
    %1829 = vmatprep.subr.mxu0 0.0
    %1830 = vmatpush1.msra.mxu0 0.0
    %1831 = vmatprep.subr.mxu0 0.0
    %1832 = vmatpush1.msra.mxu0 0.0
    %1833 = vmatprep.mubr.f32.mxu0 0.0
    %1834 = vmatmul.mubr.f32.gmra.mrb[0].mxu0 %v1767
    %v1835 = vpop.f32.mrb[0].mxu0
    %v1836 = vadd.f32 0.0, %v1835
    %v1837 = vpop.f32.mrb[0].mxu0
    %v1838 = vadd.f32 0.0, %v1837
    %1839 = vdwg.mxu0
    %1840 = vmatprep.subr.mxu0 %v1753
    %1841 = vmatpush1.msra.mxu0 %v1752
    %1842 = vmatprep.subr.mxu0 %v1757
    %1843 = vmatpush1.msra.mxu0 %v1756
    %1844 = vmatprep.subr.mxu0 %v1761
    %1845 = vmatpush1.msra.mxu0 %v1760
    %1846 = vmatprep.subr.mxu0 %v1765
    %1847 = vmatpush1.msra.mxu0 %v1764
    %1848 = vmatprep.subr.mxu0 0.0
    %1849 = vmatpush1.msra.mxu0 0.0
    %1850 = vmatprep.subr.mxu0 0.0
    %1851 = vmatpush1.msra.mxu0 0.0
    %1852 = vmatprep.subr.mxu0 0.0
    %1853 = vmatpush1.msra.mxu0 0.0
    %1854 = vmatprep.subr.mxu0 0.0
    %1855 = vmatpush1.msra.mxu0 0.0
    %1856 = vmatprep.subr.mxu0 0.0
    %1857 = vmatpush1.msra.mxu0 0.0
    %1858 = vmatprep.subr.mxu0 0.0
    %1859 = vmatpush1.msra.mxu0 0.0
    %1860 = vmatprep.subr.mxu0 0.0
    %1861 = vmatpush1.msra.mxu0 0.0
    %1862 = vmatprep.subr.mxu0 0.0
    %1863 = vmatpush1.msra.mxu0 0.0
    %1864 = vmatprep.subr.mxu0 0.0
    %1865 = vmatpush1.msra.mxu0 0.0
    %1866 = vmatprep.subr.mxu0 0.0
    %1867 = vmatpush1.msra.mxu0 0.0
    %1868 = vmatprep.subr.mxu0 0.0
    %1869 = vmatpush1.msra.mxu0 0.0
    %1870 = vmatprep.subr.mxu0 0.0
    %1871 = vmatpush1.msra.mxu0 0.0
    %1872 = vmatprep.subr.mxu0 0.0
    %1873 = vmatpush1.msra.mxu0 0.0
    %1874 = vmatprep.subr.mxu0 0.0
    %1875 = vmatpush1.msra.mxu0 0.0
    %1876 = vmatprep.subr.mxu0 0.0
    %1877 = vmatpush1.msra.mxu0 0.0
    %1878 = vmatprep.subr.mxu0 0.0
    %1879 = vmatpush1.msra.mxu0 0.0
    %1880 = vmatprep.subr.mxu0 0.0
    %1881 = vmatpush1.msra.mxu0 0.0
    %1882 = vmatprep.subr.mxu0 0.0
    %1883 = vmatpush1.msra.mxu0 0.0
    %1884 = vmatprep.subr.mxu0 0.0
    %1885 = vmatpush1.msra.mxu0 0.0
    %1886 = vmatprep.subr.mxu0 0.0
    %1887 = vmatpush1.msra.mxu0 0.0
    %1888 = vmatprep.subr.mxu0 0.0
    %1889 = vmatpush1.msra.mxu0 0.0
    %1890 = vmatprep.subr.mxu0 0.0
    %1891 = vmatpush1.msra.mxu0 0.0
    %1892 = vmatprep.subr.mxu0 0.0
    %1893 = vmatpush1.msra.mxu0 0.0
    %1894 = vmatprep.subr.mxu0 0.0
    %1895 = vmatpush1.msra.mxu0 0.0
    %1896 = vmatprep.subr.mxu0 0.0
    %1897 = vmatpush1.msra.mxu0 0.0
    %1898 = vmatprep.subr.mxu0 0.0
    %1899 = vmatpush1.msra.mxu0 0.0
    %1900 = vmatprep.subr.mxu0 0.0
    %1901 = vmatpush1.msra.mxu0 0.0
    %1902 = vmatprep.subr.mxu0 0.0
    %1903 = vmatpush1.msra.mxu0 0.0
    %1904 = vmatprep.mubr.f32.mxu0 0.0
    %1905 = vmatmul.mubr.f32.gmra.mrb[0].mxu0 %v1767
    %v1906 = vpop.f32.mrb[0].mxu0
    %v1907 = vadd.f32 0.0, %v1906
    %v1908 = vpop.f32.mrb[0].mxu0
    %v1909 = vadd.f32 0.0, %v1908
    %1910 = vdwg.mxu0
    %v1911 = vlaneseq
    %v1912 = vshrl.u32 %v1911, 7
    %v1913 = vsub.s32 0, %v1912
    %v1914 = vrot.slane %v1836, %v1913
    %v1915 = vlaneseq
    %v1916 = vshrl.u32 %v1915, 7
    %v1917 = vsub.s32 0, %v1916
    %v1918 = vrot.slane %v1838, %v1917
    %v1919 = vlaneseq
    %v1920 = vshrl.u32 %v1919, 7
    %v1921 = vsub.s32 0, %v1920
    %v1922 = vrot.slane %v1907, %v1921
    %v1923 = vlaneseq
    %v1924 = vshrl.u32 %v1923, 7
    %v1925 = vsub.s32 0, %v1924
    %v1926 = vrot.slane %v1909, %v1925
    %v1927 = vmul.f32 %v1417, %v1914
    %v1928 = vmul.f32 %v1418, %v1918
    %v1929 = vmul.f32 %v1419, %v1922
    %v1930 = vmul.f32 %v1420, %v1926
    %v1931 = vmul.f32 %v1421, %v1914
    %v1932 = vmul.f32 %v1422, %v1918
    %v1933 = vmul.f32 %v1423, %v1922
    %v1934 = vmul.f32 %v1424, %v1926
    %v1935 = vmul.f32 %v1425, %v1914
    %v1936 = vmul.f32 %v1426, %v1918
    %v1937 = vmul.f32 %v1427, %v1922
    %v1938 = vmul.f32 %v1428, %v1926
    %v1939 = vmul.f32 %v1429, %v1914
    %v1940 = vmul.f32 %v1430, %v1918
    %v1941 = vmul.f32 %v1431, %v1922
    %v1942 = vmul.f32 %v1432, %v1926
    %v1943 = vlaneseq
    %v1944 = vshrl.u32 %v1943, 7
    %v1945 = vsub.s32 1, %v1944
    %v1946 = vrot.slane %v1836, %v1945
    %v1947 = vlaneseq
    %v1948 = vshrl.u32 %v1947, 7
    %v1949 = vsub.s32 1, %v1948
    %v1950 = vrot.slane %v1838, %v1949
    %v1951 = vlaneseq
    %v1952 = vshrl.u32 %v1951, 7
    %v1953 = vsub.s32 1, %v1952
    %v1954 = vrot.slane %v1907, %v1953
    %v1955 = vlaneseq
    %v1956 = vshrl.u32 %v1955, 7
    %v1957 = vsub.s32 1, %v1956
    %v1958 = vrot.slane %v1909, %v1957
    %v1959 = vadd.f32 %v1927, %v1946
    %v1960 = vadd.f32 %v1928, %v1950
    %v1961 = vadd.f32 %v1929, %v1954
    %v1962 = vadd.f32 %v1930, %v1958
    %v1963 = vadd.f32 %v1931, %v1946
    %v1964 = vadd.f32 %v1932, %v1950
    %v1965 = vadd.f32 %v1933, %v1954
    %v1966 = vadd.f32 %v1934, %v1958
    %v1967 = vadd.f32 %v1935, %v1946
    %v1968 = vadd.f32 %v1936, %v1950
    %v1969 = vadd.f32 %v1937, %v1954
    %v1970 = vadd.f32 %v1938, %v1958
    %v1971 = vadd.f32 %v1939, %v1946
    %v1972 = vadd.f32 %v1940, %v1950
    %v1973 = vadd.f32 %v1941, %v1954
    %v1974 = vadd.f32 %v1942, %v1958
    %vm1975 = vcmp.ge.f32.partialorder %v1959, 0.0
    %vm1976 = vcmp.ge.f32.partialorder %v1960, 0.0
    %vm1977 = vcmp.ge.f32.partialorder %v1961, 0.0
    %vm1978 = vcmp.ge.f32.partialorder %v1962, 0.0
    %vm1979 = vcmp.ge.f32.partialorder %v1963, 0.0
    %vm1980 = vcmp.ge.f32.partialorder %v1964, 0.0
    %vm1981 = vcmp.ge.f32.partialorder %v1965, 0.0
    %vm1982 = vcmp.ge.f32.partialorder %v1966, 0.0
    %vm1983 = vcmp.ge.f32.partialorder %v1967, 0.0
    %vm1984 = vcmp.ge.f32.partialorder %v1968, 0.0
    %vm1985 = vcmp.ge.f32.partialorder %v1969, 0.0
    %vm1986 = vcmp.ge.f32.partialorder %v1970, 0.0
    %vm1987 = vcmp.ge.f32.partialorder %v1971, 0.0
    %vm1988 = vcmp.ge.f32.partialorder %v1972, 0.0
    %vm1989 = vcmp.ge.f32.partialorder %v1973, 0.0
    %vm1990 = vcmp.ge.f32.partialorder %v1974, 0.0
    %v1991 = vmul.f32 %v1959, 0.01
    %v1992 = vmul.f32 %v1960, 0.01
    %v1993 = vmul.f32 %v1961, 0.01
    %v1994 = vmul.f32 %v1962, 0.01
    %v1995 = vmul.f32 %v1963, 0.01
    %v1996 = vmul.f32 %v1964, 0.01
    %v1997 = vmul.f32 %v1965, 0.01
    %v1998 = vmul.f32 %v1966, 0.01
    %v1999 = vmul.f32 %v1967, 0.01
    %v2000 = vmul.f32 %v1968, 0.01
    %v2001 = vmul.f32 %v1969, 0.01
    %v2002 = vmul.f32 %v1970, 0.01
    %v2003 = vmul.f32 %v1971, 0.01
    %v2004 = vmul.f32 %v1972, 0.01
    %v2005 = vmul.f32 %v1973, 0.01
    %v2006 = vmul.f32 %v1974, 0.01
    %v2007 = vsel %vm1975, %v1959, %v1991
    %v2008 = vsel %vm1976, %v1960, %v1992
    %v2009 = vsel %vm1977, %v1961, %v1993
    %v2010 = vsel %vm1978, %v1962, %v1994
    %v2011 = vsel %vm1979, %v1963, %v1995
    %v2012 = vsel %vm1980, %v1964, %v1996
    %v2013 = vsel %vm1981, %v1965, %v1997
    %v2014 = vsel %vm1982, %v1966, %v1998
    %v2015 = vsel %vm1983, %v1967, %v1999
    %v2016 = vsel %vm1984, %v1968, %v2000
    %v2017 = vsel %vm1985, %v1969, %v2001
    %v2018 = vsel %vm1986, %v1970, %v2002
    %v2019 = vsel %vm1987, %v1971, %v2003
    %v2020 = vsel %vm1988, %v1972, %v2004
    %v2021 = vsel %vm1989, %v1973, %v2005
    %v2022 = vsel %vm1990, %v1974, %v2006
    %v2031 = vrot.slane %v2007, 7
    %v2032 = vrot.slane %v2008, 7
    %v2033 = vrot.slane %v2009, 7
    %v2034 = vrot.slane %v2010, 7
    %v2035 = vrot.slane %v2011, 7
    %v2036 = vsel %vm1521, %v2031, %v2035
    %v2037 = vrot.slane %v2012, 7
    %v2038 = vsel %vm1521, %v2032, %v2037
    %v2039 = vrot.slane %v2013, 7
    %v2040 = vsel %vm1521, %v2033, %v2039
    %v2041 = vrot.slane %v2014, 7
    %v2042 = vsel %vm1521, %v2034, %v2041
    %2043 = vrot.lane.b32.xlu0 %v2031, 32
    %v2044 = vpop.permute.xlu0 %2043
    %2045 = vrot.lane.b32.xlu0 %v2032, 32
    %v2046 = vpop.permute.xlu0 %2045
    %2047 = vrot.lane.b32.xlu0 %v2033, 32
    %v2048 = vpop.permute.xlu0 %2047
    %2049 = vrot.lane.b32.xlu0 %v2034, 32
    %v2050 = vpop.permute.xlu0 %2049
    %2051 = vrot.lane.b32.xlu0 %v2036, 32
    %v2052 = vpop.permute.xlu0 %2051
    %2053 = vrot.lane.b32.xlu0 %v2038, 32
    %v2054 = vpop.permute.xlu0 %2053
    %2055 = vrot.lane.b32.xlu0 %v2040, 32
    %v2056 = vpop.permute.xlu0 %2055
    %2057 = vrot.lane.b32.xlu0 %v2042, 32
    %v2058 = vpop.permute.xlu0 %2057
    %2059 = vrot.lane.b32.xlu0 %v2035, 32
    %v2060 = vpop.permute.xlu0 %2059
    %2061 = vrot.lane.b32.xlu0 %v2037, 32
    %v2062 = vpop.permute.xlu0 %2061
    %2063 = vrot.lane.b32.xlu0 %v2039, 32
    %v2064 = vpop.permute.xlu0 %2063
    %2065 = vrot.lane.b32.xlu0 %v2041, 32
    %v2066 = vpop.permute.xlu0 %2065
    %v2067 = vsel %vm321, %v2044, %v2046
    %v2068 = vsel %vm321, %v2046, %v2048
    %v2069 = vsel %vm321, %v2048, %v2050
    %v2070 = vsel %vm321, %v2052, %v2054
    %v2071 = vsel %vm321, %v2054, %v2056
    %v2072 = vsel %vm321, %v2056, %v2058
    %v2073 = vsel %vm321, %v2060, %v2062
    %v2074 = vsel %vm321, %v2062, %v2064
    %v2075 = vsel %vm321, %v2064, %v2066
    %vm2091 = vcmask 1047809
    %2092 = vst.msk [vmem:[#allocation2] sm:$0xfe] %vm2091, %v2044
    %2093 = vst [vmem:[#allocation2 + $0x8] sm:$0xfe] %v2067
    %2094 = vst [vmem:[#allocation2 + $0x10] sm:$0xfe] %v2068
    %2095 = vst [vmem:[#allocation2 + $0x18] sm:$0xfe] %v2069
    %vm2096 = vcmask 261121
    %2097 = vst.msk [vmem:[#allocation2 + $0x20] sm:$0xfe] %vm2096, %v2050
    %vm2098 = vcmask 1047808
    %2099 = vst.msk [vmem:[#allocation2 + $0x28] sm:$0xff] %vm2098, %v2052
    %2100 = vst [vmem:[#allocation2 + $0x30] sm:$0xff] %v2070
    %2101 = vst [vmem:[#allocation2 + $0x38] sm:$0xff] %v2071
    %2102 = vst [vmem:[#allocation2 + $0x40] sm:$0xff] %v2072
    %2103 = vst.msk [vmem:[#allocation2 + $0x48] sm:$0xff] %vm321, %v2058
    %vm2104 = vcmask 1040640
    %2105 = vst.msk [vmem:[#allocation2 + $0x50] sm:$0x1] %vm2104, %v2060
    %2106 = vst [vmem:[#allocation2 + $0x58] sm:$0x1] %v2073
    %2107 = vst [vmem:[#allocation2 + $0x60] sm:$0x1] %v2074
    %2108 = vst [vmem:[#allocation2 + $0x68] sm:$0x1] %v2075
    %vm2109 = vcmask 253952
    %2110 = vst.msk [vmem:[#allocation2 + $0x70] sm:$0x1] %vm2109, %v2066
    %vm2119 = vcmask 1042432
    %v2120 = vrot.slane %v2015, 5
    %v2121 = vrot.slane %v2016, 5
    %v2122 = vrot.slane %v2017, 5
    %v2123 = vrot.slane %v2018, 5
    %v2124 = vrot.slane %v2019, 5
    %v2125 = vsel %vm2119, %v2120, %v2124
    %v2126 = vrot.slane %v2020, 5
    %v2127 = vsel %vm2119, %v2121, %v2126
    %v2128 = vrot.slane %v2021, 5
    %v2129 = vsel %vm2119, %v2122, %v2128
    %v2130 = vrot.slane %v2022, 5
    %v2131 = vsel %vm2119, %v2123, %v2130
    %2132 = vrot.lane.b32.xlu0 %v2120, 32
    %v2133 = vpop.permute.xlu0 %2132
    %2134 = vrot.lane.b32.xlu0 %v2121, 32
    %v2135 = vpop.permute.xlu0 %2134
    %2136 = vrot.lane.b32.xlu0 %v2122, 32
    %v2137 = vpop.permute.xlu0 %2136
    %2138 = vrot.lane.b32.xlu0 %v2123, 32
    %v2139 = vpop.permute.xlu0 %2138
    %2140 = vrot.lane.b32.xlu0 %v2125, 32
    %v2141 = vpop.permute.xlu0 %2140
    %2142 = vrot.lane.b32.xlu0 %v2127, 32
    %v2143 = vpop.permute.xlu0 %2142
    %2144 = vrot.lane.b32.xlu0 %v2129, 32
    %v2145 = vpop.permute.xlu0 %2144
    %2146 = vrot.lane.b32.xlu0 %v2131, 32
    %v2147 = vpop.permute.xlu0 %2146
    %2148 = vrot.lane.b32.xlu0 %v2124, 32
    %v2149 = vpop.permute.xlu0 %2148
    %2150 = vrot.lane.b32.xlu0 %v2126, 32
    %v2151 = vpop.permute.xlu0 %2150
    %2152 = vrot.lane.b32.xlu0 %v2128, 32
    %v2153 = vpop.permute.xlu0 %2152
    %2154 = vrot.lane.b32.xlu0 %v2130, 32
    %v2155 = vpop.permute.xlu0 %2154
    %v2156 = vsel %vm321, %v2133, %v2135
    %v2157 = vsel %vm321, %v2135, %v2137
    %v2158 = vsel %vm321, %v2137, %v2139
    %v2159 = vsel %vm321, %v2141, %v2143
    %v2160 = vsel %vm321, %v2143, %v2145
    %v2161 = vsel %vm321, %v2145, %v2147
    %v2162 = vsel %vm321, %v2149, %v2151
    %v2163 = vsel %vm321, %v2151, %v2153
    %v2164 = vsel %vm321, %v2153, %v2155
    %vm2180 = vcmask 1047811
    %2181 = vst.msk [vmem:[#allocation2 + $0x50] sm:$0xf8] %vm2180, %v2133
    %2182 = vst [vmem:[#allocation2 + $0x58] sm:$0xf8] %v2156
    %2183 = vst [vmem:[#allocation2 + $0x60] sm:$0xf8] %v2157
    %2184 = vst [vmem:[#allocation2 + $0x68] sm:$0xf8] %v2158
    %vm2185 = vcmask 261123
    %2186 = vst.msk [vmem:[#allocation2 + $0x70] sm:$0xf8] %vm2185, %v2139
    %2187 = vst.msk [vmem:[#allocation2 + $0x78] sm:$0xff] %vm2098, %v2141
    %2188 = vst [vmem:[#allocation2 + $0x80] sm:$0xff] %v2159
    %2189 = vst [vmem:[#allocation2 + $0x88] sm:$0xff] %v2160
    %2190 = vst [vmem:[#allocation2 + $0x90] sm:$0xff] %v2161
    %2191 = vst.msk [vmem:[#allocation2 + $0x98] sm:$0xff] %vm321, %v2147
    %vm2192 = vcmask 1042688
    %2193 = vst.msk [vmem:[#allocation2 + $0xa0] sm:$0x7] %vm2192, %v2149
    %2194 = vst [vmem:[#allocation2 + $0xa8] sm:$0x7] %v2162
    %2195 = vst [vmem:[#allocation2 + $0xb0] sm:$0x7] %v2163
    %2196 = vst [vmem:[#allocation2 + $0xb8] sm:$0x7] %v2164
    %vm2197 = vcmask 256000
    %2198 = vst.msk [vmem:[#allocation2 + $0xc0] sm:$0x7] %vm2197, %v2155
    %v2199 = vld [vmem:[#allocation2] sm:$0xff]
    %v2200 = vld [vmem:[#allocation2 + $0x8] sm:$0xff]
    %v2201 = vld [vmem:[#allocation2 + $0x10] sm:$0xff]
    %v2202 = vld [vmem:[#allocation2 + $0x18] sm:$0xff]
    %v2203 = vld [vmem:[#allocation2 + $0x20] sm:$0xff]
    %v2204 = vld [vmem:[#allocation2 + $0x28] sm:$0xff]
    %v2205 = vld [vmem:[#allocation2 + $0x30] sm:$0xff]
    %v2206 = vld [vmem:[#allocation2 + $0x38] sm:$0xff]
    %v2207 = vld [vmem:[#allocation2 + $0x40] sm:$0xff]
    %v2208 = vld [vmem:[#allocation2 + $0x48] sm:$0xff]
    %v2209 = vld [vmem:[#allocation2 + $0x50] sm:$0xff]
    %v2210 = vld [vmem:[#allocation2 + $0x58] sm:$0xff]
    %v2211 = vld [vmem:[#allocation2 + $0x60] sm:$0xff]
    %v2212 = vld [vmem:[#allocation2 + $0x68] sm:$0xff]
    %v2213 = vld [vmem:[#allocation2 + $0x70] sm:$0xff]
    %v2214 = vld [vmem:[#allocation2 + $0x78] sm:$0xff]
    %v2215 = vld [vmem:[#allocation2 + $0x80] sm:$0xff]
    %v2216 = vld [vmem:[#allocation2 + $0x88] sm:$0xff]
    %v2217 = vld [vmem:[#allocation2 + $0x90] sm:$0xff]
    %v2218 = vld [vmem:[#allocation2 + $0x98] sm:$0xff]
    %v2219 = vld [vmem:[#allocation2 + $0xa0] sm:$0xf]
    %v2220 = vld [vmem:[#allocation2 + $0xa8] sm:$0xf]
    %v2221 = vld [vmem:[#allocation2 + $0xb0] sm:$0xf]
    %v2222 = vld [vmem:[#allocation2 + $0xb8] sm:$0xf]
    %v2223 = vld [vmem:[#allocation2 + $0xc0] sm:$0xf]
    %v2224 = vld [vmem:[#allocation10] sm:$0xff]
    %v2225 = vld [vmem:[#allocation10 + $0x8] sm:$0xff]
    %vm2226 = vcmask 293888
    %v2228 = vsel %vm2226, %v2224, 0
    %v2231 = vsel %vm2226, %v2225, 0
    %v2234 = vsel %vm358, %v2219, 0
    %v2237 = vsel %vm358, %v2220, 0
    %v2240 = vsel %vm358, %v2221, 0
    %v2243 = vsel %vm358, %v2222, 0
    %v2246 = vsel %vm358, %v2223, 0
    %2248 = vmatprep.subr.mxu0 %v2200
    %2249 = vmatpush1.msra.mxu0 %v2199
    %2250 = vmatprep.subr.mxu0 %v2205
    %2251 = vmatpush1.msra.mxu0 %v2204
    %2252 = vmatprep.subr.mxu0 %v2210
    %2253 = vmatpush1.msra.mxu0 %v2209
    %2254 = vmatprep.subr.mxu0 %v2215
    %2255 = vmatpush1.msra.mxu0 %v2214
    %2256 = vmatprep.subr.mxu0 %v2237
    %2257 = vmatpush1.msra.mxu0 %v2234
    %2258 = vmatprep.subr.mxu0 0.0
    %2259 = vmatpush1.msra.mxu0 0.0
    %2260 = vmatprep.subr.mxu0 0.0
    %2261 = vmatpush1.msra.mxu0 0.0
    %2262 = vmatprep.subr.mxu0 0.0
    %2263 = vmatpush1.msra.mxu0 0.0
    %2264 = vmatprep.subr.mxu0 0.0
    %2265 = vmatpush1.msra.mxu0 0.0
    %2266 = vmatprep.subr.mxu0 0.0
    %2267 = vmatpush1.msra.mxu0 0.0
    %2268 = vmatprep.subr.mxu0 0.0
    %2269 = vmatpush1.msra.mxu0 0.0
    %2270 = vmatprep.subr.mxu0 0.0
    %2271 = vmatpush1.msra.mxu0 0.0
    %2272 = vmatprep.subr.mxu0 0.0
    %2273 = vmatpush1.msra.mxu0 0.0
    %2274 = vmatprep.subr.mxu0 0.0
    %2275 = vmatpush1.msra.mxu0 0.0
    %2276 = vmatprep.subr.mxu0 0.0
    %2277 = vmatpush1.msra.mxu0 0.0
    %2278 = vmatprep.subr.mxu0 0.0
    %2279 = vmatpush1.msra.mxu0 0.0
    %2280 = vmatprep.subr.mxu0 0.0
    %2281 = vmatpush1.msra.mxu0 0.0
    %2282 = vmatprep.subr.mxu0 0.0
    %2283 = vmatpush1.msra.mxu0 0.0
    %2284 = vmatprep.subr.mxu0 0.0
    %2285 = vmatpush1.msra.mxu0 0.0
    %2286 = vmatprep.subr.mxu0 0.0
    %2287 = vmatpush1.msra.mxu0 0.0
    %2288 = vmatprep.subr.mxu0 0.0
    %2289 = vmatpush1.msra.mxu0 0.0
    %2290 = vmatprep.subr.mxu0 0.0
    %2291 = vmatpush1.msra.mxu0 0.0
    %2292 = vmatprep.subr.mxu0 0.0
    %2293 = vmatpush1.msra.mxu0 0.0
    %2294 = vmatprep.subr.mxu0 0.0
    %2295 = vmatpush1.msra.mxu0 0.0
    %2296 = vmatprep.subr.mxu0 0.0
    %2297 = vmatpush1.msra.mxu0 0.0
    %2298 = vmatprep.subr.mxu0 0.0
    %2299 = vmatpush1.msra.mxu0 0.0
    %2300 = vmatprep.subr.mxu0 0.0
    %2301 = vmatpush1.msra.mxu0 0.0
    %2302 = vmatprep.subr.mxu0 0.0
    %2303 = vmatpush1.msra.mxu0 0.0
    %2304 = vmatprep.subr.mxu0 0.0
    %2305 = vmatpush1.msra.mxu0 0.0
    %2306 = vmatprep.subr.mxu0 0.0
    %2307 = vmatpush1.msra.mxu0 0.0
    %2308 = vmatprep.subr.mxu0 0.0
    %2309 = vmatpush1.msra.mxu0 0.0
    %2310 = vmatprep.subr.mxu0 0.0
    %2311 = vmatpush1.msra.mxu0 0.0
    %2312 = vmatprep.mubr.f32.mxu0 0.0
    %2313 = vmatmul.mubr.f32.gmra.mrb[0].mxu0 %v2228
    %v2314 = vpop.f32.mrb[0].mxu0
    %v2315 = vadd.f32 0.0, %v2314
    %v2316 = vpop.f32.mrb[0].mxu0
    %v2317 = vadd.f32 0.0, %v2316
    %2318 = vmatprep.mubr.f32.mxu0 0.0
    %2319 = vmatmul.mubr.f32.gmra.mrb[0].mxu0 %v2231
    %v2320 = vpop.f32.mrb[0].mxu0
    %v2321 = vadd.f32 0.0, %v2320
    %v2322 = vpop.f32.mrb[0].mxu0
    %v2323 = vadd.f32 0.0, %v2322
    %2324 = vdwg.mxu0
    %2325 = vmatprep.subr.mxu0 %v2202
    %2326 = vmatpush1.msra.mxu0 %v2201
    %2327 = vmatprep.subr.mxu0 %v2207
    %2328 = vmatpush1.msra.mxu0 %v2206
    %2329 = vmatprep.subr.mxu0 %v2212
    %2330 = vmatpush1.msra.mxu0 %v2211
    %2331 = vmatprep.subr.mxu0 %v2217
    %2332 = vmatpush1.msra.mxu0 %v2216
    %2333 = vmatprep.subr.mxu0 %v2243
    %2334 = vmatpush1.msra.mxu0 %v2240
    %2335 = vmatprep.subr.mxu0 0.0
    %2336 = vmatpush1.msra.mxu0 0.0
    %2337 = vmatprep.subr.mxu0 0.0
    %2338 = vmatpush1.msra.mxu0 0.0
    %2339 = vmatprep.subr.mxu0 0.0
    %2340 = vmatpush1.msra.mxu0 0.0
    %2341 = vmatprep.subr.mxu0 0.0
    %2342 = vmatpush1.msra.mxu0 0.0
    %2343 = vmatprep.subr.mxu0 0.0
    %2344 = vmatpush1.msra.mxu0 0.0
    %2345 = vmatprep.subr.mxu0 0.0
    %2346 = vmatpush1.msra.mxu0 0.0
    %2347 = vmatprep.subr.mxu0 0.0
    %2348 = vmatpush1.msra.mxu0 0.0
    %2349 = vmatprep.subr.mxu0 0.0
    %2350 = vmatpush1.msra.mxu0 0.0
    %2351 = vmatprep.subr.mxu0 0.0
    %2352 = vmatpush1.msra.mxu0 0.0
    %2353 = vmatprep.subr.mxu0 0.0
    %2354 = vmatpush1.msra.mxu0 0.0
    %2355 = vmatprep.subr.mxu0 0.0
    %2356 = vmatpush1.msra.mxu0 0.0
    %2357 = vmatprep.subr.mxu0 0.0
    %2358 = vmatpush1.msra.mxu0 0.0
    %2359 = vmatprep.subr.mxu0 0.0
    %2360 = vmatpush1.msra.mxu0 0.0
    %2361 = vmatprep.subr.mxu0 0.0
    %2362 = vmatpush1.msra.mxu0 0.0
    %2363 = vmatprep.subr.mxu0 0.0
    %2364 = vmatpush1.msra.mxu0 0.0
    %2365 = vmatprep.subr.mxu0 0.0
    %2366 = vmatpush1.msra.mxu0 0.0
    %2367 = vmatprep.subr.mxu0 0.0
    %2368 = vmatpush1.msra.mxu0 0.0
    %2369 = vmatprep.subr.mxu0 0.0
    %2370 = vmatpush1.msra.mxu0 0.0
    %2371 = vmatprep.subr.mxu0 0.0
    %2372 = vmatpush1.msra.mxu0 0.0
    %2373 = vmatprep.subr.mxu0 0.0
    %2374 = vmatpush1.msra.mxu0 0.0
    %2375 = vmatprep.subr.mxu0 0.0
    %2376 = vmatpush1.msra.mxu0 0.0
    %2377 = vmatprep.subr.mxu0 0.0
    %2378 = vmatpush1.msra.mxu0 0.0
    %2379 = vmatprep.subr.mxu0 0.0
    %2380 = vmatpush1.msra.mxu0 0.0
    %2381 = vmatprep.subr.mxu0 0.0
    %2382 = vmatpush1.msra.mxu0 0.0
    %2383 = vmatprep.subr.mxu0 0.0
    %2384 = vmatpush1.msra.mxu0 0.0
    %2385 = vmatprep.subr.mxu0 0.0
    %2386 = vmatpush1.msra.mxu0 0.0
    %2387 = vmatprep.subr.mxu0 0.0
    %2388 = vmatpush1.msra.mxu0 0.0
    %2389 = vmatprep.mubr.f32.mxu0 0.0
    %2390 = vmatmul.mubr.f32.gmra.mrb[0].mxu0 %v2228
    %v2391 = vpop.f32.mrb[0].mxu0
    %v2392 = vadd.f32 0.0, %v2391
    %v2393 = vpop.f32.mrb[0].mxu0
    %v2394 = vadd.f32 0.0, %v2393
    %2395 = vmatprep.mubr.f32.mxu0 0.0
    %2396 = vmatmul.mubr.f32.gmra.mrb[0].mxu0 %v2231
    %v2397 = vpop.f32.mrb[0].mxu0
    %v2398 = vadd.f32 0.0, %v2397
    %v2399 = vpop.f32.mrb[0].mxu0
    %v2400 = vadd.f32 0.0, %v2399
    %2401 = vdwg.mxu0
    %2402 = vmatprep.subr.mxu0 0.0
    %2403 = vmatpush1.msra.mxu0 %v2203
    %2404 = vmatprep.subr.mxu0 0.0
    %2405 = vmatpush1.msra.mxu0 %v2208
    %2406 = vmatprep.subr.mxu0 0.0
    %2407 = vmatpush1.msra.mxu0 %v2213
    %2408 = vmatprep.subr.mxu0 0.0
    %2409 = vmatpush1.msra.mxu0 %v2218
    %2410 = vmatprep.subr.mxu0 0.0
    %2411 = vmatpush1.msra.mxu0 %v2246
    %2412 = vmatprep.subr.mxu0 0.0
    %2413 = vmatpush1.msra.mxu0 0.0
    %2414 = vmatprep.subr.mxu0 0.0
    %2415 = vmatpush1.msra.mxu0 0.0
    %2416 = vmatprep.subr.mxu0 0.0
    %2417 = vmatpush1.msra.mxu0 0.0
    %2418 = vmatprep.subr.mxu0 0.0
    %2419 = vmatpush1.msra.mxu0 0.0
    %2420 = vmatprep.subr.mxu0 0.0
    %2421 = vmatpush1.msra.mxu0 0.0
    %2422 = vmatprep.subr.mxu0 0.0
    %2423 = vmatpush1.msra.mxu0 0.0
    %2424 = vmatprep.subr.mxu0 0.0
    %2425 = vmatpush1.msra.mxu0 0.0
    %2426 = vmatprep.subr.mxu0 0.0
    %2427 = vmatpush1.msra.mxu0 0.0
    %2428 = vmatprep.subr.mxu0 0.0
    %2429 = vmatpush1.msra.mxu0 0.0
    %2430 = vmatprep.subr.mxu0 0.0
    %2431 = vmatpush1.msra.mxu0 0.0
    %2432 = vmatprep.subr.mxu0 0.0
    %2433 = vmatpush1.msra.mxu0 0.0
    %2434 = vmatprep.subr.mxu0 0.0
    %2435 = vmatpush1.msra.mxu0 0.0
    %2436 = vmatprep.subr.mxu0 0.0
    %2437 = vmatpush1.msra.mxu0 0.0
    %2438 = vmatprep.subr.mxu0 0.0
    %2439 = vmatpush1.msra.mxu0 0.0
    %2440 = vmatprep.subr.mxu0 0.0
    %2441 = vmatpush1.msra.mxu0 0.0
    %2442 = vmatprep.subr.mxu0 0.0
    %2443 = vmatpush1.msra.mxu0 0.0
    %2444 = vmatprep.subr.mxu0 0.0
    %2445 = vmatpush1.msra.mxu0 0.0
    %2446 = vmatprep.subr.mxu0 0.0
    %2447 = vmatpush1.msra.mxu0 0.0
    %2448 = vmatprep.subr.mxu0 0.0
    %2449 = vmatpush1.msra.mxu0 0.0
    %2450 = vmatprep.subr.mxu0 0.0
    %2451 = vmatpush1.msra.mxu0 0.0
    %2452 = vmatprep.subr.mxu0 0.0
    %2453 = vmatpush1.msra.mxu0 0.0
    %2454 = vmatprep.subr.mxu0 0.0
    %2455 = vmatpush1.msra.mxu0 0.0
    %2456 = vmatprep.subr.mxu0 0.0
    %2457 = vmatpush1.msra.mxu0 0.0
    %2458 = vmatprep.subr.mxu0 0.0
    %2459 = vmatpush1.msra.mxu0 0.0
    %2460 = vmatprep.subr.mxu0 0.0
    %2461 = vmatpush1.msra.mxu0 0.0
    %2462 = vmatprep.subr.mxu0 0.0
    %2463 = vmatpush1.msra.mxu0 0.0
    %2464 = vmatprep.subr.mxu0 0.0
    %2465 = vmatpush1.msra.mxu0 0.0
    %2466 = vmatprep.mubr.f32.mxu0 0.0
    %2467 = vmatmul.mubr.f32.gmra.mrb[0].mxu0 %v2228
    %v2468 = vpop.f32.mrb[0].mxu0
    %v2469 = vadd.f32 0.0, %v2468
    %v2470 = vpop.f32.mrb[0].mxu0
    %2471 = vmatprep.mubr.f32.mxu0 0.0
    %2472 = vmatmul.mubr.f32.gmra.mrb[0].mxu0 %v2231
    %v2473 = vpop.f32.mrb[0].mxu0
    %v2474 = vadd.f32 0.0, %v2473
    %v2475 = vpop.f32.mrb[0].mxu0
    %2476 = vdwg.mxu0
    %v2477 = vld [vmem:[#allocation9] sm:$0xff]
    %v2478 = vld [vmem:[#allocation9 + $0x8] sm:$0xff]
    %v2479 = vld [vmem:[#allocation9 + $0x10] sm:$0xff]
    %v2480 = vld [vmem:[#allocation9 + $0x18] sm:$0xff]
    %v2481 = vld [vmem:[#allocation9 + $0x20] sm:$0xff]
    %v2482 = vld [vmem:[#allocation9 + $0x28] sm:$0xff]
    %v2483 = vld [vmem:[#allocation9 + $0x30] sm:$0xff]
    %v2484 = vld [vmem:[#allocation9 + $0x38] sm:$0xff]
    %v2485 = vld [vmem:[#allocation9 + $0x40] sm:$0xff]
    %v2486 = vld [vmem:[#allocation9 + $0x48] sm:$0xff]
    %v2487 = vld [vmem:[#allocation9 + $0x50] sm:$0xff]
    %v2488 = vld [vmem:[#allocation9 + $0x58] sm:$0xff]
    %v2489 = vld [vmem:[#allocation9 + $0x60] sm:$0xff]
    %v2490 = vld [vmem:[#allocation9 + $0x68] sm:$0xff]
    %v2491 = vld [vmem:[#allocation9 + $0x70] sm:$0xff]
    %v2492 = vld [vmem:[#allocation9 + $0x78] sm:$0xff]
    %v2493 = vld [vmem:[#allocation9 + $0x80] sm:$0xff]
    %v2494 = vld [vmem:[#allocation9 + $0x88] sm:$0xff]
    %v2495 = vld [vmem:[#allocation9 + $0x90] sm:$0xff]
    %v2496 = vld [vmem:[#allocation9 + $0x98] sm:$0xff]
    %v2497 = vld [vmem:[#allocation9 + $0xa0] sm:$0xff]
    %v2498 = vld [vmem:[#allocation9 + $0xa8] sm:$0xff]
    %v2499 = vld [vmem:[#allocation9 + $0xb0] sm:$0xff]
    %v2500 = vld [vmem:[#allocation9 + $0xb8] sm:$0xff]
    %v2501 = vld [vmem:[#allocation9 + $0xc0] sm:$0xff]
    %v2502 = vld [vmem:[#allocation9 + $0xc8] sm:$0xff]
    %v2503 = vld [vmem:[#allocation9 + $0xd0] sm:$0xff]
    %v2504 = vld [vmem:[#allocation9 + $0xd8] sm:$0xff]
    %v2505 = vld [vmem:[#allocation9 + $0xe0] sm:$0xff]
    %v2506 = vld [vmem:[#allocation9 + $0xe8] sm:$0xff]
    %v2507 = vld [vmem:[#allocation9 + $0xf0] sm:$0xff]
    %v2508 = vld [vmem:[#allocation9 + $0xf8] sm:$0xff]
    %v2509 = vld [vmem:[#allocation9 + $0x100] sm:$0xff]
    %v2510 = vld [vmem:[#allocation9 + $0x108] sm:$0xff]
    %v2511 = vld [vmem:[#allocation9 + $0x110] sm:$0xff]
    %v2512 = vld [vmem:[#allocation9 + $0x118] sm:$0xff]
    %v2513 = vld [vmem:[#allocation9 + $0x120] sm:$0xff]
    %v2514 = vld [vmem:[#allocation9 + $0x128] sm:$0xff]
    %v2515 = vld [vmem:[#allocation9 + $0x130] sm:$0xff]
    %v2516 = vld [vmem:[#allocation9 + $0x138] sm:$0xff]
    %v2517 = vld [vmem:[#allocation9 + $0x140] sm:$0xff]
    %v2518 = vld [vmem:[#allocation9 + $0x148] sm:$0xff]
    %v2519 = vld [vmem:[#allocation9 + $0x150] sm:$0xff]
    %v2520 = vld [vmem:[#allocation9 + $0x158] sm:$0xff]
    %v2521 = vld [vmem:[#allocation9 + $0x160] sm:$0xff]
    %v2522 = vld [vmem:[#allocation9 + $0x168] sm:$0xff]
    %v2523 = vld [vmem:[#allocation9 + $0x170] sm:$0xff]
    %v2524 = vld [vmem:[#allocation9 + $0x178] sm:$0xff]
    %v2525 = vld [vmem:[#allocation9 + $0x180] sm:$0xff]
    %v2526 = vld [vmem:[#allocation9 + $0x188] sm:$0xff]
    %v2527 = vld [vmem:[#allocation9 + $0x190] sm:$0xff]
    %v2528 = vld [vmem:[#allocation9 + $0x198] sm:$0xff]
    %v2529 = vld [vmem:[#allocation9 + $0x1a0] sm:$0xff]
    %v2530 = vld [vmem:[#allocation9 + $0x1a8] sm:$0xff]
    %v2531 = vld [vmem:[#allocation9 + $0x1b0] sm:$0xff]
    %v2532 = vld [vmem:[#allocation9 + $0x1b8] sm:$0xff]
    %v2533 = vld [vmem:[#allocation9 + $0x1c0] sm:$0xff]
    %v2534 = vld [vmem:[#allocation9 + $0x1c8] sm:$0xff]
    %v2535 = vld [vmem:[#allocation9 + $0x1d0] sm:$0xff]
    %v2536 = vld [vmem:[#allocation9 + $0x1d8] sm:$0xff]
    %v2537 = vld [vmem:[#allocation9 + $0x1e0] sm:$0xff]
    %v2538 = vld [vmem:[#allocation9 + $0x1e8] sm:$0xff]
    %v2539 = vld [vmem:[#allocation9 + $0x1f0] sm:$0xff]
    %v2540 = vld [vmem:[#allocation9 + $0x1f8] sm:$0xff]
    %v2541 = vld [vmem:[#allocation9 + $0x200] sm:$0xff]
    %v2542 = vld [vmem:[#allocation9 + $0x208] sm:$0xff]
    %v2543 = vld [vmem:[#allocation9 + $0x210] sm:$0xff]
    %v2544 = vld [vmem:[#allocation9 + $0x218] sm:$0xff]
    %v2545 = vld [vmem:[#allocation9 + $0x220] sm:$0xff]
    %v2546 = vld [vmem:[#allocation9 + $0x228] sm:$0xff]
    %v2547 = vld [vmem:[#allocation9 + $0x230] sm:$0xff]
    %v2548 = vld [vmem:[#allocation9 + $0x238] sm:$0xff]
    %s2549 = scalar_lea.vmem [#allocation10], 16
    %v2550 = vld [vmem:[%s2549] sm:$0xff]
    %v2551 = vld [vmem:[%s2549 + $0x8] sm:$0xff]
    %v2553 = vsel %vm2226, %v2550, 0
    %v2556 = vsel %vm2226, %v2551, 0
    %2558 = vmatprep.subr.mxu0 %v2200
    %2559 = vmatpush1.msra.mxu0 %v2199
    %2560 = vmatprep.subr.mxu0 %v2205
    %2561 = vmatpush1.msra.mxu0 %v2204
    %2562 = vmatprep.subr.mxu0 %v2210
    %2563 = vmatpush1.msra.mxu0 %v2209
    %2564 = vmatprep.subr.mxu0 %v2215
    %2565 = vmatpush1.msra.mxu0 %v2214
    %2566 = vmatprep.subr.mxu0 %v2237
    %2567 = vmatpush1.msra.mxu0 %v2234
    %2568 = vmatprep.subr.mxu0 0.0
    %2569 = vmatpush1.msra.mxu0 0.0
    %2570 = vmatprep.subr.mxu0 0.0
    %2571 = vmatpush1.msra.mxu0 0.0
    %2572 = vmatprep.subr.mxu0 0.0
    %2573 = vmatpush1.msra.mxu0 0.0
    %2574 = vmatprep.subr.mxu0 0.0
    %2575 = vmatpush1.msra.mxu0 0.0
    %2576 = vmatprep.subr.mxu0 0.0
    %2577 = vmatpush1.msra.mxu0 0.0
    %2578 = vmatprep.subr.mxu0 0.0
    %2579 = vmatpush1.msra.mxu0 0.0
    %2580 = vmatprep.subr.mxu0 0.0
    %2581 = vmatpush1.msra.mxu0 0.0
    %2582 = vmatprep.subr.mxu0 0.0
    %2583 = vmatpush1.msra.mxu0 0.0
    %2584 = vmatprep.subr.mxu0 0.0
    %2585 = vmatpush1.msra.mxu0 0.0
    %2586 = vmatprep.subr.mxu0 0.0
    %2587 = vmatpush1.msra.mxu0 0.0
    %2588 = vmatprep.subr.mxu0 0.0
    %2589 = vmatpush1.msra.mxu0 0.0
    %2590 = vmatprep.subr.mxu0 0.0
    %2591 = vmatpush1.msra.mxu0 0.0
    %2592 = vmatprep.subr.mxu0 0.0
    %2593 = vmatpush1.msra.mxu0 0.0
    %2594 = vmatprep.subr.mxu0 0.0
    %2595 = vmatpush1.msra.mxu0 0.0
    %2596 = vmatprep.subr.mxu0 0.0
    %2597 = vmatpush1.msra.mxu0 0.0
    %2598 = vmatprep.subr.mxu0 0.0
    %2599 = vmatpush1.msra.mxu0 0.0
    %2600 = vmatprep.subr.mxu0 0.0
    %2601 = vmatpush1.msra.mxu0 0.0
    %2602 = vmatprep.subr.mxu0 0.0
    %2603 = vmatpush1.msra.mxu0 0.0
    %2604 = vmatprep.subr.mxu0 0.0
    %2605 = vmatpush1.msra.mxu0 0.0
    %2606 = vmatprep.subr.mxu0 0.0
    %2607 = vmatpush1.msra.mxu0 0.0
    %2608 = vmatprep.subr.mxu0 0.0
    %2609 = vmatpush1.msra.mxu0 0.0
    %2610 = vmatprep.subr.mxu0 0.0
    %2611 = vmatpush1.msra.mxu0 0.0
    %2612 = vmatprep.subr.mxu0 0.0
    %2613 = vmatpush1.msra.mxu0 0.0
    %2614 = vmatprep.subr.mxu0 0.0
    %2615 = vmatpush1.msra.mxu0 0.0
    %2616 = vmatprep.subr.mxu0 0.0
    %2617 = vmatpush1.msra.mxu0 0.0
    %2618 = vmatprep.subr.mxu0 0.0
    %2619 = vmatpush1.msra.mxu0 0.0
    %2620 = vmatprep.subr.mxu0 0.0
    %2621 = vmatpush1.msra.mxu0 0.0
    %2622 = vmatprep.mubr.f32.mxu0 0.0
    %2623 = vmatmul.mubr.f32.gmra.mrb[0].mxu0 %v2553
    %v2624 = vpop.f32.mrb[0].mxu0
    %v2625 = vadd.f32 0.0, %v2624
    %v2626 = vpop.f32.mrb[0].mxu0
    %v2627 = vadd.f32 0.0, %v2626
    %2628 = vmatprep.mubr.f32.mxu0 0.0
    %2629 = vmatmul.mubr.f32.gmra.mrb[0].mxu0 %v2556
    %v2630 = vpop.f32.mrb[0].mxu0
    %v2631 = vadd.f32 0.0, %v2630
    %v2632 = vpop.f32.mrb[0].mxu0
    %v2633 = vadd.f32 0.0, %v2632
    %2634 = vdwg.mxu0
    %2635 = vmatprep.subr.mxu0 %v2202
    %2636 = vmatpush1.msra.mxu0 %v2201
    %2637 = vmatprep.subr.mxu0 %v2207
    %2638 = vmatpush1.msra.mxu0 %v2206
    %2639 = vmatprep.subr.mxu0 %v2212
    %2640 = vmatpush1.msra.mxu0 %v2211
    %2641 = vmatprep.subr.mxu0 %v2217
    %2642 = vmatpush1.msra.mxu0 %v2216
    %2643 = vmatprep.subr.mxu0 %v2243
    %2644 = vmatpush1.msra.mxu0 %v2240
    %2645 = vmatprep.subr.mxu0 0.0
    %2646 = vmatpush1.msra.mxu0 0.0
    %2647 = vmatprep.subr.mxu0 0.0
    %2648 = vmatpush1.msra.mxu0 0.0
    %2649 = vmatprep.subr.mxu0 0.0
    %2650 = vmatpush1.msra.mxu0 0.0
    %2651 = vmatprep.subr.mxu0 0.0
    %2652 = vmatpush1.msra.mxu0 0.0
    %2653 = vmatprep.subr.mxu0 0.0
    %2654 = vmatpush1.msra.mxu0 0.0
    %2655 = vmatprep.subr.mxu0 0.0
    %2656 = vmatpush1.msra.mxu0 0.0
    %2657 = vmatprep.subr.mxu0 0.0
    %2658 = vmatpush1.msra.mxu0 0.0
    %2659 = vmatprep.subr.mxu0 0.0
    %2660 = vmatpush1.msra.mxu0 0.0
    %2661 = vmatprep.subr.mxu0 0.0
    %2662 = vmatpush1.msra.mxu0 0.0
    %2663 = vmatprep.subr.mxu0 0.0
    %2664 = vmatpush1.msra.mxu0 0.0
    %2665 = vmatprep.subr.mxu0 0.0
    %2666 = vmatpush1.msra.mxu0 0.0
    %2667 = vmatprep.subr.mxu0 0.0
    %2668 = vmatpush1.msra.mxu0 0.0
    %2669 = vmatprep.subr.mxu0 0.0
    %2670 = vmatpush1.msra.mxu0 0.0
    %2671 = vmatprep.subr.mxu0 0.0
    %2672 = vmatpush1.msra.mxu0 0.0
    %2673 = vmatprep.subr.mxu0 0.0
    %2674 = vmatpush1.msra.mxu0 0.0
    %2675 = vmatprep.subr.mxu0 0.0
    %2676 = vmatpush1.msra.mxu0 0.0
    %2677 = vmatprep.subr.mxu0 0.0
    %2678 = vmatpush1.msra.mxu0 0.0
    %2679 = vmatprep.subr.mxu0 0.0
    %2680 = vmatpush1.msra.mxu0 0.0
    %2681 = vmatprep.subr.mxu0 0.0
    %2682 = vmatpush1.msra.mxu0 0.0
    %2683 = vmatprep.subr.mxu0 0.0
    %2684 = vmatpush1.msra.mxu0 0.0
    %2685 = vmatprep.subr.mxu0 0.0
    %2686 = vmatpush1.msra.mxu0 0.0
    %2687 = vmatprep.subr.mxu0 0.0
    %2688 = vmatpush1.msra.mxu0 0.0
    %2689 = vmatprep.subr.mxu0 0.0
    %2690 = vmatpush1.msra.mxu0 0.0
    %2691 = vmatprep.subr.mxu0 0.0
    %2692 = vmatpush1.msra.mxu0 0.0
    %2693 = vmatprep.subr.mxu0 0.0
    %2694 = vmatpush1.msra.mxu0 0.0
    %2695 = vmatprep.subr.mxu0 0.0
    %2696 = vmatpush1.msra.mxu0 0.0
    %2697 = vmatprep.subr.mxu0 0.0
    %2698 = vmatpush1.msra.mxu0 0.0
    %2699 = vmatprep.mubr.f32.mxu0 0.0
    %2700 = vmatmul.mubr.f32.gmra.mrb[0].mxu0 %v2553
    %v2701 = vpop.f32.mrb[0].mxu0
    %v2702 = vadd.f32 0.0, %v2701
    %v2703 = vpop.f32.mrb[0].mxu0
    %v2704 = vadd.f32 0.0, %v2703
    %2705 = vmatprep.mubr.f32.mxu0 0.0
    %2706 = vmatmul.mubr.f32.gmra.mrb[0].mxu0 %v2556
    %v2707 = vpop.f32.mrb[0].mxu0
    %v2708 = vadd.f32 0.0, %v2707
    %v2709 = vpop.f32.mrb[0].mxu0
    %v2710 = vadd.f32 0.0, %v2709
    %2711 = vdwg.mxu0
    %2712 = vmatprep.subr.mxu0 0.0
    %2713 = vmatpush1.msra.mxu0 %v2203
    %2714 = vmatprep.subr.mxu0 0.0
    %2715 = vmatpush1.msra.mxu0 %v2208
    %2716 = vmatprep.subr.mxu0 0.0
    %2717 = vmatpush1.msra.mxu0 %v2213
    %2718 = vmatprep.subr.mxu0 0.0
    %2719 = vmatpush1.msra.mxu0 %v2218
    %2720 = vmatprep.subr.mxu0 0.0
    %2721 = vmatpush1.msra.mxu0 %v2246
    %2722 = vmatprep.subr.mxu0 0.0
    %2723 = vmatpush1.msra.mxu0 0.0
    %2724 = vmatprep.subr.mxu0 0.0
    %2725 = vmatpush1.msra.mxu0 0.0
    %2726 = vmatprep.subr.mxu0 0.0
    %2727 = vmatpush1.msra.mxu0 0.0
    %2728 = vmatprep.subr.mxu0 0.0
    %2729 = vmatpush1.msra.mxu0 0.0
    %2730 = vmatprep.subr.mxu0 0.0
    %2731 = vmatpush1.msra.mxu0 0.0
    %2732 = vmatprep.subr.mxu0 0.0
    %2733 = vmatpush1.msra.mxu0 0.0
    %2734 = vmatprep.subr.mxu0 0.0
    %2735 = vmatpush1.msra.mxu0 0.0
    %2736 = vmatprep.subr.mxu0 0.0
    %2737 = vmatpush1.msra.mxu0 0.0
    %2738 = vmatprep.subr.mxu0 0.0
    %2739 = vmatpush1.msra.mxu0 0.0
    %2740 = vmatprep.subr.mxu0 0.0
    %2741 = vmatpush1.msra.mxu0 0.0
    %2742 = vmatprep.subr.mxu0 0.0
    %2743 = vmatpush1.msra.mxu0 0.0
    %2744 = vmatprep.subr.mxu0 0.0
    %2745 = vmatpush1.msra.mxu0 0.0
    %2746 = vmatprep.subr.mxu0 0.0
    %2747 = vmatpush1.msra.mxu0 0.0
    %2748 = vmatprep.subr.mxu0 0.0
    %2749 = vmatpush1.msra.mxu0 0.0
    %2750 = vmatprep.subr.mxu0 0.0
    %2751 = vmatpush1.msra.mxu0 0.0
    %2752 = vmatprep.subr.mxu0 0.0
    %2753 = vmatpush1.msra.mxu0 0.0
    %2754 = vmatprep.subr.mxu0 0.0
    %2755 = vmatpush1.msra.mxu0 0.0
    %2756 = vmatprep.subr.mxu0 0.0
    %2757 = vmatpush1.msra.mxu0 0.0
    %2758 = vmatprep.subr.mxu0 0.0
    %2759 = vmatpush1.msra.mxu0 0.0
    %2760 = vmatprep.subr.mxu0 0.0
    %2761 = vmatpush1.msra.mxu0 0.0
    %2762 = vmatprep.subr.mxu0 0.0
    %2763 = vmatpush1.msra.mxu0 0.0
    %2764 = vmatprep.subr.mxu0 0.0
    %2765 = vmatpush1.msra.mxu0 0.0
    %2766 = vmatprep.subr.mxu0 0.0
    %2767 = vmatpush1.msra.mxu0 0.0
    %2768 = vmatprep.subr.mxu0 0.0
    %2769 = vmatpush1.msra.mxu0 0.0
    %2770 = vmatprep.subr.mxu0 0.0
    %2771 = vmatpush1.msra.mxu0 0.0
    %2772 = vmatprep.subr.mxu0 0.0
    %2773 = vmatpush1.msra.mxu0 0.0
    %2774 = vmatprep.subr.mxu0 0.0
    %2775 = vmatpush1.msra.mxu0 0.0
    %2776 = vmatprep.mubr.f32.mxu0 0.0
    %2777 = vmatmul.mubr.f32.gmra.mrb[0].mxu0 %v2553
    %v2778 = vpop.f32.mrb[0].mxu0
    %v2779 = vadd.f32 0.0, %v2778
    %v2780 = vpop.f32.mrb[0].mxu0
    %2781 = vmatprep.mubr.f32.mxu0 0.0
    %2782 = vmatmul.mubr.f32.gmra.mrb[0].mxu0 %v2556
    %v2783 = vpop.f32.mrb[0].mxu0
    %v2784 = vadd.f32 0.0, %v2783
    %v2785 = vpop.f32.mrb[0].mxu0
    %2786 = vdwg.mxu0
    %s2787 = scalar_lea.vmem [#allocation9], 576
    %v2788 = vld [vmem:[%s2787] sm:$0xff]
    %v2789 = vld [vmem:[%s2787 + $0x8] sm:$0xff]
    %v2790 = vld [vmem:[%s2787 + $0x10] sm:$0xff]
    %v2791 = vld [vmem:[%s2787 + $0x18] sm:$0xff]
    %v2792 = vld [vmem:[%s2787 + $0x20] sm:$0xff]
    %v2793 = vld [vmem:[%s2787 + $0x28] sm:$0xff]
    %v2794 = vld [vmem:[%s2787 + $0x30] sm:$0xff]
    %v2795 = vld [vmem:[%s2787 + $0x38] sm:$0xff]
    %v2796 = vld [vmem:[%s2787 + $0x40] sm:$0xff]
    %v2797 = vld [vmem:[%s2787 + $0x48] sm:$0xff]
    %v2798 = vld [vmem:[%s2787 + $0x50] sm:$0xff]
    %v2799 = vld [vmem:[%s2787 + $0x58] sm:$0xff]
    %v2800 = vld [vmem:[%s2787 + $0x60] sm:$0xff]
    %v2801 = vld [vmem:[%s2787 + $0x68] sm:$0xff]
    %v2802 = vld [vmem:[%s2787 + $0x70] sm:$0xff]
    %v2803 = vld [vmem:[%s2787 + $0x78] sm:$0xff]
    %v2804 = vld [vmem:[%s2787 + $0x80] sm:$0xff]
    %v2805 = vld [vmem:[%s2787 + $0x88] sm:$0xff]
    %v2806 = vld [vmem:[%s2787 + $0x90] sm:$0xff]
    %v2807 = vld [vmem:[%s2787 + $0x98] sm:$0xff]
    %v2808 = vld [vmem:[%s2787 + $0xa0] sm:$0xff]
    %v2809 = vld [vmem:[%s2787 + $0xa8] sm:$0xff]
    %v2810 = vld [vmem:[%s2787 + $0xb0] sm:$0xff]
    %v2811 = vld [vmem:[%s2787 + $0xb8] sm:$0xff]
    %v2812 = vld [vmem:[%s2787 + $0xc0] sm:$0xff]
    %v2813 = vld [vmem:[%s2787 + $0xc8] sm:$0xff]
    %v2814 = vld [vmem:[%s2787 + $0xd0] sm:$0xff]
    %v2815 = vld [vmem:[%s2787 + $0xd8] sm:$0xff]
    %v2816 = vld [vmem:[%s2787 + $0xe0] sm:$0xff]
    %v2817 = vld [vmem:[%s2787 + $0xe8] sm:$0xff]
    %v2818 = vld [vmem:[%s2787 + $0xf0] sm:$0xff]
    %v2819 = vld [vmem:[%s2787 + $0xf8] sm:$0xff]
    %v2820 = vld [vmem:[%s2787 + $0x100] sm:$0xff]
    %v2821 = vld [vmem:[%s2787 + $0x108] sm:$0xff]
    %v2822 = vld [vmem:[%s2787 + $0x110] sm:$0xff]
    %v2823 = vld [vmem:[%s2787 + $0x118] sm:$0xff]
    %v2824 = vld [vmem:[%s2787 + $0x120] sm:$0xff]
    %v2825 = vld [vmem:[%s2787 + $0x128] sm:$0xff]
    %v2826 = vld [vmem:[%s2787 + $0x130] sm:$0xff]
    %v2827 = vld [vmem:[%s2787 + $0x138] sm:$0xff]
    %v2828 = vld [vmem:[%s2787 + $0x140] sm:$0xff]
    %v2829 = vld [vmem:[%s2787 + $0x148] sm:$0xff]
    %v2830 = vld [vmem:[%s2787 + $0x150] sm:$0xff]
    %v2831 = vld [vmem:[%s2787 + $0x158] sm:$0xff]
    %v2832 = vld [vmem:[%s2787 + $0x160] sm:$0xff]
    %v2833 = vld [vmem:[%s2787 + $0x168] sm:$0xff]
    %v2834 = vld [vmem:[%s2787 + $0x170] sm:$0xff]
    %v2835 = vld [vmem:[%s2787 + $0x178] sm:$0xff]
    %v2836 = vld [vmem:[%s2787 + $0x180] sm:$0xff]
    %v2837 = vld [vmem:[%s2787 + $0x188] sm:$0xff]
    %v2838 = vld [vmem:[%s2787 + $0x190] sm:$0xff]
    %v2839 = vld [vmem:[%s2787 + $0x198] sm:$0xff]
    %v2840 = vld [vmem:[%s2787 + $0x1a0] sm:$0xff]
    %v2841 = vld [vmem:[%s2787 + $0x1a8] sm:$0xff]
    %v2842 = vld [vmem:[%s2787 + $0x1b0] sm:$0xff]
    %v2843 = vld [vmem:[%s2787 + $0x1b8] sm:$0xff]
    %v2844 = vld [vmem:[%s2787 + $0x1c0] sm:$0xff]
    %v2845 = vld [vmem:[%s2787 + $0x1c8] sm:$0xff]
    %v2846 = vld [vmem:[%s2787 + $0x1d0] sm:$0xff]
    %v2847 = vld [vmem:[%s2787 + $0x1d8] sm:$0xff]
    %v2848 = vld [vmem:[%s2787 + $0x1e0] sm:$0xff]
    %v2849 = vld [vmem:[%s2787 + $0x1e8] sm:$0xff]
    %v2850 = vld [vmem:[%s2787 + $0x1f0] sm:$0xff]
    %v2851 = vld [vmem:[%s2787 + $0x1f8] sm:$0xff]
    %v2852 = vld [vmem:[%s2787 + $0x200] sm:$0xff]
    %v2853 = vld [vmem:[%s2787 + $0x208] sm:$0xff]
    %v2854 = vld [vmem:[%s2787 + $0x210] sm:$0xff]
    %v2855 = vld [vmem:[%s2787 + $0x218] sm:$0xff]
    %v2856 = vld [vmem:[%s2787 + $0x220] sm:$0xff]
    %v2857 = vld [vmem:[%s2787 + $0x228] sm:$0xff]
    %v2858 = vld [vmem:[%s2787 + $0x230] sm:$0xff]
    %v2859 = vld [vmem:[%s2787 + $0x238] sm:$0xff]
    %v2861 = vsel %vm297, %v2779, 0
    %v2864 = vsel %vm297, %v2784, 0
    %2866 = vmatprep.subr.mxu0 0.0
    %2867 = vmatpush1.msra.mxu0 %v2788
    %2868 = vmatprep.subr.mxu0 0.0
    %2869 = vmatpush1.msra.mxu0 %v2789
    %2870 = vmatprep.subr.mxu0 0.0
    %2871 = vmatpush1.msra.mxu0 %v2790
    %2872 = vmatprep.subr.mxu0 0.0
    %2873 = vmatpush1.msra.mxu0 %v2791
    %2874 = vmatprep.subr.mxu0 0.0
    %2875 = vmatpush1.msra.mxu0 %v2792
    %2876 = vmatprep.subr.mxu0 0.0
    %2877 = vmatpush1.msra.mxu0 %v2793
    %2878 = vmatprep.subr.mxu0 0.0
    %2879 = vmatpush1.msra.mxu0 %v2794
    %2880 = vmatprep.subr.mxu0 0.0
    %2881 = vmatpush1.msra.mxu0 %v2795
    %2882 = vmatprep.subr.mxu0 0.0
    %2883 = vmatpush1.msra.mxu0 %v2796
    %2884 = vmatprep.subr.mxu0 0.0
    %2885 = vmatpush1.msra.mxu0 %v2797
    %2886 = vmatprep.subr.mxu0 0.0
    %2887 = vmatpush1.msra.mxu0 %v2798
    %2888 = vmatprep.subr.mxu0 0.0
    %2889 = vmatpush1.msra.mxu0 %v2799
    %2890 = vmatprep.subr.mxu0 0.0
    %2891 = vmatpush1.msra.mxu0 %v2800
    %2892 = vmatprep.subr.mxu0 0.0
    %2893 = vmatpush1.msra.mxu0 %v2801
    %2894 = vmatprep.subr.mxu0 0.0
    %2895 = vmatpush1.msra.mxu0 %v2802
    %2896 = vmatprep.subr.mxu0 0.0
    %2897 = vmatpush1.msra.mxu0 %v2803
    %2898 = vmatprep.subr.mxu0 0.0
    %2899 = vmatpush1.msra.mxu0 %v2804
    %2900 = vmatprep.subr.mxu0 0.0
    %2901 = vmatpush1.msra.mxu0 %v2805
    %2902 = vmatprep.subr.mxu0 0.0
    %2903 = vmatpush1.msra.mxu0 %v2806
    %2904 = vmatprep.subr.mxu0 0.0
    %2905 = vmatpush1.msra.mxu0 %v2807
    %2906 = vmatprep.subr.mxu0 0.0
    %2907 = vmatpush1.msra.mxu0 %v2808
    %2908 = vmatprep.subr.mxu0 0.0
    %2909 = vmatpush1.msra.mxu0 %v2809
    %2910 = vmatprep.subr.mxu0 0.0
    %2911 = vmatpush1.msra.mxu0 %v2810
    %2912 = vmatprep.subr.mxu0 0.0
    %2913 = vmatpush1.msra.mxu0 %v2811
    %2914 = vmatprep.subr.mxu0 0.0
    %2915 = vmatpush1.msra.mxu0 %v2812
    %2916 = vmatprep.subr.mxu0 0.0
    %2917 = vmatpush1.msra.mxu0 %v2813
    %2918 = vmatprep.subr.mxu0 0.0
    %2919 = vmatpush1.msra.mxu0 %v2814
    %2920 = vmatprep.subr.mxu0 0.0
    %2921 = vmatpush1.msra.mxu0 %v2815
    %2922 = vmatprep.subr.mxu0 0.0
    %2923 = vmatpush1.msra.mxu0 %v2816
    %2924 = vmatprep.subr.mxu0 0.0
    %2925 = vmatpush1.msra.mxu0 %v2817
    %2926 = vmatprep.subr.mxu0 0.0
    %2927 = vmatpush1.msra.mxu0 %v2818
    %2928 = vmatprep.subr.mxu0 0.0
    %2929 = vmatpush1.msra.mxu0 %v2819
    %2930 = vmatprep.mubr.f32.mxu0 %v2627
    %2931 = vmatmul.mubr.f32.gmra.mrb[0].mxu0 %v2625
    %v2932 = vpop.f32.mrb[0].mxu0
    %v2933 = vadd.f32 0.0, %v2932
    %v2934 = vpop.f32.mrb[0].mxu0
    %2935 = vmatprep.mubr.f32.mxu0 %v2633
    %2936 = vmatmul.mubr.f32.gmra.mrb[0].mxu0 %v2631
    %v2937 = vpop.f32.mrb[0].mxu0
    %v2938 = vadd.f32 0.0, %v2937
    %v2939 = vpop.f32.mrb[0].mxu0
    %2940 = vdwg.mxu0
    %2941 = vmatprep.subr.mxu0 0.0
    %2942 = vmatpush1.msra.mxu0 %v2820
    %2943 = vmatprep.subr.mxu0 0.0
    %2944 = vmatpush1.msra.mxu0 %v2821
    %2945 = vmatprep.subr.mxu0 0.0
    %2946 = vmatpush1.msra.mxu0 %v2822
    %2947 = vmatprep.subr.mxu0 0.0
    %2948 = vmatpush1.msra.mxu0 %v2823
    %2949 = vmatprep.subr.mxu0 0.0
    %2950 = vmatpush1.msra.mxu0 %v2824
    %2951 = vmatprep.subr.mxu0 0.0
    %2952 = vmatpush1.msra.mxu0 %v2825
    %2953 = vmatprep.subr.mxu0 0.0
    %2954 = vmatpush1.msra.mxu0 %v2826
    %2955 = vmatprep.subr.mxu0 0.0
    %2956 = vmatpush1.msra.mxu0 %v2827
    %2957 = vmatprep.subr.mxu0 0.0
    %2958 = vmatpush1.msra.mxu0 %v2828
    %2959 = vmatprep.subr.mxu0 0.0
    %2960 = vmatpush1.msra.mxu0 %v2829
    %2961 = vmatprep.subr.mxu0 0.0
    %2962 = vmatpush1.msra.mxu0 %v2830
    %2963 = vmatprep.subr.mxu0 0.0
    %2964 = vmatpush1.msra.mxu0 %v2831
    %2965 = vmatprep.subr.mxu0 0.0
    %2966 = vmatpush1.msra.mxu0 %v2832
    %2967 = vmatprep.subr.mxu0 0.0
    %2968 = vmatpush1.msra.mxu0 %v2833
    %2969 = vmatprep.subr.mxu0 0.0
    %2970 = vmatpush1.msra.mxu0 %v2834
    %2971 = vmatprep.subr.mxu0 0.0
    %2972 = vmatpush1.msra.mxu0 %v2835
    %2973 = vmatprep.subr.mxu0 0.0
    %2974 = vmatpush1.msra.mxu0 %v2836
    %2975 = vmatprep.subr.mxu0 0.0
    %2976 = vmatpush1.msra.mxu0 %v2837
    %2977 = vmatprep.subr.mxu0 0.0
    %2978 = vmatpush1.msra.mxu0 %v2838
    %2979 = vmatprep.subr.mxu0 0.0
    %2980 = vmatpush1.msra.mxu0 %v2839
    %2981 = vmatprep.subr.mxu0 0.0
    %2982 = vmatpush1.msra.mxu0 %v2840
    %2983 = vmatprep.subr.mxu0 0.0
    %2984 = vmatpush1.msra.mxu0 %v2841
    %2985 = vmatprep.subr.mxu0 0.0
    %2986 = vmatpush1.msra.mxu0 %v2842
    %2987 = vmatprep.subr.mxu0 0.0
    %2988 = vmatpush1.msra.mxu0 %v2843
    %2989 = vmatprep.subr.mxu0 0.0
    %2990 = vmatpush1.msra.mxu0 %v2844
    %2991 = vmatprep.subr.mxu0 0.0
    %2992 = vmatpush1.msra.mxu0 %v2845
    %2993 = vmatprep.subr.mxu0 0.0
    %2994 = vmatpush1.msra.mxu0 %v2846
    %2995 = vmatprep.subr.mxu0 0.0
    %2996 = vmatpush1.msra.mxu0 %v2847
    %2997 = vmatprep.subr.mxu0 0.0
    %2998 = vmatpush1.msra.mxu0 %v2848
    %2999 = vmatprep.subr.mxu0 0.0
    %3000 = vmatpush1.msra.mxu0 %v2849
    %3001 = vmatprep.subr.mxu0 0.0
    %3002 = vmatpush1.msra.mxu0 %v2850
    %3003 = vmatprep.subr.mxu0 0.0
    %3004 = vmatpush1.msra.mxu0 %v2851
    %3005 = vmatprep.mubr.f32.mxu0 %v2704
    %3006 = vmatmul.mubr.f32.gmra.mrb[0].mxu0 %v2702
    %v3007 = vpop.f32.mrb[0].mxu0
    %v3008 = vadd.f32 %v2933, %v3007
    %v3009 = vpop.f32.mrb[0].mxu0
    %3010 = vmatprep.mubr.f32.mxu0 %v2710
    %3011 = vmatmul.mubr.f32.gmra.mrb[0].mxu0 %v2708
    %v3012 = vpop.f32.mrb[0].mxu0
    %v3013 = vadd.f32 %v2938, %v3012
    %v3014 = vpop.f32.mrb[0].mxu0
    %3015 = vdwg.mxu0
    %3016 = vmatprep.subr.mxu0 0.0
    %3017 = vmatpush1.msra.mxu0 %v2852
    %3018 = vmatprep.subr.mxu0 0.0
    %3019 = vmatpush1.msra.mxu0 %v2853
    %3020 = vmatprep.subr.mxu0 0.0
    %3021 = vmatpush1.msra.mxu0 %v2854
    %3022 = vmatprep.subr.mxu0 0.0
    %3023 = vmatpush1.msra.mxu0 %v2855
    %3024 = vmatprep.subr.mxu0 0.0
    %3025 = vmatpush1.msra.mxu0 %v2856
    %3026 = vmatprep.subr.mxu0 0.0
    %3027 = vmatpush1.msra.mxu0 %v2857
    %3028 = vmatprep.subr.mxu0 0.0
    %3029 = vmatpush1.msra.mxu0 %v2858
    %3030 = vmatprep.subr.mxu0 0.0
    %3031 = vmatpush1.msra.mxu0 %v2859
    %3032 = vmatprep.subr.mxu0 0.0
    %3033 = vmatpush1.msra.mxu0 0.0
    %3034 = vmatprep.subr.mxu0 0.0
    %3035 = vmatpush1.msra.mxu0 0.0
    %3036 = vmatprep.subr.mxu0 0.0
    %3037 = vmatpush1.msra.mxu0 0.0
    %3038 = vmatprep.subr.mxu0 0.0
    %3039 = vmatpush1.msra.mxu0 0.0
    %3040 = vmatprep.subr.mxu0 0.0
    %3041 = vmatpush1.msra.mxu0 0.0
    %3042 = vmatprep.subr.mxu0 0.0
    %3043 = vmatpush1.msra.mxu0 0.0
    %3044 = vmatprep.subr.mxu0 0.0
    %3045 = vmatpush1.msra.mxu0 0.0
    %3046 = vmatprep.subr.mxu0 0.0
    %3047 = vmatpush1.msra.mxu0 0.0
    %3048 = vmatprep.subr.mxu0 0.0
    %3049 = vmatpush1.msra.mxu0 0.0
    %3050 = vmatprep.subr.mxu0 0.0
    %3051 = vmatpush1.msra.mxu0 0.0
    %3052 = vmatprep.subr.mxu0 0.0
    %3053 = vmatpush1.msra.mxu0 0.0
    %3054 = vmatprep.subr.mxu0 0.0
    %3055 = vmatpush1.msra.mxu0 0.0
    %3056 = vmatprep.subr.mxu0 0.0
    %3057 = vmatpush1.msra.mxu0 0.0
    %3058 = vmatprep.subr.mxu0 0.0
    %3059 = vmatpush1.msra.mxu0 0.0
    %3060 = vmatprep.subr.mxu0 0.0
    %3061 = vmatpush1.msra.mxu0 0.0
    %3062 = vmatprep.subr.mxu0 0.0
    %3063 = vmatpush1.msra.mxu0 0.0
    %3064 = vmatprep.subr.mxu0 0.0
    %3065 = vmatpush1.msra.mxu0 0.0
    %3066 = vmatprep.subr.mxu0 0.0
    %3067 = vmatpush1.msra.mxu0 0.0
    %3068 = vmatprep.subr.mxu0 0.0
    %3069 = vmatpush1.msra.mxu0 0.0
    %3070 = vmatprep.subr.mxu0 0.0
    %3071 = vmatpush1.msra.mxu0 0.0
    %3072 = vmatprep.subr.mxu0 0.0
    %3073 = vmatpush1.msra.mxu0 0.0
    %3074 = vmatprep.subr.mxu0 0.0
    %3075 = vmatpush1.msra.mxu0 0.0
    %3076 = vmatprep.subr.mxu0 0.0
    %3077 = vmatpush1.msra.mxu0 0.0
    %3078 = vmatprep.subr.mxu0 0.0
    %3079 = vmatpush1.msra.mxu0 0.0
    %3080 = vmatprep.mubr.f32.mxu0 0.0
    %3081 = vmatmul.mubr.f32.gmra.mrb[0].mxu0 %v2861
    %v3082 = vpop.f32.mrb[0].mxu0
    %v3083 = vadd.f32 %v3008, %v3082
    %v3084 = vpop.f32.mrb[0].mxu0
    %3085 = vmatprep.mubr.f32.mxu0 0.0
    %3086 = vmatmul.mubr.f32.gmra.mrb[0].mxu0 %v2864
    %v3087 = vpop.f32.mrb[0].mxu0
    %v3088 = vadd.f32 %v3013, %v3087
    %v3089 = vpop.f32.mrb[0].mxu0
    %3090 = vdwg.mxu0
    %v3092 = vsel %vm297, %v2469, 0
    %v3095 = vsel %vm297, %v2474, 0
    %3097 = vmatprep.subr.mxu0 0.0
    %3098 = vmatpush1.msra.mxu0 %v2477
    %3099 = vmatprep.subr.mxu0 0.0
    %3100 = vmatpush1.msra.mxu0 %v2478
    %3101 = vmatprep.subr.mxu0 0.0
    %3102 = vmatpush1.msra.mxu0 %v2479
    %3103 = vmatprep.subr.mxu0 0.0
    %3104 = vmatpush1.msra.mxu0 %v2480
    %3105 = vmatprep.subr.mxu0 0.0
    %3106 = vmatpush1.msra.mxu0 %v2481
    %3107 = vmatprep.subr.mxu0 0.0
    %3108 = vmatpush1.msra.mxu0 %v2482
    %3109 = vmatprep.subr.mxu0 0.0
    %3110 = vmatpush1.msra.mxu0 %v2483
    %3111 = vmatprep.subr.mxu0 0.0
    %3112 = vmatpush1.msra.mxu0 %v2484
    %3113 = vmatprep.subr.mxu0 0.0
    %3114 = vmatpush1.msra.mxu0 %v2485
    %3115 = vmatprep.subr.mxu0 0.0
    %3116 = vmatpush1.msra.mxu0 %v2486
    %3117 = vmatprep.subr.mxu0 0.0
    %3118 = vmatpush1.msra.mxu0 %v2487
    %3119 = vmatprep.subr.mxu0 0.0
    %3120 = vmatpush1.msra.mxu0 %v2488
    %3121 = vmatprep.subr.mxu0 0.0
    %3122 = vmatpush1.msra.mxu0 %v2489
    %3123 = vmatprep.subr.mxu0 0.0
    %3124 = vmatpush1.msra.mxu0 %v2490
    %3125 = vmatprep.subr.mxu0 0.0
    %3126 = vmatpush1.msra.mxu0 %v2491
    %3127 = vmatprep.subr.mxu0 0.0
    %3128 = vmatpush1.msra.mxu0 %v2492
    %3129 = vmatprep.subr.mxu0 0.0
    %3130 = vmatpush1.msra.mxu0 %v2493
    %3131 = vmatprep.subr.mxu0 0.0
    %3132 = vmatpush1.msra.mxu0 %v2494
    %3133 = vmatprep.subr.mxu0 0.0
    %3134 = vmatpush1.msra.mxu0 %v2495
    %3135 = vmatprep.subr.mxu0 0.0
    %3136 = vmatpush1.msra.mxu0 %v2496
    %3137 = vmatprep.subr.mxu0 0.0
    %3138 = vmatpush1.msra.mxu0 %v2497
    %3139 = vmatprep.subr.mxu0 0.0
    %3140 = vmatpush1.msra.mxu0 %v2498
    %3141 = vmatprep.subr.mxu0 0.0
    %3142 = vmatpush1.msra.mxu0 %v2499
    %3143 = vmatprep.subr.mxu0 0.0
    %3144 = vmatpush1.msra.mxu0 %v2500
    %3145 = vmatprep.subr.mxu0 0.0
    %3146 = vmatpush1.msra.mxu0 %v2501
    %3147 = vmatprep.subr.mxu0 0.0
    %3148 = vmatpush1.msra.mxu0 %v2502
    %3149 = vmatprep.subr.mxu0 0.0
    %3150 = vmatpush1.msra.mxu0 %v2503
    %3151 = vmatprep.subr.mxu0 0.0
    %3152 = vmatpush1.msra.mxu0 %v2504
    %3153 = vmatprep.subr.mxu0 0.0
    %3154 = vmatpush1.msra.mxu0 %v2505
    %3155 = vmatprep.subr.mxu0 0.0
    %3156 = vmatpush1.msra.mxu0 %v2506
    %3157 = vmatprep.subr.mxu0 0.0
    %3158 = vmatpush1.msra.mxu0 %v2507
    %3159 = vmatprep.subr.mxu0 0.0
    %3160 = vmatpush1.msra.mxu0 %v2508
    %3161 = vmatprep.mubr.f32.mxu0 %v2317
    %3162 = vmatmul.mubr.f32.gmra.mrb[0].mxu0 %v2315
    %v3163 = vpop.f32.mrb[0].mxu0
    %v3164 = vadd.f32 %v3083, %v3163
    %v3165 = vpop.f32.mrb[0].mxu0
    %3166 = vmatprep.mubr.f32.mxu0 %v2323
    %3167 = vmatmul.mubr.f32.gmra.mrb[0].mxu0 %v2321
    %v3168 = vpop.f32.mrb[0].mxu0
    %v3169 = vadd.f32 %v3088, %v3168
    %v3170 = vpop.f32.mrb[0].mxu0
    %3171 = vdwg.mxu0
    %3172 = vmatprep.subr.mxu0 0.0
    %3173 = vmatpush1.msra.mxu0 %v2509
    %3174 = vmatprep.subr.mxu0 0.0
    %3175 = vmatpush1.msra.mxu0 %v2510
    %3176 = vmatprep.subr.mxu0 0.0
    %3177 = vmatpush1.msra.mxu0 %v2511
    %3178 = vmatprep.subr.mxu0 0.0
    %3179 = vmatpush1.msra.mxu0 %v2512
    %3180 = vmatprep.subr.mxu0 0.0
    %3181 = vmatpush1.msra.mxu0 %v2513
    %3182 = vmatprep.subr.mxu0 0.0
    %3183 = vmatpush1.msra.mxu0 %v2514
    %3184 = vmatprep.subr.mxu0 0.0
    %3185 = vmatpush1.msra.mxu0 %v2515
    %3186 = vmatprep.subr.mxu0 0.0
    %3187 = vmatpush1.msra.mxu0 %v2516
    %3188 = vmatprep.subr.mxu0 0.0
    %3189 = vmatpush1.msra.mxu0 %v2517
    %3190 = vmatprep.subr.mxu0 0.0
    %3191 = vmatpush1.msra.mxu0 %v2518
    %3192 = vmatprep.subr.mxu0 0.0
    %3193 = vmatpush1.msra.mxu0 %v2519
    %3194 = vmatprep.subr.mxu0 0.0
    %3195 = vmatpush1.msra.mxu0 %v2520
    %3196 = vmatprep.subr.mxu0 0.0
    %3197 = vmatpush1.msra.mxu0 %v2521
    %3198 = vmatprep.subr.mxu0 0.0
    %3199 = vmatpush1.msra.mxu0 %v2522
    %3200 = vmatprep.subr.mxu0 0.0
    %3201 = vmatpush1.msra.mxu0 %v2523
    %3202 = vmatprep.subr.mxu0 0.0
    %3203 = vmatpush1.msra.mxu0 %v2524
    %3204 = vmatprep.subr.mxu0 0.0
    %3205 = vmatpush1.msra.mxu0 %v2525
    %3206 = vmatprep.subr.mxu0 0.0
    %3207 = vmatpush1.msra.mxu0 %v2526
    %3208 = vmatprep.subr.mxu0 0.0
    %3209 = vmatpush1.msra.mxu0 %v2527
    %3210 = vmatprep.subr.mxu0 0.0
    %3211 = vmatpush1.msra.mxu0 %v2528
    %3212 = vmatprep.subr.mxu0 0.0
    %3213 = vmatpush1.msra.mxu0 %v2529
    %3214 = vmatprep.subr.mxu0 0.0
    %3215 = vmatpush1.msra.mxu0 %v2530
    %3216 = vmatprep.subr.mxu0 0.0
    %3217 = vmatpush1.msra.mxu0 %v2531
    %3218 = vmatprep.subr.mxu0 0.0
    %3219 = vmatpush1.msra.mxu0 %v2532
    %3220 = vmatprep.subr.mxu0 0.0
    %3221 = vmatpush1.msra.mxu0 %v2533
    %3222 = vmatprep.subr.mxu0 0.0
    %3223 = vmatpush1.msra.mxu0 %v2534
    %3224 = vmatprep.subr.mxu0 0.0
    %3225 = vmatpush1.msra.mxu0 %v2535
    %3226 = vmatprep.subr.mxu0 0.0
    %3227 = vmatpush1.msra.mxu0 %v2536
    %3228 = vmatprep.subr.mxu0 0.0
    %3229 = vmatpush1.msra.mxu0 %v2537
    %3230 = vmatprep.subr.mxu0 0.0
    %3231 = vmatpush1.msra.mxu0 %v2538
    %3232 = vmatprep.subr.mxu0 0.0
    %3233 = vmatpush1.msra.mxu0 %v2539
    %3234 = vmatprep.subr.mxu0 0.0
    %3235 = vmatpush1.msra.mxu0 %v2540
    %3236 = vmatprep.mubr.f32.mxu0 %v2394
    %3237 = vmatmul.mubr.f32.gmra.mrb[0].mxu0 %v2392
    %v3238 = vpop.f32.mrb[0].mxu0
    %v3239 = vadd.f32 %v3164, %v3238
    %v3240 = vpop.f32.mrb[0].mxu0
    %3241 = vmatprep.mubr.f32.mxu0 %v2400
    %3242 = vmatmul.mubr.f32.gmra.mrb[0].mxu0 %v2398
    %v3243 = vpop.f32.mrb[0].mxu0
    %v3244 = vadd.f32 %v3169, %v3243
    %v3245 = vpop.f32.mrb[0].mxu0
    %3246 = vdwg.mxu0
    %3247 = vmatprep.subr.mxu0 0.0
    %3248 = vmatpush1.msra.mxu0 %v2541
    %3249 = vmatprep.subr.mxu0 0.0
    %3250 = vmatpush1.msra.mxu0 %v2542
    %3251 = vmatprep.subr.mxu0 0.0
    %3252 = vmatpush1.msra.mxu0 %v2543
    %3253 = vmatprep.subr.mxu0 0.0
    %3254 = vmatpush1.msra.mxu0 %v2544
    %3255 = vmatprep.subr.mxu0 0.0
    %3256 = vmatpush1.msra.mxu0 %v2545
    %3257 = vmatprep.subr.mxu0 0.0
    %3258 = vmatpush1.msra.mxu0 %v2546
    %3259 = vmatprep.subr.mxu0 0.0
    %3260 = vmatpush1.msra.mxu0 %v2547
    %3261 = vmatprep.subr.mxu0 0.0
    %3262 = vmatpush1.msra.mxu0 %v2548
    %3263 = vmatprep.subr.mxu0 0.0
    %3264 = vmatpush1.msra.mxu0 0.0
    %3265 = vmatprep.subr.mxu0 0.0
    %3266 = vmatpush1.msra.mxu0 0.0
    %3267 = vmatprep.subr.mxu0 0.0
    %3268 = vmatpush1.msra.mxu0 0.0
    %3269 = vmatprep.subr.mxu0 0.0
    %3270 = vmatpush1.msra.mxu0 0.0
    %3271 = vmatprep.subr.mxu0 0.0
    %3272 = vmatpush1.msra.mxu0 0.0
    %3273 = vmatprep.subr.mxu0 0.0
    %3274 = vmatpush1.msra.mxu0 0.0
    %3275 = vmatprep.subr.mxu0 0.0
    %3276 = vmatpush1.msra.mxu0 0.0
    %3277 = vmatprep.subr.mxu0 0.0
    %3278 = vmatpush1.msra.mxu0 0.0
    %3279 = vmatprep.subr.mxu0 0.0
    %3280 = vmatpush1.msra.mxu0 0.0
    %3281 = vmatprep.subr.mxu0 0.0
    %3282 = vmatpush1.msra.mxu0 0.0
    %3283 = vmatprep.subr.mxu0 0.0
    %3284 = vmatpush1.msra.mxu0 0.0
    %3285 = vmatprep.subr.mxu0 0.0
    %3286 = vmatpush1.msra.mxu0 0.0
    %3287 = vmatprep.subr.mxu0 0.0
    %3288 = vmatpush1.msra.mxu0 0.0
    %3289 = vmatprep.subr.mxu0 0.0
    %3290 = vmatpush1.msra.mxu0 0.0
    %3291 = vmatprep.subr.mxu0 0.0
    %3292 = vmatpush1.msra.mxu0 0.0
    %3293 = vmatprep.subr.mxu0 0.0
    %3294 = vmatpush1.msra.mxu0 0.0
    %3295 = vmatprep.subr.mxu0 0.0
    %3296 = vmatpush1.msra.mxu0 0.0
    %3297 = vmatprep.subr.mxu0 0.0
    %3298 = vmatpush1.msra.mxu0 0.0
    %3299 = vmatprep.subr.mxu0 0.0
    %3300 = vmatpush1.msra.mxu0 0.0
    %3301 = vmatprep.subr.mxu0 0.0
    %3302 = vmatpush1.msra.mxu0 0.0
    %3303 = vmatprep.subr.mxu0 0.0
    %3304 = vmatpush1.msra.mxu0 0.0
    %3305 = vmatprep.subr.mxu0 0.0
    %3306 = vmatpush1.msra.mxu0 0.0
    %3307 = vmatprep.subr.mxu0 0.0
    %3308 = vmatpush1.msra.mxu0 0.0
    %3309 = vmatprep.subr.mxu0 0.0
    %3310 = vmatpush1.msra.mxu0 0.0
    %3311 = vmatprep.mubr.f32.mxu0 0.0
    %3312 = vmatmul.mubr.f32.gmra.mrb[0].mxu0 %v3092
    %v3313 = vpop.f32.mrb[0].mxu0
    %v3314 = vadd.f32 %v3239, %v3313
    %v3315 = vpop.f32.mrb[0].mxu0
    %3316 = vmatprep.mubr.f32.mxu0 0.0
    %3317 = vmatmul.mubr.f32.gmra.mrb[0].mxu0 %v3095
    %v3318 = vpop.f32.mrb[0].mxu0
    %v3319 = vadd.f32 %v3244, %v3318
    %v3320 = vpop.f32.mrb[0].mxu0
    %3321 = vdwg.mxu0
    %s3322 = scalar_lea.vmem [#allocation10], 32
    %v3323 = vld [vmem:[%s3322] sm:$0xff]
    %v3324 = vld [vmem:[%s3322 + $0x8] sm:$0xff]
    %v3326 = vsel %vm2226, %v3323, 0
    %v3329 = vsel %vm2226, %v3324, 0
    %3331 = vmatprep.subr.mxu0 %v2200
    %3332 = vmatpush1.msra.mxu0 %v2199
    %3333 = vmatprep.subr.mxu0 %v2205
    %3334 = vmatpush1.msra.mxu0 %v2204
    %3335 = vmatprep.subr.mxu0 %v2210
    %3336 = vmatpush1.msra.mxu0 %v2209
    %3337 = vmatprep.subr.mxu0 %v2215
    %3338 = vmatpush1.msra.mxu0 %v2214
    %3339 = vmatprep.subr.mxu0 %v2237
    %3340 = vmatpush1.msra.mxu0 %v2234
    %3341 = vmatprep.subr.mxu0 0.0
    %3342 = vmatpush1.msra.mxu0 0.0
    %3343 = vmatprep.subr.mxu0 0.0
    %3344 = vmatpush1.msra.mxu0 0.0
    %3345 = vmatprep.subr.mxu0 0.0
    %3346 = vmatpush1.msra.mxu0 0.0
    %3347 = vmatprep.subr.mxu0 0.0
    %3348 = vmatpush1.msra.mxu0 0.0
    %3349 = vmatprep.subr.mxu0 0.0
    %3350 = vmatpush1.msra.mxu0 0.0
    %3351 = vmatprep.subr.mxu0 0.0
    %3352 = vmatpush1.msra.mxu0 0.0
    %3353 = vmatprep.subr.mxu0 0.0
    %3354 = vmatpush1.msra.mxu0 0.0
    %3355 = vmatprep.subr.mxu0 0.0
    %3356 = vmatpush1.msra.mxu0 0.0
    %3357 = vmatprep.subr.mxu0 0.0
    %3358 = vmatpush1.msra.mxu0 0.0
    %3359 = vmatprep.subr.mxu0 0.0
    %3360 = vmatpush1.msra.mxu0 0.0
    %3361 = vmatprep.subr.mxu0 0.0
    %3362 = vmatpush1.msra.mxu0 0.0
    %3363 = vmatprep.subr.mxu0 0.0
    %3364 = vmatpush1.msra.mxu0 0.0
    %3365 = vmatprep.subr.mxu0 0.0
    %3366 = vmatpush1.msra.mxu0 0.0
    %3367 = vmatprep.subr.mxu0 0.0
    %3368 = vmatpush1.msra.mxu0 0.0
    %3369 = vmatprep.subr.mxu0 0.0
    %3370 = vmatpush1.msra.mxu0 0.0
    %3371 = vmatprep.subr.mxu0 0.0
    %3372 = vmatpush1.msra.mxu0 0.0
    %3373 = vmatprep.subr.mxu0 0.0
    %3374 = vmatpush1.msra.mxu0 0.0
    %3375 = vmatprep.subr.mxu0 0.0
    %3376 = vmatpush1.msra.mxu0 0.0
    %3377 = vmatprep.subr.mxu0 0.0
    %3378 = vmatpush1.msra.mxu0 0.0
    %3379 = vmatprep.subr.mxu0 0.0
    %3380 = vmatpush1.msra.mxu0 0.0
    %3381 = vmatprep.subr.mxu0 0.0
    %3382 = vmatpush1.msra.mxu0 0.0
    %3383 = vmatprep.subr.mxu0 0.0
    %3384 = vmatpush1.msra.mxu0 0.0
    %3385 = vmatprep.subr.mxu0 0.0
    %3386 = vmatpush1.msra.mxu0 0.0
    %3387 = vmatprep.subr.mxu0 0.0
    %3388 = vmatpush1.msra.mxu0 0.0
    %3389 = vmatprep.subr.mxu0 0.0
    %3390 = vmatpush1.msra.mxu0 0.0
    %3391 = vmatprep.subr.mxu0 0.0
    %3392 = vmatpush1.msra.mxu0 0.0
    %3393 = vmatprep.subr.mxu0 0.0
    %3394 = vmatpush1.msra.mxu0 0.0
    %3395 = vmatprep.mubr.f32.mxu0 0.0
    %3396 = vmatmul.mubr.f32.gmra.mrb[0].mxu0 %v3326
    %v3397 = vpop.f32.mrb[0].mxu0
    %v3398 = vadd.f32 0.0, %v3397
    %v3399 = vpop.f32.mrb[0].mxu0
    %v3400 = vadd.f32 0.0, %v3399
    %3401 = vmatprep.mubr.f32.mxu0 0.0
    %3402 = vmatmul.mubr.f32.gmra.mrb[0].mxu0 %v3329
    %v3403 = vpop.f32.mrb[0].mxu0
    %v3404 = vadd.f32 0.0, %v3403
    %v3405 = vpop.f32.mrb[0].mxu0
    %v3406 = vadd.f32 0.0, %v3405
    %3407 = vdwg.mxu0
    %3408 = vmatprep.subr.mxu0 %v2202
    %3409 = vmatpush1.msra.mxu0 %v2201
    %3410 = vmatprep.subr.mxu0 %v2207
    %3411 = vmatpush1.msra.mxu0 %v2206
    %3412 = vmatprep.subr.mxu0 %v2212
    %3413 = vmatpush1.msra.mxu0 %v2211
    %3414 = vmatprep.subr.mxu0 %v2217
    %3415 = vmatpush1.msra.mxu0 %v2216
    %3416 = vmatprep.subr.mxu0 %v2243
    %3417 = vmatpush1.msra.mxu0 %v2240
    %3418 = vmatprep.subr.mxu0 0.0
    %3419 = vmatpush1.msra.mxu0 0.0
    %3420 = vmatprep.subr.mxu0 0.0
    %3421 = vmatpush1.msra.mxu0 0.0
    %3422 = vmatprep.subr.mxu0 0.0
    %3423 = vmatpush1.msra.mxu0 0.0
    %3424 = vmatprep.subr.mxu0 0.0
    %3425 = vmatpush1.msra.mxu0 0.0
    %3426 = vmatprep.subr.mxu0 0.0
    %3427 = vmatpush1.msra.mxu0 0.0
    %3428 = vmatprep.subr.mxu0 0.0
    %3429 = vmatpush1.msra.mxu0 0.0
    %3430 = vmatprep.subr.mxu0 0.0
    %3431 = vmatpush1.msra.mxu0 0.0
    %3432 = vmatprep.subr.mxu0 0.0
    %3433 = vmatpush1.msra.mxu0 0.0
    %3434 = vmatprep.subr.mxu0 0.0
    %3435 = vmatpush1.msra.mxu0 0.0
    %3436 = vmatprep.subr.mxu0 0.0
    %3437 = vmatpush1.msra.mxu0 0.0
    %3438 = vmatprep.subr.mxu0 0.0
    %3439 = vmatpush1.msra.mxu0 0.0
    %3440 = vmatprep.subr.mxu0 0.0
    %3441 = vmatpush1.msra.mxu0 0.0
    %3442 = vmatprep.subr.mxu0 0.0
    %3443 = vmatpush1.msra.mxu0 0.0
    %3444 = vmatprep.subr.mxu0 0.0
    %3445 = vmatpush1.msra.mxu0 0.0
    %3446 = vmatprep.subr.mxu0 0.0
    %3447 = vmatpush1.msra.mxu0 0.0
    %3448 = vmatprep.subr.mxu0 0.0
    %3449 = vmatpush1.msra.mxu0 0.0
    %3450 = vmatprep.subr.mxu0 0.0
    %3451 = vmatpush1.msra.mxu0 0.0
    %3452 = vmatprep.subr.mxu0 0.0
    %3453 = vmatpush1.msra.mxu0 0.0
    %3454 = vmatprep.subr.mxu0 0.0
    %3455 = vmatpush1.msra.mxu0 0.0
    %3456 = vmatprep.subr.mxu0 0.0
    %3457 = vmatpush1.msra.mxu0 0.0
    %3458 = vmatprep.subr.mxu0 0.0
    %3459 = vmatpush1.msra.mxu0 0.0
    %3460 = vmatprep.subr.mxu0 0.0
    %3461 = vmatpush1.msra.mxu0 0.0
    %3462 = vmatprep.subr.mxu0 0.0
    %3463 = vmatpush1.msra.mxu0 0.0
    %3464 = vmatprep.subr.mxu0 0.0
    %3465 = vmatpush1.msra.mxu0 0.0
    %3466 = vmatprep.subr.mxu0 0.0
    %3467 = vmatpush1.msra.mxu0 0.0
    %3468 = vmatprep.subr.mxu0 0.0
    %3469 = vmatpush1.msra.mxu0 0.0
    %3470 = vmatprep.subr.mxu0 0.0
    %3471 = vmatpush1.msra.mxu0 0.0
    %3472 = vmatprep.mubr.f32.mxu0 0.0
    %3473 = vmatmul.mubr.f32.gmra.mrb[0].mxu0 %v3326
    %v3474 = vpop.f32.mrb[0].mxu0
    %v3475 = vadd.f32 0.0, %v3474
    %v3476 = vpop.f32.mrb[0].mxu0
    %v3477 = vadd.f32 0.0, %v3476
    %3478 = vmatprep.mubr.f32.mxu0 0.0
    %3479 = vmatmul.mubr.f32.gmra.mrb[0].mxu0 %v3329
    %v3480 = vpop.f32.mrb[0].mxu0
    %v3481 = vadd.f32 0.0, %v3480
    %v3482 = vpop.f32.mrb[0].mxu0
    %v3483 = vadd.f32 0.0, %v3482
    %3484 = vdwg.mxu0
    %3485 = vmatprep.subr.mxu0 0.0
    %3486 = vmatpush1.msra.mxu0 %v2203
    %3487 = vmatprep.subr.mxu0 0.0
    %3488 = vmatpush1.msra.mxu0 %v2208
    %3489 = vmatprep.subr.mxu0 0.0
    %3490 = vmatpush1.msra.mxu0 %v2213
    %3491 = vmatprep.subr.mxu0 0.0
    %3492 = vmatpush1.msra.mxu0 %v2218
    %3493 = vmatprep.subr.mxu0 0.0
    %3494 = vmatpush1.msra.mxu0 %v2246
    %3495 = vmatprep.subr.mxu0 0.0
    %3496 = vmatpush1.msra.mxu0 0.0
    %3497 = vmatprep.subr.mxu0 0.0
    %3498 = vmatpush1.msra.mxu0 0.0
    %3499 = vmatprep.subr.mxu0 0.0
    %3500 = vmatpush1.msra.mxu0 0.0
    %3501 = vmatprep.subr.mxu0 0.0
    %3502 = vmatpush1.msra.mxu0 0.0
    %3503 = vmatprep.subr.mxu0 0.0
    %3504 = vmatpush1.msra.mxu0 0.0
    %3505 = vmatprep.subr.mxu0 0.0
    %3506 = vmatpush1.msra.mxu0 0.0
    %3507 = vmatprep.subr.mxu0 0.0
    %3508 = vmatpush1.msra.mxu0 0.0
    %3509 = vmatprep.subr.mxu0 0.0
    %3510 = vmatpush1.msra.mxu0 0.0
    %3511 = vmatprep.subr.mxu0 0.0
    %3512 = vmatpush1.msra.mxu0 0.0
    %3513 = vmatprep.subr.mxu0 0.0
    %3514 = vmatpush1.msra.mxu0 0.0
    %3515 = vmatprep.subr.mxu0 0.0
    %3516 = vmatpush1.msra.mxu0 0.0
    %3517 = vmatprep.subr.mxu0 0.0
    %3518 = vmatpush1.msra.mxu0 0.0
    %3519 = vmatprep.subr.mxu0 0.0
    %3520 = vmatpush1.msra.mxu0 0.0
    %3521 = vmatprep.subr.mxu0 0.0
    %3522 = vmatpush1.msra.mxu0 0.0
    %3523 = vmatprep.subr.mxu0 0.0
    %3524 = vmatpush1.msra.mxu0 0.0
    %3525 = vmatprep.subr.mxu0 0.0
    %3526 = vmatpush1.msra.mxu0 0.0
    %3527 = vmatprep.subr.mxu0 0.0
    %3528 = vmatpush1.msra.mxu0 0.0
    %3529 = vmatprep.subr.mxu0 0.0
    %3530 = vmatpush1.msra.mxu0 0.0
    %3531 = vmatprep.subr.mxu0 0.0
    %3532 = vmatpush1.msra.mxu0 0.0
    %3533 = vmatprep.subr.mxu0 0.0
    %3534 = vmatpush1.msra.mxu0 0.0
    %3535 = vmatprep.subr.mxu0 0.0
    %3536 = vmatpush1.msra.mxu0 0.0
    %3537 = vmatprep.subr.mxu0 0.0
    %3538 = vmatpush1.msra.mxu0 0.0
    %3539 = vmatprep.subr.mxu0 0.0
    %3540 = vmatpush1.msra.mxu0 0.0
    %3541 = vmatprep.subr.mxu0 0.0
    %3542 = vmatpush1.msra.mxu0 0.0
    %3543 = vmatprep.subr.mxu0 0.0
    %3544 = vmatpush1.msra.mxu0 0.0
    %3545 = vmatprep.subr.mxu0 0.0
    %3546 = vmatpush1.msra.mxu0 0.0
    %3547 = vmatprep.subr.mxu0 0.0
    %3548 = vmatpush1.msra.mxu0 0.0
    %3549 = vmatprep.mubr.f32.mxu0 0.0
    %3550 = vmatmul.mubr.f32.gmra.mrb[0].mxu0 %v3326
    %v3551 = vpop.f32.mrb[0].mxu0
    %v3552 = vadd.f32 0.0, %v3551
    %v3553 = vpop.f32.mrb[0].mxu0
    %3554 = vmatprep.mubr.f32.mxu0 0.0
    %3555 = vmatmul.mubr.f32.gmra.mrb[0].mxu0 %v3329
    %v3556 = vpop.f32.mrb[0].mxu0
    %v3557 = vadd.f32 0.0, %v3556
    %v3558 = vpop.f32.mrb[0].mxu0
    %3559 = vdwg.mxu0
    %s3560 = scalar_lea.vmem [#allocation9], 1152
    %v3561 = vld [vmem:[%s3560] sm:$0xff]
    %v3562 = vld [vmem:[%s3560 + $0x8] sm:$0xff]
    %v3563 = vld [vmem:[%s3560 + $0x10] sm:$0xff]
    %v3564 = vld [vmem:[%s3560 + $0x18] sm:$0xff]
    %v3565 = vld [vmem:[%s3560 + $0x20] sm:$0xff]
    %v3566 = vld [vmem:[%s3560 + $0x28] sm:$0xff]
    %v3567 = vld [vmem:[%s3560 + $0x30] sm:$0xff]
    %v3568 = vld [vmem:[%s3560 + $0x38] sm:$0xff]
    %v3569 = vld [vmem:[%s3560 + $0x40] sm:$0xff]
    %v3570 = vld [vmem:[%s3560 + $0x48] sm:$0xff]
    %v3571 = vld [vmem:[%s3560 + $0x50] sm:$0xff]
    %v3572 = vld [vmem:[%s3560 + $0x58] sm:$0xff]
    %v3573 = vld [vmem:[%s3560 + $0x60] sm:$0xff]
    %v3574 = vld [vmem:[%s3560 + $0x68] sm:$0xff]
    %v3575 = vld [vmem:[%s3560 + $0x70] sm:$0xff]
    %v3576 = vld [vmem:[%s3560 + $0x78] sm:$0xff]
    %v3577 = vld [vmem:[%s3560 + $0x80] sm:$0xff]
    %v3578 = vld [vmem:[%s3560 + $0x88] sm:$0xff]
    %v3579 = vld [vmem:[%s3560 + $0x90] sm:$0xff]
    %v3580 = vld [vmem:[%s3560 + $0x98] sm:$0xff]
    %v3581 = vld [vmem:[%s3560 + $0xa0] sm:$0xff]
    %v3582 = vld [vmem:[%s3560 + $0xa8] sm:$0xff]
    %v3583 = vld [vmem:[%s3560 + $0xb0] sm:$0xff]
    %v3584 = vld [vmem:[%s3560 + $0xb8] sm:$0xff]
    %v3585 = vld [vmem:[%s3560 + $0xc0] sm:$0xff]
    %v3586 = vld [vmem:[%s3560 + $0xc8] sm:$0xff]
    %v3587 = vld [vmem:[%s3560 + $0xd0] sm:$0xff]
    %v3588 = vld [vmem:[%s3560 + $0xd8] sm:$0xff]
    %v3589 = vld [vmem:[%s3560 + $0xe0] sm:$0xff]
    %v3590 = vld [vmem:[%s3560 + $0xe8] sm:$0xff]
    %v3591 = vld [vmem:[%s3560 + $0xf0] sm:$0xff]
    %v3592 = vld [vmem:[%s3560 + $0xf8] sm:$0xff]
    %v3593 = vld [vmem:[%s3560 + $0x100] sm:$0xff]
    %v3594 = vld [vmem:[%s3560 + $0x108] sm:$0xff]
    %v3595 = vld [vmem:[%s3560 + $0x110] sm:$0xff]
    %v3596 = vld [vmem:[%s3560 + $0x118] sm:$0xff]
    %v3597 = vld [vmem:[%s3560 + $0x120] sm:$0xff]
    %v3598 = vld [vmem:[%s3560 + $0x128] sm:$0xff]
    %v3599 = vld [vmem:[%s3560 + $0x130] sm:$0xff]
    %v3600 = vld [vmem:[%s3560 + $0x138] sm:$0xff]
    %v3601 = vld [vmem:[%s3560 + $0x140] sm:$0xff]
    %v3602 = vld [vmem:[%s3560 + $0x148] sm:$0xff]
    %v3603 = vld [vmem:[%s3560 + $0x150] sm:$0xff]
    %v3604 = vld [vmem:[%s3560 + $0x158] sm:$0xff]
    %v3605 = vld [vmem:[%s3560 + $0x160] sm:$0xff]
    %v3606 = vld [vmem:[%s3560 + $0x168] sm:$0xff]
    %v3607 = vld [vmem:[%s3560 + $0x170] sm:$0xff]
    %v3608 = vld [vmem:[%s3560 + $0x178] sm:$0xff]
    %v3609 = vld [vmem:[%s3560 + $0x180] sm:$0xff]
    %v3610 = vld [vmem:[%s3560 + $0x188] sm:$0xff]
    %v3611 = vld [vmem:[%s3560 + $0x190] sm:$0xff]
    %v3612 = vld [vmem:[%s3560 + $0x198] sm:$0xff]
    %v3613 = vld [vmem:[%s3560 + $0x1a0] sm:$0xff]
    %v3614 = vld [vmem:[%s3560 + $0x1a8] sm:$0xff]
    %v3615 = vld [vmem:[%s3560 + $0x1b0] sm:$0xff]
    %v3616 = vld [vmem:[%s3560 + $0x1b8] sm:$0xff]
    %v3617 = vld [vmem:[%s3560 + $0x1c0] sm:$0xff]
    %v3618 = vld [vmem:[%s3560 + $0x1c8] sm:$0xff]
    %v3619 = vld [vmem:[%s3560 + $0x1d0] sm:$0xff]
    %v3620 = vld [vmem:[%s3560 + $0x1d8] sm:$0xff]
    %v3621 = vld [vmem:[%s3560 + $0x1e0] sm:$0xff]
    %v3622 = vld [vmem:[%s3560 + $0x1e8] sm:$0xff]
    %v3623 = vld [vmem:[%s3560 + $0x1f0] sm:$0xff]
    %v3624 = vld [vmem:[%s3560 + $0x1f8] sm:$0xff]
    %v3625 = vld [vmem:[%s3560 + $0x200] sm:$0xff]
    %v3626 = vld [vmem:[%s3560 + $0x208] sm:$0xff]
    %v3627 = vld [vmem:[%s3560 + $0x210] sm:$0xff]
    %v3628 = vld [vmem:[%s3560 + $0x218] sm:$0xff]
    %v3629 = vld [vmem:[%s3560 + $0x220] sm:$0xff]
    %v3630 = vld [vmem:[%s3560 + $0x228] sm:$0xff]
    %v3631 = vld [vmem:[%s3560 + $0x230] sm:$0xff]
    %v3632 = vld [vmem:[%s3560 + $0x238] sm:$0xff]
    %v3634 = vsel %vm297, %v3552, 0
    %v3637 = vsel %vm297, %v3557, 0
    %3639 = vmatprep.subr.mxu0 0.0
    %3640 = vmatpush1.msra.mxu0 %v3561
    %3641 = vmatprep.subr.mxu0 0.0
    %3642 = vmatpush1.msra.mxu0 %v3562
    %3643 = vmatprep.subr.mxu0 0.0
    %3644 = vmatpush1.msra.mxu0 %v3563
    %3645 = vmatprep.subr.mxu0 0.0
    %3646 = vmatpush1.msra.mxu0 %v3564
    %3647 = vmatprep.subr.mxu0 0.0
    %3648 = vmatpush1.msra.mxu0 %v3565
    %3649 = vmatprep.subr.mxu0 0.0
    %3650 = vmatpush1.msra.mxu0 %v3566
    %3651 = vmatprep.subr.mxu0 0.0
    %3652 = vmatpush1.msra.mxu0 %v3567
    %3653 = vmatprep.subr.mxu0 0.0
    %3654 = vmatpush1.msra.mxu0 %v3568
    %3655 = vmatprep.subr.mxu0 0.0
    %3656 = vmatpush1.msra.mxu0 %v3569
    %3657 = vmatprep.subr.mxu0 0.0
    %3658 = vmatpush1.msra.mxu0 %v3570
    %3659 = vmatprep.subr.mxu0 0.0
    %3660 = vmatpush1.msra.mxu0 %v3571
    %3661 = vmatprep.subr.mxu0 0.0
    %3662 = vmatpush1.msra.mxu0 %v3572
    %3663 = vmatprep.subr.mxu0 0.0
    %3664 = vmatpush1.msra.mxu0 %v3573
    %3665 = vmatprep.subr.mxu0 0.0
    %3666 = vmatpush1.msra.mxu0 %v3574
    %3667 = vmatprep.subr.mxu0 0.0
    %3668 = vmatpush1.msra.mxu0 %v3575
    %3669 = vmatprep.subr.mxu0 0.0
    %3670 = vmatpush1.msra.mxu0 %v3576
    %3671 = vmatprep.subr.mxu0 0.0
    %3672 = vmatpush1.msra.mxu0 %v3577
    %3673 = vmatprep.subr.mxu0 0.0
    %3674 = vmatpush1.msra.mxu0 %v3578
    %3675 = vmatprep.subr.mxu0 0.0
    %3676 = vmatpush1.msra.mxu0 %v3579
    %3677 = vmatprep.subr.mxu0 0.0
    %3678 = vmatpush1.msra.mxu0 %v3580
    %3679 = vmatprep.subr.mxu0 0.0
    %3680 = vmatpush1.msra.mxu0 %v3581
    %3681 = vmatprep.subr.mxu0 0.0
    %3682 = vmatpush1.msra.mxu0 %v3582
    %3683 = vmatprep.subr.mxu0 0.0
    %3684 = vmatpush1.msra.mxu0 %v3583
    %3685 = vmatprep.subr.mxu0 0.0
    %3686 = vmatpush1.msra.mxu0 %v3584
    %3687 = vmatprep.subr.mxu0 0.0
    %3688 = vmatpush1.msra.mxu0 %v3585
    %3689 = vmatprep.subr.mxu0 0.0
    %3690 = vmatpush1.msra.mxu0 %v3586
    %3691 = vmatprep.subr.mxu0 0.0
    %3692 = vmatpush1.msra.mxu0 %v3587
    %3693 = vmatprep.subr.mxu0 0.0
    %3694 = vmatpush1.msra.mxu0 %v3588
    %3695 = vmatprep.subr.mxu0 0.0
    %3696 = vmatpush1.msra.mxu0 %v3589
    %3697 = vmatprep.subr.mxu0 0.0
    %3698 = vmatpush1.msra.mxu0 %v3590
    %3699 = vmatprep.subr.mxu0 0.0
    %3700 = vmatpush1.msra.mxu0 %v3591
    %3701 = vmatprep.subr.mxu0 0.0
    %3702 = vmatpush1.msra.mxu0 %v3592
    %3703 = vmatprep.mubr.f32.mxu0 %v3400
    %3704 = vmatmul.mubr.f32.gmra.mrb[0].mxu0 %v3398
    %v3705 = vpop.f32.mrb[0].mxu0
    %v3706 = vadd.f32 0.0, %v3705
    %v3707 = vpop.f32.mrb[0].mxu0
    %3708 = vmatprep.mubr.f32.mxu0 %v3406
    %3709 = vmatmul.mubr.f32.gmra.mrb[0].mxu0 %v3404
    %v3710 = vpop.f32.mrb[0].mxu0
    %v3711 = vadd.f32 0.0, %v3710
    %v3712 = vpop.f32.mrb[0].mxu0
    %3713 = vdwg.mxu0
    %3714 = vmatprep.subr.mxu0 0.0
    %3715 = vmatpush1.msra.mxu0 %v3593
    %3716 = vmatprep.subr.mxu0 0.0
    %3717 = vmatpush1.msra.mxu0 %v3594
    %3718 = vmatprep.subr.mxu0 0.0
    %3719 = vmatpush1.msra.mxu0 %v3595
    %3720 = vmatprep.subr.mxu0 0.0
    %3721 = vmatpush1.msra.mxu0 %v3596
    %3722 = vmatprep.subr.mxu0 0.0
    %3723 = vmatpush1.msra.mxu0 %v3597
    %3724 = vmatprep.subr.mxu0 0.0
    %3725 = vmatpush1.msra.mxu0 %v3598
    %3726 = vmatprep.subr.mxu0 0.0
    %3727 = vmatpush1.msra.mxu0 %v3599
    %3728 = vmatprep.subr.mxu0 0.0
    %3729 = vmatpush1.msra.mxu0 %v3600
    %3730 = vmatprep.subr.mxu0 0.0
    %3731 = vmatpush1.msra.mxu0 %v3601
    %3732 = vmatprep.subr.mxu0 0.0
    %3733 = vmatpush1.msra.mxu0 %v3602
    %3734 = vmatprep.subr.mxu0 0.0
    %3735 = vmatpush1.msra.mxu0 %v3603
    %3736 = vmatprep.subr.mxu0 0.0
    %3737 = vmatpush1.msra.mxu0 %v3604
    %3738 = vmatprep.subr.mxu0 0.0
    %3739 = vmatpush1.msra.mxu0 %v3605
    %3740 = vmatprep.subr.mxu0 0.0
    %3741 = vmatpush1.msra.mxu0 %v3606
    %3742 = vmatprep.subr.mxu0 0.0
    %3743 = vmatpush1.msra.mxu0 %v3607
    %3744 = vmatprep.subr.mxu0 0.0
    %3745 = vmatpush1.msra.mxu0 %v3608
    %3746 = vmatprep.subr.mxu0 0.0
    %3747 = vmatpush1.msra.mxu0 %v3609
    %3748 = vmatprep.subr.mxu0 0.0
    %3749 = vmatpush1.msra.mxu0 %v3610
    %3750 = vmatprep.subr.mxu0 0.0
    %3751 = vmatpush1.msra.mxu0 %v3611
    %3752 = vmatprep.subr.mxu0 0.0
    %3753 = vmatpush1.msra.mxu0 %v3612
    %3754 = vmatprep.subr.mxu0 0.0
    %3755 = vmatpush1.msra.mxu0 %v3613
    %3756 = vmatprep.subr.mxu0 0.0
    %3757 = vmatpush1.msra.mxu0 %v3614
    %3758 = vmatprep.subr.mxu0 0.0
    %3759 = vmatpush1.msra.mxu0 %v3615
    %3760 = vmatprep.subr.mxu0 0.0
    %3761 = vmatpush1.msra.mxu0 %v3616
    %3762 = vmatprep.subr.mxu0 0.0
    %3763 = vmatpush1.msra.mxu0 %v3617
    %3764 = vmatprep.subr.mxu0 0.0
    %3765 = vmatpush1.msra.mxu0 %v3618
    %3766 = vmatprep.subr.mxu0 0.0
    %3767 = vmatpush1.msra.mxu0 %v3619
    %3768 = vmatprep.subr.mxu0 0.0
    %3769 = vmatpush1.msra.mxu0 %v3620
    %3770 = vmatprep.subr.mxu0 0.0
    %3771 = vmatpush1.msra.mxu0 %v3621
    %3772 = vmatprep.subr.mxu0 0.0
    %3773 = vmatpush1.msra.mxu0 %v3622
    %3774 = vmatprep.subr.mxu0 0.0
    %3775 = vmatpush1.msra.mxu0 %v3623
    %3776 = vmatprep.subr.mxu0 0.0
    %3777 = vmatpush1.msra.mxu0 %v3624
    %3778 = vmatprep.mubr.f32.mxu0 %v3477
    %3779 = vmatmul.mubr.f32.gmra.mrb[0].mxu0 %v3475
    %v3780 = vpop.f32.mrb[0].mxu0
    %v3781 = vadd.f32 %v3706, %v3780
    %v3782 = vpop.f32.mrb[0].mxu0
    %3783 = vmatprep.mubr.f32.mxu0 %v3483
    %3784 = vmatmul.mubr.f32.gmra.mrb[0].mxu0 %v3481
    %v3785 = vpop.f32.mrb[0].mxu0
    %v3786 = vadd.f32 %v3711, %v3785
    %v3787 = vpop.f32.mrb[0].mxu0
    %3788 = vdwg.mxu0
    %3789 = vmatprep.subr.mxu0 0.0
    %3790 = vmatpush1.msra.mxu0 %v3625
    %3791 = vmatprep.subr.mxu0 0.0
    %3792 = vmatpush1.msra.mxu0 %v3626
    %3793 = vmatprep.subr.mxu0 0.0
    %3794 = vmatpush1.msra.mxu0 %v3627
    %3795 = vmatprep.subr.mxu0 0.0
    %3796 = vmatpush1.msra.mxu0 %v3628
    %3797 = vmatprep.subr.mxu0 0.0
    %3798 = vmatpush1.msra.mxu0 %v3629
    %3799 = vmatprep.subr.mxu0 0.0
    %3800 = vmatpush1.msra.mxu0 %v3630
    %3801 = vmatprep.subr.mxu0 0.0
    %3802 = vmatpush1.msra.mxu0 %v3631
    %3803 = vmatprep.subr.mxu0 0.0
    %3804 = vmatpush1.msra.mxu0 %v3632
    %3805 = vmatprep.subr.mxu0 0.0
    %3806 = vmatpush1.msra.mxu0 0.0
    %3807 = vmatprep.subr.mxu0 0.0
    %3808 = vmatpush1.msra.mxu0 0.0
    %3809 = vmatprep.subr.mxu0 0.0
    %3810 = vmatpush1.msra.mxu0 0.0
    %3811 = vmatprep.subr.mxu0 0.0
    %3812 = vmatpush1.msra.mxu0 0.0
    %3813 = vmatprep.subr.mxu0 0.0
    %3814 = vmatpush1.msra.mxu0 0.0
    %3815 = vmatprep.subr.mxu0 0.0
    %3816 = vmatpush1.msra.mxu0 0.0
    %3817 = vmatprep.subr.mxu0 0.0
    %3818 = vmatpush1.msra.mxu0 0.0
    %3819 = vmatprep.subr.mxu0 0.0
    %3820 = vmatpush1.msra.mxu0 0.0
    %3821 = vmatprep.subr.mxu0 0.0
    %3822 = vmatpush1.msra.mxu0 0.0
    %3823 = vmatprep.subr.mxu0 0.0
    %3824 = vmatpush1.msra.mxu0 0.0
    %3825 = vmatprep.subr.mxu0 0.0
    %3826 = vmatpush1.msra.mxu0 0.0
    %3827 = vmatprep.subr.mxu0 0.0
    %3828 = vmatpush1.msra.mxu0 0.0
    %3829 = vmatprep.subr.mxu0 0.0
    %3830 = vmatpush1.msra.mxu0 0.0
    %3831 = vmatprep.subr.mxu0 0.0
    %3832 = vmatpush1.msra.mxu0 0.0
    %3833 = vmatprep.subr.mxu0 0.0
    %3834 = vmatpush1.msra.mxu0 0.0
    %3835 = vmatprep.subr.mxu0 0.0
    %3836 = vmatpush1.msra.mxu0 0.0
    %3837 = vmatprep.subr.mxu0 0.0
    %3838 = vmatpush1.msra.mxu0 0.0
    %3839 = vmatprep.subr.mxu0 0.0
    %3840 = vmatpush1.msra.mxu0 0.0
    %3841 = vmatprep.subr.mxu0 0.0
    %3842 = vmatpush1.msra.mxu0 0.0
    %3843 = vmatprep.subr.mxu0 0.0
    %3844 = vmatpush1.msra.mxu0 0.0
    %3845 = vmatprep.subr.mxu0 0.0
    %3846 = vmatpush1.msra.mxu0 0.0
    %3847 = vmatprep.subr.mxu0 0.0
    %3848 = vmatpush1.msra.mxu0 0.0
    %3849 = vmatprep.subr.mxu0 0.0
    %3850 = vmatpush1.msra.mxu0 0.0
    %3851 = vmatprep.subr.mxu0 0.0
    %3852 = vmatpush1.msra.mxu0 0.0
    %3853 = vmatprep.mubr.f32.mxu0 0.0
    %3854 = vmatmul.mubr.f32.gmra.mrb[0].mxu0 %v3634
    %v3855 = vpop.f32.mrb[0].mxu0
    %v3856 = vadd.f32 %v3781, %v3855
    %v3857 = vpop.f32.mrb[0].mxu0
    %3858 = vmatprep.mubr.f32.mxu0 0.0
    %3859 = vmatmul.mubr.f32.gmra.mrb[0].mxu0 %v3637
    %v3860 = vpop.f32.mrb[0].mxu0
    %v3861 = vadd.f32 %v3786, %v3860
    %v3862 = vpop.f32.mrb[0].mxu0
    %3863 = vdwg.mxu0
    %v3864 = vadd.f32 %v3314, %v3856
    %v3865 = vadd.f32 %v3319, %v3861
    %v3866 = vadd.f32 %v3864, %v3865
    %v3867 = vrot.slane %v3866, 4
    %v3868 = vadd.f32 %v3866, %v3867
    %v3869 = vrot.slane %v3868, 2
    %v3870 = vadd.f32 %v3868, %v3869
    %v3871 = vrot.slane %v3870, 1
    %v3872 = vadd.f32 %v3870, %v3871
    %v3873 = vmul.f32 %v3864, %v3864
    %v3874 = vmul.f32 %v3865, %v3865
    %v3875 = vadd.f32 %v3873, %v3874
    %v3876 = vrot.slane %v3875, 4
    %v3877 = vadd.f32 %v3875, %v3876
    %v3878 = vrot.slane %v3877, 2
    %v3879 = vadd.f32 %v3877, %v3878
    %v3880 = vrot.slane %v3879, 1
    %v3881 = vadd.f32 %v3879, %v3880
    %v3882 = vsel %vm1521, %v3872, %v3881
    %v3883 = vld [vmem:[#allocation12] sm:$0xff]
    %v3884 = vld [vmem:[#allocation12 + $0x8] sm:$0xff]
    %v3885 = vld [vmem:[#allocation12 + $0x10] sm:$0xff]
    %v3886 = vld [vmem:[#allocation12 + $0x18] sm:$0xff]
    %v3887 = vld [vmem:[#allocation12 + $0x20] sm:$0xff]
    %v3888 = vld [vmem:[#allocation12 + $0x28] sm:$0xff]
    %v3889 = vld [vmem:[#allocation12 + $0x30] sm:$0xff]
    %v3890 = vld [vmem:[#allocation12 + $0x38] sm:$0xff]
    %v3891 = vld [vmem:[#allocation12 + $0x40] sm:$0xff]
    %v3892 = vld [vmem:[#allocation12 + $0x48] sm:$0xff]
    %v3893 = vld [vmem:[#allocation12 + $0x50] sm:$0xff]
    %v3894 = vld [vmem:[#allocation12 + $0x58] sm:$0xff]
    %v3895 = vld [vmem:[#allocation12 + $0x60] sm:$0xff]
    %v3896 = vld [vmem:[#allocation12 + $0x68] sm:$0xff]
    %v3897 = vld [vmem:[#allocation12 + $0x70] sm:$0xff]
    %v3898 = vld [vmem:[#allocation12 + $0x78] sm:$0xff]
    %3899 = vmatprep.subr.mxu0 0.0
    %3900 = vmatpush1.msra.mxu0 %v3883
    %3901 = vmatprep.subr.mxu0 0.0
    %3902 = vmatpush1.msra.mxu0 %v3884
    %3903 = vmatprep.subr.mxu0 0.0
    %3904 = vmatpush1.msra.mxu0 %v3885
    %3905 = vmatprep.subr.mxu0 0.0
    %3906 = vmatpush1.msra.mxu0 %v3886
    %3907 = vmatprep.subr.mxu0 0.0
    %3908 = vmatpush1.msra.mxu0 %v3887
    %3909 = vmatprep.subr.mxu0 0.0
    %3910 = vmatpush1.msra.mxu0 %v3888
    %3911 = vmatprep.subr.mxu0 0.0
    %3912 = vmatpush1.msra.mxu0 %v3889
    %3913 = vmatprep.subr.mxu0 0.0
    %3914 = vmatpush1.msra.mxu0 %v3890
    %3915 = vmatprep.subr.mxu0 0.0
    %3916 = vmatpush1.msra.mxu0 %v3891
    %3917 = vmatprep.subr.mxu0 0.0
    %3918 = vmatpush1.msra.mxu0 %v3892
    %3919 = vmatprep.subr.mxu0 0.0
    %3920 = vmatpush1.msra.mxu0 %v3893
    %3921 = vmatprep.subr.mxu0 0.0
    %3922 = vmatpush1.msra.mxu0 %v3894
    %3923 = vmatprep.subr.mxu0 0.0
    %3924 = vmatpush1.msra.mxu0 %v3895
    %3925 = vmatprep.subr.mxu0 0.0
    %3926 = vmatpush1.msra.mxu0 %v3896
    %3927 = vmatprep.subr.mxu0 0.0
    %3928 = vmatpush1.msra.mxu0 %v3897
    %3929 = vmatprep.subr.mxu0 0.0
    %3930 = vmatpush1.msra.mxu0 %v3898
    %3931 = vmatprep.subr.mxu0 0.0
    %3932 = vmatpush1.msra.mxu0 0.0
    %3933 = vmatprep.subr.mxu0 0.0
    %3934 = vmatpush1.msra.mxu0 0.0
    %3935 = vmatprep.subr.mxu0 0.0
    %3936 = vmatpush1.msra.mxu0 0.0
    %3937 = vmatprep.subr.mxu0 0.0
    %3938 = vmatpush1.msra.mxu0 0.0
    %3939 = vmatprep.subr.mxu0 0.0
    %3940 = vmatpush1.msra.mxu0 0.0
    %3941 = vmatprep.subr.mxu0 0.0
    %3942 = vmatpush1.msra.mxu0 0.0
    %3943 = vmatprep.subr.mxu0 0.0
    %3944 = vmatpush1.msra.mxu0 0.0
    %3945 = vmatprep.subr.mxu0 0.0
    %3946 = vmatpush1.msra.mxu0 0.0
    %3947 = vmatprep.subr.mxu0 0.0
    %3948 = vmatpush1.msra.mxu0 0.0
    %3949 = vmatprep.subr.mxu0 0.0
    %3950 = vmatpush1.msra.mxu0 0.0
    %3951 = vmatprep.subr.mxu0 0.0
    %3952 = vmatpush1.msra.mxu0 0.0
    %3953 = vmatprep.subr.mxu0 0.0
    %3954 = vmatpush1.msra.mxu0 0.0
    %3955 = vmatprep.subr.mxu0 0.0
    %3956 = vmatpush1.msra.mxu0 0.0
    %3957 = vmatprep.subr.mxu0 0.0
    %3958 = vmatpush1.msra.mxu0 0.0
    %3959 = vmatprep.subr.mxu0 0.0
    %3960 = vmatpush1.msra.mxu0 0.0
    %3961 = vmatprep.subr.mxu0 0.0
    %3962 = vmatpush1.msra.mxu0 0.0
    %3963 = vmatprep.mubr.f32.mxu0 0.0
    %3964 = vmatmul.mubr.f32.gmra.mrb[0].mxu0 %v3882
    %v3965 = vpop.f32.mrb[0].mxu0
    %v3966 = vadd.f32 0.0, %v3965
    %v3967 = vpop.f32.mrb[0].mxu0
    %3968 = vdwg.mxu0
    %v3969 = vmul.f32 %v3966, 0.0078125
    %v3970 = vmul.f32 %v3969, %v3969
    %v3972 = vrot.slane %v3970, 7
    %v3974 = vsub.f32 %v3969, %v3972
    %v3975 = vld [vmem:[#allocation15] sm:$0x1]
    %v3976 = vld [vmem:[#allocation15 + $0x1] sm:$0x1]
    %v3977 = vadd.f32 %v3974, 1e-05
    %v3978 = vrsqrt.pop %v3977
    %v3980 = vrot.slane %v3978, 1
    %v3982 = vmul.f32 %v3975, %v3980
    %v3983 = vmul.f32 %v3969, %v3982
    %v3984 = vsub.f32 %v3976, %v3983
    %v3986 = vrot.slane %v3984, 7
    %v3988 = vsel %vm1521, %v3982, %v3986
    %v3989 = vld [vmem:[#allocation13] sm:$0xff]
    %v3990 = vld [vmem:[#allocation13 + $0x8] sm:$0xff]
    %vm3991 = vcmask 130048
    %v3993 = vsel %vm3991, %v3988, 0
    %3995 = vmatprep.subr.mxu0 0.0
    %3996 = vmatpush1.msra.mxu0 %v3989
    %3997 = vmatprep.subr.mxu0 0.0
    %3998 = vmatpush1.msra.mxu0 %v3990
    %3999 = vmatprep.subr.mxu0 0.0
    %4000 = vmatpush1.msra.mxu0 0.0
    %4001 = vmatprep.subr.mxu0 0.0
    %4002 = vmatpush1.msra.mxu0 0.0
    %4003 = vmatprep.subr.mxu0 0.0
    %4004 = vmatpush1.msra.mxu0 0.0
    %4005 = vmatprep.subr.mxu0 0.0
    %4006 = vmatpush1.msra.mxu0 0.0
    %4007 = vmatprep.subr.mxu0 0.0
    %4008 = vmatpush1.msra.mxu0 0.0
    %4009 = vmatprep.subr.mxu0 0.0
    %4010 = vmatpush1.msra.mxu0 0.0
    %4011 = vmatprep.subr.mxu0 0.0
    %4012 = vmatpush1.msra.mxu0 0.0
    %4013 = vmatprep.subr.mxu0 0.0
    %4014 = vmatpush1.msra.mxu0 0.0
    %4015 = vmatprep.subr.mxu0 0.0
    %4016 = vmatpush1.msra.mxu0 0.0
    %4017 = vmatprep.subr.mxu0 0.0
    %4018 = vmatpush1.msra.mxu0 0.0
    %4019 = vmatprep.subr.mxu0 0.0
    %4020 = vmatpush1.msra.mxu0 0.0
    %4021 = vmatprep.subr.mxu0 0.0
    %4022 = vmatpush1.msra.mxu0 0.0
    %4023 = vmatprep.subr.mxu0 0.0
    %4024 = vmatpush1.msra.mxu0 0.0
    %4025 = vmatprep.subr.mxu0 0.0
    %4026 = vmatpush1.msra.mxu0 0.0
    %4027 = vmatprep.subr.mxu0 0.0
    %4028 = vmatpush1.msra.mxu0 0.0
    %4029 = vmatprep.subr.mxu0 0.0
    %4030 = vmatpush1.msra.mxu0 0.0
    %4031 = vmatprep.subr.mxu0 0.0
    %4032 = vmatpush1.msra.mxu0 0.0
    %4033 = vmatprep.subr.mxu0 0.0
    %4034 = vmatpush1.msra.mxu0 0.0
    %4035 = vmatprep.subr.mxu0 0.0
    %4036 = vmatpush1.msra.mxu0 0.0
    %4037 = vmatprep.subr.mxu0 0.0
    %4038 = vmatpush1.msra.mxu0 0.0
    %4039 = vmatprep.subr.mxu0 0.0
    %4040 = vmatpush1.msra.mxu0 0.0
    %4041 = vmatprep.subr.mxu0 0.0
    %4042 = vmatpush1.msra.mxu0 0.0
    %4043 = vmatprep.subr.mxu0 0.0
    %4044 = vmatpush1.msra.mxu0 0.0
    %4045 = vmatprep.subr.mxu0 0.0
    %4046 = vmatpush1.msra.mxu0 0.0
    %4047 = vmatprep.subr.mxu0 0.0
    %4048 = vmatpush1.msra.mxu0 0.0
    %4049 = vmatprep.subr.mxu0 0.0
    %4050 = vmatpush1.msra.mxu0 0.0
    %4051 = vmatprep.subr.mxu0 0.0
    %4052 = vmatpush1.msra.mxu0 0.0
    %4053 = vmatprep.subr.mxu0 0.0
    %4054 = vmatpush1.msra.mxu0 0.0
    %4055 = vmatprep.subr.mxu0 0.0
    %4056 = vmatpush1.msra.mxu0 0.0
    %4057 = vmatprep.subr.mxu0 0.0
    %4058 = vmatpush1.msra.mxu0 0.0
    %4059 = vmatprep.mubr.f32.mxu0 0.0
    %4060 = vmatmul.mubr.f32.gmra.mrb[0].mxu0 %v3993
    %v4061 = vpop.f32.mrb[0].mxu0
    %v4062 = vadd.f32 0.0, %v4061
    %v4063 = vpop.f32.mrb[0].mxu0
    %4064 = vdwg.mxu0
    %v4065 = vlaneseq
    %v4066 = vshrl.u32 %v4065, 7
    %v4067 = vsub.s32 0, %v4066
    %v4068 = vrot.slane %v4062, %v4067
    %v4069 = vmul.f32 %v3864, %v4068
    %v4070 = vmul.f32 %v3865, %v4068
    %v4071 = vlaneseq
    %v4072 = vshrl.u32 %v4071, 7
    %v4073 = vsub.s32 1, %v4072
    %v4074 = vrot.slane %v4062, %v4073
    %v4075 = vadd.f32 %v4069, %v4074
    %v4076 = vadd.f32 %v4070, %v4074
    %vm4077 = vcmp.ge.f32.partialorder %v4075, 0.0
    %vm4078 = vcmp.ge.f32.partialorder %v4076, 0.0
    %v4079 = vmul.f32 %v4075, 0.01
    %v4080 = vmul.f32 %v4076, 0.01
    %v4081 = vsel %vm4077, %v4075, %v4079
    %v4082 = vsel %vm4078, %v4076, %v4080
    %v4084 = vrot.slane %v4081, 7
    %4085 = vrot.lane.b32.xlu0 %v4084, 16
    %v4086 = vpop.permute.xlu0 %4085
    %vm4088 = vcmask 1047681
    %4089 = vst.msk [vmem:[#allocation3] sm:$0xfe] %vm4088, %v4086
    %vm4090 = vcmask 130049
    %4091 = vst.msk [vmem:[#allocation3 + $0x8] sm:$0xfe] %vm4090, %v4086
    %vm4092 = vcmask 1040512
    %4093 = vst.msk [vmem:[#allocation3 + $0x10] sm:$0x1] %vm4092, %v4086
    %vm4094 = vcmask 122880
    %4095 = vst.msk [vmem:[#allocation3 + $0x18] sm:$0x1] %vm4094, %v4086
    %v4097 = vrot.slane %v4082, 5
    %4098 = vrot.lane.b32.xlu0 %v4097, 16
    %v4099 = vpop.permute.xlu0 %4098
    %vm4101 = vcmask 1047683
    %4102 = vst.msk [vmem:[#allocation3 + $0x10] sm:$0xf8] %vm4101, %v4099
    %vm4103 = vcmask 130051
    %4104 = vst.msk [vmem:[#allocation3 + $0x18] sm:$0xf8] %vm4103, %v4099
    %vm4105 = vcmask 1042560
    %4106 = vst.msk [vmem:[#allocation3 + $0x20] sm:$0x7] %vm4105, %v4099
    %vm4107 = vcmask 124928
    %4108 = vst.msk [vmem:[#allocation3 + $0x28] sm:$0x7] %vm4107, %v4099
    %v4109 = vld [vmem:[#allocation3] sm:$0xff]
    %v4110 = vld [vmem:[#allocation3 + $0x8] sm:$0xff]
    %v4111 = vld [vmem:[#allocation3 + $0x10] sm:$0xff]
    %v4112 = vld [vmem:[#allocation3 + $0x18] sm:$0xff]
    %v4113 = vld [vmem:[#allocation3 + $0x20] sm:$0xf]
    %v4114 = vld [vmem:[#allocation3 + $0x28] sm:$0xf]
    %v4115 = vld [vmem:[#allocation18] sm:$0xff]
    %vm4116 = vcmask 162816
    %v4118 = vsel %vm4116, %v4115, 0
    %v4121 = vsel %vm358, %v4113, 0
    %v4124 = vsel %vm358, %v4114, 0
    %4126 = vmatprep.subr.mxu0 %v4110
    %4127 = vmatpush1.msra.mxu0 %v4109
    %4128 = vmatprep.subr.mxu0 %v4112
    %4129 = vmatpush1.msra.mxu0 %v4111
    %4130 = vmatprep.subr.mxu0 %v4124
    %4131 = vmatpush1.msra.mxu0 %v4121
    %4132 = vmatprep.subr.mxu0 0.0
    %4133 = vmatpush1.msra.mxu0 0.0
    %4134 = vmatprep.subr.mxu0 0.0
    %4135 = vmatpush1.msra.mxu0 0.0
    %4136 = vmatprep.subr.mxu0 0.0
    %4137 = vmatpush1.msra.mxu0 0.0
    %4138 = vmatprep.subr.mxu0 0.0
    %4139 = vmatpush1.msra.mxu0 0.0
    %4140 = vmatprep.subr.mxu0 0.0
    %4141 = vmatpush1.msra.mxu0 0.0
    %4142 = vmatprep.subr.mxu0 0.0
    %4143 = vmatpush1.msra.mxu0 0.0
    %4144 = vmatprep.subr.mxu0 0.0
    %4145 = vmatpush1.msra.mxu0 0.0
    %4146 = vmatprep.subr.mxu0 0.0
    %4147 = vmatpush1.msra.mxu0 0.0
    %4148 = vmatprep.subr.mxu0 0.0
    %4149 = vmatpush1.msra.mxu0 0.0
    %4150 = vmatprep.subr.mxu0 0.0
    %4151 = vmatpush1.msra.mxu0 0.0
    %4152 = vmatprep.subr.mxu0 0.0
    %4153 = vmatpush1.msra.mxu0 0.0
    %4154 = vmatprep.subr.mxu0 0.0
    %4155 = vmatpush1.msra.mxu0 0.0
    %4156 = vmatprep.subr.mxu0 0.0
    %4157 = vmatpush1.msra.mxu0 0.0
    %4158 = vmatprep.subr.mxu0 0.0
    %4159 = vmatpush1.msra.mxu0 0.0
    %4160 = vmatprep.subr.mxu0 0.0
    %4161 = vmatpush1.msra.mxu0 0.0
    %4162 = vmatprep.subr.mxu0 0.0
    %4163 = vmatpush1.msra.mxu0 0.0
    %4164 = vmatprep.subr.mxu0 0.0
    %4165 = vmatpush1.msra.mxu0 0.0
    %4166 = vmatprep.subr.mxu0 0.0
    %4167 = vmatpush1.msra.mxu0 0.0
    %4168 = vmatprep.subr.mxu0 0.0
    %4169 = vmatpush1.msra.mxu0 0.0
    %4170 = vmatprep.subr.mxu0 0.0
    %4171 = vmatpush1.msra.mxu0 0.0
    %4172 = vmatprep.subr.mxu0 0.0
    %4173 = vmatpush1.msra.mxu0 0.0
    %4174 = vmatprep.subr.mxu0 0.0
    %4175 = vmatpush1.msra.mxu0 0.0
    %4176 = vmatprep.subr.mxu0 0.0
    %4177 = vmatpush1.msra.mxu0 0.0
    %4178 = vmatprep.subr.mxu0 0.0
    %4179 = vmatpush1.msra.mxu0 0.0
    %4180 = vmatprep.subr.mxu0 0.0
    %4181 = vmatpush1.msra.mxu0 0.0
    %4182 = vmatprep.subr.mxu0 0.0
    %4183 = vmatpush1.msra.mxu0 0.0
    %4184 = vmatprep.subr.mxu0 0.0
    %4185 = vmatpush1.msra.mxu0 0.0
    %4186 = vmatprep.subr.mxu0 0.0
    %4187 = vmatpush1.msra.mxu0 0.0
    %4188 = vmatprep.subr.mxu0 0.0
    %4189 = vmatpush1.msra.mxu0 0.0
    %4190 = vmatprep.mubr.f32.mxu0 0.0
    %4191 = vmatmul.mubr.f32.gmra.mrb[0].mxu0 %v4118
    %v4192 = vpop.f32.mrb[0].mxu0
    %v4193 = vadd.f32 0.0, %v4192
    %v4194 = vpop.f32.mrb[0].mxu0
    %v4195 = vadd.f32 0.0, %v4194
    %4196 = vdwg.mxu0
    %v4197 = vld [vmem:[#allocation16] sm:$0xff]
    %v4198 = vld [vmem:[#allocation16 + $0x8] sm:$0xff]
    %v4199 = vld [vmem:[#allocation16 + $0x10] sm:$0xff]
    %v4200 = vld [vmem:[#allocation16 + $0x18] sm:$0xff]
    %v4201 = vld [vmem:[#allocation16 + $0x20] sm:$0xff]
    %v4202 = vld [vmem:[#allocation16 + $0x28] sm:$0xff]
    %v4203 = vld [vmem:[#allocation16 + $0x30] sm:$0xff]
    %v4204 = vld [vmem:[#allocation16 + $0x38] sm:$0xff]
    %v4205 = vld [vmem:[#allocation16 + $0x40] sm:$0xff]
    %v4206 = vld [vmem:[#allocation16 + $0x48] sm:$0xff]
    %v4207 = vld [vmem:[#allocation16 + $0x50] sm:$0xff]
    %v4208 = vld [vmem:[#allocation16 + $0x58] sm:$0xff]
    %v4209 = vld [vmem:[#allocation16 + $0x60] sm:$0xff]
    %v4210 = vld [vmem:[#allocation16 + $0x68] sm:$0xff]
    %v4211 = vld [vmem:[#allocation16 + $0x70] sm:$0xff]
    %v4212 = vld [vmem:[#allocation16 + $0x78] sm:$0xff]
    %v4213 = vld [vmem:[#allocation16 + $0x80] sm:$0xff]
    %v4214 = vld [vmem:[#allocation16 + $0x88] sm:$0xff]
    %v4215 = vld [vmem:[#allocation16 + $0x90] sm:$0xff]
    %v4216 = vld [vmem:[#allocation16 + $0x98] sm:$0xff]
    %s4217 = scalar_lea.vmem [#allocation18], 8
    %v4218 = vld [vmem:[%s4217] sm:$0xff]
    %v4220 = vsel %vm4116, %v4218, 0
    %4222 = vmatprep.subr.mxu0 %v4110
    %4223 = vmatpush1.msra.mxu0 %v4109
    %4224 = vmatprep.subr.mxu0 %v4112
    %4225 = vmatpush1.msra.mxu0 %v4111
    %4226 = vmatprep.subr.mxu0 %v4124
    %4227 = vmatpush1.msra.mxu0 %v4121
    %4228 = vmatprep.subr.mxu0 0.0
    %4229 = vmatpush1.msra.mxu0 0.0
    %4230 = vmatprep.subr.mxu0 0.0
    %4231 = vmatpush1.msra.mxu0 0.0
    %4232 = vmatprep.subr.mxu0 0.0
    %4233 = vmatpush1.msra.mxu0 0.0
    %4234 = vmatprep.subr.mxu0 0.0
    %4235 = vmatpush1.msra.mxu0 0.0
    %4236 = vmatprep.subr.mxu0 0.0
    %4237 = vmatpush1.msra.mxu0 0.0
    %4238 = vmatprep.subr.mxu0 0.0
    %4239 = vmatpush1.msra.mxu0 0.0
    %4240 = vmatprep.subr.mxu0 0.0
    %4241 = vmatpush1.msra.mxu0 0.0
    %4242 = vmatprep.subr.mxu0 0.0
    %4243 = vmatpush1.msra.mxu0 0.0
    %4244 = vmatprep.subr.mxu0 0.0
    %4245 = vmatpush1.msra.mxu0 0.0
    %4246 = vmatprep.subr.mxu0 0.0
    %4247 = vmatpush1.msra.mxu0 0.0
    %4248 = vmatprep.subr.mxu0 0.0
    %4249 = vmatpush1.msra.mxu0 0.0
    %4250 = vmatprep.subr.mxu0 0.0
    %4251 = vmatpush1.msra.mxu0 0.0
    %4252 = vmatprep.subr.mxu0 0.0
    %4253 = vmatpush1.msra.mxu0 0.0
    %4254 = vmatprep.subr.mxu0 0.0
    %4255 = vmatpush1.msra.mxu0 0.0
    %4256 = vmatprep.subr.mxu0 0.0
    %4257 = vmatpush1.msra.mxu0 0.0
    %4258 = vmatprep.subr.mxu0 0.0
    %4259 = vmatpush1.msra.mxu0 0.0
    %4260 = vmatprep.subr.mxu0 0.0
    %4261 = vmatpush1.msra.mxu0 0.0
    %4262 = vmatprep.subr.mxu0 0.0
    %4263 = vmatpush1.msra.mxu0 0.0
    %4264 = vmatprep.subr.mxu0 0.0
    %4265 = vmatpush1.msra.mxu0 0.0
    %4266 = vmatprep.subr.mxu0 0.0
    %4267 = vmatpush1.msra.mxu0 0.0
    %4268 = vmatprep.subr.mxu0 0.0
    %4269 = vmatpush1.msra.mxu0 0.0
    %4270 = vmatprep.subr.mxu0 0.0
    %4271 = vmatpush1.msra.mxu0 0.0
    %4272 = vmatprep.subr.mxu0 0.0
    %4273 = vmatpush1.msra.mxu0 0.0
    %4274 = vmatprep.subr.mxu0 0.0
    %4275 = vmatpush1.msra.mxu0 0.0
    %4276 = vmatprep.subr.mxu0 0.0
    %4277 = vmatpush1.msra.mxu0 0.0
    %4278 = vmatprep.subr.mxu0 0.0
    %4279 = vmatpush1.msra.mxu0 0.0
    %4280 = vmatprep.subr.mxu0 0.0
    %4281 = vmatpush1.msra.mxu0 0.0
    %4282 = vmatprep.subr.mxu0 0.0
    %4283 = vmatpush1.msra.mxu0 0.0
    %4284 = vmatprep.subr.mxu0 0.0
    %4285 = vmatpush1.msra.mxu0 0.0
    %4286 = vmatprep.mubr.f32.mxu0 0.0
    %4287 = vmatmul.mubr.f32.gmra.mrb[0].mxu0 %v4220
    %v4288 = vpop.f32.mrb[0].mxu0
    %v4289 = vadd.f32 0.0, %v4288
    %v4290 = vpop.f32.mrb[0].mxu0
    %v4291 = vadd.f32 0.0, %v4290
    %4292 = vdwg.mxu0
    %s4293 = scalar_lea.vmem [#allocation16], 160
    %v4294 = vld [vmem:[%s4293] sm:$0xff]
    %v4295 = vld [vmem:[%s4293 + $0x8] sm:$0xff]
    %v4296 = vld [vmem:[%s4293 + $0x10] sm:$0xff]
    %v4297 = vld [vmem:[%s4293 + $0x18] sm:$0xff]
    %v4298 = vld [vmem:[%s4293 + $0x20] sm:$0xff]
    %v4299 = vld [vmem:[%s4293 + $0x28] sm:$0xff]
    %v4300 = vld [vmem:[%s4293 + $0x30] sm:$0xff]
    %v4301 = vld [vmem:[%s4293 + $0x38] sm:$0xff]
    %v4302 = vld [vmem:[%s4293 + $0x40] sm:$0xff]
    %v4303 = vld [vmem:[%s4293 + $0x48] sm:$0xff]
    %v4304 = vld [vmem:[%s4293 + $0x50] sm:$0xff]
    %v4305 = vld [vmem:[%s4293 + $0x58] sm:$0xff]
    %v4306 = vld [vmem:[%s4293 + $0x60] sm:$0xff]
    %v4307 = vld [vmem:[%s4293 + $0x68] sm:$0xff]
    %v4308 = vld [vmem:[%s4293 + $0x70] sm:$0xff]
    %v4309 = vld [vmem:[%s4293 + $0x78] sm:$0xff]
    %v4310 = vld [vmem:[%s4293 + $0x80] sm:$0xff]
    %v4311 = vld [vmem:[%s4293 + $0x88] sm:$0xff]
    %v4312 = vld [vmem:[%s4293 + $0x90] sm:$0xff]
    %v4313 = vld [vmem:[%s4293 + $0x98] sm:$0xff]
    %v4315 = vsel %vm321, %v4291, 0
    %4317 = vmatprep.subr.mxu0 0.0
    %4318 = vmatpush1.msra.mxu0 %v4294
    %4319 = vmatprep.subr.mxu0 0.0
    %4320 = vmatpush1.msra.mxu0 %v4295
    %4321 = vmatprep.subr.mxu0 0.0
    %4322 = vmatpush1.msra.mxu0 %v4296
    %4323 = vmatprep.subr.mxu0 0.0
    %4324 = vmatpush1.msra.mxu0 %v4297
    %4325 = vmatprep.subr.mxu0 0.0
    %4326 = vmatpush1.msra.mxu0 %v4298
    %4327 = vmatprep.subr.mxu0 0.0
    %4328 = vmatpush1.msra.mxu0 %v4299
    %4329 = vmatprep.subr.mxu0 0.0
    %4330 = vmatpush1.msra.mxu0 %v4300
    %4331 = vmatprep.subr.mxu0 0.0
    %4332 = vmatpush1.msra.mxu0 %v4301
    %4333 = vmatprep.subr.mxu0 0.0
    %4334 = vmatpush1.msra.mxu0 %v4302
    %4335 = vmatprep.subr.mxu0 0.0
    %4336 = vmatpush1.msra.mxu0 %v4303
    %4337 = vmatprep.subr.mxu0 0.0
    %4338 = vmatpush1.msra.mxu0 %v4304
    %4339 = vmatprep.subr.mxu0 0.0
    %4340 = vmatpush1.msra.mxu0 %v4305
    %4341 = vmatprep.subr.mxu0 0.0
    %4342 = vmatpush1.msra.mxu0 %v4306
    %4343 = vmatprep.subr.mxu0 0.0
    %4344 = vmatpush1.msra.mxu0 %v4307
    %4345 = vmatprep.subr.mxu0 0.0
    %4346 = vmatpush1.msra.mxu0 %v4308
    %4347 = vmatprep.subr.mxu0 0.0
    %4348 = vmatpush1.msra.mxu0 %v4309
    %4349 = vmatprep.subr.mxu0 0.0
    %4350 = vmatpush1.msra.mxu0 %v4310
    %4351 = vmatprep.subr.mxu0 0.0
    %4352 = vmatpush1.msra.mxu0 %v4311
    %4353 = vmatprep.subr.mxu0 0.0
    %4354 = vmatpush1.msra.mxu0 %v4312
    %4355 = vmatprep.subr.mxu0 0.0
    %4356 = vmatpush1.msra.mxu0 %v4313
    %4357 = vmatprep.subr.mxu0 0.0
    %4358 = vmatpush1.msra.mxu0 0.0
    %4359 = vmatprep.subr.mxu0 0.0
    %4360 = vmatpush1.msra.mxu0 0.0
    %4361 = vmatprep.subr.mxu0 0.0
    %4362 = vmatpush1.msra.mxu0 0.0
    %4363 = vmatprep.subr.mxu0 0.0
    %4364 = vmatpush1.msra.mxu0 0.0
    %4365 = vmatprep.subr.mxu0 0.0
    %4366 = vmatpush1.msra.mxu0 0.0
    %4367 = vmatprep.subr.mxu0 0.0
    %4368 = vmatpush1.msra.mxu0 0.0
    %4369 = vmatprep.subr.mxu0 0.0
    %4370 = vmatpush1.msra.mxu0 0.0
    %4371 = vmatprep.subr.mxu0 0.0
    %4372 = vmatpush1.msra.mxu0 0.0
    %4373 = vmatprep.subr.mxu0 0.0
    %4374 = vmatpush1.msra.mxu0 0.0
    %4375 = vmatprep.subr.mxu0 0.0
    %4376 = vmatpush1.msra.mxu0 0.0
    %4377 = vmatprep.subr.mxu0 0.0
    %4378 = vmatpush1.msra.mxu0 0.0
    %4379 = vmatprep.subr.mxu0 0.0
    %4380 = vmatpush1.msra.mxu0 0.0
    %4381 = vmatprep.mubr.f32.mxu0 %v4315
    %4382 = vmatmul.mubr.f32.gmra.mrb[0].mxu0 %v4289
    %v4383 = vpop.f32.mrb[0].mxu0
    %v4384 = vadd.f32 0.0, %v4383
    %v4385 = vpop.f32.mrb[0].mxu0
    %4386 = vdwg.mxu0
    %v4388 = vsel %vm321, %v4195, 0
    %4390 = vmatprep.subr.mxu0 0.0
    %4391 = vmatpush1.msra.mxu0 %v4197
    %4392 = vmatprep.subr.mxu0 0.0
    %4393 = vmatpush1.msra.mxu0 %v4198
    %4394 = vmatprep.subr.mxu0 0.0
    %4395 = vmatpush1.msra.mxu0 %v4199
    %4396 = vmatprep.subr.mxu0 0.0
    %4397 = vmatpush1.msra.mxu0 %v4200
    %4398 = vmatprep.subr.mxu0 0.0
    %4399 = vmatpush1.msra.mxu0 %v4201
    %4400 = vmatprep.subr.mxu0 0.0
    %4401 = vmatpush1.msra.mxu0 %v4202
    %4402 = vmatprep.subr.mxu0 0.0
    %4403 = vmatpush1.msra.mxu0 %v4203
    %4404 = vmatprep.subr.mxu0 0.0
    %4405 = vmatpush1.msra.mxu0 %v4204
    %4406 = vmatprep.subr.mxu0 0.0
    %4407 = vmatpush1.msra.mxu0 %v4205
    %4408 = vmatprep.subr.mxu0 0.0
    %4409 = vmatpush1.msra.mxu0 %v4206
    %4410 = vmatprep.subr.mxu0 0.0
    %4411 = vmatpush1.msra.mxu0 %v4207
    %4412 = vmatprep.subr.mxu0 0.0
    %4413 = vmatpush1.msra.mxu0 %v4208
    %4414 = vmatprep.subr.mxu0 0.0
    %4415 = vmatpush1.msra.mxu0 %v4209
    %4416 = vmatprep.subr.mxu0 0.0
    %4417 = vmatpush1.msra.mxu0 %v4210
    %4418 = vmatprep.subr.mxu0 0.0
    %4419 = vmatpush1.msra.mxu0 %v4211
    %4420 = vmatprep.subr.mxu0 0.0
    %4421 = vmatpush1.msra.mxu0 %v4212
    %4422 = vmatprep.subr.mxu0 0.0
    %4423 = vmatpush1.msra.mxu0 %v4213
    %4424 = vmatprep.subr.mxu0 0.0
    %4425 = vmatpush1.msra.mxu0 %v4214
    %4426 = vmatprep.subr.mxu0 0.0
    %4427 = vmatpush1.msra.mxu0 %v4215
    %4428 = vmatprep.subr.mxu0 0.0
    %4429 = vmatpush1.msra.mxu0 %v4216
    %4430 = vmatprep.subr.mxu0 0.0
    %4431 = vmatpush1.msra.mxu0 0.0
    %4432 = vmatprep.subr.mxu0 0.0
    %4433 = vmatpush1.msra.mxu0 0.0
    %4434 = vmatprep.subr.mxu0 0.0
    %4435 = vmatpush1.msra.mxu0 0.0
    %4436 = vmatprep.subr.mxu0 0.0
    %4437 = vmatpush1.msra.mxu0 0.0
    %4438 = vmatprep.subr.mxu0 0.0
    %4439 = vmatpush1.msra.mxu0 0.0
    %4440 = vmatprep.subr.mxu0 0.0
    %4441 = vmatpush1.msra.mxu0 0.0
    %4442 = vmatprep.subr.mxu0 0.0
    %4443 = vmatpush1.msra.mxu0 0.0
    %4444 = vmatprep.subr.mxu0 0.0
    %4445 = vmatpush1.msra.mxu0 0.0
    %4446 = vmatprep.subr.mxu0 0.0
    %4447 = vmatpush1.msra.mxu0 0.0
    %4448 = vmatprep.subr.mxu0 0.0
    %4449 = vmatpush1.msra.mxu0 0.0
    %4450 = vmatprep.subr.mxu0 0.0
    %4451 = vmatpush1.msra.mxu0 0.0
    %4452 = vmatprep.subr.mxu0 0.0
    %4453 = vmatpush1.msra.mxu0 0.0
    %4454 = vmatprep.mubr.f32.mxu0 %v4388
    %4455 = vmatmul.mubr.f32.gmra.mrb[0].mxu0 %v4193
    %v4456 = vpop.f32.mrb[0].mxu0
    %v4457 = vadd.f32 %v4384, %v4456
    %v4458 = vpop.f32.mrb[0].mxu0
    %4459 = vdwg.mxu0
    %s4460 = scalar_lea.vmem [#allocation18], 16
    %v4461 = vld [vmem:[%s4460] sm:$0xff]
    %v4463 = vsel %vm4116, %v4461, 0
    %4465 = vmatprep.subr.mxu0 %v4110
    %4466 = vmatpush1.msra.mxu0 %v4109
    %4467 = vmatprep.subr.mxu0 %v4112
    %4468 = vmatpush1.msra.mxu0 %v4111
    %4469 = vmatprep.subr.mxu0 %v4124
    %4470 = vmatpush1.msra.mxu0 %v4121
    %4471 = vmatprep.subr.mxu0 0.0
    %4472 = vmatpush1.msra.mxu0 0.0
    %4473 = vmatprep.subr.mxu0 0.0
    %4474 = vmatpush1.msra.mxu0 0.0
    %4475 = vmatprep.subr.mxu0 0.0
    %4476 = vmatpush1.msra.mxu0 0.0
    %4477 = vmatprep.subr.mxu0 0.0
    %4478 = vmatpush1.msra.mxu0 0.0
    %4479 = vmatprep.subr.mxu0 0.0
    %4480 = vmatpush1.msra.mxu0 0.0
    %4481 = vmatprep.subr.mxu0 0.0
    %4482 = vmatpush1.msra.mxu0 0.0
    %4483 = vmatprep.subr.mxu0 0.0
    %4484 = vmatpush1.msra.mxu0 0.0
    %4485 = vmatprep.subr.mxu0 0.0
    %4486 = vmatpush1.msra.mxu0 0.0
    %4487 = vmatprep.subr.mxu0 0.0
    %4488 = vmatpush1.msra.mxu0 0.0
    %4489 = vmatprep.subr.mxu0 0.0
    %4490 = vmatpush1.msra.mxu0 0.0
    %4491 = vmatprep.subr.mxu0 0.0
    %4492 = vmatpush1.msra.mxu0 0.0
    %4493 = vmatprep.subr.mxu0 0.0
    %4494 = vmatpush1.msra.mxu0 0.0
    %4495 = vmatprep.subr.mxu0 0.0
    %4496 = vmatpush1.msra.mxu0 0.0
    %4497 = vmatprep.subr.mxu0 0.0
    %4498 = vmatpush1.msra.mxu0 0.0
    %4499 = vmatprep.subr.mxu0 0.0
    %4500 = vmatpush1.msra.mxu0 0.0
    %4501 = vmatprep.subr.mxu0 0.0
    %4502 = vmatpush1.msra.mxu0 0.0
    %4503 = vmatprep.subr.mxu0 0.0
    %4504 = vmatpush1.msra.mxu0 0.0
    %4505 = vmatprep.subr.mxu0 0.0
    %4506 = vmatpush1.msra.mxu0 0.0
    %4507 = vmatprep.subr.mxu0 0.0
    %4508 = vmatpush1.msra.mxu0 0.0
    %4509 = vmatprep.subr.mxu0 0.0
    %4510 = vmatpush1.msra.mxu0 0.0
    %4511 = vmatprep.subr.mxu0 0.0
    %4512 = vmatpush1.msra.mxu0 0.0
    %4513 = vmatprep.subr.mxu0 0.0
    %4514 = vmatpush1.msra.mxu0 0.0
    %4515 = vmatprep.subr.mxu0 0.0
    %4516 = vmatpush1.msra.mxu0 0.0
    %4517 = vmatprep.subr.mxu0 0.0
    %4518 = vmatpush1.msra.mxu0 0.0
    %4519 = vmatprep.subr.mxu0 0.0
    %4520 = vmatpush1.msra.mxu0 0.0
    %4521 = vmatprep.subr.mxu0 0.0
    %4522 = vmatpush1.msra.mxu0 0.0
    %4523 = vmatprep.subr.mxu0 0.0
    %4524 = vmatpush1.msra.mxu0 0.0
    %4525 = vmatprep.subr.mxu0 0.0
    %4526 = vmatpush1.msra.mxu0 0.0
    %4527 = vmatprep.subr.mxu0 0.0
    %4528 = vmatpush1.msra.mxu0 0.0
    %4529 = vmatprep.mubr.f32.mxu0 0.0
    %4530 = vmatmul.mubr.f32.gmra.mrb[0].mxu0 %v4463
    %v4531 = vpop.f32.mrb[0].mxu0
    %v4532 = vadd.f32 0.0, %v4531
    %v4533 = vpop.f32.mrb[0].mxu0
    %v4534 = vadd.f32 0.0, %v4533
    %4535 = vdwg.mxu0
    %s4536 = scalar_lea.vmem [#allocation16], 320
    %v4537 = vld [vmem:[%s4536] sm:$0xff]
    %v4538 = vld [vmem:[%s4536 + $0x8] sm:$0xff]
    %v4539 = vld [vmem:[%s4536 + $0x10] sm:$0xff]
    %v4540 = vld [vmem:[%s4536 + $0x18] sm:$0xff]
    %v4541 = vld [vmem:[%s4536 + $0x20] sm:$0xff]
    %v4542 = vld [vmem:[%s4536 + $0x28] sm:$0xff]
    %v4543 = vld [vmem:[%s4536 + $0x30] sm:$0xff]
    %v4544 = vld [vmem:[%s4536 + $0x38] sm:$0xff]
    %v4545 = vld [vmem:[%s4536 + $0x40] sm:$0xff]
    %v4546 = vld [vmem:[%s4536 + $0x48] sm:$0xff]
    %v4547 = vld [vmem:[%s4536 + $0x50] sm:$0xff]
    %v4548 = vld [vmem:[%s4536 + $0x58] sm:$0xff]
    %v4549 = vld [vmem:[%s4536 + $0x60] sm:$0xff]
    %v4550 = vld [vmem:[%s4536 + $0x68] sm:$0xff]
    %v4551 = vld [vmem:[%s4536 + $0x70] sm:$0xff]
    %v4552 = vld [vmem:[%s4536 + $0x78] sm:$0xff]
    %v4553 = vld [vmem:[%s4536 + $0x80] sm:$0xff]
    %v4554 = vld [vmem:[%s4536 + $0x88] sm:$0xff]
    %v4555 = vld [vmem:[%s4536 + $0x90] sm:$0xff]
    %v4556 = vld [vmem:[%s4536 + $0x98] sm:$0xff]
    %v4558 = vsel %vm321, %v4534, 0
    %4560 = vmatprep.subr.mxu0 0.0
    %4561 = vmatpush1.msra.mxu0 %v4537
    %4562 = vmatprep.subr.mxu0 0.0
    %4563 = vmatpush1.msra.mxu0 %v4538
    %4564 = vmatprep.subr.mxu0 0.0
    %4565 = vmatpush1.msra.mxu0 %v4539
    %4566 = vmatprep.subr.mxu0 0.0
    %4567 = vmatpush1.msra.mxu0 %v4540
    %4568 = vmatprep.subr.mxu0 0.0
    %4569 = vmatpush1.msra.mxu0 %v4541
    %4570 = vmatprep.subr.mxu0 0.0
    %4571 = vmatpush1.msra.mxu0 %v4542
    %4572 = vmatprep.subr.mxu0 0.0
    %4573 = vmatpush1.msra.mxu0 %v4543
    %4574 = vmatprep.subr.mxu0 0.0
    %4575 = vmatpush1.msra.mxu0 %v4544
    %4576 = vmatprep.subr.mxu0 0.0
    %4577 = vmatpush1.msra.mxu0 %v4545
    %4578 = vmatprep.subr.mxu0 0.0
    %4579 = vmatpush1.msra.mxu0 %v4546
    %4580 = vmatprep.subr.mxu0 0.0
    %4581 = vmatpush1.msra.mxu0 %v4547
    %4582 = vmatprep.subr.mxu0 0.0
    %4583 = vmatpush1.msra.mxu0 %v4548
    %4584 = vmatprep.subr.mxu0 0.0
    %4585 = vmatpush1.msra.mxu0 %v4549
    %4586 = vmatprep.subr.mxu0 0.0
    %4587 = vmatpush1.msra.mxu0 %v4550
    %4588 = vmatprep.subr.mxu0 0.0
    %4589 = vmatpush1.msra.mxu0 %v4551
    %4590 = vmatprep.subr.mxu0 0.0
    %4591 = vmatpush1.msra.mxu0 %v4552
    %4592 = vmatprep.subr.mxu0 0.0
    %4593 = vmatpush1.msra.mxu0 %v4553
    %4594 = vmatprep.subr.mxu0 0.0
    %4595 = vmatpush1.msra.mxu0 %v4554
    %4596 = vmatprep.subr.mxu0 0.0
    %4597 = vmatpush1.msra.mxu0 %v4555
    %4598 = vmatprep.subr.mxu0 0.0
    %4599 = vmatpush1.msra.mxu0 %v4556
    %4600 = vmatprep.subr.mxu0 0.0
    %4601 = vmatpush1.msra.mxu0 0.0
    %4602 = vmatprep.subr.mxu0 0.0
    %4603 = vmatpush1.msra.mxu0 0.0
    %4604 = vmatprep.subr.mxu0 0.0
    %4605 = vmatpush1.msra.mxu0 0.0
    %4606 = vmatprep.subr.mxu0 0.0
    %4607 = vmatpush1.msra.mxu0 0.0
    %4608 = vmatprep.subr.mxu0 0.0
    %4609 = vmatpush1.msra.mxu0 0.0
    %4610 = vmatprep.subr.mxu0 0.0
    %4611 = vmatpush1.msra.mxu0 0.0
    %4612 = vmatprep.subr.mxu0 0.0
    %4613 = vmatpush1.msra.mxu0 0.0
    %4614 = vmatprep.subr.mxu0 0.0
    %4615 = vmatpush1.msra.mxu0 0.0
    %4616 = vmatprep.subr.mxu0 0.0
    %4617 = vmatpush1.msra.mxu0 0.0
    %4618 = vmatprep.subr.mxu0 0.0
    %4619 = vmatpush1.msra.mxu0 0.0
    %4620 = vmatprep.subr.mxu0 0.0
    %4621 = vmatpush1.msra.mxu0 0.0
    %4622 = vmatprep.subr.mxu0 0.0
    %4623 = vmatpush1.msra.mxu0 0.0
    %4624 = vmatprep.mubr.f32.mxu0 %v4558
    %4625 = vmatmul.mubr.f32.gmra.mrb[0].mxu0 %v4532
    %v4626 = vpop.f32.mrb[0].mxu0
    %v4627 = vadd.f32 0.0, %v4626
    %v4628 = vpop.f32.mrb[0].mxu0
    %4629 = vdwg.mxu0
    %v4630 = vadd.f32 %v4457, %v4627
    %v4631 = vsel %vm3991, %v4630, 0.0
    %v4632 = vrot.slane %v4631, 4
    %v4633 = vadd.f32 %v4631, %v4632
    %v4634 = vrot.slane %v4633, 2
    %v4635 = vadd.f32 %v4633, %v4634
    %v4636 = vrot.slane %v4635, 1
    %v4637 = vadd.f32 %v4635, %v4636
    %v4638 = vmul.f32 %v4630, %v4630
    %v4639 = vsel %vm3991, %v4638, 0.0
    %v4640 = vrot.slane %v4639, 4
    %v4641 = vadd.f32 %v4639, %v4640
    %v4642 = vrot.slane %v4641, 2
    %v4643 = vadd.f32 %v4641, %v4642
    %v4644 = vrot.slane %v4643, 1
    %v4645 = vadd.f32 %v4643, %v4644
    %v4646 = vsel %vm1521, %v4637, %v4645
    %v4647 = vld [vmem:[#allocation19] sm:$0xff]
    %v4648 = vld [vmem:[#allocation19 + $0x8] sm:$0xff]
    %v4650 = vsel %vm3991, %v4646, 0
    %4652 = vmatprep.subr.mxu0 0.0
    %4653 = vmatpush1.msra.mxu0 %v4647
    %4654 = vmatprep.subr.mxu0 0.0
    %4655 = vmatpush1.msra.mxu0 %v4648
    %4656 = vmatprep.subr.mxu0 0.0
    %4657 = vmatpush1.msra.mxu0 0.0
    %4658 = vmatprep.subr.mxu0 0.0
    %4659 = vmatpush1.msra.mxu0 0.0
    %4660 = vmatprep.subr.mxu0 0.0
    %4661 = vmatpush1.msra.mxu0 0.0
    %4662 = vmatprep.subr.mxu0 0.0
    %4663 = vmatpush1.msra.mxu0 0.0
    %4664 = vmatprep.subr.mxu0 0.0
    %4665 = vmatpush1.msra.mxu0 0.0
    %4666 = vmatprep.subr.mxu0 0.0
    %4667 = vmatpush1.msra.mxu0 0.0
    %4668 = vmatprep.subr.mxu0 0.0
    %4669 = vmatpush1.msra.mxu0 0.0
    %4670 = vmatprep.subr.mxu0 0.0
    %4671 = vmatpush1.msra.mxu0 0.0
    %4672 = vmatprep.subr.mxu0 0.0
    %4673 = vmatpush1.msra.mxu0 0.0
    %4674 = vmatprep.subr.mxu0 0.0
    %4675 = vmatpush1.msra.mxu0 0.0
    %4676 = vmatprep.subr.mxu0 0.0
    %4677 = vmatpush1.msra.mxu0 0.0
    %4678 = vmatprep.subr.mxu0 0.0
    %4679 = vmatpush1.msra.mxu0 0.0
    %4680 = vmatprep.subr.mxu0 0.0
    %4681 = vmatpush1.msra.mxu0 0.0
    %4682 = vmatprep.subr.mxu0 0.0
    %4683 = vmatpush1.msra.mxu0 0.0
    %4684 = vmatprep.subr.mxu0 0.0
    %4685 = vmatpush1.msra.mxu0 0.0
    %4686 = vmatprep.subr.mxu0 0.0
    %4687 = vmatpush1.msra.mxu0 0.0
    %4688 = vmatprep.subr.mxu0 0.0
    %4689 = vmatpush1.msra.mxu0 0.0
    %4690 = vmatprep.subr.mxu0 0.0
    %4691 = vmatpush1.msra.mxu0 0.0
    %4692 = vmatprep.subr.mxu0 0.0
    %4693 = vmatpush1.msra.mxu0 0.0
    %4694 = vmatprep.subr.mxu0 0.0
    %4695 = vmatpush1.msra.mxu0 0.0
    %4696 = vmatprep.subr.mxu0 0.0
    %4697 = vmatpush1.msra.mxu0 0.0
    %4698 = vmatprep.subr.mxu0 0.0
    %4699 = vmatpush1.msra.mxu0 0.0
    %4700 = vmatprep.subr.mxu0 0.0
    %4701 = vmatpush1.msra.mxu0 0.0
    %4702 = vmatprep.subr.mxu0 0.0
    %4703 = vmatpush1.msra.mxu0 0.0
    %4704 = vmatprep.subr.mxu0 0.0
    %4705 = vmatpush1.msra.mxu0 0.0
    %4706 = vmatprep.subr.mxu0 0.0
    %4707 = vmatpush1.msra.mxu0 0.0
    %4708 = vmatprep.subr.mxu0 0.0
    %4709 = vmatpush1.msra.mxu0 0.0
    %4710 = vmatprep.subr.mxu0 0.0
    %4711 = vmatpush1.msra.mxu0 0.0
    %4712 = vmatprep.subr.mxu0 0.0
    %4713 = vmatpush1.msra.mxu0 0.0
    %4714 = vmatprep.subr.mxu0 0.0
    %4715 = vmatpush1.msra.mxu0 0.0
    %4716 = vmatprep.mubr.f32.mxu0 0.0
    %4717 = vmatmul.mubr.f32.gmra.mrb[0].mxu0 %v4650
    %v4718 = vpop.f32.mrb[0].mxu0
    %v4719 = vadd.f32 0.0, %v4718
    %v4720 = vpop.f32.mrb[0].mxu0
    %4721 = vdwg.mxu0
    %v4722 = vmul.f32 %v4719, 0.03125
    %v4723 = vmul.f32 %v4722, %v4722
    %v4725 = vrot.slane %v4723, 7
    %v4727 = vsub.f32 %v4722, %v4725
    %v4728 = vld [vmem:[#allocation22] sm:$0x1]
    %v4729 = vld [vmem:[#allocation22 + $0x1] sm:$0x1]
    %v4730 = vadd.f32 %v4727, 1e-05
    %v4731 = vrsqrt.pop %v4730
    %v4733 = vrot.slane %v4731, 1
    %v4735 = vmul.f32 %v4728, %v4733
    %v4736 = vmul.f32 %v4722, %v4735
    %v4737 = vsub.f32 %v4729, %v4736
    %v4739 = vrot.slane %v4737, 7
    %v4741 = vsel %vm1521, %v4735, %v4739
    %v4742 = vld [vmem:[#allocation21] sm:$0xf]
    %vm4743 = vcmask 31744
    %v4745 = vsel %vm4743, %v4741, 0
    %v4748 = vsel %vm358, %v4742, 0
    %4750 = vmatprep.subr.mxu0 0.0
    %4751 = vmatpush1.msra.mxu0 %v4748
    %4752 = vmatprep.subr.mxu0 0.0
    %4753 = vmatpush1.msra.mxu0 0.0
    %4754 = vmatprep.subr.mxu0 0.0
    %4755 = vmatpush1.msra.mxu0 0.0
    %4756 = vmatprep.subr.mxu0 0.0
    %4757 = vmatpush1.msra.mxu0 0.0
    %4758 = vmatprep.subr.mxu0 0.0
    %4759 = vmatpush1.msra.mxu0 0.0
    %4760 = vmatprep.subr.mxu0 0.0
    %4761 = vmatpush1.msra.mxu0 0.0
    %4762 = vmatprep.subr.mxu0 0.0
    %4763 = vmatpush1.msra.mxu0 0.0
    %4764 = vmatprep.subr.mxu0 0.0
    %4765 = vmatpush1.msra.mxu0 0.0
    %4766 = vmatprep.subr.mxu0 0.0
    %4767 = vmatpush1.msra.mxu0 0.0
    %4768 = vmatprep.subr.mxu0 0.0
    %4769 = vmatpush1.msra.mxu0 0.0
    %4770 = vmatprep.subr.mxu0 0.0
    %4771 = vmatpush1.msra.mxu0 0.0
    %4772 = vmatprep.subr.mxu0 0.0
    %4773 = vmatpush1.msra.mxu0 0.0
    %4774 = vmatprep.subr.mxu0 0.0
    %4775 = vmatpush1.msra.mxu0 0.0
    %4776 = vmatprep.subr.mxu0 0.0
    %4777 = vmatpush1.msra.mxu0 0.0
    %4778 = vmatprep.subr.mxu0 0.0
    %4779 = vmatpush1.msra.mxu0 0.0
    %4780 = vmatprep.subr.mxu0 0.0
    %4781 = vmatpush1.msra.mxu0 0.0
    %4782 = vmatprep.subr.mxu0 0.0
    %4783 = vmatpush1.msra.mxu0 0.0
    %4784 = vmatprep.subr.mxu0 0.0
    %4785 = vmatpush1.msra.mxu0 0.0
    %4786 = vmatprep.subr.mxu0 0.0
    %4787 = vmatpush1.msra.mxu0 0.0
    %4788 = vmatprep.subr.mxu0 0.0
    %4789 = vmatpush1.msra.mxu0 0.0
    %4790 = vmatprep.subr.mxu0 0.0
    %4791 = vmatpush1.msra.mxu0 0.0
    %4792 = vmatprep.subr.mxu0 0.0
    %4793 = vmatpush1.msra.mxu0 0.0
    %4794 = vmatprep.subr.mxu0 0.0
    %4795 = vmatpush1.msra.mxu0 0.0
    %4796 = vmatprep.subr.mxu0 0.0
    %4797 = vmatpush1.msra.mxu0 0.0
    %4798 = vmatprep.subr.mxu0 0.0
    %4799 = vmatpush1.msra.mxu0 0.0
    %4800 = vmatprep.subr.mxu0 0.0
    %4801 = vmatpush1.msra.mxu0 0.0
    %4802 = vmatprep.subr.mxu0 0.0
    %4803 = vmatpush1.msra.mxu0 0.0
    %4804 = vmatprep.subr.mxu0 0.0
    %4805 = vmatpush1.msra.mxu0 0.0
    %4806 = vmatprep.subr.mxu0 0.0
    %4807 = vmatpush1.msra.mxu0 0.0
    %4808 = vmatprep.subr.mxu0 0.0
    %4809 = vmatpush1.msra.mxu0 0.0
    %4810 = vmatprep.subr.mxu0 0.0
    %4811 = vmatpush1.msra.mxu0 0.0
    %4812 = vmatprep.subr.mxu0 0.0
    %4813 = vmatpush1.msra.mxu0 0.0
    %4814 = vmatprep.mubr.f32.mxu0 0.0
    %4815 = vmatmul.mubr.f32.gmra.mrb[0].mxu0 %v4745
    %v4816 = vpop.f32.mrb[0].mxu0
    %v4817 = vadd.f32 0.0, %v4816
    %v4818 = vpop.f32.mrb[0].mxu0
    %4819 = vdwg.mxu0
    %v4820 = vlaneseq
    %v4821 = vshrl.u32 %v4820, 7
    %v4822 = vsub.s32 0, %v4821
    %v4823 = vrot.slane %v4817, %v4822
    %v4824 = vmul.f32 %v4630, %v4823
    %v4825 = vlaneseq
    %v4826 = vshrl.u32 %v4825, 7
    %v4827 = vsub.s32 1, %v4826
    %v4828 = vrot.slane %v4817, %v4827
    %v4829 = vadd.f32 %v4824, %v4828
    %vm4830 = vcmp.ge.f32.partialorder %v4829, 0.0
    %v4831 = vmul.f32 %v4829, 0.01
    %v4832 = vsel %vm4830, %v4829, %v4831
    %4834 = vrot.lane.b32.xlu0 %v4832, 4
    %v4835 = vpop.permute.xlu0 %4834
    %vm4837 = vcmask 158752
    %4838 = vst.msk [vmem:[#allocation4 + $0x1] sm:$0xf] %vm4837, %v4835
    %vm4839 = vcmask 162852
    %4840 = vst.msk [vmem:[#allocation4 + $0x3] sm:$0xf0] %vm4839, %v4835
    %v4841 = vld [vmem:[#allocation4] sm:$0xff]
    %v4842 = vld [vmem:[#allocation4 + $0x8] sm:$0xf]
    %v4843 = vld [vmem:[%s17] sm:$0xf]
    %vm4844 = vcmask 97280
    %v4846 = vsel %vm4844, %v4843, 0
    %v4849 = vsel %vm358, %v4842, 0
    %4851 = vmatprep.subr.mxu0 0.0
    %4852 = vmatpush1.msra.mxu0 %v4841
    %4853 = vmatprep.subr.mxu0 0.0
    %4854 = vmatpush1.msra.mxu0 %v4849
    %4855 = vmatprep.subr.mxu0 0.0
    %4856 = vmatpush1.msra.mxu0 0.0
    %4857 = vmatprep.subr.mxu0 0.0
    %4858 = vmatpush1.msra.mxu0 0.0
    %4859 = vmatprep.subr.mxu0 0.0
    %4860 = vmatpush1.msra.mxu0 0.0
    %4861 = vmatprep.subr.mxu0 0.0
    %4862 = vmatpush1.msra.mxu0 0.0
    %4863 = vmatprep.subr.mxu0 0.0
    %4864 = vmatpush1.msra.mxu0 0.0
    %4865 = vmatprep.subr.mxu0 0.0
    %4866 = vmatpush1.msra.mxu0 0.0
    %4867 = vmatprep.subr.mxu0 0.0
    %4868 = vmatpush1.msra.mxu0 0.0
    %4869 = vmatprep.subr.mxu0 0.0
    %4870 = vmatpush1.msra.mxu0 0.0
    %4871 = vmatprep.subr.mxu0 0.0
    %4872 = vmatpush1.msra.mxu0 0.0
    %4873 = vmatprep.subr.mxu0 0.0
    %4874 = vmatpush1.msra.mxu0 0.0
    %4875 = vmatprep.subr.mxu0 0.0
    %4876 = vmatpush1.msra.mxu0 0.0
    %4877 = vmatprep.subr.mxu0 0.0
    %4878 = vmatpush1.msra.mxu0 0.0
    %4879 = vmatprep.subr.mxu0 0.0
    %4880 = vmatpush1.msra.mxu0 0.0
    %4881 = vmatprep.subr.mxu0 0.0
    %4882 = vmatpush1.msra.mxu0 0.0
    %4883 = vmatprep.subr.mxu0 0.0
    %4884 = vmatpush1.msra.mxu0 0.0
    %4885 = vmatprep.subr.mxu0 0.0
    %4886 = vmatpush1.msra.mxu0 0.0
    %4887 = vmatprep.subr.mxu0 0.0
    %4888 = vmatpush1.msra.mxu0 0.0
    %4889 = vmatprep.subr.mxu0 0.0
    %4890 = vmatpush1.msra.mxu0 0.0
    %4891 = vmatprep.subr.mxu0 0.0
    %4892 = vmatpush1.msra.mxu0 0.0
    %4893 = vmatprep.subr.mxu0 0.0
    %4894 = vmatpush1.msra.mxu0 0.0
    %4895 = vmatprep.subr.mxu0 0.0
    %4896 = vmatpush1.msra.mxu0 0.0
    %4897 = vmatprep.subr.mxu0 0.0
    %4898 = vmatpush1.msra.mxu0 0.0
    %4899 = vmatprep.subr.mxu0 0.0
    %4900 = vmatpush1.msra.mxu0 0.0
    %4901 = vmatprep.subr.mxu0 0.0
    %4902 = vmatpush1.msra.mxu0 0.0
    %4903 = vmatprep.subr.mxu0 0.0
    %4904 = vmatpush1.msra.mxu0 0.0
    %4905 = vmatprep.subr.mxu0 0.0
    %4906 = vmatpush1.msra.mxu0 0.0
    %4907 = vmatprep.subr.mxu0 0.0
    %4908 = vmatpush1.msra.mxu0 0.0
    %4909 = vmatprep.subr.mxu0 0.0
    %4910 = vmatpush1.msra.mxu0 0.0
    %4911 = vmatprep.subr.mxu0 0.0
    %4912 = vmatpush1.msra.mxu0 0.0
    %4913 = vmatprep.subr.mxu0 0.0
    %4914 = vmatpush1.msra.mxu0 0.0
    %4915 = vmatprep.mubr.f32.mxu0 0.0
    %4916 = vmatmul.mubr.f32.gmra.mrb[0].mxu0 %v4846
    %v4917 = vpop.f32.mrb[0].mxu0
    %v4918 = vadd.f32 0.0, %v4917
    %v4919 = vpop.f32.mrb[0].mxu0
    %4920 = vdwg.mxu0
    %v4921 = vld [vmem:[#allocation24] sm:$0xff]
    %v4922 = vld [vmem:[#allocation24 + $0x8] sm:$0xff]
    %v4923 = vld [vmem:[#allocation24 + $0x10] sm:$0xff]
    %s4924 = scalar_lea.vmem %s17, 4
    %v4925 = vld [vmem:[%s4924] sm:$0xf]
    %v4927 = vsel %vm4844, %v4925, 0
    %4929 = vmatprep.subr.mxu0 0.0
    %4930 = vmatpush1.msra.mxu0 %v4841
    %4931 = vmatprep.subr.mxu0 0.0
    %4932 = vmatpush1.msra.mxu0 %v4849
    %4933 = vmatprep.subr.mxu0 0.0
    %4934 = vmatpush1.msra.mxu0 0.0
    %4935 = vmatprep.subr.mxu0 0.0
    %4936 = vmatpush1.msra.mxu0 0.0
    %4937 = vmatprep.subr.mxu0 0.0
    %4938 = vmatpush1.msra.mxu0 0.0
    %4939 = vmatprep.subr.mxu0 0.0
    %4940 = vmatpush1.msra.mxu0 0.0
    %4941 = vmatprep.subr.mxu0 0.0
    %4942 = vmatpush1.msra.mxu0 0.0
    %4943 = vmatprep.subr.mxu0 0.0
    %4944 = vmatpush1.msra.mxu0 0.0
    %4945 = vmatprep.subr.mxu0 0.0
    %4946 = vmatpush1.msra.mxu0 0.0
    %4947 = vmatprep.subr.mxu0 0.0
    %4948 = vmatpush1.msra.mxu0 0.0
    %4949 = vmatprep.subr.mxu0 0.0
    %4950 = vmatpush1.msra.mxu0 0.0
    %4951 = vmatprep.subr.mxu0 0.0
    %4952 = vmatpush1.msra.mxu0 0.0
    %4953 = vmatprep.subr.mxu0 0.0
    %4954 = vmatpush1.msra.mxu0 0.0
    %4955 = vmatprep.subr.mxu0 0.0
    %4956 = vmatpush1.msra.mxu0 0.0
    %4957 = vmatprep.subr.mxu0 0.0
    %4958 = vmatpush1.msra.mxu0 0.0
    %4959 = vmatprep.subr.mxu0 0.0
    %4960 = vmatpush1.msra.mxu0 0.0
    %4961 = vmatprep.subr.mxu0 0.0
    %4962 = vmatpush1.msra.mxu0 0.0
    %4963 = vmatprep.subr.mxu0 0.0
    %4964 = vmatpush1.msra.mxu0 0.0
    %4965 = vmatprep.subr.mxu0 0.0
    %4966 = vmatpush1.msra.mxu0 0.0
    %4967 = vmatprep.subr.mxu0 0.0
    %4968 = vmatpush1.msra.mxu0 0.0
    %4969 = vmatprep.subr.mxu0 0.0
    %4970 = vmatpush1.msra.mxu0 0.0
    %4971 = vmatprep.subr.mxu0 0.0
    %4972 = vmatpush1.msra.mxu0 0.0
    %4973 = vmatprep.subr.mxu0 0.0
    %4974 = vmatpush1.msra.mxu0 0.0
    %4975 = vmatprep.subr.mxu0 0.0
    %4976 = vmatpush1.msra.mxu0 0.0
    %4977 = vmatprep.subr.mxu0 0.0
    %4978 = vmatpush1.msra.mxu0 0.0
    %4979 = vmatprep.subr.mxu0 0.0
    %4980 = vmatpush1.msra.mxu0 0.0
    %4981 = vmatprep.subr.mxu0 0.0
    %4982 = vmatpush1.msra.mxu0 0.0
    %4983 = vmatprep.subr.mxu0 0.0
    %4984 = vmatpush1.msra.mxu0 0.0
    %4985 = vmatprep.subr.mxu0 0.0
    %4986 = vmatpush1.msra.mxu0 0.0
    %4987 = vmatprep.subr.mxu0 0.0
    %4988 = vmatpush1.msra.mxu0 0.0
    %4989 = vmatprep.subr.mxu0 0.0
    %4990 = vmatpush1.msra.mxu0 0.0
    %4991 = vmatprep.subr.mxu0 0.0
    %4992 = vmatpush1.msra.mxu0 0.0
    %4993 = vmatprep.mubr.f32.mxu0 0.0
    %4994 = vmatmul.mubr.f32.gmra.mrb[0].mxu0 %v4927
    %v4995 = vpop.f32.mrb[0].mxu0
    %v4996 = vadd.f32 0.0, %v4995
    %v4997 = vpop.f32.mrb[0].mxu0
    %4998 = vdwg.mxu0
    %s4999 = scalar_lea.vmem [#allocation24], 24
    %v5000 = vld [vmem:[%s4999] sm:$0xff]
    %v5001 = vld [vmem:[%s4999 + $0x8] sm:$0xff]
    %v5002 = vld [vmem:[%s4999 + $0x10] sm:$0xff]
    %v5004 = vsel %vm328, %v4996, 0
    %5006 = vmatprep.subr.mxu0 0.0
    %5007 = vmatpush1.msra.mxu0 %v5000
    %5008 = vmatprep.subr.mxu0 0.0
    %5009 = vmatpush1.msra.mxu0 %v5001
    %5010 = vmatprep.subr.mxu0 0.0
    %5011 = vmatpush1.msra.mxu0 %v5002
    %5012 = vmatprep.subr.mxu0 0.0
    %5013 = vmatpush1.msra.mxu0 0.0
    %5014 = vmatprep.subr.mxu0 0.0
    %5015 = vmatpush1.msra.mxu0 0.0
    %5016 = vmatprep.subr.mxu0 0.0
    %5017 = vmatpush1.msra.mxu0 0.0
    %5018 = vmatprep.subr.mxu0 0.0
    %5019 = vmatpush1.msra.mxu0 0.0
    %5020 = vmatprep.subr.mxu0 0.0
    %5021 = vmatpush1.msra.mxu0 0.0
    %5022 = vmatprep.subr.mxu0 0.0
    %5023 = vmatpush1.msra.mxu0 0.0
    %5024 = vmatprep.subr.mxu0 0.0
    %5025 = vmatpush1.msra.mxu0 0.0
    %5026 = vmatprep.subr.mxu0 0.0
    %5027 = vmatpush1.msra.mxu0 0.0
    %5028 = vmatprep.subr.mxu0 0.0
    %5029 = vmatpush1.msra.mxu0 0.0
    %5030 = vmatprep.subr.mxu0 0.0
    %5031 = vmatpush1.msra.mxu0 0.0
    %5032 = vmatprep.subr.mxu0 0.0
    %5033 = vmatpush1.msra.mxu0 0.0
    %5034 = vmatprep.subr.mxu0 0.0
    %5035 = vmatpush1.msra.mxu0 0.0
    %5036 = vmatprep.subr.mxu0 0.0
    %5037 = vmatpush1.msra.mxu0 0.0
    %5038 = vmatprep.subr.mxu0 0.0
    %5039 = vmatpush1.msra.mxu0 0.0
    %5040 = vmatprep.subr.mxu0 0.0
    %5041 = vmatpush1.msra.mxu0 0.0
    %5042 = vmatprep.subr.mxu0 0.0
    %5043 = vmatpush1.msra.mxu0 0.0
    %5044 = vmatprep.subr.mxu0 0.0
    %5045 = vmatpush1.msra.mxu0 0.0
    %5046 = vmatprep.subr.mxu0 0.0
    %5047 = vmatpush1.msra.mxu0 0.0
    %5048 = vmatprep.subr.mxu0 0.0
    %5049 = vmatpush1.msra.mxu0 0.0
    %5050 = vmatprep.subr.mxu0 0.0
    %5051 = vmatpush1.msra.mxu0 0.0
    %5052 = vmatprep.subr.mxu0 0.0
    %5053 = vmatpush1.msra.mxu0 0.0
    %5054 = vmatprep.subr.mxu0 0.0
    %5055 = vmatpush1.msra.mxu0 0.0
    %5056 = vmatprep.subr.mxu0 0.0
    %5057 = vmatpush1.msra.mxu0 0.0
    %5058 = vmatprep.subr.mxu0 0.0
    %5059 = vmatpush1.msra.mxu0 0.0
    %5060 = vmatprep.subr.mxu0 0.0
    %5061 = vmatpush1.msra.mxu0 0.0
    %5062 = vmatprep.subr.mxu0 0.0
    %5063 = vmatpush1.msra.mxu0 0.0
    %5064 = vmatprep.subr.mxu0 0.0
    %5065 = vmatpush1.msra.mxu0 0.0
    %5066 = vmatprep.subr.mxu0 0.0
    %5067 = vmatpush1.msra.mxu0 0.0
    %5068 = vmatprep.subr.mxu0 0.0
    %5069 = vmatpush1.msra.mxu0 0.0
    %5070 = vmatprep.mubr.f32.mxu0 0.0
    %5071 = vmatmul.mubr.f32.gmra.mrb[0].mxu0 %v5004
    %v5072 = vpop.f32.mrb[0].mxu0
    %v5073 = vadd.f32 0.0, %v5072
    %v5074 = vpop.f32.mrb[0].mxu0
    %5075 = vdwg.mxu0
    %v5077 = vsel %vm328, %v4918, 0
    %5079 = vmatprep.subr.mxu0 0.0
    %5080 = vmatpush1.msra.mxu0 %v4921
    %5081 = vmatprep.subr.mxu0 0.0
    %5082 = vmatpush1.msra.mxu0 %v4922
    %5083 = vmatprep.subr.mxu0 0.0
    %5084 = vmatpush1.msra.mxu0 %v4923
    %5085 = vmatprep.subr.mxu0 0.0
    %5086 = vmatpush1.msra.mxu0 0.0
    %5087 = vmatprep.subr.mxu0 0.0
    %5088 = vmatpush1.msra.mxu0 0.0
    %5089 = vmatprep.subr.mxu0 0.0
    %5090 = vmatpush1.msra.mxu0 0.0
    %5091 = vmatprep.subr.mxu0 0.0
    %5092 = vmatpush1.msra.mxu0 0.0
    %5093 = vmatprep.subr.mxu0 0.0
    %5094 = vmatpush1.msra.mxu0 0.0
    %5095 = vmatprep.subr.mxu0 0.0
    %5096 = vmatpush1.msra.mxu0 0.0
    %5097 = vmatprep.subr.mxu0 0.0
    %5098 = vmatpush1.msra.mxu0 0.0
    %5099 = vmatprep.subr.mxu0 0.0
    %5100 = vmatpush1.msra.mxu0 0.0
    %5101 = vmatprep.subr.mxu0 0.0
    %5102 = vmatpush1.msra.mxu0 0.0
    %5103 = vmatprep.subr.mxu0 0.0
    %5104 = vmatpush1.msra.mxu0 0.0
    %5105 = vmatprep.subr.mxu0 0.0
    %5106 = vmatpush1.msra.mxu0 0.0
    %5107 = vmatprep.subr.mxu0 0.0
    %5108 = vmatpush1.msra.mxu0 0.0
    %5109 = vmatprep.subr.mxu0 0.0
    %5110 = vmatpush1.msra.mxu0 0.0
    %5111 = vmatprep.subr.mxu0 0.0
    %5112 = vmatpush1.msra.mxu0 0.0
    %5113 = vmatprep.subr.mxu0 0.0
    %5114 = vmatpush1.msra.mxu0 0.0
    %5115 = vmatprep.subr.mxu0 0.0
    %5116 = vmatpush1.msra.mxu0 0.0
    %5117 = vmatprep.subr.mxu0 0.0
    %5118 = vmatpush1.msra.mxu0 0.0
    %5119 = vmatprep.subr.mxu0 0.0
    %5120 = vmatpush1.msra.mxu0 0.0
    %5121 = vmatprep.subr.mxu0 0.0
    %5122 = vmatpush1.msra.mxu0 0.0
    %5123 = vmatprep.subr.mxu0 0.0
    %5124 = vmatpush1.msra.mxu0 0.0
    %5125 = vmatprep.subr.mxu0 0.0
    %5126 = vmatpush1.msra.mxu0 0.0
    %5127 = vmatprep.subr.mxu0 0.0
    %5128 = vmatpush1.msra.mxu0 0.0
    %5129 = vmatprep.subr.mxu0 0.0
    %5130 = vmatpush1.msra.mxu0 0.0
    %5131 = vmatprep.subr.mxu0 0.0
    %5132 = vmatpush1.msra.mxu0 0.0
    %5133 = vmatprep.subr.mxu0 0.0
    %5134 = vmatpush1.msra.mxu0 0.0
    %5135 = vmatprep.subr.mxu0 0.0
    %5136 = vmatpush1.msra.mxu0 0.0
    %5137 = vmatprep.subr.mxu0 0.0
    %5138 = vmatpush1.msra.mxu0 0.0
    %5139 = vmatprep.subr.mxu0 0.0
    %5140 = vmatpush1.msra.mxu0 0.0
    %5141 = vmatprep.subr.mxu0 0.0
    %5142 = vmatpush1.msra.mxu0 0.0
    %5143 = vmatprep.mubr.f32.mxu0 0.0
    %5144 = vmatmul.mubr.f32.gmra.mrb[0].mxu0 %v5077
    %v5145 = vpop.f32.mrb[0].mxu0
    %v5146 = vadd.f32 %v5073, %v5145
    %v5147 = vpop.f32.mrb[0].mxu0
    %5148 = vdwg.mxu0
    %s5149 = scalar_lea.vmem %s17, 8
    %v5150 = vld [vmem:[%s5149] sm:$0xf]
    %v5152 = vsel %vm4844, %v5150, 0
    %5154 = vmatprep.subr.mxu0 0.0
    %5155 = vmatpush1.msra.mxu0 %v4841
    %5156 = vmatprep.subr.mxu0 0.0
    %5157 = vmatpush1.msra.mxu0 %v4849
    %5158 = vmatprep.subr.mxu0 0.0
    %5159 = vmatpush1.msra.mxu0 0.0
    %5160 = vmatprep.subr.mxu0 0.0
    %5161 = vmatpush1.msra.mxu0 0.0
    %5162 = vmatprep.subr.mxu0 0.0
    %5163 = vmatpush1.msra.mxu0 0.0
    %5164 = vmatprep.subr.mxu0 0.0
    %5165 = vmatpush1.msra.mxu0 0.0
    %5166 = vmatprep.subr.mxu0 0.0
    %5167 = vmatpush1.msra.mxu0 0.0
    %5168 = vmatprep.subr.mxu0 0.0
    %5169 = vmatpush1.msra.mxu0 0.0
    %5170 = vmatprep.subr.mxu0 0.0
    %5171 = vmatpush1.msra.mxu0 0.0
    %5172 = vmatprep.subr.mxu0 0.0
    %5173 = vmatpush1.msra.mxu0 0.0
    %5174 = vmatprep.subr.mxu0 0.0
    %5175 = vmatpush1.msra.mxu0 0.0
    %5176 = vmatprep.subr.mxu0 0.0
    %5177 = vmatpush1.msra.mxu0 0.0
    %5178 = vmatprep.subr.mxu0 0.0
    %5179 = vmatpush1.msra.mxu0 0.0
    %5180 = vmatprep.subr.mxu0 0.0
    %5181 = vmatpush1.msra.mxu0 0.0
    %5182 = vmatprep.subr.mxu0 0.0
    %5183 = vmatpush1.msra.mxu0 0.0
    %5184 = vmatprep.subr.mxu0 0.0
    %5185 = vmatpush1.msra.mxu0 0.0
    %5186 = vmatprep.subr.mxu0 0.0
    %5187 = vmatpush1.msra.mxu0 0.0
    %5188 = vmatprep.subr.mxu0 0.0
    %5189 = vmatpush1.msra.mxu0 0.0
    %5190 = vmatprep.subr.mxu0 0.0
    %5191 = vmatpush1.msra.mxu0 0.0
    %5192 = vmatprep.subr.mxu0 0.0
    %5193 = vmatpush1.msra.mxu0 0.0
    %5194 = vmatprep.subr.mxu0 0.0
    %5195 = vmatpush1.msra.mxu0 0.0
    %5196 = vmatprep.subr.mxu0 0.0
    %5197 = vmatpush1.msra.mxu0 0.0
    %5198 = vmatprep.subr.mxu0 0.0
    %5199 = vmatpush1.msra.mxu0 0.0
    %5200 = vmatprep.subr.mxu0 0.0
    %5201 = vmatpush1.msra.mxu0 0.0
    %5202 = vmatprep.subr.mxu0 0.0
    %5203 = vmatpush1.msra.mxu0 0.0
    %5204 = vmatprep.subr.mxu0 0.0
    %5205 = vmatpush1.msra.mxu0 0.0
    %5206 = vmatprep.subr.mxu0 0.0
    %5207 = vmatpush1.msra.mxu0 0.0
    %5208 = vmatprep.subr.mxu0 0.0
    %5209 = vmatpush1.msra.mxu0 0.0
    %5210 = vmatprep.subr.mxu0 0.0
    %5211 = vmatpush1.msra.mxu0 0.0
    %5212 = vmatprep.subr.mxu0 0.0
    %5213 = vmatpush1.msra.mxu0 0.0
    %5214 = vmatprep.subr.mxu0 0.0
    %5215 = vmatpush1.msra.mxu0 0.0
    %5216 = vmatprep.subr.mxu0 0.0
    %5217 = vmatpush1.msra.mxu0 0.0
    %5218 = vmatprep.mubr.f32.mxu0 0.0
    %5219 = vmatmul.mubr.f32.gmra.mrb[0].mxu0 %v5152
    %v5220 = vpop.f32.mrb[0].mxu0
    %v5221 = vadd.f32 0.0, %v5220
    %v5222 = vpop.f32.mrb[0].mxu0
    %5223 = vdwg.mxu0
    %s5224 = scalar_lea.vmem [#allocation24], 48
    %v5225 = vld [vmem:[%s5224] sm:$0xff]
    %v5226 = vld [vmem:[%s5224 + $0x8] sm:$0xff]
    %v5227 = vld [vmem:[%s5224 + $0x10] sm:$0xff]
    %v5229 = vsel %vm328, %v5221, 0
    %5231 = vmatprep.subr.mxu0 0.0
    %5232 = vmatpush1.msra.mxu0 %v5225
    %5233 = vmatprep.subr.mxu0 0.0
    %5234 = vmatpush1.msra.mxu0 %v5226
    %5235 = vmatprep.subr.mxu0 0.0
    %5236 = vmatpush1.msra.mxu0 %v5227
    %5237 = vmatprep.subr.mxu0 0.0
    %5238 = vmatpush1.msra.mxu0 0.0
    %5239 = vmatprep.subr.mxu0 0.0
    %5240 = vmatpush1.msra.mxu0 0.0
    %5241 = vmatprep.subr.mxu0 0.0
    %5242 = vmatpush1.msra.mxu0 0.0
    %5243 = vmatprep.subr.mxu0 0.0
    %5244 = vmatpush1.msra.mxu0 0.0
    %5245 = vmatprep.subr.mxu0 0.0
    %5246 = vmatpush1.msra.mxu0 0.0
    %5247 = vmatprep.subr.mxu0 0.0
    %5248 = vmatpush1.msra.mxu0 0.0
    %5249 = vmatprep.subr.mxu0 0.0
    %5250 = vmatpush1.msra.mxu0 0.0
    %5251 = vmatprep.subr.mxu0 0.0
    %5252 = vmatpush1.msra.mxu0 0.0
    %5253 = vmatprep.subr.mxu0 0.0
    %5254 = vmatpush1.msra.mxu0 0.0
    %5255 = vmatprep.subr.mxu0 0.0
    %5256 = vmatpush1.msra.mxu0 0.0
    %5257 = vmatprep.subr.mxu0 0.0
    %5258 = vmatpush1.msra.mxu0 0.0
    %5259 = vmatprep.subr.mxu0 0.0
    %5260 = vmatpush1.msra.mxu0 0.0
    %5261 = vmatprep.subr.mxu0 0.0
    %5262 = vmatpush1.msra.mxu0 0.0
    %5263 = vmatprep.subr.mxu0 0.0
    %5264 = vmatpush1.msra.mxu0 0.0
    %5265 = vmatprep.subr.mxu0 0.0
    %5266 = vmatpush1.msra.mxu0 0.0
    %5267 = vmatprep.subr.mxu0 0.0
    %5268 = vmatpush1.msra.mxu0 0.0
    %5269 = vmatprep.subr.mxu0 0.0
    %5270 = vmatpush1.msra.mxu0 0.0
    %5271 = vmatprep.subr.mxu0 0.0
    %5272 = vmatpush1.msra.mxu0 0.0
    %5273 = vmatprep.subr.mxu0 0.0
    %5274 = vmatpush1.msra.mxu0 0.0
    %5275 = vmatprep.subr.mxu0 0.0
    %5276 = vmatpush1.msra.mxu0 0.0
    %5277 = vmatprep.subr.mxu0 0.0
    %5278 = vmatpush1.msra.mxu0 0.0
    %5279 = vmatprep.subr.mxu0 0.0
    %5280 = vmatpush1.msra.mxu0 0.0
    %5281 = vmatprep.subr.mxu0 0.0
    %5282 = vmatpush1.msra.mxu0 0.0
    %5283 = vmatprep.subr.mxu0 0.0
    %5284 = vmatpush1.msra.mxu0 0.0
    %5285 = vmatprep.subr.mxu0 0.0
    %5286 = vmatpush1.msra.mxu0 0.0
    %5287 = vmatprep.subr.mxu0 0.0
    %5288 = vmatpush1.msra.mxu0 0.0
    %5289 = vmatprep.subr.mxu0 0.0
    %5290 = vmatpush1.msra.mxu0 0.0
    %5291 = vmatprep.subr.mxu0 0.0
    %5292 = vmatpush1.msra.mxu0 0.0
    %5293 = vmatprep.subr.mxu0 0.0
    %5294 = vmatpush1.msra.mxu0 0.0
    %5295 = vmatprep.mubr.f32.mxu0 0.0
    %5296 = vmatmul.mubr.f32.gmra.mrb[0].mxu0 %v5229
    %v5297 = vpop.f32.mrb[0].mxu0
    %v5298 = vadd.f32 0.0, %v5297
    %v5299 = vpop.f32.mrb[0].mxu0
    %5300 = vdwg.mxu0
    %v5301 = vadd.f32 %v5146, %v5298
    %vm5302 = vcmask 11264
    %v5303 = vsel %vm5302, %v5301, 0.0
    %v5304 = vrot.slane %v5303, 4
    %v5305 = vadd.f32 %v5303, %v5304
    %v5306 = vrot.slane %v5305, 2
    %v5307 = vadd.f32 %v5305, %v5306
    %v5308 = vrot.slane %v5307, 1
    %v5309 = vadd.f32 %v5307, %v5308
    %v5310 = vmul.f32 %v5301, %v5301
    %v5311 = vsel %vm5302, %v5310, 0.0
    %v5312 = vrot.slane %v5311, 4
    %v5313 = vadd.f32 %v5311, %v5312
    %v5314 = vrot.slane %v5313, 2
    %v5315 = vadd.f32 %v5313, %v5314
    %v5316 = vrot.slane %v5315, 1
    %v5317 = vadd.f32 %v5315, %v5316
    %v5318 = vsel %vm1521, %v5309, %v5317
    %v5319 = vld [vmem:[%s18] sm:$0x3]
    %vm5320 = vcmask 15360
    %v5322 = vsel %vm5320, %v5318, 0
    %vm5324 = vcmask 1041408
    %v5326 = vsel %vm5324, %v5319, 0
    %5328 = vmatprep.subr.mxu0 0.0
    %5329 = vmatpush1.msra.mxu0 %v5326
    %5330 = vmatprep.subr.mxu0 0.0
    %5331 = vmatpush1.msra.mxu0 0.0
    %5332 = vmatprep.subr.mxu0 0.0
    %5333 = vmatpush1.msra.mxu0 0.0
    %5334 = vmatprep.subr.mxu0 0.0
    %5335 = vmatpush1.msra.mxu0 0.0
    %5336 = vmatprep.subr.mxu0 0.0
    %5337 = vmatpush1.msra.mxu0 0.0
    %5338 = vmatprep.subr.mxu0 0.0
    %5339 = vmatpush1.msra.mxu0 0.0
    %5340 = vmatprep.subr.mxu0 0.0
    %5341 = vmatpush1.msra.mxu0 0.0
    %5342 = vmatprep.subr.mxu0 0.0
    %5343 = vmatpush1.msra.mxu0 0.0
    %5344 = vmatprep.subr.mxu0 0.0
    %5345 = vmatpush1.msra.mxu0 0.0
    %5346 = vmatprep.subr.mxu0 0.0
    %5347 = vmatpush1.msra.mxu0 0.0
    %5348 = vmatprep.subr.mxu0 0.0
    %5349 = vmatpush1.msra.mxu0 0.0
    %5350 = vmatprep.subr.mxu0 0.0
    %5351 = vmatpush1.msra.mxu0 0.0
    %5352 = vmatprep.subr.mxu0 0.0
    %5353 = vmatpush1.msra.mxu0 0.0
    %5354 = vmatprep.subr.mxu0 0.0
    %5355 = vmatpush1.msra.mxu0 0.0
    %5356 = vmatprep.subr.mxu0 0.0
    %5357 = vmatpush1.msra.mxu0 0.0
    %5358 = vmatprep.subr.mxu0 0.0
    %5359 = vmatpush1.msra.mxu0 0.0
    %5360 = vmatprep.subr.mxu0 0.0
    %5361 = vmatpush1.msra.mxu0 0.0
    %5362 = vmatprep.subr.mxu0 0.0
    %5363 = vmatpush1.msra.mxu0 0.0
    %5364 = vmatprep.subr.mxu0 0.0
    %5365 = vmatpush1.msra.mxu0 0.0
    %5366 = vmatprep.subr.mxu0 0.0
    %5367 = vmatpush1.msra.mxu0 0.0
    %5368 = vmatprep.subr.mxu0 0.0
    %5369 = vmatpush1.msra.mxu0 0.0
    %5370 = vmatprep.subr.mxu0 0.0
    %5371 = vmatpush1.msra.mxu0 0.0
    %5372 = vmatprep.subr.mxu0 0.0
    %5373 = vmatpush1.msra.mxu0 0.0
    %5374 = vmatprep.subr.mxu0 0.0
    %5375 = vmatpush1.msra.mxu0 0.0
    %5376 = vmatprep.subr.mxu0 0.0
    %5377 = vmatpush1.msra.mxu0 0.0
    %5378 = vmatprep.subr.mxu0 0.0
    %5379 = vmatpush1.msra.mxu0 0.0
    %5380 = vmatprep.subr.mxu0 0.0
    %5381 = vmatpush1.msra.mxu0 0.0
    %5382 = vmatprep.subr.mxu0 0.0
    %5383 = vmatpush1.msra.mxu0 0.0
    %5384 = vmatprep.subr.mxu0 0.0
    %5385 = vmatpush1.msra.mxu0 0.0
    %5386 = vmatprep.subr.mxu0 0.0
    %5387 = vmatpush1.msra.mxu0 0.0
    %5388 = vmatprep.subr.mxu0 0.0
    %5389 = vmatpush1.msra.mxu0 0.0
    %5390 = vmatprep.subr.mxu0 0.0
    %5391 = vmatpush1.msra.mxu0 0.0
    %5392 = vmatprep.mubr.f32.mxu0 0.0
    %5393 = vmatmul.mubr.f32.gmra.mrb[0].mxu0 %v5322
    %v5394 = vpop.f32.mrb[0].mxu0
    %v5395 = vadd.f32 0.0, %v5394
    %v5396 = vpop.f32.mrb[0].mxu0
    %5397 = vdwg.mxu0
    %v5398 = vmul.f32 %v5395, 0.125
    %v5399 = vmul.f32 %v5398, %v5398
    %v5401 = vrot.slane %v5399, 7
    %v5403 = vsub.f32 %v5398, %v5401
    %v5404 = vld [vmem:[#allocation25] sm:$0x1]
    %v5405 = vld [vmem:[#allocation25 + $0x1] sm:$0x1]
    %v5406 = vadd.f32 %v5403, 1e-05
    %v5407 = vrsqrt.pop %v5406
    %v5409 = vrot.slane %v5407, 1
    %v5411 = vmul.f32 %v5404, %v5409
    %v5412 = vmul.f32 %v5398, %v5411
    %v5413 = vsub.f32 %v5405, %v5412
    %v5415 = vrot.slane %v5413, 7
    %v5417 = vsel %vm1521, %v5411, %v5415
    %v5418 = vld [vmem:[%s19] sm:$0x1]
    %vm5419 = vcmask 7168
    %v5421 = vsel %vm5419, %v5417, 0
    %v5424 = vsel %vm1521, %v5418, 0
    %5426 = vmatprep.subr.mxu0 0.0
    %5427 = vmatpush1.msra.mxu0 %v5424
    %5428 = vmatprep.subr.mxu0 0.0
    %5429 = vmatpush1.msra.mxu0 0.0
    %5430 = vmatprep.subr.mxu0 0.0
    %5431 = vmatpush1.msra.mxu0 0.0
    %5432 = vmatprep.subr.mxu0 0.0
    %5433 = vmatpush1.msra.mxu0 0.0
    %5434 = vmatprep.subr.mxu0 0.0
    %5435 = vmatpush1.msra.mxu0 0.0
    %5436 = vmatprep.subr.mxu0 0.0
    %5437 = vmatpush1.msra.mxu0 0.0
    %5438 = vmatprep.subr.mxu0 0.0
    %5439 = vmatpush1.msra.mxu0 0.0
    %5440 = vmatprep.subr.mxu0 0.0
    %5441 = vmatpush1.msra.mxu0 0.0
    %5442 = vmatprep.subr.mxu0 0.0
    %5443 = vmatpush1.msra.mxu0 0.0
    %5444 = vmatprep.subr.mxu0 0.0
    %5445 = vmatpush1.msra.mxu0 0.0
    %5446 = vmatprep.subr.mxu0 0.0
    %5447 = vmatpush1.msra.mxu0 0.0
    %5448 = vmatprep.subr.mxu0 0.0
    %5449 = vmatpush1.msra.mxu0 0.0
    %5450 = vmatprep.subr.mxu0 0.0
    %5451 = vmatpush1.msra.mxu0 0.0
    %5452 = vmatprep.subr.mxu0 0.0
    %5453 = vmatpush1.msra.mxu0 0.0
    %5454 = vmatprep.subr.mxu0 0.0
    %5455 = vmatpush1.msra.mxu0 0.0
    %5456 = vmatprep.subr.mxu0 0.0
    %5457 = vmatpush1.msra.mxu0 0.0
    %5458 = vmatprep.subr.mxu0 0.0
    %5459 = vmatpush1.msra.mxu0 0.0
    %5460 = vmatprep.subr.mxu0 0.0
    %5461 = vmatpush1.msra.mxu0 0.0
    %5462 = vmatprep.subr.mxu0 0.0
    %5463 = vmatpush1.msra.mxu0 0.0
    %5464 = vmatprep.subr.mxu0 0.0
    %5465 = vmatpush1.msra.mxu0 0.0
    %5466 = vmatprep.subr.mxu0 0.0
    %5467 = vmatpush1.msra.mxu0 0.0
    %5468 = vmatprep.subr.mxu0 0.0
    %5469 = vmatpush1.msra.mxu0 0.0
    %5470 = vmatprep.subr.mxu0 0.0
    %5471 = vmatpush1.msra.mxu0 0.0
    %5472 = vmatprep.subr.mxu0 0.0
    %5473 = vmatpush1.msra.mxu0 0.0
    %5474 = vmatprep.subr.mxu0 0.0
    %5475 = vmatpush1.msra.mxu0 0.0
    %5476 = vmatprep.subr.mxu0 0.0
    %5477 = vmatpush1.msra.mxu0 0.0
    %5478 = vmatprep.subr.mxu0 0.0
    %5479 = vmatpush1.msra.mxu0 0.0
    %5480 = vmatprep.subr.mxu0 0.0
    %5481 = vmatpush1.msra.mxu0 0.0
    %5482 = vmatprep.subr.mxu0 0.0
    %5483 = vmatpush1.msra.mxu0 0.0
    %5484 = vmatprep.subr.mxu0 0.0
    %5485 = vmatpush1.msra.mxu0 0.0
    %5486 = vmatprep.subr.mxu0 0.0
    %5487 = vmatpush1.msra.mxu0 0.0
    %5488 = vmatprep.subr.mxu0 0.0
    %5489 = vmatpush1.msra.mxu0 0.0
    %5490 = vmatprep.mubr.f32.mxu0 0.0
    %5491 = vmatmul.mubr.f32.gmra.mrb[0].mxu0 %v5421
    %v5492 = vpop.f32.mrb[0].mxu0
    %v5493 = vadd.f32 0.0, %v5492
    %v5494 = vpop.f32.mrb[0].mxu0
    %5495 = vdwg.mxu0
    %v5496 = vlaneseq
    %v5497 = vshrl.u32 %v5496, 7
    %v5498 = vsub.s32 0, %v5497
    %v5499 = vrot.slane %v5493, %v5498
    %v5500 = vmul.f32 %v5301, %v5499
    %v5501 = vlaneseq
    %v5502 = vshrl.u32 %v5501, 7
    %v5503 = vsub.s32 1, %v5502
    %v5504 = vrot.slane %v5493, %v5503
    %v5505 = vadd.f32 %v5500, %v5504
    %vm5506 = vcmp.ge.f32.partialorder %v5505, 0.0
    %v5507 = vmul.f32 %v5505, 0.01
    %v5508 = vsel %vm5506, %v5505, %v5507
    %v5509 = vld [vmem:[#allocation27] sm:$0xf]
    %v5510 = vld [vmem:[#allocation28] sm:$0xf]
    %5512 = vrot.lane.b32.xlu0 %v5508, 127
    %v5513 = vpop.permute.xlu0 %5512
    %v5515 = vsel %vm4743, %v5510, 0
    %v5517 = vsel %vm358, %v5513, 0
    %5519 = vmatprep.subr.mxu0 0.0
    %5520 = vmatpush1.msra.mxu0 %v5517
    %5521 = vmatprep.subr.mxu0 0.0
    %5522 = vmatpush1.msra.mxu0 0.0
    %5523 = vmatprep.subr.mxu0 0.0
    %5524 = vmatpush1.msra.mxu0 0.0
    %5525 = vmatprep.subr.mxu0 0.0
    %5526 = vmatpush1.msra.mxu0 0.0
    %5527 = vmatprep.subr.mxu0 0.0
    %5528 = vmatpush1.msra.mxu0 0.0
    %5529 = vmatprep.subr.mxu0 0.0
    %5530 = vmatpush1.msra.mxu0 0.0
    %5531 = vmatprep.subr.mxu0 0.0
    %5532 = vmatpush1.msra.mxu0 0.0
    %5533 = vmatprep.subr.mxu0 0.0
    %5534 = vmatpush1.msra.mxu0 0.0
    %5535 = vmatprep.subr.mxu0 0.0
    %5536 = vmatpush1.msra.mxu0 0.0
    %5537 = vmatprep.subr.mxu0 0.0
    %5538 = vmatpush1.msra.mxu0 0.0
    %5539 = vmatprep.subr.mxu0 0.0
    %5540 = vmatpush1.msra.mxu0 0.0
    %5541 = vmatprep.subr.mxu0 0.0
    %5542 = vmatpush1.msra.mxu0 0.0
    %5543 = vmatprep.subr.mxu0 0.0
    %5544 = vmatpush1.msra.mxu0 0.0
    %5545 = vmatprep.subr.mxu0 0.0
    %5546 = vmatpush1.msra.mxu0 0.0
    %5547 = vmatprep.subr.mxu0 0.0
    %5548 = vmatpush1.msra.mxu0 0.0
    %5549 = vmatprep.subr.mxu0 0.0
    %5550 = vmatpush1.msra.mxu0 0.0
    %5551 = vmatprep.subr.mxu0 0.0
    %5552 = vmatpush1.msra.mxu0 0.0
    %5553 = vmatprep.subr.mxu0 0.0
    %5554 = vmatpush1.msra.mxu0 0.0
    %5555 = vmatprep.subr.mxu0 0.0
    %5556 = vmatpush1.msra.mxu0 0.0
    %5557 = vmatprep.subr.mxu0 0.0
    %5558 = vmatpush1.msra.mxu0 0.0
    %5559 = vmatprep.subr.mxu0 0.0
    %5560 = vmatpush1.msra.mxu0 0.0
    %5561 = vmatprep.subr.mxu0 0.0
    %5562 = vmatpush1.msra.mxu0 0.0
    %5563 = vmatprep.subr.mxu0 0.0
    %5564 = vmatpush1.msra.mxu0 0.0
    %5565 = vmatprep.subr.mxu0 0.0
    %5566 = vmatpush1.msra.mxu0 0.0
    %5567 = vmatprep.subr.mxu0 0.0
    %5568 = vmatpush1.msra.mxu0 0.0
    %5569 = vmatprep.subr.mxu0 0.0
    %5570 = vmatpush1.msra.mxu0 0.0
    %5571 = vmatprep.subr.mxu0 0.0
    %5572 = vmatpush1.msra.mxu0 0.0
    %5573 = vmatprep.subr.mxu0 0.0
    %5574 = vmatpush1.msra.mxu0 0.0
    %5575 = vmatprep.subr.mxu0 0.0
    %5576 = vmatpush1.msra.mxu0 0.0
    %5577 = vmatprep.subr.mxu0 0.0
    %5578 = vmatpush1.msra.mxu0 0.0
    %5579 = vmatprep.subr.mxu0 0.0
    %5580 = vmatpush1.msra.mxu0 0.0
    %5581 = vmatprep.subr.mxu0 0.0
    %5582 = vmatpush1.msra.mxu0 0.0
    %5583 = vmatprep.mubr.f32.mxu0 0.0
    %5584 = vmatmul.mubr.f32.gmra.mrb[0].mxu0 %v5515
    %v5585 = vpop.f32.mrb[0].mxu0
    %v5586 = vadd.f32 0.0, %v5585
    %v5587 = vpop.f32.mrb[0].mxu0
    %5588 = vdwg.mxu0
    %v5590 = vsel %vm4743, %v5509, 0
    %v5592 = vsel %vm358, %v5508, 0
    %5594 = vmatprep.subr.mxu0 0.0
    %5595 = vmatpush1.msra.mxu0 %v5592
    %5596 = vmatprep.subr.mxu0 0.0
    %5597 = vmatpush1.msra.mxu0 0.0
    %5598 = vmatprep.subr.mxu0 0.0
    %5599 = vmatpush1.msra.mxu0 0.0
    %5600 = vmatprep.subr.mxu0 0.0
    %5601 = vmatpush1.msra.mxu0 0.0
    %5602 = vmatprep.subr.mxu0 0.0
    %5603 = vmatpush1.msra.mxu0 0.0
    %5604 = vmatprep.subr.mxu0 0.0
    %5605 = vmatpush1.msra.mxu0 0.0
    %5606 = vmatprep.subr.mxu0 0.0
    %5607 = vmatpush1.msra.mxu0 0.0
    %5608 = vmatprep.subr.mxu0 0.0
    %5609 = vmatpush1.msra.mxu0 0.0
    %5610 = vmatprep.subr.mxu0 0.0
    %5611 = vmatpush1.msra.mxu0 0.0
    %5612 = vmatprep.subr.mxu0 0.0
    %5613 = vmatpush1.msra.mxu0 0.0
    %5614 = vmatprep.subr.mxu0 0.0
    %5615 = vmatpush1.msra.mxu0 0.0
    %5616 = vmatprep.subr.mxu0 0.0
    %5617 = vmatpush1.msra.mxu0 0.0
    %5618 = vmatprep.subr.mxu0 0.0
    %5619 = vmatpush1.msra.mxu0 0.0
    %5620 = vmatprep.subr.mxu0 0.0
    %5621 = vmatpush1.msra.mxu0 0.0
    %5622 = vmatprep.subr.mxu0 0.0
    %5623 = vmatpush1.msra.mxu0 0.0
    %5624 = vmatprep.subr.mxu0 0.0
    %5625 = vmatpush1.msra.mxu0 0.0
    %5626 = vmatprep.subr.mxu0 0.0
    %5627 = vmatpush1.msra.mxu0 0.0
    %5628 = vmatprep.subr.mxu0 0.0
    %5629 = vmatpush1.msra.mxu0 0.0
    %5630 = vmatprep.subr.mxu0 0.0
    %5631 = vmatpush1.msra.mxu0 0.0
    %5632 = vmatprep.subr.mxu0 0.0
    %5633 = vmatpush1.msra.mxu0 0.0
    %5634 = vmatprep.subr.mxu0 0.0
    %5635 = vmatpush1.msra.mxu0 0.0
    %5636 = vmatprep.subr.mxu0 0.0
    %5637 = vmatpush1.msra.mxu0 0.0
    %5638 = vmatprep.subr.mxu0 0.0
    %5639 = vmatpush1.msra.mxu0 0.0
    %5640 = vmatprep.subr.mxu0 0.0
    %5641 = vmatpush1.msra.mxu0 0.0
    %5642 = vmatprep.subr.mxu0 0.0
    %5643 = vmatpush1.msra.mxu0 0.0
    %5644 = vmatprep.subr.mxu0 0.0
    %5645 = vmatpush1.msra.mxu0 0.0
    %5646 = vmatprep.subr.mxu0 0.0
    %5647 = vmatpush1.msra.mxu0 0.0
    %5648 = vmatprep.subr.mxu0 0.0
    %5649 = vmatpush1.msra.mxu0 0.0
    %5650 = vmatprep.subr.mxu0 0.0
    %5651 = vmatpush1.msra.mxu0 0.0
    %5652 = vmatprep.subr.mxu0 0.0
    %5653 = vmatpush1.msra.mxu0 0.0
    %5654 = vmatprep.subr.mxu0 0.0
    %5655 = vmatpush1.msra.mxu0 0.0
    %5656 = vmatprep.subr.mxu0 0.0
    %5657 = vmatpush1.msra.mxu0 0.0
    %5658 = vmatprep.mubr.f32.mxu0 0.0
    %5659 = vmatmul.mubr.f32.gmra.mrb[0].mxu0 %v5590
    %v5660 = vpop.f32.mrb[0].mxu0
    %v5661 = vadd.f32 %v5586, %v5660
    %v5662 = vpop.f32.mrb[0].mxu0
    %5663 = vdwg.mxu0
    %v5664 = vld [vmem:[#allocation30] sm:$0xf]
    %v5665 = vadd.f32 %v5661, %v5664
    %vm5666 = vcmask 3072
    %5667 = vst.msk [vmem:[%s24] sm:$0xf] %vm5666, %v5665
    // Predicated region
    $region166: #{forward.1} parent=1 // pred_check
      _
    $region167: #{forward.1} parent=1 // pred_check_branch
      %5669 = sbr.rel (0) target = $region169
    $region168: #{forward.1} parent=1 // pred_region
      _
    $region169: #{forward.1} parent=1 // pred_fallthru
      _
    // Predicated region
    $region170: #{forward.1} parent=1 // pred_check
      _
    $region171: #{forward.1} parent=1 // pred_check_branch
      %5671 = sbr.rel (0) target = $region173
    $region172: #{forward.1} parent=1 // pred_region
      _
    $region173: #{forward.1} parent=1 // pred_fallthru
      _
    %5672 = vsyncpa [#allocation6], 1
    %5673 = vsyncpa [#allocation8], 1
    %5674 = vsyncpa [#allocation11], 1
    %5675 = vsyncpa [#allocation14], 1
    %5676 = vsyncpa [#allocation17], 1
    %5677 = vsyncpa [#allocation20], 1
    %5678 = vsyncpa [#allocation23], 1
    %5679 = vsyncpa [#allocation26], 1
    %5680 = vsyncpa [#allocation29], 1

</llo_original>
